<compile_context>
chip_gen: v5e
topology: v5e:2x2
jax: 0.10.0
libtpu: 0.0.40
codegen_flags: <defaults>
</compile_context>

<pallas_src>
import numpy as np
import jax
import jax.numpy as jnp
from jax.experimental import pallas as pl
from jax.experimental.pallas import tpu as pltpu


# --------------------------------------------------------------------------
# host-side constant tables (bilinear 2x matrix, space_to_depth(2) selection)
# --------------------------------------------------------------------------
def _bilinear_taps(in_size, out_size):
    taps = []
    for o in range(out_size):
        src = (o + 0.5) * in_size / out_size - 0.5
        i0 = int(np.floor(src))
        frac = float(src - i0)
        i0c = min(max(i0, 0), in_size - 1)
        i1c = min(max(i0 + 1, 0), in_size - 1)
        taps.append((i0c, i1c, 1.0 - frac, frac))
    return taps


def _bilinear_matrix_2d(h_in, w_in, h_out, w_out):
    # dense (h_out*w_out, h_in*w_in) bilinear (align_corners=False) interpolation matrix
    th = _bilinear_taps(h_in, h_out)
    tw = _bilinear_taps(w_in, w_out)
    m = np.zeros((h_out * w_out, h_in * w_in), np.float32)
    for oh, (ih0, ih1, wh0, wh1) in enumerate(th):
        for ow, (iw0, iw1, ww0, ww1) in enumerate(tw):
            o = oh * w_out + ow
            m[o, ih0 * w_in + iw0] += wh0 * ww0
            m[o, ih0 * w_in + iw1] += wh0 * ww1
            m[o, ih1 * w_in + iw0] += wh1 * ww0
            m[o, ih1 * w_in + iw1] += wh1 * ww1
    return m


def _s2d2_select(h, w):
    # (4, h/2*w/2, h*w) 0/1 phase-selection matrices for an in-kernel space_to_depth(2)
    ho, wo = h // 2, w // 2
    s = np.zeros((4, ho * wo, h * w), np.float32)
    for ph in range(2):
        for pw in range(2):
            p = ph * 2 + pw
            for oh in range(ho):
                for ow in range(wo):
                    s[p, oh * wo + ow, (2 * oh + ph) * w + (2 * ow + pw)] = 1.0
    return s


# --------------------------------------------------------------------------
# fused forward kernel: backbone stub + upsample + concat + convs + depth
# --------------------------------------------------------------------------
def _make_fused_kernel(H, W, C8, C16, C1):
    HW = H * W
    Cc = C8 + C16                  # padded concat channels
    H16, W16 = H // 2, W // 2
    HW16 = H16 * W16
    bf16 = jnp.bfloat16

    def im2col_conv_gn_relu(pad_ref, slab_ref, w_ref, g_ref, b_ref, cin):
        # build the (HW, 9*cin) im2col slab from the zero-padded (H+2, W+2, cin)
        # buffer (weights are stored tap-major so this is a plain reshape match),
        # then ONE long-K MXU matmul, then GroupNorm(1) + ReLU.
        for k in range(9):
            dh, dw = divmod(k, 3)
            win = pad_ref[pl.ds(dh, H), pl.ds(dw, W), :].reshape(HW, cin)
            slab_ref[:, pl.ds(k * cin, cin)] = win
        acc = jnp.dot(slab_ref[...], w_ref[...], preferred_element_type=jnp.float32)
        # GroupNorm(num_groups=1): stats over all of (HW, Cout) per sample, eps=1e-5.
        # Correct because Cout == C1 == 128 exactly (no lane padding in the GN'd tensor).
        mean = jnp.mean(acc)
        var = jnp.mean(jnp.square(acc - mean))
        xn = (acc - mean) * jax.lax.rsqrt(var + 1e-5)
        return jnp.maximum(xn * g_ref[...] + b_ref[...], 0.0)

    def kernel(xs_ref, w0_ref, b0_ref, w8_ref, b8_ref, sel_ref, w16_ref, b16_ref,
               u_ref, w1c_ref, g1_ref, gb1_ref, w2c_ref, g2_ref, gb2_ref,
               wd_ref, bd_ref, o_ref, pad1_ref, pad2_ref, slab1_ref, slab2_ref):
        # ---------------- backbone stub ----------------
        # TODO(synk): the pretrained EfficientNet-b4 backbone has no in-script
        # equivalent; it is replaced by a deterministic space-to-depth + pointwise
        # pyramid producing features with the channel counts / strides the head
        # consumes (reduction_3: 56 ch @ /8, reduction_4: 160 ch @ /16), lane-padded.
        kin = xs_ref.shape[-1]
        xs = xs_ref[0].reshape(HW, kin)                                 # (HW, 192) bf16
        h = jnp.dot(xs, w0_ref[...], preferred_element_type=jnp.float32)
        h = jnp.maximum(h + b0_ref[...], 0.0).astype(bf16)              # trunk @ /8

        f8 = jnp.dot(h, w8_ref[...], preferred_element_type=jnp.float32)
        f8 = jnp.maximum(f8 + b8_ref[...], 0.0)                         # (HW, 128), 56 real

        # /16 feature: space_to_depth(2) of the trunk via 4 phase-selection matmuls
        acc16 = jnp.zeros((HW16, C16), jnp.float32) + b16_ref[...]
        for p in range(4):
            hp = jnp.dot(sel_ref[p], h, preferred_element_type=jnp.float32).astype(bf16)
            acc16 = acc16 + jnp.dot(hp, w16_ref[p], preferred_element_type=jnp.float32)
        f16 = jnp.maximum(acc16, 0.0)                                   # (HW16, 256), 160 real

        # ---------------- decode head ----------------
        # zero ONLY the 1-px halo strips (interior is fully overwritten every step;
        # no program_id==0 guard so 'parallel' megacore sharding stays correct).
        pad1_ref[pl.ds(0, 1), :, :] = jnp.zeros((1, W + 2, Cc), bf16)
        pad1_ref[pl.ds(H + 1, 1), :, :] = jnp.zeros((1, W + 2, Cc), bf16)
        pad1_ref[pl.ds(1, H), pl.ds(0, 1), :] = jnp.zeros((H, 1, Cc), bf16)
        pad1_ref[pl.ds(1, H), pl.ds(W + 1, 1), :] = jnp.zeros((H, 1, Cc), bf16)
        pad2_ref[pl.ds(0, 1), :, :] = jnp.zeros((1, W + 2, C1), bf16)
        pad2_ref[pl.ds(H + 1, 1), :, :] = jnp.zeros((1, W + 2, C1), bf16)
        pad2_ref[pl.ds(1, H), pl.ds(0, 1), :] = jnp.zeros((H, 1, C1), bf16)
        pad2_ref[pl.ds(1, H), pl.ds(W + 1, 1), :] = jnp.zeros((H, 1, C1), bf16)

        # torch.cat([x(/8 skip), upsampled(/16)], dim=1):
        #   channels [0:C8]    = stride-8 skip feature (56 real)
        #   channels [C8:Cc]   = bilinear-2x upsampled stride-16 feature (160 real)
        pad1_ref[pl.ds(1, H), pl.ds(1, W), pl.ds(0, C8)] = \
            f8.reshape(H, W, C8).astype(bf16)
        up = jnp.dot(u_ref[...], f16.astype(bf16), preferred_element_type=jnp.float32)
        pad1_ref[pl.ds(1, H), pl.ds(1, W), pl.ds(C8, C16)] = \
            up.reshape(H, W, C16).astype(bf16)

        # conv1 3x3 (pad=1, no bias) + GN(1,128) + ReLU
        h1 = im2col_conv_gn_relu(pad1_ref, slab1_ref, w1c_ref, g1_ref, gb1_ref, Cc)
        pad2_ref[pl.ds(1, H), pl.ds(1, W), :] = h1.reshape(H, W, C1).astype(bf16)

        # conv2 3x3 (pad=1, no bias) + GN(1,128) + ReLU
        h2 = im2col_conv_gn_relu(pad2_ref, slab2_ref, w2c_ref, g2_ref, gb2_ref, C1)

        # depth 1x1 conv + bias (output channel-padded to 128; real C sliced by caller)
        yd = jnp.dot(h2.astype(bf16), wd_ref[...], preferred_element_type=jnp.float32)
        o_ref[0] = (yd + bd_ref[...]).astype(o_ref.dtype)

    return kernel


def fused_forward(xs, params):
    n, H, W, K = xs.shape
    H16, W16 = H // 2, W // 2
    HW, HW16 = H * W, H16 * W16
    CT = params["stub_w0"].shape[1]
    C8 = params["stub_w8"].shape[1]
    C16 = params["stub_w16"].shape[2]
    C1 = params["conv1_w"].shape[1]
    Cd = params["depth_w"].shape[1]
    Cc = C8 + C16
    assert params["conv1_w"].shape[0] == 9 * Cc

    u = jnp.asarray(_bilinear_matrix_2d(H16, W16, H, W)).astype(jnp.bfloat16)
    sel = jnp.asarray(_s2d2_select(H, W)).astype(jnp.bfloat16)

    kernel = _make_fused_kernel(H, W, C8, C16, C1)
    full2 = lambda b: (0, 0)
    full3 = lambda b: (0, 0, 0)

    out = pl.pallas_call(
        kernel,
        out_shape=jax.ShapeDtypeStruct((n, HW, Cd), jnp.float32),
        grid=(n,),
        in_specs=[
            pl.BlockSpec((1, H, W, K), lambda b: (b, 0, 0, 0)),   # s2d(8) image block
            pl.BlockSpec((K, CT), full2),                         # stub trunk weight
            pl.BlockSpec((1, CT), full2),
            pl.BlockSpec((CT, C8), full2),                        # stub /8 projection
            pl.BlockSpec((1, C8), full2),
            pl.BlockSpec((4, HW16, HW), full3),                   # s2d(2) selection mats
            pl.BlockSpec((4, CT, C16), full3),                    # stub /16 projection
            pl.BlockSpec((1, C16), full2),
            pl.BlockSpec((HW, HW16), full2),                      # bilinear 2x matrix
            pl.BlockSpec((9 * Cc, C1), full2),                    # conv1 (im2col layout)
            pl.BlockSpec((1, C1), full2),
            pl.BlockSpec((1, C1), full2),
            pl.BlockSpec((9 * C1, C1), full2),                    # conv2 (im2col layout)
            pl.BlockSpec((1, C1), full2),
            pl.BlockSpec((1, C1), full2),
            pl.BlockSpec((C1, Cd), full2),                        # depth 1x1
            pl.BlockSpec((1, Cd), full2),
        ],
        out_specs=pl.BlockSpec((1, HW, Cd), lambda b: (b, 0, 0)),
        scratch_shapes=[
            pltpu.VMEM((H + 2, W + 2, Cc), jnp.bfloat16),   # padded concat buffer
            pltpu.VMEM((H + 2, W + 2, C1), jnp.bfloat16),   # padded conv2 input
            pltpu.VMEM((HW, 9 * Cc), jnp.bfloat16),         # im2col slab conv1
            pltpu.VMEM((HW, 9 * C1), jnp.bfloat16),         # im2col slab conv2
        ],
        compiler_params=pltpu.CompilerParams(dimension_semantics=("parallel",)),
    )(xs, params["stub_w0"], params["stub_b0"], params["stub_w8"], params["stub_b8"],
      sel, params["stub_w16"], params["stub_b16"], u,
      params["conv1_w"], params["gn1_g"], params["gn1_b"],
      params["conv2_w"], params["gn2_g"], params["gn2_b"],
      params["depth_w"], params["depth_b"])
    return out


# --------------------------------------------------------------------------
# parameters
# --------------------------------------------------------------------------
def init_params(key, C):
    ks = jax.random.split(key, 8)

    def rnd(k, shape, scale=0.05):
        return scale * jax.random.normal(k, shape, jnp.float32)

    # stub backbone (see TODO in kernel): trunk @ /8, /8 projection (56 real of 128),
    # /16 projection (160 real of 256). Padding columns are zero so padded channels
    # stay exactly zero through ReLU.
    w0 = rnd(ks[0], (192, 128))
    b0 = jnp.zeros((1, 128), jnp.float32)
    w8 = jnp.zeros((128, 128), jnp.float32).at[:, :56].set(rnd(ks[1], (128, 56)))
    b8 = jnp.zeros((1, 128), jnp.float32)
    w16 = jnp.zeros((4, 128, 256), jnp.float32).at[:, :, :160].set(rnd(ks[2], (4, 128, 160)))
    b16 = jnp.zeros((1, 256), jnp.float32)

    # UpsamplingConcat(216 -> 128): conv1 weights stored tap-major (9, Cin_pad, Cout)
    # then flattened to (9*Cin_pad, Cout) for the im2col matmul. Real input rows sit
    # at [0:56] (the /8 skip, cat position 0) and [128:288] (the upsampled /16 feature,
    # cat position 1), matching torch.cat([x, x_to_upsample], dim=1).
    w1r = rnd(ks[3], (9, 216, 128))
    w1 = jnp.zeros((9, 384, 128), jnp.float32)
    w1 = w1.at[:, 0:56, :].set(w1r[:, 0:56, :])
    w1 = w1.at[:, 128:288, :].set(w1r[:, 56:216, :])
    w2 = rnd(ks[4], (9, 128, 128))

    # depth_layer: Conv2d(128, C, k=1) with bias; output channels lane-padded to 128.
    wd = jnp.zeros((128, 128), jnp.float32).at[:, :C].set(rnd(ks[5], (128, C)))
    bd = jnp.zeros((1, 128), jnp.float32).at[:, :C].set(rnd(ks[6], (1, C)))

    return {
        "stub_w0": w0.astype(jnp.bfloat16), "stub_b0": b0,
        "stub_w8": w8.astype(jnp.bfloat16), "stub_b8": b8,
        "stub_w16": w16.astype(jnp.bfloat16), "stub_b16": b16,
        "conv1_w": w1.reshape(9 * 384, 128).astype(jnp.bfloat16),
        "gn1_g": jnp.ones((1, 128), jnp.float32),
        "gn1_b": jnp.zeros((1, 128), jnp.float32),
        "conv2_w": w2.reshape(9 * 128, 128).astype(jnp.bfloat16),
        "gn2_g": jnp.ones((1, 128), jnp.float32),
        "gn2_b": jnp.zeros((1, 128), jnp.float32),
        "depth_w": wd.astype(jnp.bfloat16),
        "depth_b": bd,
    }


# --------------------------------------------------------------------------
# forward
# --------------------------------------------------------------------------
def encoder_eff_forward(x_nchw, params, C):
    n, cin, H0, W0 = x_nchw.shape
    ds = 8
    H, W = H0 // ds, W0 // ds
    # NCHW -> NHWC, then ONE tiny XLA space_to_depth(8) relayout of the raw image so
    # channels become lane-dense (192) AFTER s2d -- no 3->32 pre-padding of the input.
    x = jnp.transpose(x_nchw, (0, 2, 3, 1))
    xs = x.reshape(n, H, ds, W, ds, cin).transpose(0, 1, 3, 2, 4, 5)
    xs = xs.reshape(n, H, W, ds * ds * cin).astype(jnp.bfloat16)

    out = fused_forward(xs, params)                 # (N, H*W, 128) f32, fully fused
    out = out[..., :C].reshape(n, H, W, C)          # drop lane padding -> real channels
    return jnp.transpose(out, (0, 3, 1, 2))         # back to NCHW


# --------------------------------------------------------------------------
# main
# --------------------------------------------------------------------------
if __name__ == "__main__":
    C = 16
    key = jax.random.PRNGKey(0)
    kx, kp = jax.random.split(key)
    x = jax.random.normal(kx, (2, 3, 64, 64), jnp.float32)    # NCHW image input
    params = init_params(kp, C)

    fwd = jax.jit(encoder_eff_forward, static_argnums=2)
    out = jax.block_until_ready(fwd(x, params, C))

    assert out.shape == (2, C, 8, 8), out.shape    # stride-8 features, C depth channels
    assert bool(jnp.isfinite(out).all())
    print("KERNEL_OK")
</pallas_src>

<mosaic_0001>
module attributes {stable_mosaic.version = 11 : i64} {
  func.func @kernel(%arg0: i32, %arg1: memref<1x8x8x192xbf16, #tpu.memory_space<vmem>>, %arg2: memref<192x128xbf16, #tpu.memory_space<vmem>>, %arg3: memref<1x128xf32, #tpu.memory_space<vmem>>, %arg4: memref<128x128xbf16, #tpu.memory_space<vmem>>, %arg5: memref<1x128xf32, #tpu.memory_space<vmem>>, %arg6: memref<4x16x64xbf16, #tpu.memory_space<vmem>>, %arg7: memref<4x128x256xbf16, #tpu.memory_space<vmem>>, %arg8: memref<1x256xf32, #tpu.memory_space<vmem>>, %arg9: memref<64x16xbf16, #tpu.memory_space<vmem>>, %arg10: memref<3456x128xbf16, #tpu.memory_space<vmem>>, %arg11: memref<1x128xf32, #tpu.memory_space<vmem>>, %arg12: memref<1x128xf32, #tpu.memory_space<vmem>>, %arg13: memref<1152x128xbf16, #tpu.memory_space<vmem>>, %arg14: memref<1x128xf32, #tpu.memory_space<vmem>>, %arg15: memref<1x128xf32, #tpu.memory_space<vmem>>, %arg16: memref<128x128xbf16, #tpu.memory_space<vmem>>, %arg17: memref<1x128xf32, #tpu.memory_space<vmem>>, %arg18: memref<1x64x128xf32, #tpu.memory_space<vmem>>, %arg19: memref<10x10x384xbf16, #tpu.memory_space<vmem>>, %arg20: memref<10x10x128xbf16, #tpu.memory_space<vmem>>, %arg21: memref<64x3456xbf16, #tpu.memory_space<vmem>>, %arg22: memref<64x1152xbf16, #tpu.memory_space<vmem>>) attributes {dimension_semantics = [#tpu.dimension_semantics<parallel>], iteration_bounds = array<i64: 2>, scalar_prefetch = 0 : i64, scratch_operands = 4 : i64, tpu.core_type = #tpu.core_type<tc>, window_params = [{transform_indices = @transform_0, window_bounds = array<i64: 1, 8, 8, 192>}, {pipeline_mode = #tpu.pipeline_mode<synchronous>, transform_indices = @transform_1, window_bounds = array<i64: 192, 128>}, {pipeline_mode = #tpu.pipeline_mode<synchronous>, transform_indices = @transform_2, window_bounds = array<i64: 1, 128>}, {pipeline_mode = #tpu.pipeline_mode<synchronous>, transform_indices = @transform_3, window_bounds = array<i64: 128, 128>}, {pipeline_mode = #tpu.pipeline_mode<synchronous>, transform_indices = @transform_4, window_bounds = array<i64: 1, 128>}, {pipeline_mode = #tpu.pipeline_mode<synchronous>, transform_indices = @transform_5, window_bounds = array<i64: 4, 16, 64>}, {pipeline_mode = #tpu.pipeline_mode<synchronous>, transform_indices = @transform_6, window_bounds = array<i64: 4, 128, 256>}, {pipeline_mode = #tpu.pipeline_mode<synchronous>, transform_indices = @transform_7, window_bounds = array<i64: 1, 256>}, {pipeline_mode = #tpu.pipeline_mode<synchronous>, transform_indices = @transform_8, window_bounds = array<i64: 64, 16>}, {pipeline_mode = #tpu.pipeline_mode<synchronous>, transform_indices = @transform_9, window_bounds = array<i64: 3456, 128>}, {pipeline_mode = #tpu.pipeline_mode<synchronous>, transform_indices = @transform_10, window_bounds = array<i64: 1, 128>}, {pipeline_mode = #tpu.pipeline_mode<synchronous>, transform_indices = @transform_11, window_bounds = array<i64: 1, 128>}, {pipeline_mode = #tpu.pipeline_mode<synchronous>, transform_indices = @transform_12, window_bounds = array<i64: 1152, 128>}, {pipeline_mode = #tpu.pipeline_mode<synchronous>, transform_indices = @transform_13, window_bounds = array<i64: 1, 128>}, {pipeline_mode = #tpu.pipeline_mode<synchronous>, transform_indices = @transform_14, window_bounds = array<i64: 1, 128>}, {pipeline_mode = #tpu.pipeline_mode<synchronous>, transform_indices = @transform_15, window_bounds = array<i64: 128, 128>}, {pipeline_mode = #tpu.pipeline_mode<synchronous>, transform_indices = @transform_16, window_bounds = array<i64: 1, 128>}, {transform_indices = @transform_17, window_bounds = array<i64: 1, 64, 128>}]} {
    %c0 = arith.constant 0 : index
    %c0_0 = arith.constant 0 : index
    %c0_1 = arith.constant 0 : index
    %c0_2 = arith.constant 0 : index
    %0 = vector.load %arg1[%c0, %c0_0, %c0_1, %c0_2] : memref<1x8x8x192xbf16, #tpu.memory_space<vmem>>, vector<1x8x8x192xbf16>
    %1 = vector.shape_cast %0 : vector<1x8x8x192xbf16> to vector<8x8x192xbf16>
    %2 = vector.shape_cast %1 : vector<8x8x192xbf16> to vector<64x192xbf16>
    %c0_3 = arith.constant 0 : index
    %c0_4 = arith.constant 0 : index
    %3 = vector.load %arg2[%c0_3, %c0_4] : memref<192x128xbf16, #tpu.memory_space<vmem>>, vector<192x128xbf16>
    %cst = arith.constant dense<0.000000e+00> : vector<64x128xf32>
    %4 = tpu.matmul %2, %3, %cst {dimension_numbers = #tpu.dot_dimension_numbers<[1], [0], [0], [1], [0, 0, 1, 1], [], []>} : vector<64x192xbf16>, vector<192x128xbf16>, vector<64x128xf32> -> vector<64x128xf32>
    %c0_5 = arith.constant 0 : index
    %c0_6 = arith.constant 0 : index
    %5 = vector.load %arg3[%c0_5, %c0_6] : memref<1x128xf32, #tpu.memory_space<vmem>>, vector<1x128xf32>
    %6 = vector.broadcast %5 : vector<1x128xf32> to vector<64x128xf32>
    %7 = arith.addf %4, %6 : vector<64x128xf32>
    %cst_7 = arith.constant 0.000000e+00 : f32
    %8 = vector.broadcast %cst_7 : f32 to vector<64x128xf32>
    %9 = arith.maximumf %7, %8 : vector<64x128xf32>
    %10 = arith.truncf %9 : vector<64x128xf32> to vector<64x128xbf16>
    %c0_8 = arith.constant 0 : index
    %c0_9 = arith.constant 0 : index
    %11 = vector.load %arg4[%c0_8, %c0_9] : memref<128x128xbf16, #tpu.memory_space<vmem>>, vector<128x128xbf16>
    %cst_10 = arith.constant dense<0.000000e+00> : vector<64x128xf32>
    %12 = tpu.matmul %10, %11, %cst_10 {dimension_numbers = #tpu.dot_dimension_numbers<[1], [0], [0], [1], [0, 0, 1, 1], [], []>} : vector<64x128xbf16>, vector<128x128xbf16>, vector<64x128xf32> -> vector<64x128xf32>
    %c0_11 = arith.constant 0 : index
    %c0_12 = arith.constant 0 : index
    %13 = vector.load %arg5[%c0_11, %c0_12] : memref<1x128xf32, #tpu.memory_space<vmem>>, vector<1x128xf32>
    %14 = vector.broadcast %13 : vector<1x128xf32> to vector<64x128xf32>
    %15 = arith.addf %12, %14 : vector<64x128xf32>
    %cst_13 = arith.constant 0.000000e+00 : f32
    %16 = vector.broadcast %cst_13 : f32 to vector<64x128xf32>
    %17 = arith.maximumf %15, %16 : vector<64x128xf32>
    %cst_14 = arith.constant 0.000000e+00 : f32
    %18 = vector.broadcast %cst_14 : f32 to vector<16x256xf32>
    %c0_15 = arith.constant 0 : index
    %c0_16 = arith.constant 0 : index
    %19 = vector.load %arg8[%c0_15, %c0_16] : memref<1x256xf32, #tpu.memory_space<vmem>>, vector<1x256xf32>
    %20 = vector.broadcast %19 : vector<1x256xf32> to vector<16x256xf32>
    %21 = arith.addf %18, %20 : vector<16x256xf32>
    %c0_17 = arith.constant 0 : index
    %c0_18 = arith.constant 0 : index
    %c0_19 = arith.constant 0 : index
    %22 = vector.load %arg6[%c0_17, %c0_18, %c0_19] : memref<4x16x64xbf16, #tpu.memory_space<vmem>>, vector<1x16x64xbf16>
    %23 = vector.shape_cast %22 : vector<1x16x64xbf16> to vector<16x64xbf16>
    %cst_20 = arith.constant dense<0.000000e+00> : vector<16x128xf32>
    %24 = tpu.matmul %23, %10, %cst_20 {dimension_numbers = #tpu.dot_dimension_numbers<[1], [0], [0], [1], [0, 0, 1, 1], [], []>} : vector<16x64xbf16>, vector<64x128xbf16>, vector<16x128xf32> -> vector<16x128xf32>
    %25 = arith.truncf %24 : vector<16x128xf32> to vector<16x128xbf16>
    %c0_21 = arith.constant 0 : index
    %c0_22 = arith.constant 0 : index
    %c0_23 = arith.constant 0 : index
    %26 = vector.load %arg7[%c0_21, %c0_22, %c0_23] : memref<4x128x256xbf16, #tpu.memory_space<vmem>>, vector<1x128x256xbf16>
    %27 = vector.shape_cast %26 : vector<1x128x256xbf16> to vector<128x256xbf16>
    %cst_24 = arith.constant dense<0.000000e+00> : vector<16x256xf32>
    %28 = tpu.matmul %25, %27, %cst_24 {dimension_numbers = #tpu.dot_dimension_numbers<[1], [0], [0], [1], [0, 0, 1, 1], [], []>} : vector<16x128xbf16>, vector<128x256xbf16>, vector<16x256xf32> -> vector<16x256xf32>
    %29 = arith.addf %21, %28 : vector<16x256xf32>
    %c1 = arith.constant 1 : index
    %c0_25 = arith.constant 0 : index
    %c0_26 = arith.constant 0 : index
    %30 = vector.load %arg6[%c1, %c0_25, %c0_26] : memref<4x16x64xbf16, #tpu.memory_space<vmem>>, vector<1x16x64xbf16>
    %31 = vector.shape_cast %30 : vector<1x16x64xbf16> to vector<16x64xbf16>
    %cst_27 = arith.constant dense<0.000000e+00> : vector<16x128xf32>
    %32 = tpu.matmul %31, %10, %cst_27 {dimension_numbers = #tpu.dot_dimension_numbers<[1], [0], [0], [1], [0, 0, 1, 1], [], []>} : vector<16x64xbf16>, vector<64x128xbf16>, vector<16x128xf32> -> vector<16x128xf32>
    %33 = arith.truncf %32 : vector<16x128xf32> to vector<16x128xbf16>
    %c1_28 = arith.constant 1 : index
    %c0_29 = arith.constant 0 : index
    %c0_30 = arith.constant 0 : index
    %34 = vector.load %arg7[%c1_28, %c0_29, %c0_30] : memref<4x128x256xbf16, #tpu.memory_space<vmem>>, vector<1x128x256xbf16>
    %35 = vector.shape_cast %34 : vector<1x128x256xbf16> to vector<128x256xbf16>
    %cst_31 = arith.constant dense<0.000000e+00> : vector<16x256xf32>
    %36 = tpu.matmul %33, %35, %cst_31 {dimension_numbers = #tpu.dot_dimension_numbers<[1], [0], [0], [1], [0, 0, 1, 1], [], []>} : vector<16x128xbf16>, vector<128x256xbf16>, vector<16x256xf32> -> vector<16x256xf32>
    %37 = arith.addf %29, %36 : vector<16x256xf32>
    %c2 = arith.constant 2 : index
    %c0_32 = arith.constant 0 : index
    %c0_33 = arith.constant 0 : index
    %38 = vector.load %arg6[%c2, %c0_32, %c0_33] : memref<4x16x64xbf16, #tpu.memory_space<vmem>>, vector<1x16x64xbf16>
    %39 = vector.shape_cast %38 : vector<1x16x64xbf16> to vector<16x64xbf16>
    %cst_34 = arith.constant dense<0.000000e+00> : vector<16x128xf32>
    %40 = tpu.matmul %39, %10, %cst_34 {dimension_numbers = #tpu.dot_dimension_numbers<[1], [0], [0], [1], [0, 0, 1, 1], [], []>} : vector<16x64xbf16>, vector<64x128xbf16>, vector<16x128xf32> -> vector<16x128xf32>
    %41 = arith.truncf %40 : vector<16x128xf32> to vector<16x128xbf16>
    %c2_35 = arith.constant 2 : index
    %c0_36 = arith.constant 0 : index
    %c0_37 = arith.constant 0 : index
    %42 = vector.load %arg7[%c2_35, %c0_36, %c0_37] : memref<4x128x256xbf16, #tpu.memory_space<vmem>>, vector<1x128x256xbf16>
    %43 = vector.shape_cast %42 : vector<1x128x256xbf16> to vector<128x256xbf16>
    %cst_38 = arith.constant dense<0.000000e+00> : vector<16x256xf32>
    %44 = tpu.matmul %41, %43, %cst_38 {dimension_numbers = #tpu.dot_dimension_numbers<[1], [0], [0], [1], [0, 0, 1, 1], [], []>} : vector<16x128xbf16>, vector<128x256xbf16>, vector<16x256xf32> -> vector<16x256xf32>
    %45 = arith.addf %37, %44 : vector<16x256xf32>
    %c3 = arith.constant 3 : index
    %c0_39 = arith.constant 0 : index
    %c0_40 = arith.constant 0 : index
    %46 = vector.load %arg6[%c3, %c0_39, %c0_40] : memref<4x16x64xbf16, #tpu.memory_space<vmem>>, vector<1x16x64xbf16>
    %47 = vector.shape_cast %46 : vector<1x16x64xbf16> to vector<16x64xbf16>
    %cst_41 = arith.constant dense<0.000000e+00> : vector<16x128xf32>
    %48 = tpu.matmul %47, %10, %cst_41 {dimension_numbers = #tpu.dot_dimension_numbers<[1], [0], [0], [1], [0, 0, 1, 1], [], []>} : vector<16x64xbf16>, vector<64x128xbf16>, vector<16x128xf32> -> vector<16x128xf32>
    %49 = arith.truncf %48 : vector<16x128xf32> to vector<16x128xbf16>
    %c3_42 = arith.constant 3 : index
    %c0_43 = arith.constant 0 : index
    %c0_44 = arith.constant 0 : index
    %50 = vector.load %arg7[%c3_42, %c0_43, %c0_44] : memref<4x128x256xbf16, #tpu.memory_space<vmem>>, vector<1x128x256xbf16>
    %51 = vector.shape_cast %50 : vector<1x128x256xbf16> to vector<128x256xbf16>
    %cst_45 = arith.constant dense<0.000000e+00> : vector<16x256xf32>
    %52 = tpu.matmul %49, %51, %cst_45 {dimension_numbers = #tpu.dot_dimension_numbers<[1], [0], [0], [1], [0, 0, 1, 1], [], []>} : vector<16x128xbf16>, vector<128x256xbf16>, vector<16x256xf32> -> vector<16x256xf32>
    %53 = arith.addf %45, %52 : vector<16x256xf32>
    %cst_46 = arith.constant 0.000000e+00 : f32
    %54 = vector.broadcast %cst_46 : f32 to vector<16x256xf32>
    %55 = arith.maximumf %53, %54 : vector<16x256xf32>
    %cst_47 = arith.constant 0.000000e+00 : bf16
    %56 = vector.broadcast %cst_47 : bf16 to vector<1x10x384xbf16>
    %c0_48 = arith.constant 0 : index
    %c0_49 = arith.constant 0 : index
    %c0_50 = arith.constant 0 : index
    %57 = vector.load %arg19[%c0_48, %c0_49, %c0_50] : memref<10x10x384xbf16, #tpu.memory_space<vmem>>, vector<1x10x384xbf16>
    tpu.vector_store %arg19[%c0_48, %c0_49, %c0_50], %56 {strides = array<i32>} : memref<10x10x384xbf16, #tpu.memory_space<vmem>>, vector<1x10x384xbf16>,
    %cst_51 = arith.constant 0.000000e+00 : bf16
    %58 = vector.broadcast %cst_51 : bf16 to vector<1x10x384xbf16>
    %c9 = arith.constant 9 : index
    %c0_52 = arith.constant 0 : index
    %c0_53 = arith.constant 0 : index
    %59 = vector.load %arg19[%c9, %c0_52, %c0_53] : memref<10x10x384xbf16, #tpu.memory_space<vmem>>, vector<1x10x384xbf16>
    tpu.vector_store %arg19[%c9, %c0_52, %c0_53], %58 {strides = array<i32>} : memref<10x10x384xbf16, #tpu.memory_space<vmem>>, vector<1x10x384xbf16>,
    %cst_54 = arith.constant 0.000000e+00 : bf16
    %60 = vector.broadcast %cst_54 : bf16 to vector<8x1x384xbf16>
    %c1_55 = arith.constant 1 : index
    %c0_56 = arith.constant 0 : index
    %c0_57 = arith.constant 0 : index
    %61 = vector.load %arg19[%c1_55, %c0_56, %c0_57] : memref<10x10x384xbf16, #tpu.memory_space<vmem>>, vector<8x1x384xbf16>
    tpu.vector_store %arg19[%c1_55, %c0_56, %c0_57], %60 {strides = array<i32>} : memref<10x10x384xbf16, #tpu.memory_space<vmem>>, vector<8x1x384xbf16>,
    %cst_58 = arith.constant 0.000000e+00 : bf16
    %62 = vector.broadcast %cst_58 : bf16 to vector<8x1x384xbf16>
    %c1_59 = arith.constant 1 : index
    %c9_60 = arith.constant 9 : index
    %c0_61 = arith.constant 0 : index
    %63 = vector.load %arg19[%c1_59, %c9_60, %c0_61] : memref<10x10x384xbf16, #tpu.memory_space<vmem>>, vector<8x1x384xbf16>
    tpu.vector_store %arg19[%c1_59, %c9_60, %c0_61], %62 {strides = array<i32>} : memref<10x10x384xbf16, #tpu.memory_space<vmem>>, vector<8x1x384xbf16>,
    %cst_62 = arith.constant 0.000000e+00 : bf16
    %64 = vector.broadcast %cst_62 : bf16 to vector<1x10x128xbf16>
    %c0_63 = arith.constant 0 : index
    %c0_64 = arith.constant 0 : index
    %c0_65 = arith.constant 0 : index
    %65 = vector.load %arg20[%c0_63, %c0_64, %c0_65] : memref<10x10x128xbf16, #tpu.memory_space<vmem>>, vector<1x10x128xbf16>
    tpu.vector_store %arg20[%c0_63, %c0_64, %c0_65], %64 {strides = array<i32>} : memref<10x10x128xbf16, #tpu.memory_space<vmem>>, vector<1x10x128xbf16>,
    %cst_66 = arith.constant 0.000000e+00 : bf16
    %66 = vector.broadcast %cst_66 : bf16 to vector<1x10x128xbf16>
    %c9_67 = arith.constant 9 : index
    %c0_68 = arith.constant 0 : index
    %c0_69 = arith.constant 0 : index
    %67 = vector.load %arg20[%c9_67, %c0_68, %c0_69] : memref<10x10x128xbf16, #tpu.memory_space<vmem>>, vector<1x10x128xbf16>
    tpu.vector_store %arg20[%c9_67, %c0_68, %c0_69], %66 {strides = array<i32>} : memref<10x10x128xbf16, #tpu.memory_space<vmem>>, vector<1x10x128xbf16>,
    %cst_70 = arith.constant 0.000000e+00 : bf16
    %68 = vector.broadcast %cst_70 : bf16 to vector<8x1x128xbf16>
    %c1_71 = arith.constant 1 : index
    %c0_72 = arith.constant 0 : index
    %c0_73 = arith.constant 0 : index
    %69 = vector.load %arg20[%c1_71, %c0_72, %c0_73] : memref<10x10x128xbf16, #tpu.memory_space<vmem>>, vector<8x1x128xbf16>
    tpu.vector_store %arg20[%c1_71, %c0_72, %c0_73], %68 {strides = array<i32>} : memref<10x10x128xbf16, #tpu.memory_space<vmem>>, vector<8x1x128xbf16>,
    %cst_74 = arith.constant 0.000000e+00 : bf16
    %70 = vector.broadcast %cst_74 : bf16 to vector<8x1x128xbf16>
    %c1_75 = arith.constant 1 : index
    %c9_76 = arith.constant 9 : index
    %c0_77 = arith.constant 0 : index
    %71 = vector.load %arg20[%c1_75, %c9_76, %c0_77] : memref<10x10x128xbf16, #tpu.memory_space<vmem>>, vector<8x1x128xbf16>
    tpu.vector_store %arg20[%c1_75, %c9_76, %c0_77], %70 {strides = array<i32>} : memref<10x10x128xbf16, #tpu.memory_space<vmem>>, vector<8x1x128xbf16>,
    %72 = vector.shape_cast %17 : vector<64x128xf32> to vector<8x8x128xf32>
    %73 = arith.truncf %72 : vector<8x8x128xf32> to vector<8x8x128xbf16>
    %c1_78 = arith.constant 1 : index
    %c1_79 = arith.constant 1 : index
    %c0_80 = arith.constant 0 : index
    %74 = vector.load %arg19[%c1_78, %c1_79, %c0_80] : memref<10x10x384xbf16, #tpu.memory_space<vmem>>, vector<8x8x128xbf16>
    tpu.vector_store %arg19[%c1_78, %c1_79, %c0_80], %73 {strides = array<i32>} : memref<10x10x384xbf16, #tpu.memory_space<vmem>>, vector<8x8x128xbf16>,
    %c0_81 = arith.constant 0 : index
    %c0_82 = arith.constant 0 : index
    %75 = vector.load %arg9[%c0_81, %c0_82] : memref<64x16xbf16, #tpu.memory_space<vmem>>, vector<64x16xbf16>
    %76 = arith.truncf %55 : vector<16x256xf32> to vector<16x256xbf16>
    %cst_83 = arith.constant dense<0.000000e+00> : vector<64x256xf32>
    %77 = tpu.matmul %75, %76, %cst_83 {dimension_numbers = #tpu.dot_dimension_numbers<[1], [0], [0], [1], [0, 0, 1, 1], [], []>} : vector<64x16xbf16>, vector<16x256xbf16>, vector<64x256xf32> -> vector<64x256xf32>
    %78 = vector.shape_cast %77 : vector<64x256xf32> to vector<8x8x256xf32>
    %79 = arith.truncf %78 : vector<8x8x256xf32> to vector<8x8x256xbf16>
    %c1_84 = arith.constant 1 : index
    %c1_85 = arith.constant 1 : index
    %c128 = arith.constant 128 : index
    %80 = vector.load %arg19[%c1_84, %c1_85, %c128] : memref<10x10x384xbf16, #tpu.memory_space<vmem>>, vector<8x8x256xbf16>
    tpu.vector_store %arg19[%c1_84, %c1_85, %c128], %79 {strides = array<i32>} : memref<10x10x384xbf16, #tpu.memory_space<vmem>>, vector<8x8x256xbf16>,
    %c0_86 = arith.constant 0 : index
    %c0_87 = arith.constant 0 : index
    %c0_88 = arith.constant 0 : index
    %81 = vector.load %arg19[%c0_86, %c0_87, %c0_88] : memref<10x10x384xbf16, #tpu.memory_space<vmem>>, vector<8x8x384xbf16>
    %82 = vector.shape_cast %81 : vector<8x8x384xbf16> to vector<64x384xbf16>
    %c0_89 = arith.constant 0 : index
    %c0_90 = arith.constant 0 : index
    %83 = vector.load %arg21[%c0_89, %c0_90] : memref<64x3456xbf16, #tpu.memory_space<vmem>>, vector<64x384xbf16>
    tpu.vector_store %arg21[%c0_89, %c0_90], %82 {strides = array<i32>} : memref<64x3456xbf16, #tpu.memory_space<vmem>>, vector<64x384xbf16>,
    %c0_91 = arith.constant 0 : index
    %c1_92 = arith.constant 1 : index
    %c0_93 = arith.constant 0 : index
    %84 = vector.load %arg19[%c0_91, %c1_92, %c0_93] : memref<10x10x384xbf16, #tpu.memory_space<vmem>>, vector<8x8x384xbf16>
    %85 = vector.shape_cast %84 : vector<8x8x384xbf16> to vector<64x384xbf16>
    %c0_94 = arith.constant 0 : index
    %c384 = arith.constant 384 : index
    %86 = vector.load %arg21[%c0_94, %c384] : memref<64x3456xbf16, #tpu.memory_space<vmem>>, vector<64x384xbf16>
    tpu.vector_store %arg21[%c0_94, %c384], %85 {strides = array<i32>} : memref<64x3456xbf16, #tpu.memory_space<vmem>>, vector<64x384xbf16>,
    %c0_95 = arith.constant 0 : index
    %c2_96 = arith.constant 2 : index
    %c0_97 = arith.constant 0 : index
    %87 = vector.load %arg19[%c0_95, %c2_96, %c0_97] : memref<10x10x384xbf16, #tpu.memory_space<vmem>>, vector<8x8x384xbf16>
    %88 = vector.shape_cast %87 : vector<8x8x384xbf16> to vector<64x384xbf16>
    %c0_98 = arith.constant 0 : index
    %c768 = arith.constant 768 : index
    %89 = vector.load %arg21[%c0_98, %c768] : memref<64x3456xbf16, #tpu.memory_space<vmem>>, vector<64x384xbf16>
    tpu.vector_store %arg21[%c0_98, %c768], %88 {strides = array<i32>} : memref<64x3456xbf16, #tpu.memory_space<vmem>>, vector<64x384xbf16>,
    %c1_99 = arith.constant 1 : index
    %c0_100 = arith.constant 0 : index
    %c0_101 = arith.constant 0 : index
    %90 = vector.load %arg19[%c1_99, %c0_100, %c0_101] : memref<10x10x384xbf16, #tpu.memory_space<vmem>>, vector<8x8x384xbf16>
    %91 = vector.shape_cast %90 : vector<8x8x384xbf16> to vector<64x384xbf16>
    %c0_102 = arith.constant 0 : index
    %c1152 = arith.constant 1152 : index
    %92 = vector.load %arg21[%c0_102, %c1152] : memref<64x3456xbf16, #tpu.memory_space<vmem>>, vector<64x384xbf16>
    tpu.vector_store %arg21[%c0_102, %c1152], %91 {strides = array<i32>} : memref<64x3456xbf16, #tpu.memory_space<vmem>>, vector<64x384xbf16>,
    %c1_103 = arith.constant 1 : index
    %c1_104 = arith.constant 1 : index
    %c0_105 = arith.constant 0 : index
    %93 = vector.load %arg19[%c1_103, %c1_104, %c0_105] : memref<10x10x384xbf16, #tpu.memory_space<vmem>>, vector<8x8x384xbf16>
    %94 = vector.shape_cast %93 : vector<8x8x384xbf16> to vector<64x384xbf16>
    %c0_106 = arith.constant 0 : index
    %c1536 = arith.constant 1536 : index
    %95 = vector.load %arg21[%c0_106, %c1536] : memref<64x3456xbf16, #tpu.memory_space<vmem>>, vector<64x384xbf16>
    tpu.vector_store %arg21[%c0_106, %c1536], %94 {strides = array<i32>} : memref<64x3456xbf16, #tpu.memory_space<vmem>>, vector<64x384xbf16>,
    %c1_107 = arith.constant 1 : index
    %c2_108 = arith.constant 2 : index
    %c0_109 = arith.constant 0 : index
    %96 = vector.load %arg19[%c1_107, %c2_108, %c0_109] : memref<10x10x384xbf16, #tpu.memory_space<vmem>>, vector<8x8x384xbf16>
    %97 = vector.shape_cast %96 : vector<8x8x384xbf16> to vector<64x384xbf16>
    %c0_110 = arith.constant 0 : index
    %c1920 = arith.constant 1920 : index
    %98 = vector.load %arg21[%c0_110, %c1920] : memref<64x3456xbf16, #tpu.memory_space<vmem>>, vector<64x384xbf16>
    tpu.vector_store %arg21[%c0_110, %c1920], %97 {strides = array<i32>} : memref<64x3456xbf16, #tpu.memory_space<vmem>>, vector<64x384xbf16>,
    %c2_111 = arith.constant 2 : index
    %c0_112 = arith.constant 0 : index
    %c0_113 = arith.constant 0 : index
    %99 = vector.load %arg19[%c2_111, %c0_112, %c0_113] : memref<10x10x384xbf16, #tpu.memory_space<vmem>>, vector<8x8x384xbf16>
    %100 = vector.shape_cast %99 : vector<8x8x384xbf16> to vector<64x384xbf16>
    %c0_114 = arith.constant 0 : index
    %c2304 = arith.constant 2304 : index
    %101 = vector.load %arg21[%c0_114, %c2304] : memref<64x3456xbf16, #tpu.memory_space<vmem>>, vector<64x384xbf16>
    tpu.vector_store %arg21[%c0_114, %c2304], %100 {strides = array<i32>} : memref<64x3456xbf16, #tpu.memory_space<vmem>>, vector<64x384xbf16>,
    %c2_115 = arith.constant 2 : index
    %c1_116 = arith.constant 1 : index
    %c0_117 = arith.constant 0 : index
    %102 = vector.load %arg19[%c2_115, %c1_116, %c0_117] : memref<10x10x384xbf16, #tpu.memory_space<vmem>>, vector<8x8x384xbf16>
    %103 = vector.shape_cast %102 : vector<8x8x384xbf16> to vector<64x384xbf16>
    %c0_118 = arith.constant 0 : index
    %c2688 = arith.constant 2688 : index
    %104 = vector.load %arg21[%c0_118, %c2688] : memref<64x3456xbf16, #tpu.memory_space<vmem>>, vector<64x384xbf16>
    tpu.vector_store %arg21[%c0_118, %c2688], %103 {strides = array<i32>} : memref<64x3456xbf16, #tpu.memory_space<vmem>>, vector<64x384xbf16>,
    %c2_119 = arith.constant 2 : index
    %c2_120 = arith.constant 2 : index
    %c0_121 = arith.constant 0 : index
    %105 = vector.load %arg19[%c2_119, %c2_120, %c0_121] : memref<10x10x384xbf16, #tpu.memory_space<vmem>>, vector<8x8x384xbf16>
    %106 = vector.shape_cast %105 : vector<8x8x384xbf16> to vector<64x384xbf16>
    %c0_122 = arith.constant 0 : index
    %c3072 = arith.constant 3072 : index
    %107 = vector.load %arg21[%c0_122, %c3072] : memref<64x3456xbf16, #tpu.memory_space<vmem>>, vector<64x384xbf16>
    tpu.vector_store %arg21[%c0_122, %c3072], %106 {strides = array<i32>} : memref<64x3456xbf16, #tpu.memory_space<vmem>>, vector<64x384xbf16>,
    %c0_123 = arith.constant 0 : index
    %c0_124 = arith.constant 0 : index
    %108 = vector.load %arg21[%c0_123, %c0_124] : memref<64x3456xbf16, #tpu.memory_space<vmem>>, vector<64x3456xbf16>
    %c0_125 = arith.constant 0 : index
    %c0_126 = arith.constant 0 : index
    %109 = vector.load %arg10[%c0_125, %c0_126] : memref<3456x128xbf16, #tpu.memory_space<vmem>>, vector<3456x128xbf16>
    %cst_127 = arith.constant dense<0.000000e+00> : vector<64x128xf32>
    %110 = tpu.matmul %108, %109, %cst_127 {dimension_numbers = #tpu.dot_dimension_numbers<[1], [0], [0], [1], [0, 0, 1, 1], [], []>} : vector<64x3456xbf16>, vector<3456x128xbf16>, vector<64x128xf32> -> vector<64x128xf32>
    %111 = vector.shape_cast %110 : vector<64x128xf32> to vector<1x64x128xf32>
    %cst_128 = arith.constant dense<0.000000e+00> : vector<1xf32>
    %112 = vector.multi_reduction <add>, %111, %cst_128 [1, 2] : vector<1x64x128xf32> to vector<1xf32>
    %113 = vector.shape_cast %112 : vector<1xf32> to vector<1x1x1xf32>
    %114 = vector.extract %113[0, 0, 0] : f32 from vector<1x1x1xf32>
    %cst_129 = arith.constant 8.192000e+03 : f32
    %115 = arith.divf %114, %cst_129 : f32
    %116 = vector.broadcast %115 : f32 to vector<64x128xf32>
    %117 = arith.subf %110, %116 : vector<64x128xf32>
    %118 = arith.mulf %117, %117 : vector<64x128xf32>
    %119 = vector.shape_cast %118 : vector<64x128xf32> to vector<1x64x128xf32>
    %cst_130 = arith.constant dense<0.000000e+00> : vector<1xf32>
    %120 = vector.multi_reduction <add>, %119, %cst_130 [1, 2] : vector<1x64x128xf32> to vector<1xf32>
    %121 = vector.shape_cast %120 : vector<1xf32> to vector<1x1x1xf32>
    %122 = vector.extract %121[0, 0, 0] : f32 from vector<1x1x1xf32>
    %cst_131 = arith.constant 8.192000e+03 : f32
    %123 = arith.divf %122, %cst_131 : f32
    %124 = vector.broadcast %115 : f32 to vector<64x128xf32>
    %125 = arith.subf %110, %124 : vector<64x128xf32>
    %cst_132 = arith.constant 9.99999974E-6 : f32
    %126 = arith.addf %123, %cst_132 : f32
    %127 = math.rsqrt %126 : f32
    %128 = vector.broadcast %127 : f32 to vector<64x128xf32>
    %129 = arith.mulf %125, %128 : vector<64x128xf32>
    %c0_133 = arith.constant 0 : index
    %c0_134 = arith.constant 0 : index
    %130 = vector.load %arg11[%c0_133, %c0_134] : memref<1x128xf32, #tpu.memory_space<vmem>>, vector<1x128xf32>
    %131 = vector.broadcast %130 : vector<1x128xf32> to vector<64x128xf32>
    %132 = arith.mulf %129, %131 : vector<64x128xf32>
    %c0_135 = arith.constant 0 : index
    %c0_136 = arith.constant 0 : index
    %133 = vector.load %arg12[%c0_135, %c0_136] : memref<1x128xf32, #tpu.memory_space<vmem>>, vector<1x128xf32>
    %134 = vector.broadcast %133 : vector<1x128xf32> to vector<64x128xf32>
    %135 = arith.addf %132, %134 : vector<64x128xf32>
    %cst_137 = arith.constant 0.000000e+00 : f32
    %136 = vector.broadcast %cst_137 : f32 to vector<64x128xf32>
    %137 = arith.maximumf %135, %136 : vector<64x128xf32>
    %138 = vector.shape_cast %137 : vector<64x128xf32> to vector<8x8x128xf32>
    %139 = arith.truncf %138 : vector<8x8x128xf32> to vector<8x8x128xbf16>
    %c1_138 = arith.constant 1 : index
    %c1_139 = arith.constant 1 : index
    %c0_140 = arith.constant 0 : index
    %140 = vector.load %arg20[%c1_138, %c1_139, %c0_140] : memref<10x10x128xbf16, #tpu.memory_space<vmem>>, vector<8x8x128xbf16>
    tpu.vector_store %arg20[%c1_138, %c1_139, %c0_140], %139 {strides = array<i32>} : memref<10x10x128xbf16, #tpu.memory_space<vmem>>, vector<8x8x128xbf16>,
    %c0_141 = arith.constant 0 : index
    %c0_142 = arith.constant 0 : index
    %c0_143 = arith.constant 0 : index
    %141 = vector.load %arg20[%c0_141, %c0_142, %c0_143] : memref<10x10x128xbf16, #tpu.memory_space<vmem>>, vector<8x8x128xbf16>
    %142 = vector.shape_cast %141 : vector<8x8x128xbf16> to vector<64x128xbf16>
    %c0_144 = arith.constant 0 : index
    %c0_145 = arith.constant 0 : index
    %143 = vector.load %arg22[%c0_144, %c0_145] : memref<64x1152xbf16, #tpu.memory_space<vmem>>, vector<64x128xbf16>
    tpu.vector_store %arg22[%c0_144, %c0_145], %142 {strides = array<i32>} : memref<64x1152xbf16, #tpu.memory_space<vmem>>, vector<64x128xbf16>,
    %c0_146 = arith.constant 0 : index
    %c1_147 = arith.constant 1 : index
    %c0_148 = arith.constant 0 : index
    %144 = vector.load %arg20[%c0_146, %c1_147, %c0_148] : memref<10x10x128xbf16, #tpu.memory_space<vmem>>, vector<8x8x128xbf16>
    %145 = vector.shape_cast %144 : vector<8x8x128xbf16> to vector<64x128xbf16>
    %c0_149 = arith.constant 0 : index
    %c128_150 = arith.constant 128 : index
    %146 = vector.load %arg22[%c0_149, %c128_150] : memref<64x1152xbf16, #tpu.memory_space<vmem>>, vector<64x128xbf16>
    tpu.vector_store %arg22[%c0_149, %c128_150], %145 {strides = array<i32>} : memref<64x1152xbf16, #tpu.memory_space<vmem>>, vector<64x128xbf16>,
    %c0_151 = arith.constant 0 : index
    %c2_152 = arith.constant 2 : index
    %c0_153 = arith.constant 0 : index
    %147 = vector.load %arg20[%c0_151, %c2_152, %c0_153] : memref<10x10x128xbf16, #tpu.memory_space<vmem>>, vector<8x8x128xbf16>
    %148 = vector.shape_cast %147 : vector<8x8x128xbf16> to vector<64x128xbf16>
    %c0_154 = arith.constant 0 : index
    %c256 = arith.constant 256 : index
    %149 = vector.load %arg22[%c0_154, %c256] : memref<64x1152xbf16, #tpu.memory_space<vmem>>, vector<64x128xbf16>
    tpu.vector_store %arg22[%c0_154, %c256], %148 {strides = array<i32>} : memref<64x1152xbf16, #tpu.memory_space<vmem>>, vector<64x128xbf16>,
    %c1_155 = arith.constant 1 : index
    %c0_156 = arith.constant 0 : index
    %c0_157 = arith.constant 0 : index
    %150 = vector.load %arg20[%c1_155, %c0_156, %c0_157] : memref<10x10x128xbf16, #tpu.memory_space<vmem>>, vector<8x8x128xbf16>
    %151 = vector.shape_cast %150 : vector<8x8x128xbf16> to vector<64x128xbf16>
    %c0_158 = arith.constant 0 : index
    %c384_159 = arith.constant 384 : index
    %152 = vector.load %arg22[%c0_158, %c384_159] : memref<64x1152xbf16, #tpu.memory_space<vmem>>, vector<64x128xbf16>
    tpu.vector_store %arg22[%c0_158, %c384_159], %151 {strides = array<i32>} : memref<64x1152xbf16, #tpu.memory_space<vmem>>, vector<64x128xbf16>,
    %c1_160 = arith.constant 1 : index
    %c1_161 = arith.constant 1 : index
    %c0_162 = arith.constant 0 : index
    %153 = vector.load %arg20[%c1_160, %c1_161, %c0_162] : memref<10x10x128xbf16, #tpu.memory_space<vmem>>, vector<8x8x128xbf16>
    %154 = vector.shape_cast %153 : vector<8x8x128xbf16> to vector<64x128xbf16>
    %c0_163 = arith.constant 0 : index
    %c512 = arith.constant 512 : index
    %155 = vector.load %arg22[%c0_163, %c512] : memref<64x1152xbf16, #tpu.memory_space<vmem>>, vector<64x128xbf16>
    tpu.vector_store %arg22[%c0_163, %c512], %154 {strides = array<i32>} : memref<64x1152xbf16, #tpu.memory_space<vmem>>, vector<64x128xbf16>,
    %c1_164 = arith.constant 1 : index
    %c2_165 = arith.constant 2 : index
    %c0_166 = arith.constant 0 : index
    %156 = vector.load %arg20[%c1_164, %c2_165, %c0_166] : memref<10x10x128xbf16, #tpu.memory_space<vmem>>, vector<8x8x128xbf16>
    %157 = vector.shape_cast %156 : vector<8x8x128xbf16> to vector<64x128xbf16>
    %c0_167 = arith.constant 0 : index
    %c640 = arith.constant 640 : index
    %158 = vector.load %arg22[%c0_167, %c640] : memref<64x1152xbf16, #tpu.memory_space<vmem>>, vector<64x128xbf16>
    tpu.vector_store %arg22[%c0_167, %c640], %157 {strides = array<i32>} : memref<64x1152xbf16, #tpu.memory_space<vmem>>, vector<64x128xbf16>,
    %c2_168 = arith.constant 2 : index
    %c0_169 = arith.constant 0 : index
    %c0_170 = arith.constant 0 : index
    %159 = vector.load %arg20[%c2_168, %c0_169, %c0_170] : memref<10x10x128xbf16, #tpu.memory_space<vmem>>, vector<8x8x128xbf16>
    %160 = vector.shape_cast %159 : vector<8x8x128xbf16> to vector<64x128xbf16>
    %c0_171 = arith.constant 0 : index
    %c768_172 = arith.constant 768 : index
    %161 = vector.load %arg22[%c0_171, %c768_172] : memref<64x1152xbf16, #tpu.memory_space<vmem>>, vector<64x128xbf16>
    tpu.vector_store %arg22[%c0_171, %c768_172], %160 {strides = array<i32>} : memref<64x1152xbf16, #tpu.memory_space<vmem>>, vector<64x128xbf16>,
    %c2_173 = arith.constant 2 : index
    %c1_174 = arith.constant 1 : index
    %c0_175 = arith.constant 0 : index
    %162 = vector.load %arg20[%c2_173, %c1_174, %c0_175] : memref<10x10x128xbf16, #tpu.memory_space<vmem>>, vector<8x8x128xbf16>
    %163 = vector.shape_cast %162 : vector<8x8x128xbf16> to vector<64x128xbf16>
    %c0_176 = arith.constant 0 : index
    %c896 = arith.constant 896 : index
    %164 = vector.load %arg22[%c0_176, %c896] : memref<64x1152xbf16, #tpu.memory_space<vmem>>, vector<64x128xbf16>
    tpu.vector_store %arg22[%c0_176, %c896], %163 {strides = array<i32>} : memref<64x1152xbf16, #tpu.memory_space<vmem>>, vector<64x128xbf16>,
    %c2_177 = arith.constant 2 : index
    %c2_178 = arith.constant 2 : index
    %c0_179 = arith.constant 0 : index
    %165 = vector.load %arg20[%c2_177, %c2_178, %c0_179] : memref<10x10x128xbf16, #tpu.memory_space<vmem>>, vector<8x8x128xbf16>
    %166 = vector.shape_cast %165 : vector<8x8x128xbf16> to vector<64x128xbf16>
    %c0_180 = arith.constant 0 : index
    %c1024 = arith.constant 1024 : index
    %167 = vector.load %arg22[%c0_180, %c1024] : memref<64x1152xbf16, #tpu.memory_space<vmem>>, vector<64x128xbf16>
    tpu.vector_store %arg22[%c0_180, %c1024], %166 {strides = array<i32>} : memref<64x1152xbf16, #tpu.memory_space<vmem>>, vector<64x128xbf16>,
    %c0_181 = arith.constant 0 : index
    %c0_182 = arith.constant 0 : index
    %168 = vector.load %arg22[%c0_181, %c0_182] : memref<64x1152xbf16, #tpu.memory_space<vmem>>, vector<64x1152xbf16>
    %c0_183 = arith.constant 0 : index
    %c0_184 = arith.constant 0 : index
    %169 = vector.load %arg13[%c0_183, %c0_184] : memref<1152x128xbf16, #tpu.memory_space<vmem>>, vector<1152x128xbf16>
    %cst_185 = arith.constant dense<0.000000e+00> : vector<64x128xf32>
    %170 = tpu.matmul %168, %169, %cst_185 {dimension_numbers = #tpu.dot_dimension_numbers<[1], [0], [0], [1], [0, 0, 1, 1], [], []>} : vector<64x1152xbf16>, vector<1152x128xbf16>, vector<64x128xf32> -> vector<64x128xf32>
    %171 = vector.shape_cast %170 : vector<64x128xf32> to vector<1x64x128xf32>
    %cst_186 = arith.constant dense<0.000000e+00> : vector<1xf32>
    %172 = vector.multi_reduction <add>, %171, %cst_186 [1, 2] : vector<1x64x128xf32> to vector<1xf32>
    %173 = vector.shape_cast %172 : vector<1xf32> to vector<1x1x1xf32>
    %174 = vector.extract %173[0, 0, 0] : f32 from vector<1x1x1xf32>
    %cst_187 = arith.constant 8.192000e+03 : f32
    %175 = arith.divf %174, %cst_187 : f32
    %176 = vector.broadcast %175 : f32 to vector<64x128xf32>
    %177 = arith.subf %170, %176 : vector<64x128xf32>
    %178 = arith.mulf %177, %177 : vector<64x128xf32>
    %179 = vector.shape_cast %178 : vector<64x128xf32> to vector<1x64x128xf32>
    %cst_188 = arith.constant dense<0.000000e+00> : vector<1xf32>
    %180 = vector.multi_reduction <add>, %179, %cst_188 [1, 2] : vector<1x64x128xf32> to vector<1xf32>
    %181 = vector.shape_cast %180 : vector<1xf32> to vector<1x1x1xf32>
    %182 = vector.extract %181[0, 0, 0] : f32 from vector<1x1x1xf32>
    %cst_189 = arith.constant 8.192000e+03 : f32
    %183 = arith.divf %182, %cst_189 : f32
    %184 = vector.broadcast %175 : f32 to vector<64x128xf32>
    %185 = arith.subf %170, %184 : vector<64x128xf32>
    %cst_190 = arith.constant 9.99999974E-6 : f32
    %186 = arith.addf %183, %cst_190 : f32
    %187 = math.rsqrt %186 : f32
    %188 = vector.broadcast %187 : f32 to vector<64x128xf32>
    %189 = arith.mulf %185, %188 : vector<64x128xf32>
    %c0_191 = arith.constant 0 : index
    %c0_192 = arith.constant 0 : index
    %190 = vector.load %arg14[%c0_191, %c0_192] : memref<1x128xf32, #tpu.memory_space<vmem>>, vector<1x128xf32>
    %191 = vector.broadcast %190 : vector<1x128xf32> to vector<64x128xf32>
    %192 = arith.mulf %189, %191 : vector<64x128xf32>
    %c0_193 = arith.constant 0 : index
    %c0_194 = arith.constant 0 : index
    %193 = vector.load %arg15[%c0_193, %c0_194] : memref<1x128xf32, #tpu.memory_space<vmem>>, vector<1x128xf32>
    %194 = vector.broadcast %193 : vector<1x128xf32> to vector<64x128xf32>
    %195 = arith.addf %192, %194 : vector<64x128xf32>
    %cst_195 = arith.constant 0.000000e+00 : f32
    %196 = vector.broadcast %cst_195 : f32 to vector<64x128xf32>
    %197 = arith.maximumf %195, %196 : vector<64x128xf32>
    %198 = arith.truncf %197 : vector<64x128xf32> to vector<64x128xbf16>
    %c0_196 = arith.constant 0 : index
    %c0_197 = arith.constant 0 : index
    %199 = vector.load %arg16[%c0_196, %c0_197] : memref<128x128xbf16, #tpu.memory_space<vmem>>, vector<128x128xbf16>
    %cst_198 = arith.constant dense<0.000000e+00> : vector<64x128xf32>
    %200 = tpu.matmul %198, %199, %cst_198 {dimension_numbers = #tpu.dot_dimension_numbers<[1], [0], [0], [1], [0, 0, 1, 1], [], []>} : vector<64x128xbf16>, vector<128x128xbf16>, vector<64x128xf32> -> vector<64x128xf32>
    %c0_199 = arith.constant 0 : index
    %c0_200 = arith.constant 0 : index
    %201 = vector.load %arg17[%c0_199, %c0_200] : memref<1x128xf32, #tpu.memory_space<vmem>>, vector<1x128xf32>
    %202 = vector.broadcast %201 : vector<1x128xf32> to vector<64x128xf32>
    %203 = arith.addf %200, %202 : vector<64x128xf32>
    %c0_201 = arith.constant 0 : index
    %c0_202 = arith.constant 0 : index
    %c0_203 = arith.constant 0 : index
    %204 = vector.load %arg18[%c0_201, %c0_202, %c0_203] : memref<1x64x128xf32, #tpu.memory_space<vmem>>, vector<1x64x128xf32>
    %205 = vector.shape_cast %204 : vector<1x64x128xf32> to vector<64x128xf32>
    %206 = vector.shape_cast %203 : vector<64x128xf32> to vector<1x64x128xf32>
    tpu.vector_store %arg18[%c0_201, %c0_202, %c0_203], %206 {strides = array<i32>} : memref<1x64x128xf32, #tpu.memory_space<vmem>>, vector<1x64x128xf32>,
    return
  }
  func.func @transform_0(%arg0: i32) -> (i32, i32, i32, i32) {
    %c0_i32 = arith.constant 0 : i32
    %c0_i32_0 = arith.constant 0 : i32
    %c0_i32_1 = arith.constant 0 : i32
    %c0_i32_2 = arith.constant 0 : i32
    return %arg0, %c0_i32, %c0_i32_0, %c0_i32_1 : i32, i32, i32, i32
  }
  func.func @transform_1(%arg0: i32) -> (i32, i32) {
    %c0_i32 = arith.constant 0 : i32
    %c0_i32_0 = arith.constant 0 : i32
    %c0_i32_1 = arith.constant 0 : i32
    return %c0_i32, %c0_i32_0 : i32, i32
  }
  func.func @transform_2(%arg0: i32) -> (i32, i32) {
    %c0_i32 = arith.constant 0 : i32
    %c0_i32_0 = arith.constant 0 : i32
    %c0_i32_1 = arith.constant 0 : i32
    return %c0_i32, %c0_i32_0 : i32, i32
  }
  func.func @transform_3(%arg0: i32) -> (i32, i32) {
    %c0_i32 = arith.constant 0 : i32
    %c0_i32_0 = arith.constant 0 : i32
    %c0_i32_1 = arith.constant 0 : i32
    return %c0_i32, %c0_i32_0 : i32, i32
  }
  func.func @transform_4(%arg0: i32) -> (i32, i32) {
    %c0_i32 = arith.constant 0 : i32
    %c0_i32_0 = arith.constant 0 : i32
    %c0_i32_1 = arith.constant 0 : i32
    return %c0_i32, %c0_i32_0 : i32, i32
  }
  func.func @transform_5(%arg0: i32) -> (i32, i32, i32) {
    %c0_i32 = arith.constant 0 : i32
    %c0_i32_0 = arith.constant 0 : i32
    %c0_i32_1 = arith.constant 0 : i32
    %c0_i32_2 = arith.constant 0 : i32
    return %c0_i32, %c0_i32_0, %c0_i32_1 : i32, i32, i32
  }
  func.func @transform_6(%arg0: i32) -> (i32, i32, i32) {
    %c0_i32 = arith.constant 0 : i32
    %c0_i32_0 = arith.constant 0 : i32
    %c0_i32_1 = arith.constant 0 : i32
    %c0_i32_2 = arith.constant 0 : i32
    return %c0_i32, %c0_i32_0, %c0_i32_1 : i32, i32, i32
  }
  func.func @transform_7(%arg0: i32) -> (i32, i32) {
    %c0_i32 = arith.constant 0 : i32
    %c0_i32_0 = arith.constant 0 : i32
    %c0_i32_1 = arith.constant 0 : i32
    return %c0_i32, %c0_i32_0 : i32, i32
  }
  func.func @transform_8(%arg0: i32) -> (i32, i32) {
    %c0_i32 = arith.constant 0 : i32
    %c0_i32_0 = arith.constant 0 : i32
    %c0_i32_1 = arith.constant 0 : i32
    return %c0_i32, %c0_i32_0 : i32, i32
  }
  func.func @transform_9(%arg0: i32) -> (i32, i32) {
    %c0_i32 = arith.constant 0 : i32
    %c0_i32_0 = arith.constant 0 : i32
    %c0_i32_1 = arith.constant 0 : i32
    return %c0_i32, %c0_i32_0 : i32, i32
  }
  func.func @transform_10(%arg0: i32) -> (i32, i32) {
    %c0_i32 = arith.constant 0 : i32
    %c0_i32_0 = arith.constant 0 : i32
    %c0_i32_1 = arith.constant 0 : i32
    return %c0_i32, %c0_i32_0 : i32, i32
  }
  func.func @transform_11(%arg0: i32) -> (i32, i32) {
    %c0_i32 = arith.constant 0 : i32
    %c0_i32_0 = arith.constant 0 : i32
    %c0_i32_1 = arith.constant 0 : i32
    return %c0_i32, %c0_i32_0 : i32, i32
  }
  func.func @transform_12(%arg0: i32) -> (i32, i32) {
    %c0_i32 = arith.constant 0 : i32
    %c0_i32_0 = arith.constant 0 : i32
    %c0_i32_1 = arith.constant 0 : i32
    return %c0_i32, %c0_i32_0 : i32, i32
  }
  func.func @transform_13(%arg0: i32) -> (i32, i32) {
    %c0_i32 = arith.constant 0 : i32
    %c0_i32_0 = arith.constant 0 : i32
    %c0_i32_1 = arith.constant 0 : i32
    return %c0_i32, %c0_i32_0 : i32, i32
  }
  func.func @transform_14(%arg0: i32) -> (i32, i32) {
    %c0_i32 = arith.constant 0 : i32
    %c0_i32_0 = arith.constant 0 : i32
    %c0_i32_1 = arith.constant 0 : i32
    return %c0_i32, %c0_i32_0 : i32, i32
  }
  func.func @transform_15(%arg0: i32) -> (i32, i32) {
    %c0_i32 = arith.constant 0 : i32
    %c0_i32_0 = arith.constant 0 : i32
    %c0_i32_1 = arith.constant 0 : i32
    return %c0_i32, %c0_i32_0 : i32, i32
  }
  func.func @transform_16(%arg0: i32) -> (i32, i32) {
    %c0_i32 = arith.constant 0 : i32
    %c0_i32_0 = arith.constant 0 : i32
    %c0_i32_1 = arith.constant 0 : i32
    return %c0_i32, %c0_i32_0 : i32, i32
  }
  func.func @transform_17(%arg0: i32) -> (i32, i32, i32) {
    %c0_i32 = arith.constant 0 : i32
    %c0_i32_0 = arith.constant 0 : i32
    %c0_i32_1 = arith.constant 0 : i32
    return %arg0, %c0_i32, %c0_i32_0 : i32, i32, i32
  }
}

</mosaic_0001>

<llo_original>
// kernel: encoder_eff_forward.1
$region0: #{encoder_eff_forward.1}
  #allocation0 [shape = 'u32[]', space=smem, size = 0x4, offset = 0x4, fixed_abs, tag = 'smem constant byte address 0x4 - core index']
  #allocation1 [shape = 'u32[72,128]{1,0:T(1,128)}', space=vmem, size = 0x9000, scoped, tag = 'internal scratch']
  #allocation2 [shape = 'bf16[10,10,384]{2,1,0:T(8,128)(2,1)}', space=vmem, size = 0x1e000, scoped, tag = 'scratch operand']
  #allocation3 [shape = 'bf16[10,10,128]{2,1,0:T(8,128)(2,1)}', space=vmem, size = 0xa000, scoped, tag = 'scratch operand']
  #allocation4 [shape = 'bf16[64,3456]{1,0:T(8,128)(2,1)}', space=vmem, size = 0x6c000, scoped, tag = 'scratch operand']
  #allocation5 [shape = 'bf16[64,1152]{1,0:T(8,128)(2,1)}', space=vmem, size = 0x24000, scoped, tag = 'scratch operand']
  %s0 = inlined_call_operand.vmem [shape: bf16[2,8,8,192], index: 0, kind: input, shape index: {}]
  %s1 = inlined_call_operand.vmem [shape: bf16[192,128], index: 1, kind: input, shape index: {}]
  %s2 = inlined_call_operand.vmem [shape: f32[1,128], index: 2, kind: input, shape index: {}]
  %s3 = inlined_call_operand.vmem [shape: bf16[128,128], index: 3, kind: input, shape index: {}]
  %s4 = inlined_call_operand.vmem [shape: f32[1,128], index: 4, kind: input, shape index: {}]
  %s5 = inlined_call_operand.vmem [shape: bf16[4,16,64], index: 5, kind: input, shape index: {}]
  %s6 = inlined_call_operand.vmem [shape: bf16[4,128,256], index: 6, kind: input, shape index: {}]
  %s7 = inlined_call_operand.vmem [shape: f32[1,256], index: 7, kind: input, shape index: {}]
  %s8 = inlined_call_operand.vmem [shape: bf16[64,16], index: 8, kind: input, shape index: {}]
  %s9 = inlined_call_operand.vmem [shape: bf16[3456,128], index: 9, kind: input, shape index: {}]
  %s10 = inlined_call_operand.vmem [shape: f32[1,128], index: 10, kind: input, shape index: {}]
  %s11 = inlined_call_operand.vmem [shape: f32[1,128], index: 11, kind: input, shape index: {}]
  %s12 = inlined_call_operand.vmem [shape: bf16[1152,128], index: 12, kind: input, shape index: {}]
  %s13 = inlined_call_operand.vmem [shape: f32[1,128], index: 13, kind: input, shape index: {}]
  %s14 = inlined_call_operand.vmem [shape: f32[1,128], index: 14, kind: input, shape index: {}]
  %s15 = inlined_call_operand.vmem [shape: bf16[128,128], index: 15, kind: input, shape index: {}]
  %s16 = inlined_call_operand.vmem [shape: f32[1,128], index: 16, kind: input, shape index: {}]
  %s17 = inlined_call_operand.vmem [shape: f32[2,64,128], index: 17, kind: output, shape index: {}]
  %s18 = sld [smem:[#allocation0]]
  $region101: #{encoder_eff_forward.1} parent=0
    _
  %s20 = ssub.s32 1, %s18
  %s21 = scalar_select 0, %s20, %s18
  loop: start=0, step=1, limit=4
  $region2: #{encoder_eff_forward.1} parent=0 // loop_pre_header
    _
  $region3: #{encoder_eff_forward.1} parent=0 // loop_header
    %s23 = sphi 0, %s27
    %p24 = scmp.ge.s32.totalorder %s23, 4
    %s33 = sphi 0, %s35
    %s36 = sphi 0, %s33
    %s37 = sphi 0, %s36
    %s53 = sphi 0, %s37
    %s57 = sphi 0, %s57
    %s59 = sphi 0, %s57
    %s60 = sphi 0, %s59
    %s74 = sphi 0, %s60
    %s78 = sphi 0, %s78
    %s80 = sphi 0, %s78
    %s81 = sphi 0, %s80
    %s95 = sphi 0, %s81
    %s99 = sphi 0, %s99
    %s101 = sphi 0, %s99
    %s102 = sphi 0, %s101
    %s116 = sphi 0, %s102
    %s120 = sphi 0, %s120
    %s122 = sphi 0, %s120
    %s123 = sphi 0, %s122
    %s137 = sphi 0, %s123
    %s141 = sphi 0, %s141
    %s143 = sphi 0, %s141
    %s144 = sphi 0, %s143
    %s158 = sphi 0, %s144
    %s162 = sphi 0, %s162
    %s164 = sphi 0, %s162
    %s165 = sphi 0, %s164
    %s179 = sphi 0, %s165
    %s183 = sphi 0, %s183
    %s185 = sphi 0, %s183
    %s186 = sphi 0, %s185
    %s200 = sphi 0, %s186
    %s204 = sphi 0, %s204
    %s206 = sphi 0, %s204
    %s207 = sphi 0, %s206
    %s221 = sphi 0, %s207
    %s225 = sphi 0, %s225
    %s227 = sphi 0, %s225
    %s228 = sphi 0, %s227
    %s242 = sphi 0, %s228
    %s246 = sphi 0, %s246
    %s248 = sphi 0, %s246
    %s249 = sphi 0, %s248
    %s263 = sphi 0, %s249
    %s267 = sphi 0, %s267
    %s269 = sphi 0, %s267
    %s270 = sphi 0, %s269
    %s284 = sphi 0, %s270
    %s288 = sphi 0, %s288
    %s290 = sphi 0, %s288
    %s291 = sphi 0, %s290
    %s305 = sphi 0, %s291
    %s309 = sphi 0, %s309
    %s311 = sphi 0, %s309
    %s312 = sphi 0, %s311
    %s326 = sphi 0, %s312
    %s330 = sphi 0, %s330
    %s332 = sphi 0, %s330
    %s333 = sphi 0, %s332
    %s347 = sphi 0, %s333
    %s351 = sphi 0, %s351
    %s353 = sphi 0, %s351
    %s354 = sphi 0, %s353
    %s368 = sphi 0, %s354
    %s372 = sphi 0, %s372
    %s374 = sphi 0, %s372
    %s375 = sphi 0, %s374
    %s389 = sphi 0, %s375
    %s395 = sphi 0, %s397
    %s398 = sphi 0, %s395
    %s399 = sphi 0, %s398
    %s415 = sphi 0, %s399
  $region4: #{encoder_eff_forward.1} parent=0 // loop_header_branch
    %26 = sbr.rel (%p24) target = $region8
  $region5: #{encoder_eff_forward.1} parent=0 // loop_body
    %s28 = ssub.s32 %s23, 1
    %s29 = ssub.s32 %s23, 2
    %s30 = sadd.s32 %s23, 1
    %s31 = ssub.s32 %s23, %s30
    %p32 = scmp.eq.s32.totalorder %s31, 0
    %s34 = sadd.s32 %s33, 1
    %s35 = scalar_select %p32, %s33, %s34
    %p38 = pneg %p32
    %p39 = scmp.eq.s32.totalorder %s23, 1
    %p40 = por %p38, %p39
    %p41 = scmp.ne.s32.totalorder %s33, %s36
    %p42 = scmp.eq.s32.totalorder %s23, 0
    %p43 = por %p41, %p42
    %p44 = scmp.ne.s32.totalorder %s33, %s36
    %p45 = scmp.eq.s32.totalorder %s28, 1
    %p46 = por %p44, %p45
    %p47 = scmp.ne.s32.totalorder %s36, %s37
    %p48 = scmp.eq.s32.totalorder %s28, 0
    %p49 = por %p47, %p48
    %p50 = scmp.ne.s32.totalorder %s36, %s37
    %p51 = scmp.eq.s32.totalorder %s29, 1
    %p52 = por %p50, %p51
    %p54 = scmp.ne.s32.totalorder %s37, %s53
    %p55 = scmp.eq.s32.totalorder %s29, 0
    %p56 = por %p54, %p55
    %s58 = sadd.s32 %s57, 1
    %p61 = scmp.eq.s32.totalorder %s23, 1
    %p62 = scmp.ne.s32.totalorder %s57, %s59
    %p63 = scmp.eq.s32.totalorder %s23, 0
    %p64 = por %p62, %p63
    %p65 = scmp.ne.s32.totalorder %s57, %s59
    %p66 = scmp.eq.s32.totalorder %s28, 1
    %p67 = por %p65, %p66
    %p68 = scmp.ne.s32.totalorder %s59, %s60
    %p69 = scmp.eq.s32.totalorder %s28, 0
    %p70 = por %p68, %p69
    %p71 = scmp.ne.s32.totalorder %s59, %s60
    %p72 = scmp.eq.s32.totalorder %s29, 1
    %p73 = por %p71, %p72
    %p75 = scmp.ne.s32.totalorder %s60, %s74
    %p76 = scmp.eq.s32.totalorder %s29, 0
    %p77 = por %p75, %p76
    %s79 = sadd.s32 %s78, 1
    %p82 = scmp.eq.s32.totalorder %s23, 1
    %p83 = scmp.ne.s32.totalorder %s78, %s80
    %p84 = scmp.eq.s32.totalorder %s23, 0
    %p85 = por %p83, %p84
    %p86 = scmp.ne.s32.totalorder %s78, %s80
    %p87 = scmp.eq.s32.totalorder %s28, 1
    %p88 = por %p86, %p87
    %p89 = scmp.ne.s32.totalorder %s80, %s81
    %p90 = scmp.eq.s32.totalorder %s28, 0
    %p91 = por %p89, %p90
    %p92 = scmp.ne.s32.totalorder %s80, %s81
    %p93 = scmp.eq.s32.totalorder %s29, 1
    %p94 = por %p92, %p93
    %p96 = scmp.ne.s32.totalorder %s81, %s95
    %p97 = scmp.eq.s32.totalorder %s29, 0
    %p98 = por %p96, %p97
    %s100 = sadd.s32 %s99, 1
    %p103 = scmp.eq.s32.totalorder %s23, 1
    %p104 = scmp.ne.s32.totalorder %s99, %s101
    %p105 = scmp.eq.s32.totalorder %s23, 0
    %p106 = por %p104, %p105
    %p107 = scmp.ne.s32.totalorder %s99, %s101
    %p108 = scmp.eq.s32.totalorder %s28, 1
    %p109 = por %p107, %p108
    %p110 = scmp.ne.s32.totalorder %s101, %s102
    %p111 = scmp.eq.s32.totalorder %s28, 0
    %p112 = por %p110, %p111
    %p113 = scmp.ne.s32.totalorder %s101, %s102
    %p114 = scmp.eq.s32.totalorder %s29, 1
    %p115 = por %p113, %p114
    %p117 = scmp.ne.s32.totalorder %s102, %s116
    %p118 = scmp.eq.s32.totalorder %s29, 0
    %p119 = por %p117, %p118
    %s121 = sadd.s32 %s120, 1
    %p124 = scmp.eq.s32.totalorder %s23, 1
    %p125 = scmp.ne.s32.totalorder %s120, %s122
    %p126 = scmp.eq.s32.totalorder %s23, 0
    %p127 = por %p125, %p126
    %p128 = scmp.ne.s32.totalorder %s120, %s122
    %p129 = scmp.eq.s32.totalorder %s28, 1
    %p130 = por %p128, %p129
    %p131 = scmp.ne.s32.totalorder %s122, %s123
    %p132 = scmp.eq.s32.totalorder %s28, 0
    %p133 = por %p131, %p132
    %p134 = scmp.ne.s32.totalorder %s122, %s123
    %p135 = scmp.eq.s32.totalorder %s29, 1
    %p136 = por %p134, %p135
    %p138 = scmp.ne.s32.totalorder %s123, %s137
    %p139 = scmp.eq.s32.totalorder %s29, 0
    %p140 = por %p138, %p139
    %s142 = sadd.s32 %s141, 1
    %p145 = scmp.eq.s32.totalorder %s23, 1
    %p146 = scmp.ne.s32.totalorder %s141, %s143
    %p147 = scmp.eq.s32.totalorder %s23, 0
    %p148 = por %p146, %p147
    %p149 = scmp.ne.s32.totalorder %s141, %s143
    %p150 = scmp.eq.s32.totalorder %s28, 1
    %p151 = por %p149, %p150
    %p152 = scmp.ne.s32.totalorder %s143, %s144
    %p153 = scmp.eq.s32.totalorder %s28, 0
    %p154 = por %p152, %p153
    %p155 = scmp.ne.s32.totalorder %s143, %s144
    %p156 = scmp.eq.s32.totalorder %s29, 1
    %p157 = por %p155, %p156
    %p159 = scmp.ne.s32.totalorder %s144, %s158
    %p160 = scmp.eq.s32.totalorder %s29, 0
    %p161 = por %p159, %p160
    %s163 = sadd.s32 %s162, 1
    %p166 = scmp.eq.s32.totalorder %s23, 1
    %p167 = scmp.ne.s32.totalorder %s162, %s164
    %p168 = scmp.eq.s32.totalorder %s23, 0
    %p169 = por %p167, %p168
    %p170 = scmp.ne.s32.totalorder %s162, %s164
    %p171 = scmp.eq.s32.totalorder %s28, 1
    %p172 = por %p170, %p171
    %p173 = scmp.ne.s32.totalorder %s164, %s165
    %p174 = scmp.eq.s32.totalorder %s28, 0
    %p175 = por %p173, %p174
    %p176 = scmp.ne.s32.totalorder %s164, %s165
    %p177 = scmp.eq.s32.totalorder %s29, 1
    %p178 = por %p176, %p177
    %p180 = scmp.ne.s32.totalorder %s165, %s179
    %p181 = scmp.eq.s32.totalorder %s29, 0
    %p182 = por %p180, %p181
    %s184 = sadd.s32 %s183, 1
    %p187 = scmp.eq.s32.totalorder %s23, 1
    %p188 = scmp.ne.s32.totalorder %s183, %s185
    %p189 = scmp.eq.s32.totalorder %s23, 0
    %p190 = por %p188, %p189
    %p191 = scmp.ne.s32.totalorder %s183, %s185
    %p192 = scmp.eq.s32.totalorder %s28, 1
    %p193 = por %p191, %p192
    %p194 = scmp.ne.s32.totalorder %s185, %s186
    %p195 = scmp.eq.s32.totalorder %s28, 0
    %p196 = por %p194, %p195
    %p197 = scmp.ne.s32.totalorder %s185, %s186
    %p198 = scmp.eq.s32.totalorder %s29, 1
    %p199 = por %p197, %p198
    %p201 = scmp.ne.s32.totalorder %s186, %s200
    %p202 = scmp.eq.s32.totalorder %s29, 0
    %p203 = por %p201, %p202
    %s205 = sadd.s32 %s204, 1
    %p208 = scmp.eq.s32.totalorder %s23, 1
    %p209 = scmp.ne.s32.totalorder %s204, %s206
    %p210 = scmp.eq.s32.totalorder %s23, 0
    %p211 = por %p209, %p210
    %p212 = scmp.ne.s32.totalorder %s204, %s206
    %p213 = scmp.eq.s32.totalorder %s28, 1
    %p214 = por %p212, %p213
    %p215 = scmp.ne.s32.totalorder %s206, %s207
    %p216 = scmp.eq.s32.totalorder %s28, 0
    %p217 = por %p215, %p216
    %p218 = scmp.ne.s32.totalorder %s206, %s207
    %p219 = scmp.eq.s32.totalorder %s29, 1
    %p220 = por %p218, %p219
    %p222 = scmp.ne.s32.totalorder %s207, %s221
    %p223 = scmp.eq.s32.totalorder %s29, 0
    %p224 = por %p222, %p223
    %s226 = sadd.s32 %s225, 1
    %p229 = scmp.eq.s32.totalorder %s23, 1
    %p230 = scmp.ne.s32.totalorder %s225, %s227
    %p231 = scmp.eq.s32.totalorder %s23, 0
    %p232 = por %p230, %p231
    %p233 = scmp.ne.s32.totalorder %s225, %s227
    %p234 = scmp.eq.s32.totalorder %s28, 1
    %p235 = por %p233, %p234
    %p236 = scmp.ne.s32.totalorder %s227, %s228
    %p237 = scmp.eq.s32.totalorder %s28, 0
    %p238 = por %p236, %p237
    %p239 = scmp.ne.s32.totalorder %s227, %s228
    %p240 = scmp.eq.s32.totalorder %s29, 1
    %p241 = por %p239, %p240
    %p243 = scmp.ne.s32.totalorder %s228, %s242
    %p244 = scmp.eq.s32.totalorder %s29, 0
    %p245 = por %p243, %p244
    %s247 = sadd.s32 %s246, 1
    %p250 = scmp.eq.s32.totalorder %s23, 1
    %p251 = scmp.ne.s32.totalorder %s246, %s248
    %p252 = scmp.eq.s32.totalorder %s23, 0
    %p253 = por %p251, %p252
    %p254 = scmp.ne.s32.totalorder %s246, %s248
    %p255 = scmp.eq.s32.totalorder %s28, 1
    %p256 = por %p254, %p255
    %p257 = scmp.ne.s32.totalorder %s248, %s249
    %p258 = scmp.eq.s32.totalorder %s28, 0
    %p259 = por %p257, %p258
    %p260 = scmp.ne.s32.totalorder %s248, %s249
    %p261 = scmp.eq.s32.totalorder %s29, 1
    %p262 = por %p260, %p261
    %p264 = scmp.ne.s32.totalorder %s249, %s263
    %p265 = scmp.eq.s32.totalorder %s29, 0
    %p266 = por %p264, %p265
    %s268 = sadd.s32 %s267, 1
    %p271 = scmp.eq.s32.totalorder %s23, 1
    %p272 = scmp.ne.s32.totalorder %s267, %s269
    %p273 = scmp.eq.s32.totalorder %s23, 0
    %p274 = por %p272, %p273
    %p275 = scmp.ne.s32.totalorder %s267, %s269
    %p276 = scmp.eq.s32.totalorder %s28, 1
    %p277 = por %p275, %p276
    %p278 = scmp.ne.s32.totalorder %s269, %s270
    %p279 = scmp.eq.s32.totalorder %s28, 0
    %p280 = por %p278, %p279
    %p281 = scmp.ne.s32.totalorder %s269, %s270
    %p282 = scmp.eq.s32.totalorder %s29, 1
    %p283 = por %p281, %p282
    %p285 = scmp.ne.s32.totalorder %s270, %s284
    %p286 = scmp.eq.s32.totalorder %s29, 0
    %p287 = por %p285, %p286
    %s289 = sadd.s32 %s288, 1
    %p292 = scmp.eq.s32.totalorder %s23, 1
    %p293 = scmp.ne.s32.totalorder %s288, %s290
    %p294 = scmp.eq.s32.totalorder %s23, 0
    %p295 = por %p293, %p294
    %p296 = scmp.ne.s32.totalorder %s288, %s290
    %p297 = scmp.eq.s32.totalorder %s28, 1
    %p298 = por %p296, %p297
    %p299 = scmp.ne.s32.totalorder %s290, %s291
    %p300 = scmp.eq.s32.totalorder %s28, 0
    %p301 = por %p299, %p300
    %p302 = scmp.ne.s32.totalorder %s290, %s291
    %p303 = scmp.eq.s32.totalorder %s29, 1
    %p304 = por %p302, %p303
    %p306 = scmp.ne.s32.totalorder %s291, %s305
    %p307 = scmp.eq.s32.totalorder %s29, 0
    %p308 = por %p306, %p307
    %s310 = sadd.s32 %s309, 1
    %p313 = scmp.eq.s32.totalorder %s23, 1
    %p314 = scmp.ne.s32.totalorder %s309, %s311
    %p315 = scmp.eq.s32.totalorder %s23, 0
    %p316 = por %p314, %p315
    %p317 = scmp.ne.s32.totalorder %s309, %s311
    %p318 = scmp.eq.s32.totalorder %s28, 1
    %p319 = por %p317, %p318
    %p320 = scmp.ne.s32.totalorder %s311, %s312
    %p321 = scmp.eq.s32.totalorder %s28, 0
    %p322 = por %p320, %p321
    %p323 = scmp.ne.s32.totalorder %s311, %s312
    %p324 = scmp.eq.s32.totalorder %s29, 1
    %p325 = por %p323, %p324
    %p327 = scmp.ne.s32.totalorder %s312, %s326
    %p328 = scmp.eq.s32.totalorder %s29, 0
    %p329 = por %p327, %p328
    %s331 = sadd.s32 %s330, 1
    %p334 = scmp.eq.s32.totalorder %s23, 1
    %p335 = scmp.ne.s32.totalorder %s330, %s332
    %p336 = scmp.eq.s32.totalorder %s23, 0
    %p337 = por %p335, %p336
    %p338 = scmp.ne.s32.totalorder %s330, %s332
    %p339 = scmp.eq.s32.totalorder %s28, 1
    %p340 = por %p338, %p339
    %p341 = scmp.ne.s32.totalorder %s332, %s333
    %p342 = scmp.eq.s32.totalorder %s28, 0
    %p343 = por %p341, %p342
    %p344 = scmp.ne.s32.totalorder %s332, %s333
    %p345 = scmp.eq.s32.totalorder %s29, 1
    %p346 = por %p344, %p345
    %p348 = scmp.ne.s32.totalorder %s333, %s347
    %p349 = scmp.eq.s32.totalorder %s29, 0
    %p350 = por %p348, %p349
    %s352 = sadd.s32 %s351, 1
    %p355 = scmp.eq.s32.totalorder %s23, 1
    %p356 = scmp.ne.s32.totalorder %s351, %s353
    %p357 = scmp.eq.s32.totalorder %s23, 0
    %p358 = por %p356, %p357
    %p359 = scmp.ne.s32.totalorder %s351, %s353
    %p360 = scmp.eq.s32.totalorder %s28, 1
    %p361 = por %p359, %p360
    %p362 = scmp.ne.s32.totalorder %s353, %s354
    %p363 = scmp.eq.s32.totalorder %s28, 0
    %p364 = por %p362, %p363
    %p365 = scmp.ne.s32.totalorder %s353, %s354
    %p366 = scmp.eq.s32.totalorder %s29, 1
    %p367 = por %p365, %p366
    %p369 = scmp.ne.s32.totalorder %s354, %s368
    %p370 = scmp.eq.s32.totalorder %s29, 0
    %p371 = por %p369, %p370
    %s373 = sadd.s32 %s372, 1
    %p376 = scmp.eq.s32.totalorder %s23, 1
    %p377 = scmp.ne.s32.totalorder %s372, %s374
    %p378 = scmp.eq.s32.totalorder %s23, 0
    %p379 = por %p377, %p378
    %p380 = scmp.ne.s32.totalorder %s372, %s374
    %p381 = scmp.eq.s32.totalorder %s28, 1
    %p382 = por %p380, %p381
    %p383 = scmp.ne.s32.totalorder %s374, %s375
    %p384 = scmp.eq.s32.totalorder %s28, 0
    %p385 = por %p383, %p384
    %p386 = scmp.ne.s32.totalorder %s374, %s375
    %p387 = scmp.eq.s32.totalorder %s29, 1
    %p388 = por %p386, %p387
    %p390 = scmp.ne.s32.totalorder %s375, %s389
    %p391 = scmp.eq.s32.totalorder %s29, 0
    %p392 = por %p390, %p391
    %s393 = ssub.s32 %s23, %s30
    %p394 = scmp.eq.s32.totalorder %s393, 0
    %s396 = sadd.s32 %s395, 1
    %s397 = scalar_select %p394, %s395, %s396
    %p400 = pneg %p394
    %p401 = scmp.eq.s32.totalorder %s23, 1
    %p402 = por %p400, %p401
    %p403 = scmp.ne.s32.totalorder %s395, %s398
    %p404 = scmp.eq.s32.totalorder %s23, 0
    %p405 = por %p403, %p404
    %p406 = scmp.ne.s32.totalorder %s395, %s398
    %p407 = scmp.eq.s32.totalorder %s28, 1
    %p408 = por %p406, %p407
    %p409 = scmp.ne.s32.totalorder %s398, %s399
    %p410 = scmp.eq.s32.totalorder %s28, 0
    %p411 = por %p409, %p410
    %p412 = scmp.ne.s32.totalorder %s398, %s399
    %p413 = scmp.eq.s32.totalorder %s29, 1
    %p414 = por %p412, %p413
    %p416 = scmp.ne.s32.totalorder %s399, %s415
    %p417 = scmp.eq.s32.totalorder %s29, 0
    %p418 = por %p416, %p417
    %p419 = scmp.le.s32.totalorder 1, %s23
    %p420 = scmp.lt.s32.totalorder %s23, 3
    %p421 = pnand %p419, %p420
    %p422 = pneg %p421
    // Predicated region
    $region9: #{encoder_eff_forward.1} parent=5 // pred_check
      _
    $region10: #{encoder_eff_forward.1} parent=5 // pred_check_branch
      %424 = sbr.rel (%p421) target = $region12
    $region11: #{encoder_eff_forward.1} parent=5 // pred_region
      %s425 = ssub.s32 %s23, 1
      // Predicated region
      $region13: #{encoder_eff_forward.1} parent=11 // pred_check
        %p426 = pneg %p70
      $region14: #{encoder_eff_forward.1} parent=11 // pred_check_branch
        %428 = sbr.rel (%p426) target = $region16
      $region15: #{encoder_eff_forward.1} parent=11 // pred_region
        _
      $region16: #{encoder_eff_forward.1} parent=11 // pred_fallthru
        _
      // Predicated region
      $region17: #{encoder_eff_forward.1} parent=11 // pred_check
        %p429 = pneg %p91
      $region18: #{encoder_eff_forward.1} parent=11 // pred_check_branch
        %431 = sbr.rel (%p429) target = $region20
      $region19: #{encoder_eff_forward.1} parent=11 // pred_region
        _
      $region20: #{encoder_eff_forward.1} parent=11 // pred_fallthru
        _
      // Predicated region
      $region21: #{encoder_eff_forward.1} parent=11 // pred_check
        %p432 = pneg %p112
      $region22: #{encoder_eff_forward.1} parent=11 // pred_check_branch
        %434 = sbr.rel (%p432) target = $region24
      $region23: #{encoder_eff_forward.1} parent=11 // pred_region
        _
      $region24: #{encoder_eff_forward.1} parent=11 // pred_fallthru
        _
      // Predicated region
      $region25: #{encoder_eff_forward.1} parent=11 // pred_check
        %p435 = pneg %p133
      $region26: #{encoder_eff_forward.1} parent=11 // pred_check_branch
        %437 = sbr.rel (%p435) target = $region28
      $region27: #{encoder_eff_forward.1} parent=11 // pred_region
        _
      $region28: #{encoder_eff_forward.1} parent=11 // pred_fallthru
        _
      // Predicated region
      $region29: #{encoder_eff_forward.1} parent=11 // pred_check
        %p438 = pneg %p154
      $region30: #{encoder_eff_forward.1} parent=11 // pred_check_branch
        %440 = sbr.rel (%p438) target = $region32
      $region31: #{encoder_eff_forward.1} parent=11 // pred_region
        _
      $region32: #{encoder_eff_forward.1} parent=11 // pred_fallthru
        _
      // Predicated region
      $region33: #{encoder_eff_forward.1} parent=11 // pred_check
        %p441 = pneg %p175
      $region34: #{encoder_eff_forward.1} parent=11 // pred_check_branch
        %443 = sbr.rel (%p441) target = $region36
      $region35: #{encoder_eff_forward.1} parent=11 // pred_region
        _
      $region36: #{encoder_eff_forward.1} parent=11 // pred_fallthru
        _
      // Predicated region
      $region37: #{encoder_eff_forward.1} parent=11 // pred_check
        %p444 = pneg %p196
      $region38: #{encoder_eff_forward.1} parent=11 // pred_check_branch
        %446 = sbr.rel (%p444) target = $region40
      $region39: #{encoder_eff_forward.1} parent=11 // pred_region
        _
      $region40: #{encoder_eff_forward.1} parent=11 // pred_fallthru
        _
      // Predicated region
      $region41: #{encoder_eff_forward.1} parent=11 // pred_check
        %p447 = pneg %p217
      $region42: #{encoder_eff_forward.1} parent=11 // pred_check_branch
        %449 = sbr.rel (%p447) target = $region44
      $region43: #{encoder_eff_forward.1} parent=11 // pred_region
        _
      $region44: #{encoder_eff_forward.1} parent=11 // pred_fallthru
        _
      // Predicated region
      $region45: #{encoder_eff_forward.1} parent=11 // pred_check
        %p450 = pneg %p238
      $region46: #{encoder_eff_forward.1} parent=11 // pred_check_branch
        %452 = sbr.rel (%p450) target = $region48
      $region47: #{encoder_eff_forward.1} parent=11 // pred_region
        _
      $region48: #{encoder_eff_forward.1} parent=11 // pred_fallthru
        _
      // Predicated region
      $region49: #{encoder_eff_forward.1} parent=11 // pred_check
        %p453 = pneg %p259
      $region50: #{encoder_eff_forward.1} parent=11 // pred_check_branch
        %455 = sbr.rel (%p453) target = $region52
      $region51: #{encoder_eff_forward.1} parent=11 // pred_region
        _
      $region52: #{encoder_eff_forward.1} parent=11 // pred_fallthru
        _
      // Predicated region
      $region53: #{encoder_eff_forward.1} parent=11 // pred_check
        %p456 = pneg %p280
      $region54: #{encoder_eff_forward.1} parent=11 // pred_check_branch
        %458 = sbr.rel (%p456) target = $region56
      $region55: #{encoder_eff_forward.1} parent=11 // pred_region
        _
      $region56: #{encoder_eff_forward.1} parent=11 // pred_fallthru
        _
      // Predicated region
      $region57: #{encoder_eff_forward.1} parent=11 // pred_check
        %p459 = pneg %p301
      $region58: #{encoder_eff_forward.1} parent=11 // pred_check_branch
        %461 = sbr.rel (%p459) target = $region60
      $region59: #{encoder_eff_forward.1} parent=11 // pred_region
        _
      $region60: #{encoder_eff_forward.1} parent=11 // pred_fallthru
        _
      // Predicated region
      $region61: #{encoder_eff_forward.1} parent=11 // pred_check
        %p462 = pneg %p322
      $region62: #{encoder_eff_forward.1} parent=11 // pred_check_branch
        %464 = sbr.rel (%p462) target = $region64
      $region63: #{encoder_eff_forward.1} parent=11 // pred_region
        _
      $region64: #{encoder_eff_forward.1} parent=11 // pred_fallthru
        _
      // Predicated region
      $region65: #{encoder_eff_forward.1} parent=11 // pred_check
        %p465 = pneg %p343
      $region66: #{encoder_eff_forward.1} parent=11 // pred_check_branch
        %467 = sbr.rel (%p465) target = $region68
      $region67: #{encoder_eff_forward.1} parent=11 // pred_region
        _
      $region68: #{encoder_eff_forward.1} parent=11 // pred_fallthru
        _
      // Predicated region
      $region69: #{encoder_eff_forward.1} parent=11 // pred_check
        %p468 = pneg %p364
      $region70: #{encoder_eff_forward.1} parent=11 // pred_check_branch
        %470 = sbr.rel (%p468) target = $region72
      $region71: #{encoder_eff_forward.1} parent=11 // pred_region
        _
      $region72: #{encoder_eff_forward.1} parent=11 // pred_fallthru
        _
      // Predicated region
      $region73: #{encoder_eff_forward.1} parent=11 // pred_check
        %p471 = pneg %p385
      $region74: #{encoder_eff_forward.1} parent=11 // pred_check_branch
        %473 = sbr.rel (%p471) target = $region76
      $region75: #{encoder_eff_forward.1} parent=11 // pred_region
        _
      $region76: #{encoder_eff_forward.1} parent=11 // pred_fallthru
        _
    $region12: #{encoder_eff_forward.1} parent=5 // pred_fallthru
      _
    %p474 = scmp.lt.s32.totalorder %s23, 2
    // Predicated region
    $region77: #{encoder_eff_forward.1} parent=5 // pred_check
      %p475 = pneg %p474
    $region78: #{encoder_eff_forward.1} parent=5 // pred_check_branch
      %477 = sbr.rel (%p475) target = $region80
    $region79: #{encoder_eff_forward.1} parent=5 // pred_region
      // Predicated region
      $region81: #{encoder_eff_forward.1} parent=79 // pred_check
        %p478 = pneg %p43
      $region82: #{encoder_eff_forward.1} parent=79 // pred_check_branch
        %480 = sbr.rel (%p478) target = $region84
      $region83: #{encoder_eff_forward.1} parent=79 // pred_region
        %p481 = scmp.lt.s32.totalorder %s23, 1
        %s482 = scalar_select %p481, %s23, 1
        %s483 = smul.addr %s482, 16
        %s484 = smul.addr %s483, 4
        %s485 = scalar_lea.vmem %s0, %s484
      $region84: #{encoder_eff_forward.1} parent=79 // pred_fallthru
        _
    $region80: #{encoder_eff_forward.1} parent=5 // pred_fallthru
      _
    %p486 = scmp.le.s32.totalorder 1, %s23
    %p487 = scmp.lt.s32.totalorder %s23, 3
    %p488 = pnand %p486, %p487
    %p489 = pneg %p488
    // Predicated region
    $region85: #{encoder_eff_forward.1} parent=5 // pred_check
      _
    $region86: #{encoder_eff_forward.1} parent=5 // pred_check_branch
      %491 = sbr.rel (%p488) target = $region88
    $region87: #{encoder_eff_forward.1} parent=5 // pred_region
      %s492 = ssub.s32 %s23, 1
      %p493 = scmp.lt.s32.totalorder %s28, 1
      %s494 = scalar_select %p493, %s28, 1
      %s495 = smul.addr %s494, 16
      %s496 = smul.addr %s495, 4
      %s497 = scalar_lea.vmem %s0, %s496
      %p498 = pneg %p49
      %p499 = pneg %p46
      %p500 = pneg %p70
      %p501 = pneg %p67
      %p502 = pneg %p91
      %p503 = pneg %p88
      %p504 = pneg %p112
      %p505 = pneg %p109
      %p506 = pneg %p133
      %p507 = pneg %p130
      %p508 = pneg %p154
      %p509 = pneg %p151
      %p510 = pneg %p175
      %p511 = pneg %p172
      %p512 = pneg %p196
      %p513 = pneg %p193
      %p514 = pneg %p217
      %p515 = pneg %p214
      %p516 = pneg %p238
      %p517 = pneg %p235
      %p518 = pneg %p259
      %p519 = pneg %p256
      %p520 = pneg %p280
      %p521 = pneg %p277
      %p522 = pneg %p301
      %p523 = pneg %p298
      %p524 = pneg %p322
      %p525 = pneg %p319
      %p526 = pneg %p343
      %p527 = pneg %p340
      %p528 = pneg %p364
      %p529 = pneg %p361
      %p530 = pneg %p385
      %p531 = pneg %p382
      %p532 = pneg %p411
      %p533 = pneg %p408
      %p534 = scmp.lt.s32.totalorder %s28, 1
      %s535 = scalar_select %p534, %s28, 1
      %s536 = smul.addr %s535, 8
      %s537 = smul.addr %s536, 8
      %s538 = scalar_lea.vmem %s17, %s537
      %p539 = scmp.lt.s32.totalorder %s28, 1
      %s540 = scalar_select %p539, %s28, 1
      %s541 = smul.addr %s540, 16
      %s542 = smul.addr %s541, 4
      %s543 = scalar_lea.vmem %s0, %s542
      %p544 = scmp.lt.s32.totalorder %s28, 1
      %s545 = scalar_select %p544, %s28, 1
      %s546 = smul.addr %s545, 8
      %s547 = smul.addr %s546, 8
      %s548 = scalar_lea.vmem %s17, %s547
      %v550 = vld [vmem:[%s543] sm:$0xff]
      %v551 = vld [vmem:[%s543 + $0x8] sm:$0xff]
      %v552 = vld [vmem:[%s543 + $0x10] sm:$0xff]
      %v553 = vld [vmem:[%s543 + $0x18] sm:$0xff]
      %v554 = vld [vmem:[%s543 + $0x20] sm:$0xff]
      %v555 = vld [vmem:[%s543 + $0x28] sm:$0xff]
      %v556 = vld [vmem:[%s543 + $0x30] sm:$0xff]
      %v557 = vld [vmem:[%s543 + $0x38] sm:$0xff]
      %v558 = vld [vmem:[%s1] sm:$0xf]
      %v559 = vld [vmem:[%s1 + $0x4] sm:$0xf]
      %v560 = vld [vmem:[%s1 + $0x8] sm:$0xf]
      %v561 = vld [vmem:[%s1 + $0xc] sm:$0xf]
      %v562 = vld [vmem:[%s1 + $0x10] sm:$0xf]
      %v563 = vld [vmem:[%s1 + $0x14] sm:$0xf]
      %v564 = vld [vmem:[%s1 + $0x18] sm:$0xf]
      %v565 = vld [vmem:[%s1 + $0x1c] sm:$0xf]
      %v566 = vld [vmem:[%s1 + $0x20] sm:$0xf]
      %v567 = vld [vmem:[%s1 + $0x24] sm:$0xf]
      %v568 = vld [vmem:[%s1 + $0x28] sm:$0xf]
      %v569 = vld [vmem:[%s1 + $0x2c] sm:$0xf]
      %v570 = vld [vmem:[%s1 + $0x30] sm:$0xf]
      %v571 = vld [vmem:[%s1 + $0x34] sm:$0xf]
      %v572 = vld [vmem:[%s1 + $0x38] sm:$0xf]
      %v573 = vld [vmem:[%s1 + $0x3c] sm:$0xf]
      %v574 = vld [vmem:[%s1 + $0x40] sm:$0xf]
      %v575 = vld [vmem:[%s1 + $0x44] sm:$0xf]
      %v576 = vld [vmem:[%s1 + $0x48] sm:$0xf]
      %v577 = vld [vmem:[%s1 + $0x4c] sm:$0xf]
      %v578 = vld [vmem:[%s1 + $0x50] sm:$0xf]
      %v579 = vld [vmem:[%s1 + $0x54] sm:$0xf]
      %v580 = vld [vmem:[%s1 + $0x58] sm:$0xf]
      %v581 = vld [vmem:[%s1 + $0x5c] sm:$0xf]
      %v582 = vld [vmem:[%s2] sm:$0x1]
      %v584 = vperm.slane %v582, 0
      %v594 = vunpack.c.l.b16 %v550
      %v595 = vunpack.c.h.b16 %v550
      %v596 = vunpack.c.l.b16 %v551
      %v597 = vunpack.c.h.b16 %v551
      %v598 = vunpack.c.l.b16 %v552
      %v599 = vunpack.c.h.b16 %v552
      %v600 = vunpack.c.l.b16 %v553
      %v601 = vunpack.c.h.b16 %v553
      %v602 = vunpack.c.l.b16 %v554
      %v603 = vunpack.c.h.b16 %v554
      %v604 = vunpack.c.l.b16 %v555
      %v605 = vunpack.c.h.b16 %v555
      %v606 = vunpack.c.l.b16 %v556
      %v607 = vunpack.c.h.b16 %v556
      %v608 = vunpack.c.l.b16 %v557
      %v609 = vunpack.c.h.b16 %v557
      %v610 = vpack.c.b16 %v596, %v594
      %v611 = vpack.c.b16 %v597, %v595
      %v612 = vpack.c.b16 %v600, %v598
      %v613 = vpack.c.b16 %v601, %v599
      %v614 = vpack.c.b16 %v604, %v602
      %v615 = vpack.c.b16 %v605, %v603
      %v616 = vpack.c.b16 %v608, %v606
      %v617 = vpack.c.b16 %v609, %v607
      %v646 = vunpack.c.l.b16 %v558
      %v647 = vunpack.c.l.b16 %v559
      %v648 = vunpack.c.l.b16 %v560
      %v649 = vunpack.c.l.b16 %v561
      %v650 = vunpack.c.l.b16 %v562
      %v651 = vunpack.c.l.b16 %v563
      %v652 = vunpack.c.l.b16 %v564
      %v653 = vunpack.c.l.b16 %v565
      %v654 = vunpack.c.l.b16 %v566
      %v655 = vunpack.c.l.b16 %v567
      %v656 = vunpack.c.l.b16 %v568
      %v657 = vunpack.c.l.b16 %v569
      %v658 = vunpack.c.l.b16 %v570
      %v659 = vunpack.c.l.b16 %v571
      %v660 = vunpack.c.l.b16 %v572
      %v661 = vunpack.c.l.b16 %v573
      %v662 = vunpack.c.l.b16 %v574
      %v663 = vunpack.c.l.b16 %v575
      %v664 = vunpack.c.l.b16 %v576
      %v665 = vunpack.c.l.b16 %v577
      %v666 = vunpack.c.l.b16 %v578
      %v667 = vunpack.c.l.b16 %v579
      %v668 = vunpack.c.l.b16 %v580
      %v669 = vunpack.c.l.b16 %v581
      %v670 = vpack.c.b16 %v647, %v646
      %v671 = vpack.c.b16 %v649, %v648
      %v672 = vpack.c.b16 %v651, %v650
      %v673 = vpack.c.b16 %v653, %v652
      %v674 = vpack.c.b16 %v655, %v654
      %v675 = vpack.c.b16 %v657, %v656
      %v676 = vpack.c.b16 %v659, %v658
      %v677 = vpack.c.b16 %v661, %v660
      %v678 = vpack.c.b16 %v663, %v662
      %v679 = vpack.c.b16 %v665, %v664
      %v680 = vpack.c.b16 %v667, %v666
      %v681 = vpack.c.b16 %v669, %v668
      %vm694 = vcmask 523264
      %v696 = vsel %vm694, %v611, 0
      %v699 = vsel %vm694, %v613, 0
      %v702 = vsel %vm694, %v615, 0
      %v705 = vsel %vm694, %v617, 0
      %707 = vmatpush.bf16.msra.mxu0 %v677
      %708 = vmatpush.bf16.msra.mxu0 %v676
      %709 = vmatpush.bf16.msra.mxu0 %v675
      %710 = vmatpush.bf16.msra.mxu0 %v674
      %711 = vmatpush.bf16.msra.mxu0 %v673
      %712 = vmatpush.bf16.msra.mxu0 %v672
      %713 = vmatpush.bf16.msra.mxu0 %v671
      %714 = vmatpush.bf16.msra.mxu0 %v670
      %715 = vmatmul.bf16.gmra.mxu0 %v610
      %v716 = vpop.f32.mrf.mxu0
      %v717 = vadd.f32 %v584, %v716
      %v718 = vpop.f32.mrf.mxu0
      %v719 = vadd.f32 %v584, %v718
      %720 = vmatmul.bf16.gmra.mxu0 %v612
      %v721 = vpop.f32.mrf.mxu0
      %v722 = vadd.f32 %v584, %v721
      %v723 = vpop.f32.mrf.mxu0
      %v724 = vadd.f32 %v584, %v723
      %725 = vmatmul.bf16.gmra.mxu0 %v614
      %v726 = vpop.f32.mrf.mxu0
      %v727 = vadd.f32 %v584, %v726
      %v728 = vpop.f32.mrf.mxu0
      %v729 = vadd.f32 %v584, %v728
      %730 = vmatmul.bf16.gmra.mxu0 %v616
      %v731 = vpop.f32.mrf.mxu0
      %v732 = vadd.f32 %v584, %v731
      %v733 = vpop.f32.mrf.mxu0
      %v734 = vadd.f32 %v584, %v733
      %735 = vdwg.mxu0
      %736 = vmatpush.bf16.msra.mxu0 0
      %737 = vmatpush.bf16.msra.mxu0 0
      %738 = vmatpush.bf16.msra.mxu0 0
      %739 = vmatpush.bf16.msra.mxu0 0
      %740 = vmatpush.bf16.msra.mxu0 %v681
      %741 = vmatpush.bf16.msra.mxu0 %v680
      %742 = vmatpush.bf16.msra.mxu0 %v679
      %743 = vmatpush.bf16.msra.mxu0 %v678
      %744 = vmatmul.bf16.gmra.mxu0 %v696
      %v745 = vpop.f32.mrf.mxu0
      %v746 = vadd.f32 %v717, %v745
      %v747 = vpop.f32.mrf.mxu0
      %v748 = vadd.f32 %v719, %v747
      %749 = vmatmul.bf16.gmra.mxu0 %v699
      %v750 = vpop.f32.mrf.mxu0
      %v751 = vadd.f32 %v722, %v750
      %v752 = vpop.f32.mrf.mxu0
      %v753 = vadd.f32 %v724, %v752
      %754 = vmatmul.bf16.gmra.mxu0 %v702
      %v755 = vpop.f32.mrf.mxu0
      %v756 = vadd.f32 %v727, %v755
      %v757 = vpop.f32.mrf.mxu0
      %v758 = vadd.f32 %v729, %v757
      %759 = vmatmul.bf16.gmra.mxu0 %v705
      %v760 = vpop.f32.mrf.mxu0
      %v761 = vadd.f32 %v732, %v760
      %v762 = vpop.f32.mrf.mxu0
      %v763 = vadd.f32 %v734, %v762
      %764 = vdwg.mxu0
      %v765 = vmax.f32 %v746, 0.0
      %v766 = vmax.f32 %v748, 0.0
      %v767 = vmax.f32 %v751, 0.0
      %v768 = vmax.f32 %v753, 0.0
      %v769 = vmax.f32 %v756, 0.0
      %v770 = vmax.f32 %v758, 0.0
      %v771 = vmax.f32 %v761, 0.0
      %v772 = vmax.f32 %v763, 0.0
      %v773 = vpack.c.bf16 %v766, %v765
      %v774 = vpack.c.bf16 %v768, %v767
      %v775 = vpack.c.bf16 %v770, %v769
      %v776 = vpack.c.bf16 %v772, %v771
      %v777 = vld [vmem:[%s3] sm:$0xf]
      %v778 = vld [vmem:[%s3 + $0x4] sm:$0xf]
      %v779 = vld [vmem:[%s3 + $0x8] sm:$0xf]
      %v780 = vld [vmem:[%s3 + $0xc] sm:$0xf]
      %v781 = vld [vmem:[%s3 + $0x10] sm:$0xf]
      %v782 = vld [vmem:[%s3 + $0x14] sm:$0xf]
      %v783 = vld [vmem:[%s3 + $0x18] sm:$0xf]
      %v784 = vld [vmem:[%s3 + $0x1c] sm:$0xf]
      %v785 = vld [vmem:[%s3 + $0x20] sm:$0xf]
      %v786 = vld [vmem:[%s3 + $0x24] sm:$0xf]
      %v787 = vld [vmem:[%s3 + $0x28] sm:$0xf]
      %v788 = vld [vmem:[%s3 + $0x2c] sm:$0xf]
      %v789 = vld [vmem:[%s3 + $0x30] sm:$0xf]
      %v790 = vld [vmem:[%s3 + $0x34] sm:$0xf]
      %v791 = vld [vmem:[%s3 + $0x38] sm:$0xf]
      %v792 = vld [vmem:[%s3 + $0x3c] sm:$0xf]
      %v793 = vld [vmem:[%s4] sm:$0x1]
      %v795 = vperm.slane %v793, 0
      %v813 = vunpack.c.l.b16 %v777
      %v814 = vunpack.c.l.b16 %v778
      %v815 = vunpack.c.l.b16 %v779
      %v816 = vunpack.c.l.b16 %v780
      %v817 = vunpack.c.l.b16 %v781
      %v818 = vunpack.c.l.b16 %v782
      %v819 = vunpack.c.l.b16 %v783
      %v820 = vunpack.c.l.b16 %v784
      %v821 = vunpack.c.l.b16 %v785
      %v822 = vunpack.c.l.b16 %v786
      %v823 = vunpack.c.l.b16 %v787
      %v824 = vunpack.c.l.b16 %v788
      %v825 = vunpack.c.l.b16 %v789
      %v826 = vunpack.c.l.b16 %v790
      %v827 = vunpack.c.l.b16 %v791
      %v828 = vunpack.c.l.b16 %v792
      %v829 = vpack.c.b16 %v814, %v813
      %v830 = vpack.c.b16 %v816, %v815
      %v831 = vpack.c.b16 %v818, %v817
      %v832 = vpack.c.b16 %v820, %v819
      %v833 = vpack.c.b16 %v822, %v821
      %v834 = vpack.c.b16 %v824, %v823
      %v835 = vpack.c.b16 %v826, %v825
      %v836 = vpack.c.b16 %v828, %v827
      %845 = vmatpush.bf16.msra.mxu0 %v836
      %846 = vmatpush.bf16.msra.mxu0 %v835
      %847 = vmatpush.bf16.msra.mxu0 %v834
      %848 = vmatpush.bf16.msra.mxu0 %v833
      %849 = vmatpush.bf16.msra.mxu0 %v832
      %850 = vmatpush.bf16.msra.mxu0 %v831
      %851 = vmatpush.bf16.msra.mxu0 %v830
      %852 = vmatpush.bf16.msra.mxu0 %v829
      %853 = vmatmul.bf16.gmra.mxu0 %v773
      %v854 = vpop.f32.mrf.mxu0
      %v855 = vadd.f32 %v795, %v854
      %v856 = vpop.f32.mrf.mxu0
      %v857 = vadd.f32 %v795, %v856
      %858 = vmatmul.bf16.gmra.mxu0 %v774
      %v859 = vpop.f32.mrf.mxu0
      %v860 = vadd.f32 %v795, %v859
      %v861 = vpop.f32.mrf.mxu0
      %v862 = vadd.f32 %v795, %v861
      %863 = vmatmul.bf16.gmra.mxu0 %v775
      %v864 = vpop.f32.mrf.mxu0
      %v865 = vadd.f32 %v795, %v864
      %v866 = vpop.f32.mrf.mxu0
      %v867 = vadd.f32 %v795, %v866
      %868 = vmatmul.bf16.gmra.mxu0 %v776
      %v869 = vpop.f32.mrf.mxu0
      %v870 = vadd.f32 %v795, %v869
      %v871 = vpop.f32.mrf.mxu0
      %v872 = vadd.f32 %v795, %v871
      %873 = vdwg.mxu0
      %v874 = vmax.f32 %v855, 0.0
      %v875 = vmax.f32 %v857, 0.0
      %v876 = vmax.f32 %v860, 0.0
      %v877 = vmax.f32 %v862, 0.0
      %v878 = vmax.f32 %v865, 0.0
      %v879 = vmax.f32 %v867, 0.0
      %v880 = vmax.f32 %v870, 0.0
      %v881 = vmax.f32 %v872, 0.0
      %v882 = vld [vmem:[%s7] sm:$0x3]
      %v884 = vperm.slane %v882, 0
      %v885 = vperm.slane %v882, 1
      %v888 = vadd.f32 %v884, 0.0
      %v889 = vadd.f32 %v885, 0.0
      %v890 = vld [vmem:[%s5] sm:$0xf]
      %v891 = vld [vmem:[%s5 + $0x4] sm:$0xf]
      %v894 = vunpack.c.l.b16 %v890
      %v895 = vunpack.c.l.b16 %v891
      %v896 = vpack.c.b16 %v895, %v894
      %v898 = vsel %vm694, %v896, 0
      %900 = vmatpush.bf16.msra.mxu0 0
      %901 = vmatpush.bf16.msra.mxu0 0
      %902 = vmatpush.bf16.msra.mxu0 0
      %903 = vmatpush.bf16.msra.mxu0 0
      %904 = vmatpush.bf16.msra.mxu0 %v776
      %905 = vmatpush.bf16.msra.mxu0 %v775
      %906 = vmatpush.bf16.msra.mxu0 %v774
      %907 = vmatpush.bf16.msra.mxu0 %v773
      %908 = vmatmul.bf16.gmra.mxu0 %v898
      %v909 = vpop.f32.mrf.mxu0
      %v910 = vadd.f32 0.0, %v909
      %v911 = vpop.f32.mrf.mxu0
      %v912 = vadd.f32 0.0, %v911
      %913 = vdwg.mxu0
      %v914 = vpack.c.bf16 %v912, %v910
      %v915 = vld [vmem:[%s6] sm:$0xff]
      %v916 = vld [vmem:[%s6 + $0x8] sm:$0xff]
      %v917 = vld [vmem:[%s6 + $0x10] sm:$0xff]
      %v918 = vld [vmem:[%s6 + $0x18] sm:$0xff]
      %v919 = vld [vmem:[%s6 + $0x20] sm:$0xff]
      %v920 = vld [vmem:[%s6 + $0x28] sm:$0xff]
      %v921 = vld [vmem:[%s6 + $0x30] sm:$0xff]
      %v922 = vld [vmem:[%s6 + $0x38] sm:$0xff]
      %v923 = vld [vmem:[%s6 + $0x40] sm:$0xff]
      %v924 = vld [vmem:[%s6 + $0x48] sm:$0xff]
      %v925 = vld [vmem:[%s6 + $0x50] sm:$0xff]
      %v926 = vld [vmem:[%s6 + $0x58] sm:$0xff]
      %v927 = vld [vmem:[%s6 + $0x60] sm:$0xff]
      %v928 = vld [vmem:[%s6 + $0x68] sm:$0xff]
      %v929 = vld [vmem:[%s6 + $0x70] sm:$0xff]
      %v930 = vld [vmem:[%s6 + $0x78] sm:$0xff]
      %v947 = vunpack.c.l.b16 %v915
      %v948 = vunpack.c.h.b16 %v915
      %v949 = vunpack.c.l.b16 %v916
      %v950 = vunpack.c.h.b16 %v916
      %v951 = vunpack.c.l.b16 %v917
      %v952 = vunpack.c.h.b16 %v917
      %v953 = vunpack.c.l.b16 %v918
      %v954 = vunpack.c.h.b16 %v918
      %v955 = vunpack.c.l.b16 %v919
      %v956 = vunpack.c.h.b16 %v919
      %v957 = vunpack.c.l.b16 %v920
      %v958 = vunpack.c.h.b16 %v920
      %v959 = vunpack.c.l.b16 %v921
      %v960 = vunpack.c.h.b16 %v921
      %v961 = vunpack.c.l.b16 %v922
      %v962 = vunpack.c.h.b16 %v922
      %v963 = vunpack.c.l.b16 %v923
      %v964 = vunpack.c.h.b16 %v923
      %v965 = vunpack.c.l.b16 %v924
      %v966 = vunpack.c.h.b16 %v924
      %v967 = vunpack.c.l.b16 %v925
      %v968 = vunpack.c.h.b16 %v925
      %v969 = vunpack.c.l.b16 %v926
      %v970 = vunpack.c.h.b16 %v926
      %v971 = vunpack.c.l.b16 %v927
      %v972 = vunpack.c.h.b16 %v927
      %v973 = vunpack.c.l.b16 %v928
      %v974 = vunpack.c.h.b16 %v928
      %v975 = vunpack.c.l.b16 %v929
      %v976 = vunpack.c.h.b16 %v929
      %v977 = vunpack.c.l.b16 %v930
      %v978 = vunpack.c.h.b16 %v930
      %v979 = vpack.c.b16 %v949, %v947
      %v980 = vpack.c.b16 %v950, %v948
      %v981 = vpack.c.b16 %v953, %v951
      %v982 = vpack.c.b16 %v954, %v952
      %v983 = vpack.c.b16 %v957, %v955
      %v984 = vpack.c.b16 %v958, %v956
      %v985 = vpack.c.b16 %v961, %v959
      %v986 = vpack.c.b16 %v962, %v960
      %v987 = vpack.c.b16 %v965, %v963
      %v988 = vpack.c.b16 %v966, %v964
      %v989 = vpack.c.b16 %v969, %v967
      %v990 = vpack.c.b16 %v970, %v968
      %v991 = vpack.c.b16 %v973, %v971
      %v992 = vpack.c.b16 %v974, %v972
      %v993 = vpack.c.b16 %v977, %v975
      %v994 = vpack.c.b16 %v978, %v976
      %1011 = vmatpush.bf16.msra.mxu0 %v993
      %1012 = vmatpush.bf16.msra.mxu0 %v991
      %1013 = vmatpush.bf16.msra.mxu0 %v989
      %1014 = vmatpush.bf16.msra.mxu0 %v987
      %1015 = vmatpush.bf16.msra.mxu0 %v985
      %1016 = vmatpush.bf16.msra.mxu0 %v983
      %1017 = vmatpush.bf16.msra.mxu0 %v981
      %1018 = vmatpush.bf16.msra.mxu0 %v979
      %1019 = vmatmul.bf16.gmra.mxu0 %v914
      %v1020 = vpop.f32.mrf.mxu0
      %v1021 = vadd.f32 0.0, %v1020
      %v1022 = vpop.f32.mrf.mxu0
      %v1023 = vadd.f32 0.0, %v1022
      %1024 = vdwg.mxu0
      %1025 = vmatpush.bf16.msra.mxu0 %v994
      %1026 = vmatpush.bf16.msra.mxu0 %v992
      %1027 = vmatpush.bf16.msra.mxu0 %v990
      %1028 = vmatpush.bf16.msra.mxu0 %v988
      %1029 = vmatpush.bf16.msra.mxu0 %v986
      %1030 = vmatpush.bf16.msra.mxu0 %v984
      %1031 = vmatpush.bf16.msra.mxu0 %v982
      %1032 = vmatpush.bf16.msra.mxu0 %v980
      %1033 = vmatmul.bf16.gmra.mxu0 %v914
      %v1034 = vpop.f32.mrf.mxu0
      %v1035 = vadd.f32 0.0, %v1034
      %v1036 = vpop.f32.mrf.mxu0
      %v1037 = vadd.f32 0.0, %v1036
      %1038 = vdwg.mxu0
      %v1039 = vadd.f32 %v888, %v1021
      %v1040 = vadd.f32 %v889, %v1035
      %v1041 = vadd.f32 %v888, %v1023
      %v1042 = vadd.f32 %v889, %v1037
      %s1043 = scalar_lea.vmem %s5, 8
      %v1044 = vld [vmem:[%s1043] sm:$0xf]
      %v1045 = vld [vmem:[%s1043 + $0x4] sm:$0xf]
      %v1048 = vunpack.c.l.b16 %v1044
      %v1049 = vunpack.c.l.b16 %v1045
      %v1050 = vpack.c.b16 %v1049, %v1048
      %v1052 = vsel %vm694, %v1050, 0
      %1054 = vmatpush.bf16.msra.mxu0 0
      %1055 = vmatpush.bf16.msra.mxu0 0
      %1056 = vmatpush.bf16.msra.mxu0 0
      %1057 = vmatpush.bf16.msra.mxu0 0
      %1058 = vmatpush.bf16.msra.mxu0 %v776
      %1059 = vmatpush.bf16.msra.mxu0 %v775
      %1060 = vmatpush.bf16.msra.mxu0 %v774
      %1061 = vmatpush.bf16.msra.mxu0 %v773
      %1062 = vmatmul.bf16.gmra.mxu0 %v1052
      %v1063 = vpop.f32.mrf.mxu0
      %v1064 = vadd.f32 0.0, %v1063
      %v1065 = vpop.f32.mrf.mxu0
      %v1066 = vadd.f32 0.0, %v1065
      %1067 = vdwg.mxu0
      %v1068 = vpack.c.bf16 %v1066, %v1064
      %s1069 = scalar_lea.vmem %s6, 128
      %v1070 = vld [vmem:[%s1069] sm:$0xff]
      %v1071 = vld [vmem:[%s1069 + $0x8] sm:$0xff]
      %v1072 = vld [vmem:[%s1069 + $0x10] sm:$0xff]
      %v1073 = vld [vmem:[%s1069 + $0x18] sm:$0xff]
      %v1074 = vld [vmem:[%s1069 + $0x20] sm:$0xff]
      %v1075 = vld [vmem:[%s1069 + $0x28] sm:$0xff]
      %v1076 = vld [vmem:[%s1069 + $0x30] sm:$0xff]
      %v1077 = vld [vmem:[%s1069 + $0x38] sm:$0xff]
      %v1078 = vld [vmem:[%s1069 + $0x40] sm:$0xff]
      %v1079 = vld [vmem:[%s1069 + $0x48] sm:$0xff]
      %v1080 = vld [vmem:[%s1069 + $0x50] sm:$0xff]
      %v1081 = vld [vmem:[%s1069 + $0x58] sm:$0xff]
      %v1082 = vld [vmem:[%s1069 + $0x60] sm:$0xff]
      %v1083 = vld [vmem:[%s1069 + $0x68] sm:$0xff]
      %v1084 = vld [vmem:[%s1069 + $0x70] sm:$0xff]
      %v1085 = vld [vmem:[%s1069 + $0x78] sm:$0xff]
      %v1102 = vunpack.c.l.b16 %v1070
      %v1103 = vunpack.c.h.b16 %v1070
      %v1104 = vunpack.c.l.b16 %v1071
      %v1105 = vunpack.c.h.b16 %v1071
      %v1106 = vunpack.c.l.b16 %v1072
      %v1107 = vunpack.c.h.b16 %v1072
      %v1108 = vunpack.c.l.b16 %v1073
      %v1109 = vunpack.c.h.b16 %v1073
      %v1110 = vunpack.c.l.b16 %v1074
      %v1111 = vunpack.c.h.b16 %v1074
      %v1112 = vunpack.c.l.b16 %v1075
      %v1113 = vunpack.c.h.b16 %v1075
      %v1114 = vunpack.c.l.b16 %v1076
      %v1115 = vunpack.c.h.b16 %v1076
      %v1116 = vunpack.c.l.b16 %v1077
      %v1117 = vunpack.c.h.b16 %v1077
      %v1118 = vunpack.c.l.b16 %v1078
      %v1119 = vunpack.c.h.b16 %v1078
      %v1120 = vunpack.c.l.b16 %v1079
      %v1121 = vunpack.c.h.b16 %v1079
      %v1122 = vunpack.c.l.b16 %v1080
      %v1123 = vunpack.c.h.b16 %v1080
      %v1124 = vunpack.c.l.b16 %v1081
      %v1125 = vunpack.c.h.b16 %v1081
      %v1126 = vunpack.c.l.b16 %v1082
      %v1127 = vunpack.c.h.b16 %v1082
      %v1128 = vunpack.c.l.b16 %v1083
      %v1129 = vunpack.c.h.b16 %v1083
      %v1130 = vunpack.c.l.b16 %v1084
      %v1131 = vunpack.c.h.b16 %v1084
      %v1132 = vunpack.c.l.b16 %v1085
      %v1133 = vunpack.c.h.b16 %v1085
      %v1134 = vpack.c.b16 %v1104, %v1102
      %v1135 = vpack.c.b16 %v1105, %v1103
      %v1136 = vpack.c.b16 %v1108, %v1106
      %v1137 = vpack.c.b16 %v1109, %v1107
      %v1138 = vpack.c.b16 %v1112, %v1110
      %v1139 = vpack.c.b16 %v1113, %v1111
      %v1140 = vpack.c.b16 %v1116, %v1114
      %v1141 = vpack.c.b16 %v1117, %v1115
      %v1142 = vpack.c.b16 %v1120, %v1118
      %v1143 = vpack.c.b16 %v1121, %v1119
      %v1144 = vpack.c.b16 %v1124, %v1122
      %v1145 = vpack.c.b16 %v1125, %v1123
      %v1146 = vpack.c.b16 %v1128, %v1126
      %v1147 = vpack.c.b16 %v1129, %v1127
      %v1148 = vpack.c.b16 %v1132, %v1130
      %v1149 = vpack.c.b16 %v1133, %v1131
      %1166 = vmatpush.bf16.msra.mxu0 %v1148
      %1167 = vmatpush.bf16.msra.mxu0 %v1146
      %1168 = vmatpush.bf16.msra.mxu0 %v1144
      %1169 = vmatpush.bf16.msra.mxu0 %v1142
      %1170 = vmatpush.bf16.msra.mxu0 %v1140
      %1171 = vmatpush.bf16.msra.mxu0 %v1138
      %1172 = vmatpush.bf16.msra.mxu0 %v1136
      %1173 = vmatpush.bf16.msra.mxu0 %v1134
      %1174 = vmatmul.bf16.gmra.mxu0 %v1068
      %v1175 = vpop.f32.mrf.mxu0
      %v1176 = vadd.f32 0.0, %v1175
      %v1177 = vpop.f32.mrf.mxu0
      %v1178 = vadd.f32 0.0, %v1177
      %1179 = vdwg.mxu0
      %1180 = vmatpush.bf16.msra.mxu0 %v1149
      %1181 = vmatpush.bf16.msra.mxu0 %v1147
      %1182 = vmatpush.bf16.msra.mxu0 %v1145
      %1183 = vmatpush.bf16.msra.mxu0 %v1143
      %1184 = vmatpush.bf16.msra.mxu0 %v1141
      %1185 = vmatpush.bf16.msra.mxu0 %v1139
      %1186 = vmatpush.bf16.msra.mxu0 %v1137
      %1187 = vmatpush.bf16.msra.mxu0 %v1135
      %1188 = vmatmul.bf16.gmra.mxu0 %v1068
      %v1189 = vpop.f32.mrf.mxu0
      %v1190 = vadd.f32 0.0, %v1189
      %v1191 = vpop.f32.mrf.mxu0
      %v1192 = vadd.f32 0.0, %v1191
      %1193 = vdwg.mxu0
      %v1194 = vadd.f32 %v1039, %v1176
      %v1195 = vadd.f32 %v1040, %v1190
      %v1196 = vadd.f32 %v1041, %v1178
      %v1197 = vadd.f32 %v1042, %v1192
      %s1198 = scalar_lea.vmem %s5, 16
      %v1199 = vld [vmem:[%s1198] sm:$0xf]
      %v1200 = vld [vmem:[%s1198 + $0x4] sm:$0xf]
      %v1203 = vunpack.c.l.b16 %v1199
      %v1204 = vunpack.c.l.b16 %v1200
      %v1205 = vpack.c.b16 %v1204, %v1203
      %v1207 = vsel %vm694, %v1205, 0
      %1209 = vmatpush.bf16.msra.mxu0 0
      %1210 = vmatpush.bf16.msra.mxu0 0
      %1211 = vmatpush.bf16.msra.mxu0 0
      %1212 = vmatpush.bf16.msra.mxu0 0
      %1213 = vmatpush.bf16.msra.mxu0 %v776
      %1214 = vmatpush.bf16.msra.mxu0 %v775
      %1215 = vmatpush.bf16.msra.mxu0 %v774
      %1216 = vmatpush.bf16.msra.mxu0 %v773
      %1217 = vmatmul.bf16.gmra.mxu0 %v1207
      %v1218 = vpop.f32.mrf.mxu0
      %v1219 = vadd.f32 0.0, %v1218
      %v1220 = vpop.f32.mrf.mxu0
      %v1221 = vadd.f32 0.0, %v1220
      %1222 = vdwg.mxu0
      %v1223 = vpack.c.bf16 %v1221, %v1219
      %s1224 = scalar_lea.vmem %s6, 256
      %v1225 = vld [vmem:[%s1224] sm:$0xff]
      %v1226 = vld [vmem:[%s1224 + $0x8] sm:$0xff]
      %v1227 = vld [vmem:[%s1224 + $0x10] sm:$0xff]
      %v1228 = vld [vmem:[%s1224 + $0x18] sm:$0xff]
      %v1229 = vld [vmem:[%s1224 + $0x20] sm:$0xff]
      %v1230 = vld [vmem:[%s1224 + $0x28] sm:$0xff]
      %v1231 = vld [vmem:[%s1224 + $0x30] sm:$0xff]
      %v1232 = vld [vmem:[%s1224 + $0x38] sm:$0xff]
      %v1233 = vld [vmem:[%s1224 + $0x40] sm:$0xff]
      %v1234 = vld [vmem:[%s1224 + $0x48] sm:$0xff]
      %v1235 = vld [vmem:[%s1224 + $0x50] sm:$0xff]
      %v1236 = vld [vmem:[%s1224 + $0x58] sm:$0xff]
      %v1237 = vld [vmem:[%s1224 + $0x60] sm:$0xff]
      %v1238 = vld [vmem:[%s1224 + $0x68] sm:$0xff]
      %v1239 = vld [vmem:[%s1224 + $0x70] sm:$0xff]
      %v1240 = vld [vmem:[%s1224 + $0x78] sm:$0xff]
      %v1257 = vunpack.c.l.b16 %v1225
      %v1258 = vunpack.c.h.b16 %v1225
      %v1259 = vunpack.c.l.b16 %v1226
      %v1260 = vunpack.c.h.b16 %v1226
      %v1261 = vunpack.c.l.b16 %v1227
      %v1262 = vunpack.c.h.b16 %v1227
      %v1263 = vunpack.c.l.b16 %v1228
      %v1264 = vunpack.c.h.b16 %v1228
      %v1265 = vunpack.c.l.b16 %v1229
      %v1266 = vunpack.c.h.b16 %v1229
      %v1267 = vunpack.c.l.b16 %v1230
      %v1268 = vunpack.c.h.b16 %v1230
      %v1269 = vunpack.c.l.b16 %v1231
      %v1270 = vunpack.c.h.b16 %v1231
      %v1271 = vunpack.c.l.b16 %v1232
      %v1272 = vunpack.c.h.b16 %v1232
      %v1273 = vunpack.c.l.b16 %v1233
      %v1274 = vunpack.c.h.b16 %v1233
      %v1275 = vunpack.c.l.b16 %v1234
      %v1276 = vunpack.c.h.b16 %v1234
      %v1277 = vunpack.c.l.b16 %v1235
      %v1278 = vunpack.c.h.b16 %v1235
      %v1279 = vunpack.c.l.b16 %v1236
      %v1280 = vunpack.c.h.b16 %v1236
      %v1281 = vunpack.c.l.b16 %v1237
      %v1282 = vunpack.c.h.b16 %v1237
      %v1283 = vunpack.c.l.b16 %v1238
      %v1284 = vunpack.c.h.b16 %v1238
      %v1285 = vunpack.c.l.b16 %v1239
      %v1286 = vunpack.c.h.b16 %v1239
      %v1287 = vunpack.c.l.b16 %v1240
      %v1288 = vunpack.c.h.b16 %v1240
      %v1289 = vpack.c.b16 %v1259, %v1257
      %v1290 = vpack.c.b16 %v1260, %v1258
      %v1291 = vpack.c.b16 %v1263, %v1261
      %v1292 = vpack.c.b16 %v1264, %v1262
      %v1293 = vpack.c.b16 %v1267, %v1265
      %v1294 = vpack.c.b16 %v1268, %v1266
      %v1295 = vpack.c.b16 %v1271, %v1269
      %v1296 = vpack.c.b16 %v1272, %v1270
      %v1297 = vpack.c.b16 %v1275, %v1273
      %v1298 = vpack.c.b16 %v1276, %v1274
      %v1299 = vpack.c.b16 %v1279, %v1277
      %v1300 = vpack.c.b16 %v1280, %v1278
      %v1301 = vpack.c.b16 %v1283, %v1281
      %v1302 = vpack.c.b16 %v1284, %v1282
      %v1303 = vpack.c.b16 %v1287, %v1285
      %v1304 = vpack.c.b16 %v1288, %v1286
      %1321 = vmatpush.bf16.msra.mxu0 %v1303
      %1322 = vmatpush.bf16.msra.mxu0 %v1301
      %1323 = vmatpush.bf16.msra.mxu0 %v1299
      %1324 = vmatpush.bf16.msra.mxu0 %v1297
      %1325 = vmatpush.bf16.msra.mxu0 %v1295
      %1326 = vmatpush.bf16.msra.mxu0 %v1293
      %1327 = vmatpush.bf16.msra.mxu0 %v1291
      %1328 = vmatpush.bf16.msra.mxu0 %v1289
      %1329 = vmatmul.bf16.gmra.mxu0 %v1223
      %v1330 = vpop.f32.mrf.mxu0
      %v1331 = vadd.f32 0.0, %v1330
      %v1332 = vpop.f32.mrf.mxu0
      %v1333 = vadd.f32 0.0, %v1332
      %1334 = vdwg.mxu0
      %1335 = vmatpush.bf16.msra.mxu0 %v1304
      %1336 = vmatpush.bf16.msra.mxu0 %v1302
      %1337 = vmatpush.bf16.msra.mxu0 %v1300
      %1338 = vmatpush.bf16.msra.mxu0 %v1298
      %1339 = vmatpush.bf16.msra.mxu0 %v1296
      %1340 = vmatpush.bf16.msra.mxu0 %v1294
      %1341 = vmatpush.bf16.msra.mxu0 %v1292
      %1342 = vmatpush.bf16.msra.mxu0 %v1290
      %1343 = vmatmul.bf16.gmra.mxu0 %v1223
      %v1344 = vpop.f32.mrf.mxu0
      %v1345 = vadd.f32 0.0, %v1344
      %v1346 = vpop.f32.mrf.mxu0
      %v1347 = vadd.f32 0.0, %v1346
      %1348 = vdwg.mxu0
      %v1349 = vadd.f32 %v1194, %v1331
      %v1350 = vadd.f32 %v1195, %v1345
      %v1351 = vadd.f32 %v1196, %v1333
      %v1352 = vadd.f32 %v1197, %v1347
      %s1353 = scalar_lea.vmem %s5, 24
      %v1354 = vld [vmem:[%s1353] sm:$0xf]
      %v1355 = vld [vmem:[%s1353 + $0x4] sm:$0xf]
      %v1358 = vunpack.c.l.b16 %v1354
      %v1359 = vunpack.c.l.b16 %v1355
      %v1360 = vpack.c.b16 %v1359, %v1358
      %v1362 = vsel %vm694, %v1360, 0
      %1364 = vmatpush.bf16.msra.mxu0 0
      %1365 = vmatpush.bf16.msra.mxu0 0
      %1366 = vmatpush.bf16.msra.mxu0 0
      %1367 = vmatpush.bf16.msra.mxu0 0
      %1368 = vmatpush.bf16.msra.mxu0 %v776
      %1369 = vmatpush.bf16.msra.mxu0 %v775
      %1370 = vmatpush.bf16.msra.mxu0 %v774
      %1371 = vmatpush.bf16.msra.mxu0 %v773
      %1372 = vmatmul.bf16.gmra.mxu0 %v1362
      %v1373 = vpop.f32.mrf.mxu0
      %v1374 = vadd.f32 0.0, %v1373
      %v1375 = vpop.f32.mrf.mxu0
      %v1376 = vadd.f32 0.0, %v1375
      %1377 = vdwg.mxu0
      %v1378 = vpack.c.bf16 %v1376, %v1374
      %s1379 = scalar_lea.vmem %s6, 384
      %v1380 = vld [vmem:[%s1379] sm:$0xff]
      %v1381 = vld [vmem:[%s1379 + $0x8] sm:$0xff]
      %v1382 = vld [vmem:[%s1379 + $0x10] sm:$0xff]
      %v1383 = vld [vmem:[%s1379 + $0x18] sm:$0xff]
      %v1384 = vld [vmem:[%s1379 + $0x20] sm:$0xff]
      %v1385 = vld [vmem:[%s1379 + $0x28] sm:$0xff]
      %v1386 = vld [vmem:[%s1379 + $0x30] sm:$0xff]
      %v1387 = vld [vmem:[%s1379 + $0x38] sm:$0xff]
      %v1388 = vld [vmem:[%s1379 + $0x40] sm:$0xff]
      %v1389 = vld [vmem:[%s1379 + $0x48] sm:$0xff]
      %v1390 = vld [vmem:[%s1379 + $0x50] sm:$0xff]
      %v1391 = vld [vmem:[%s1379 + $0x58] sm:$0xff]
      %v1392 = vld [vmem:[%s1379 + $0x60] sm:$0xff]
      %v1393 = vld [vmem:[%s1379 + $0x68] sm:$0xff]
      %v1394 = vld [vmem:[%s1379 + $0x70] sm:$0xff]
      %v1395 = vld [vmem:[%s1379 + $0x78] sm:$0xff]
      %v1412 = vunpack.c.l.b16 %v1380
      %v1413 = vunpack.c.h.b16 %v1380
      %v1414 = vunpack.c.l.b16 %v1381
      %v1415 = vunpack.c.h.b16 %v1381
      %v1416 = vunpack.c.l.b16 %v1382
      %v1417 = vunpack.c.h.b16 %v1382
      %v1418 = vunpack.c.l.b16 %v1383
      %v1419 = vunpack.c.h.b16 %v1383
      %v1420 = vunpack.c.l.b16 %v1384
      %v1421 = vunpack.c.h.b16 %v1384
      %v1422 = vunpack.c.l.b16 %v1385
      %v1423 = vunpack.c.h.b16 %v1385
      %v1424 = vunpack.c.l.b16 %v1386
      %v1425 = vunpack.c.h.b16 %v1386
      %v1426 = vunpack.c.l.b16 %v1387
      %v1427 = vunpack.c.h.b16 %v1387
      %v1428 = vunpack.c.l.b16 %v1388
      %v1429 = vunpack.c.h.b16 %v1388
      %v1430 = vunpack.c.l.b16 %v1389
      %v1431 = vunpack.c.h.b16 %v1389
      %v1432 = vunpack.c.l.b16 %v1390
      %v1433 = vunpack.c.h.b16 %v1390
      %v1434 = vunpack.c.l.b16 %v1391
      %v1435 = vunpack.c.h.b16 %v1391
      %v1436 = vunpack.c.l.b16 %v1392
      %v1437 = vunpack.c.h.b16 %v1392
      %v1438 = vunpack.c.l.b16 %v1393
      %v1439 = vunpack.c.h.b16 %v1393
      %v1440 = vunpack.c.l.b16 %v1394
      %v1441 = vunpack.c.h.b16 %v1394
      %v1442 = vunpack.c.l.b16 %v1395
      %v1443 = vunpack.c.h.b16 %v1395
      %v1444 = vpack.c.b16 %v1414, %v1412
      %v1445 = vpack.c.b16 %v1415, %v1413
      %v1446 = vpack.c.b16 %v1418, %v1416
      %v1447 = vpack.c.b16 %v1419, %v1417
      %v1448 = vpack.c.b16 %v1422, %v1420
      %v1449 = vpack.c.b16 %v1423, %v1421
      %v1450 = vpack.c.b16 %v1426, %v1424
      %v1451 = vpack.c.b16 %v1427, %v1425
      %v1452 = vpack.c.b16 %v1430, %v1428
      %v1453 = vpack.c.b16 %v1431, %v1429
      %v1454 = vpack.c.b16 %v1434, %v1432
      %v1455 = vpack.c.b16 %v1435, %v1433
      %v1456 = vpack.c.b16 %v1438, %v1436
      %v1457 = vpack.c.b16 %v1439, %v1437
      %v1458 = vpack.c.b16 %v1442, %v1440
      %v1459 = vpack.c.b16 %v1443, %v1441
      %1476 = vmatpush.bf16.msra.mxu0 %v1458
      %1477 = vmatpush.bf16.msra.mxu0 %v1456
      %1478 = vmatpush.bf16.msra.mxu0 %v1454
      %1479 = vmatpush.bf16.msra.mxu0 %v1452
      %1480 = vmatpush.bf16.msra.mxu0 %v1450
      %1481 = vmatpush.bf16.msra.mxu0 %v1448
      %1482 = vmatpush.bf16.msra.mxu0 %v1446
      %1483 = vmatpush.bf16.msra.mxu0 %v1444
      %1484 = vmatmul.bf16.gmra.mxu0 %v1378
      %v1485 = vpop.f32.mrf.mxu0
      %v1486 = vadd.f32 0.0, %v1485
      %v1487 = vpop.f32.mrf.mxu0
      %v1488 = vadd.f32 0.0, %v1487
      %1489 = vdwg.mxu0
      %1490 = vmatpush.bf16.msra.mxu0 %v1459
      %1491 = vmatpush.bf16.msra.mxu0 %v1457
      %1492 = vmatpush.bf16.msra.mxu0 %v1455
      %1493 = vmatpush.bf16.msra.mxu0 %v1453
      %1494 = vmatpush.bf16.msra.mxu0 %v1451
      %1495 = vmatpush.bf16.msra.mxu0 %v1449
      %1496 = vmatpush.bf16.msra.mxu0 %v1447
      %1497 = vmatpush.bf16.msra.mxu0 %v1445
      %1498 = vmatmul.bf16.gmra.mxu0 %v1378
      %v1499 = vpop.f32.mrf.mxu0
      %v1500 = vadd.f32 0.0, %v1499
      %v1501 = vpop.f32.mrf.mxu0
      %v1502 = vadd.f32 0.0, %v1501
      %1503 = vdwg.mxu0
      %v1504 = vadd.f32 %v1349, %v1486
      %v1505 = vadd.f32 %v1350, %v1500
      %v1506 = vadd.f32 %v1351, %v1488
      %v1507 = vadd.f32 %v1352, %v1502
      %v1508 = vmax.f32 %v1504, 0.0
      %v1509 = vmax.f32 %v1505, 0.0
      %v1510 = vmax.f32 %v1506, 0.0
      %v1511 = vmax.f32 %v1507, 0.0
      %1512 = vst [vmem:[#allocation2] sm:$0xff] 0
      %1513 = vst [vmem:[#allocation2 + $0x8] sm:$0xf] 0
      %1514 = vst [vmem:[#allocation2 + $0xc] sm:$0x11] 0
      %1515 = vst [vmem:[#allocation2 + $0x14] sm:$0x1] 0
      %s1516 = scalar_lea.vmem [#allocation2], 216
      %1517 = vst [vmem:[%s1516] sm:$0xff] 0
      %1518 = vst [vmem:[%s1516 + $0x8] sm:$0xf] 0
      %1519 = vst [vmem:[%s1516 + $0xc] sm:$0x11] 0
      %1520 = vst [vmem:[%s1516 + $0x14] sm:$0x1] 0
      %s1521 = scalar_lea.vmem [#allocation2], 24
      %vm1522 = vcmask 1040384
      %vm1523 = vsmask.f32 256
      %vm1524 = vmand %vm1522, %vm1523
      %vm1525 = vcmask 1044484
      %vm1526 = vsmask.f32 4352
      %vm1527 = vmand %vm1525, %vm1526
      %vm1528 = vmor %vm1527, %vm1524
      %v1529 = vld [vmem:[%s1521] sm:$0x11]
      %v1530 = vsel %vm1528, 0, %v1529
      %1531 = vst [vmem:[%s1521] sm:$0x11] %v1530
      %v1532 = vld [vmem:[%s1521 + $0x8] sm:$0x1]
      %v1533 = vsel %vm1524, 0, %v1532
      %1534 = vst [vmem:[%s1521 + $0x8] sm:$0x1] %v1533
      %v1535 = vld [vmem:[%s1521 + $0x18] sm:$0x11]
      %v1536 = vsel %vm1528, 0, %v1535
      %1537 = vst [vmem:[%s1521 + $0x18] sm:$0x11] %v1536
      %v1538 = vld [vmem:[%s1521 + $0x20] sm:$0x1]
      %v1539 = vsel %vm1524, 0, %v1538
      %1540 = vst [vmem:[%s1521 + $0x20] sm:$0x1] %v1539
      %v1541 = vld [vmem:[%s1521 + $0x30] sm:$0x11]
      %v1542 = vsel %vm1528, 0, %v1541
      %1543 = vst [vmem:[%s1521 + $0x30] sm:$0x11] %v1542
      %v1544 = vld [vmem:[%s1521 + $0x38] sm:$0x1]
      %v1545 = vsel %vm1524, 0, %v1544
      %1546 = vst [vmem:[%s1521 + $0x38] sm:$0x1] %v1545
      %v1547 = vld [vmem:[%s1521 + $0x48] sm:$0x11]
      %v1548 = vsel %vm1528, 0, %v1547
      %1549 = vst [vmem:[%s1521 + $0x48] sm:$0x11] %v1548
      %v1550 = vld [vmem:[%s1521 + $0x50] sm:$0x1]
      %v1551 = vsel %vm1524, 0, %v1550
      %1552 = vst [vmem:[%s1521 + $0x50] sm:$0x1] %v1551
      %v1553 = vld [vmem:[%s1521 + $0x60] sm:$0x11]
      %v1554 = vsel %vm1528, 0, %v1553
      %1555 = vst [vmem:[%s1521 + $0x60] sm:$0x11] %v1554
      %v1556 = vld [vmem:[%s1521 + $0x68] sm:$0x1]
      %v1557 = vsel %vm1524, 0, %v1556
      %1558 = vst [vmem:[%s1521 + $0x68] sm:$0x1] %v1557
      %v1559 = vld [vmem:[%s1521 + $0x78] sm:$0x11]
      %v1560 = vsel %vm1528, 0, %v1559
      %1561 = vst [vmem:[%s1521 + $0x78] sm:$0x11] %v1560
      %v1562 = vld [vmem:[%s1521 + $0x80] sm:$0x1]
      %v1563 = vsel %vm1524, 0, %v1562
      %1564 = vst [vmem:[%s1521 + $0x80] sm:$0x1] %v1563
      %v1565 = vld [vmem:[%s1521 + $0x90] sm:$0x11]
      %v1566 = vsel %vm1528, 0, %v1565
      %1567 = vst [vmem:[%s1521 + $0x90] sm:$0x11] %v1566
      %v1568 = vld [vmem:[%s1521 + $0x98] sm:$0x1]
      %v1569 = vsel %vm1524, 0, %v1568
      %1570 = vst [vmem:[%s1521 + $0x98] sm:$0x1] %v1569
      %v1571 = vld [vmem:[%s1521 + $0xa8] sm:$0x11]
      %v1572 = vsel %vm1528, 0, %v1571
      %1573 = vst [vmem:[%s1521 + $0xa8] sm:$0x11] %v1572
      %v1574 = vld [vmem:[%s1521 + $0xb0] sm:$0x1]
      %v1575 = vsel %vm1524, 0, %v1574
      %1576 = vst [vmem:[%s1521 + $0xb0] sm:$0x1] %v1575
      %vm1577 = vsmask.f32 7938
      %vm1578 = vmand %vm1522, %vm1577
      %vm1579 = vsmask.f32 7954
      %vm1580 = vmand %vm1525, %vm1579
      %vm1581 = vmor %vm1580, %vm1578
      %v1582 = vld [vmem:[%s1521 + $0xc] sm:$0x11]
      %v1583 = vsel %vm1581, 0, %v1582
      %1584 = vst [vmem:[%s1521 + $0xc] sm:$0x11] %v1583
      %v1585 = vld [vmem:[%s1521 + $0x14] sm:$0x1]
      %v1586 = vsel %vm1578, 0, %v1585
      %1587 = vst [vmem:[%s1521 + $0x14] sm:$0x1] %v1586
      %v1588 = vld [vmem:[%s1521 + $0x24] sm:$0x11]
      %v1589 = vsel %vm1581, 0, %v1588
      %1590 = vst [vmem:[%s1521 + $0x24] sm:$0x11] %v1589
      %v1591 = vld [vmem:[%s1521 + $0x2c] sm:$0x1]
      %v1592 = vsel %vm1578, 0, %v1591
      %1593 = vst [vmem:[%s1521 + $0x2c] sm:$0x1] %v1592
      %v1594 = vld [vmem:[%s1521 + $0x3c] sm:$0x11]
      %v1595 = vsel %vm1581, 0, %v1594
      %1596 = vst [vmem:[%s1521 + $0x3c] sm:$0x11] %v1595
      %v1597 = vld [vmem:[%s1521 + $0x44] sm:$0x1]
      %v1598 = vsel %vm1578, 0, %v1597
      %1599 = vst [vmem:[%s1521 + $0x44] sm:$0x1] %v1598
      %v1600 = vld [vmem:[%s1521 + $0x54] sm:$0x11]
      %v1601 = vsel %vm1581, 0, %v1600
      %1602 = vst [vmem:[%s1521 + $0x54] sm:$0x11] %v1601
      %v1603 = vld [vmem:[%s1521 + $0x5c] sm:$0x1]
      %v1604 = vsel %vm1578, 0, %v1603
      %1605 = vst [vmem:[%s1521 + $0x5c] sm:$0x1] %v1604
      %v1606 = vld [vmem:[%s1521 + $0x6c] sm:$0x11]
      %v1607 = vsel %vm1581, 0, %v1606
      %1608 = vst [vmem:[%s1521 + $0x6c] sm:$0x11] %v1607
      %v1609 = vld [vmem:[%s1521 + $0x74] sm:$0x1]
      %v1610 = vsel %vm1578, 0, %v1609
      %1611 = vst [vmem:[%s1521 + $0x74] sm:$0x1] %v1610
      %v1612 = vld [vmem:[%s1521 + $0x84] sm:$0x11]
      %v1613 = vsel %vm1581, 0, %v1612
      %1614 = vst [vmem:[%s1521 + $0x84] sm:$0x11] %v1613
      %v1615 = vld [vmem:[%s1521 + $0x8c] sm:$0x1]
      %v1616 = vsel %vm1578, 0, %v1615
      %1617 = vst [vmem:[%s1521 + $0x8c] sm:$0x1] %v1616
      %v1618 = vld [vmem:[%s1521 + $0x9c] sm:$0x11]
      %v1619 = vsel %vm1581, 0, %v1618
      %1620 = vst [vmem:[%s1521 + $0x9c] sm:$0x11] %v1619
      %v1621 = vld [vmem:[%s1521 + $0xa4] sm:$0x1]
      %v1622 = vsel %vm1578, 0, %v1621
      %1623 = vst [vmem:[%s1521 + $0xa4] sm:$0x1] %v1622
      %v1624 = vld [vmem:[%s1521 + $0xb4] sm:$0x11]
      %v1625 = vsel %vm1581, 0, %v1624
      %1626 = vst [vmem:[%s1521 + $0xb4] sm:$0x11] %v1625
      %v1627 = vld [vmem:[%s1521 + $0xbc] sm:$0x1]
      %v1628 = vsel %vm1578, 0, %v1627
      %1629 = vst [vmem:[%s1521 + $0xbc] sm:$0x1] %v1628
      %1630 = vst [vmem:[#allocation3] sm:$0xf] 0
      %1631 = vst [vmem:[#allocation3 + $0x4] sm:$0x1] 0
      %s1632 = scalar_lea.vmem [#allocation3], 72
      %1633 = vst [vmem:[%s1632] sm:$0xf] 0
      %1634 = vst [vmem:[%s1632 + $0x4] sm:$0x1] 0
      %s1635 = scalar_lea.vmem [#allocation3], 8
      %v1636 = vld [vmem:[%s1635] sm:$0x1]
      %v1637 = vsel %vm1524, 0, %v1636
      %1638 = vst [vmem:[%s1635] sm:$0x1] %v1637
      %v1639 = vld [vmem:[%s1635 + $0x8] sm:$0x1]
      %v1640 = vsel %vm1524, 0, %v1639
      %1641 = vst [vmem:[%s1635 + $0x8] sm:$0x1] %v1640
      %v1642 = vld [vmem:[%s1635 + $0x10] sm:$0x1]
      %v1643 = vsel %vm1524, 0, %v1642
      %1644 = vst [vmem:[%s1635 + $0x10] sm:$0x1] %v1643
      %v1645 = vld [vmem:[%s1635 + $0x18] sm:$0x1]
      %v1646 = vsel %vm1524, 0, %v1645
      %1647 = vst [vmem:[%s1635 + $0x18] sm:$0x1] %v1646
      %v1648 = vld [vmem:[%s1635 + $0x20] sm:$0x1]
      %v1649 = vsel %vm1524, 0, %v1648
      %1650 = vst [vmem:[%s1635 + $0x20] sm:$0x1] %v1649
      %v1651 = vld [vmem:[%s1635 + $0x28] sm:$0x1]
      %v1652 = vsel %vm1524, 0, %v1651
      %1653 = vst [vmem:[%s1635 + $0x28] sm:$0x1] %v1652
      %v1654 = vld [vmem:[%s1635 + $0x30] sm:$0x1]
      %v1655 = vsel %vm1524, 0, %v1654
      %1656 = vst [vmem:[%s1635 + $0x30] sm:$0x1] %v1655
      %v1657 = vld [vmem:[%s1635 + $0x38] sm:$0x1]
      %v1658 = vsel %vm1524, 0, %v1657
      %1659 = vst [vmem:[%s1635 + $0x38] sm:$0x1] %v1658
      %v1660 = vld [vmem:[%s1635 + $0x4] sm:$0x1]
      %v1661 = vsel %vm1578, 0, %v1660
      %1662 = vst [vmem:[%s1635 + $0x4] sm:$0x1] %v1661
      %v1663 = vld [vmem:[%s1635 + $0xc] sm:$0x1]
      %v1664 = vsel %vm1578, 0, %v1663
      %1665 = vst [vmem:[%s1635 + $0xc] sm:$0x1] %v1664
      %v1666 = vld [vmem:[%s1635 + $0x14] sm:$0x1]
      %v1667 = vsel %vm1578, 0, %v1666
      %1668 = vst [vmem:[%s1635 + $0x14] sm:$0x1] %v1667
      %v1669 = vld [vmem:[%s1635 + $0x1c] sm:$0x1]
      %v1670 = vsel %vm1578, 0, %v1669
      %1671 = vst [vmem:[%s1635 + $0x1c] sm:$0x1] %v1670
      %v1672 = vld [vmem:[%s1635 + $0x24] sm:$0x1]
      %v1673 = vsel %vm1578, 0, %v1672
      %1674 = vst [vmem:[%s1635 + $0x24] sm:$0x1] %v1673
      %v1675 = vld [vmem:[%s1635 + $0x2c] sm:$0x1]
      %v1676 = vsel %vm1578, 0, %v1675
      %1677 = vst [vmem:[%s1635 + $0x2c] sm:$0x1] %v1676
      %v1678 = vld [vmem:[%s1635 + $0x34] sm:$0x1]
      %v1679 = vsel %vm1578, 0, %v1678
      %1680 = vst [vmem:[%s1635 + $0x34] sm:$0x1] %v1679
      %v1681 = vld [vmem:[%s1635 + $0x3c] sm:$0x1]
      %v1682 = vsel %vm1578, 0, %v1681
      %1683 = vst [vmem:[%s1635 + $0x3c] sm:$0x1] %v1682
      %v1684 = vpack.c.bf16 %v874, %v874
      %v1685 = vpack.c.bf16 %v875, %v875
      %v1686 = vpack.c.bf16 %v876, %v876
      %v1687 = vpack.c.bf16 %v877, %v877
      %v1688 = vpack.c.bf16 %v878, %v878
      %v1689 = vpack.c.bf16 %v879, %v879
      %v1690 = vpack.c.bf16 %v880, %v880
      %v1691 = vpack.c.bf16 %v881, %v881
      %v1693 = vshrl.u32 %v1684, 16
      %v1695 = vrot.slane %v1693, 7
      %v1696 = vshll.u32 %v1684, 16
      %v1698 = vor.u32 %v1695, %v1696
      %v1699 = vrot.slane %v1695, 4
      %v1701 = vshrl.u32 %v1685, 16
      %v1703 = vrot.slane %v1701, 7
      %v1704 = vshll.u32 %v1685, 16
      %v1706 = vor.u32 %v1703, %v1704
      %v1707 = vrot.slane %v1703, 4
      %v1709 = vshrl.u32 %v1686, 16
      %v1711 = vrot.slane %v1709, 7
      %v1712 = vshll.u32 %v1686, 16
      %v1714 = vor.u32 %v1711, %v1712
      %v1715 = vrot.slane %v1711, 4
      %v1717 = vshrl.u32 %v1687, 16
      %v1719 = vrot.slane %v1717, 7
      %v1720 = vshll.u32 %v1687, 16
      %v1722 = vor.u32 %v1719, %v1720
      %v1723 = vrot.slane %v1719, 4
      %v1725 = vshrl.u32 %v1688, 16
      %v1727 = vrot.slane %v1725, 7
      %v1728 = vshll.u32 %v1688, 16
      %v1730 = vor.u32 %v1727, %v1728
      %v1731 = vrot.slane %v1727, 4
      %v1733 = vshrl.u32 %v1689, 16
      %v1735 = vrot.slane %v1733, 7
      %v1736 = vshll.u32 %v1689, 16
      %v1738 = vor.u32 %v1735, %v1736
      %v1739 = vrot.slane %v1735, 4
      %v1741 = vshrl.u32 %v1690, 16
      %v1743 = vrot.slane %v1741, 7
      %v1744 = vshll.u32 %v1690, 16
      %v1746 = vor.u32 %v1743, %v1744
      %v1747 = vrot.slane %v1743, 4
      %v1749 = vshrl.u32 %v1691, 16
      %v1751 = vrot.slane %v1749, 7
      %v1752 = vshll.u32 %v1691, 16
      %v1754 = vor.u32 %v1751, %v1752
      %v1755 = vrot.slane %v1751, 4
      %vm1772 = vcmask 1043456
      %vm1773 = vmand %vm1772, %vm1577
      %v1774 = vld [vmem:[%s1521] sm:$0xf]
      %v1775 = vsel %vm1773, %v1698, %v1774
      %1776 = vst [vmem:[%s1521] sm:$0xf] %v1775
      %v1777 = vld [vmem:[%s1521 + $0xc] sm:$0x1]
      %v1778 = vsel %vm1524, %v1699, %v1777
      %1779 = vst [vmem:[%s1521 + $0xc] sm:$0x1] %v1778
      %v1780 = vld [vmem:[%s1521 + $0x18] sm:$0xf]
      %v1781 = vsel %vm1773, %v1706, %v1780
      %1782 = vst [vmem:[%s1521 + $0x18] sm:$0xf] %v1781
      %v1783 = vld [vmem:[%s1521 + $0x24] sm:$0x1]
      %v1784 = vsel %vm1524, %v1707, %v1783
      %1785 = vst [vmem:[%s1521 + $0x24] sm:$0x1] %v1784
      %v1786 = vld [vmem:[%s1521 + $0x30] sm:$0xf]
      %v1787 = vsel %vm1773, %v1714, %v1786
      %1788 = vst [vmem:[%s1521 + $0x30] sm:$0xf] %v1787
      %v1789 = vld [vmem:[%s1521 + $0x3c] sm:$0x1]
      %v1790 = vsel %vm1524, %v1715, %v1789
      %1791 = vst [vmem:[%s1521 + $0x3c] sm:$0x1] %v1790
      %v1792 = vld [vmem:[%s1521 + $0x48] sm:$0xf]
      %v1793 = vsel %vm1773, %v1722, %v1792
      %1794 = vst [vmem:[%s1521 + $0x48] sm:$0xf] %v1793
      %v1795 = vld [vmem:[%s1521 + $0x54] sm:$0x1]
      %v1796 = vsel %vm1524, %v1723, %v1795
      %1797 = vst [vmem:[%s1521 + $0x54] sm:$0x1] %v1796
      %v1798 = vld [vmem:[%s1521 + $0x60] sm:$0xf]
      %v1799 = vsel %vm1773, %v1730, %v1798
      %1800 = vst [vmem:[%s1521 + $0x60] sm:$0xf] %v1799
      %v1801 = vld [vmem:[%s1521 + $0x6c] sm:$0x1]
      %v1802 = vsel %vm1524, %v1731, %v1801
      %1803 = vst [vmem:[%s1521 + $0x6c] sm:$0x1] %v1802
      %v1804 = vld [vmem:[%s1521 + $0x78] sm:$0xf]
      %v1805 = vsel %vm1773, %v1738, %v1804
      %1806 = vst [vmem:[%s1521 + $0x78] sm:$0xf] %v1805
      %v1807 = vld [vmem:[%s1521 + $0x84] sm:$0x1]
      %v1808 = vsel %vm1524, %v1739, %v1807
      %1809 = vst [vmem:[%s1521 + $0x84] sm:$0x1] %v1808
      %v1810 = vld [vmem:[%s1521 + $0x90] sm:$0xf]
      %v1811 = vsel %vm1773, %v1746, %v1810
      %1812 = vst [vmem:[%s1521 + $0x90] sm:$0xf] %v1811
      %v1813 = vld [vmem:[%s1521 + $0x9c] sm:$0x1]
      %v1814 = vsel %vm1524, %v1747, %v1813
      %1815 = vst [vmem:[%s1521 + $0x9c] sm:$0x1] %v1814
      %v1816 = vld [vmem:[%s1521 + $0xa8] sm:$0xf]
      %v1817 = vsel %vm1773, %v1754, %v1816
      %1818 = vst [vmem:[%s1521 + $0xa8] sm:$0xf] %v1817
      %v1819 = vld [vmem:[%s1521 + $0xb4] sm:$0x1]
      %v1820 = vsel %vm1524, %v1755, %v1819
      %1821 = vst [vmem:[%s1521 + $0xb4] sm:$0x1] %v1820
      %v1822 = vld [vmem:[%s8] sm:$0xf]
      %v1823 = vld [vmem:[%s8 + $0x4] sm:$0xf]
      %v1824 = vld [vmem:[%s8 + $0x8] sm:$0xf]
      %v1825 = vld [vmem:[%s8 + $0xc] sm:$0xf]
      %v1826 = vld [vmem:[%s8 + $0x10] sm:$0xf]
      %v1827 = vld [vmem:[%s8 + $0x14] sm:$0xf]
      %v1828 = vld [vmem:[%s8 + $0x18] sm:$0xf]
      %v1829 = vld [vmem:[%s8 + $0x1c] sm:$0xf]
      %v1830 = vpack.c.bf16 %v1510, %v1508
      %v1831 = vpack.c.bf16 %v1511, %v1509
      %v1840 = vunpack.c.l.b16 %v1822
      %v1841 = vunpack.c.l.b16 %v1823
      %v1842 = vunpack.c.l.b16 %v1824
      %v1843 = vunpack.c.l.b16 %v1825
      %v1844 = vunpack.c.l.b16 %v1826
      %v1845 = vunpack.c.l.b16 %v1827
      %v1846 = vunpack.c.l.b16 %v1828
      %v1847 = vunpack.c.l.b16 %v1829
      %v1848 = vpack.c.b16 %v1841, %v1840
      %v1849 = vpack.c.b16 %v1843, %v1842
      %v1850 = vpack.c.b16 %v1845, %v1844
      %v1851 = vpack.c.b16 %v1847, %v1846
      %vm1852 = vcmask 130048
      %v1854 = vsel %vm1852, %v1848, 0
      %v1857 = vsel %vm1852, %v1849, 0
      %v1860 = vsel %vm1852, %v1850, 0
      %v1863 = vsel %vm1852, %v1851, 0
      %1865 = vmatpush.bf16.msra.mxu0 0
      %1866 = vmatpush.bf16.msra.mxu0 0
      %1867 = vmatpush.bf16.msra.mxu0 0
      %1868 = vmatpush.bf16.msra.mxu0 0
      %1869 = vmatpush.bf16.msra.mxu0 0
      %1870 = vmatpush.bf16.msra.mxu0 0
      %1871 = vmatpush.bf16.msra.mxu0 0
      %1872 = vmatpush.bf16.msra.mxu0 %v1830
      %1873 = vmatmul.bf16.gmra.mxu0 %v1854
      %v1874 = vpop.f32.mrf.mxu0
      %v1875 = vadd.f32 0.0, %v1874
      %v1876 = vpop.f32.mrf.mxu0
      %v1877 = vadd.f32 0.0, %v1876
      %1878 = vmatmul.bf16.gmra.mxu0 %v1857
      %v1879 = vpop.f32.mrf.mxu0
      %v1880 = vadd.f32 0.0, %v1879
      %v1881 = vpop.f32.mrf.mxu0
      %v1882 = vadd.f32 0.0, %v1881
      %1883 = vmatmul.bf16.gmra.mxu0 %v1860
      %v1884 = vpop.f32.mrf.mxu0
      %v1885 = vadd.f32 0.0, %v1884
      %v1886 = vpop.f32.mrf.mxu0
      %v1887 = vadd.f32 0.0, %v1886
      %1888 = vmatmul.bf16.gmra.mxu0 %v1863
      %v1889 = vpop.f32.mrf.mxu0
      %v1890 = vadd.f32 0.0, %v1889
      %v1891 = vpop.f32.mrf.mxu0
      %v1892 = vadd.f32 0.0, %v1891
      %1893 = vdwg.mxu0
      %1894 = vmatpush.bf16.msra.mxu0 0
      %1895 = vmatpush.bf16.msra.mxu0 0
      %1896 = vmatpush.bf16.msra.mxu0 0
      %1897 = vmatpush.bf16.msra.mxu0 0
      %1898 = vmatpush.bf16.msra.mxu0 0
      %1899 = vmatpush.bf16.msra.mxu0 0
      %1900 = vmatpush.bf16.msra.mxu0 0
      %1901 = vmatpush.bf16.msra.mxu0 %v1831
      %1902 = vmatmul.bf16.gmra.mxu0 %v1854
      %v1903 = vpop.f32.mrf.mxu0
      %v1904 = vadd.f32 0.0, %v1903
      %v1905 = vpop.f32.mrf.mxu0
      %v1906 = vadd.f32 0.0, %v1905
      %1907 = vmatmul.bf16.gmra.mxu0 %v1857
      %v1908 = vpop.f32.mrf.mxu0
      %v1909 = vadd.f32 0.0, %v1908
      %v1910 = vpop.f32.mrf.mxu0
      %v1911 = vadd.f32 0.0, %v1910
      %1912 = vmatmul.bf16.gmra.mxu0 %v1860
      %v1913 = vpop.f32.mrf.mxu0
      %v1914 = vadd.f32 0.0, %v1913
      %v1915 = vpop.f32.mrf.mxu0
      %v1916 = vadd.f32 0.0, %v1915
      %1917 = vmatmul.bf16.gmra.mxu0 %v1863
      %v1918 = vpop.f32.mrf.mxu0
      %v1919 = vadd.f32 0.0, %v1918
      %v1920 = vpop.f32.mrf.mxu0
      %v1921 = vadd.f32 0.0, %v1920
      %1922 = vdwg.mxu0
      %v1923 = vpack.c.bf16 %v1904, %v1875
      %v1924 = vpack.c.bf16 %v1906, %v1877
      %v1925 = vpack.c.bf16 %v1909, %v1880
      %v1926 = vpack.c.bf16 %v1911, %v1882
      %v1927 = vpack.c.bf16 %v1914, %v1885
      %v1928 = vpack.c.bf16 %v1916, %v1887
      %v1929 = vpack.c.bf16 %v1919, %v1890
      %v1930 = vpack.c.bf16 %v1921, %v1892
      %v1932 = vshrl.u32 %v1923, 16
      %v1934 = vrot.slane %v1932, 7
      %v1935 = vshll.u32 %v1923, 16
      %v1937 = vor.u32 %v1934, %v1935
      %v1938 = vrot.slane %v1934, 4
      %v1940 = vshrl.u32 %v1924, 16
      %v1942 = vrot.slane %v1940, 7
      %v1943 = vshll.u32 %v1924, 16
      %v1945 = vor.u32 %v1942, %v1943
      %v1946 = vrot.slane %v1942, 4
      %v1948 = vshrl.u32 %v1925, 16
      %v1950 = vrot.slane %v1948, 7
      %v1951 = vshll.u32 %v1925, 16
      %v1953 = vor.u32 %v1950, %v1951
      %v1954 = vrot.slane %v1950, 4
      %v1956 = vshrl.u32 %v1926, 16
      %v1958 = vrot.slane %v1956, 7
      %v1959 = vshll.u32 %v1926, 16
      %v1961 = vor.u32 %v1958, %v1959
      %v1962 = vrot.slane %v1958, 4
      %v1964 = vshrl.u32 %v1927, 16
      %v1966 = vrot.slane %v1964, 7
      %v1967 = vshll.u32 %v1927, 16
      %v1969 = vor.u32 %v1966, %v1967
      %v1970 = vrot.slane %v1966, 4
      %v1972 = vshrl.u32 %v1928, 16
      %v1974 = vrot.slane %v1972, 7
      %v1975 = vshll.u32 %v1928, 16
      %v1977 = vor.u32 %v1974, %v1975
      %v1978 = vrot.slane %v1974, 4
      %v1980 = vshrl.u32 %v1929, 16
      %v1982 = vrot.slane %v1980, 7
      %v1983 = vshll.u32 %v1929, 16
      %v1985 = vor.u32 %v1982, %v1983
      %v1986 = vrot.slane %v1982, 4
      %v1988 = vshrl.u32 %v1930, 16
      %v1990 = vrot.slane %v1988, 7
      %v1991 = vshll.u32 %v1930, 16
      %v1993 = vor.u32 %v1990, %v1991
      %v1994 = vrot.slane %v1990, 4
      %vm2011 = vcmask 1047556
      %vm2012 = vmand %vm2011, %vm1579
      %vm2013 = vmor %vm2012, %vm1773
      %v2014 = vld [vmem:[%s1521 + $0x4] sm:$0xff]
      %v2015 = vsel %vm2013, %v1937, %v2014
      %2016 = vst [vmem:[%s1521 + $0x4] sm:$0xff] %v2015
      %v2017 = vld [vmem:[%s1521 + $0x10] sm:$0x11]
      %v2018 = vsel %vm1528, %v1938, %v2017
      %2019 = vst [vmem:[%s1521 + $0x10] sm:$0x11] %v2018
      %v2020 = vld [vmem:[%s1521 + $0x1c] sm:$0xff]
      %v2021 = vsel %vm2013, %v1945, %v2020
      %2022 = vst [vmem:[%s1521 + $0x1c] sm:$0xff] %v2021
      %v2023 = vld [vmem:[%s1521 + $0x28] sm:$0x11]
      %v2024 = vsel %vm1528, %v1946, %v2023
      %2025 = vst [vmem:[%s1521 + $0x28] sm:$0x11] %v2024
      %v2026 = vld [vmem:[%s1521 + $0x34] sm:$0xff]
      %v2027 = vsel %vm2013, %v1953, %v2026
      %2028 = vst [vmem:[%s1521 + $0x34] sm:$0xff] %v2027
      %v2029 = vld [vmem:[%s1521 + $0x40] sm:$0x11]
      %v2030 = vsel %vm1528, %v1954, %v2029
      %2031 = vst [vmem:[%s1521 + $0x40] sm:$0x11] %v2030
      %v2032 = vld [vmem:[%s1521 + $0x4c] sm:$0xff]
      %v2033 = vsel %vm2013, %v1961, %v2032
      %2034 = vst [vmem:[%s1521 + $0x4c] sm:$0xff] %v2033
      %v2035 = vld [vmem:[%s1521 + $0x58] sm:$0x11]
      %v2036 = vsel %vm1528, %v1962, %v2035
      %2037 = vst [vmem:[%s1521 + $0x58] sm:$0x11] %v2036
      %v2038 = vld [vmem:[%s1521 + $0x64] sm:$0xff]
      %v2039 = vsel %vm2013, %v1969, %v2038
      %2040 = vst [vmem:[%s1521 + $0x64] sm:$0xff] %v2039
      %v2041 = vld [vmem:[%s1521 + $0x70] sm:$0x11]
      %v2042 = vsel %vm1528, %v1970, %v2041
      %2043 = vst [vmem:[%s1521 + $0x70] sm:$0x11] %v2042
      %v2044 = vld [vmem:[%s1521 + $0x7c] sm:$0xff]
      %v2045 = vsel %vm2013, %v1977, %v2044
      %2046 = vst [vmem:[%s1521 + $0x7c] sm:$0xff] %v2045
      %v2047 = vld [vmem:[%s1521 + $0x88] sm:$0x11]
      %v2048 = vsel %vm1528, %v1978, %v2047
      %2049 = vst [vmem:[%s1521 + $0x88] sm:$0x11] %v2048
      %v2050 = vld [vmem:[%s1521 + $0x94] sm:$0xff]
      %v2051 = vsel %vm2013, %v1985, %v2050
      %2052 = vst [vmem:[%s1521 + $0x94] sm:$0xff] %v2051
      %v2053 = vld [vmem:[%s1521 + $0xa0] sm:$0x11]
      %v2054 = vsel %vm1528, %v1986, %v2053
      %2055 = vst [vmem:[%s1521 + $0xa0] sm:$0x11] %v2054
      %v2056 = vld [vmem:[%s1521 + $0xac] sm:$0xff]
      %v2057 = vsel %vm2013, %v1993, %v2056
      %2058 = vst [vmem:[%s1521 + $0xac] sm:$0xff] %v2057
      %v2059 = vld [vmem:[%s1521 + $0xb8] sm:$0x11]
      %v2060 = vsel %vm1528, %v1994, %v2059
      %2061 = vst [vmem:[%s1521 + $0xb8] sm:$0x11] %v2060
      %v2062 = vld [vmem:[#allocation2] sm:$0xff]
      %v2063 = vld [vmem:[#allocation2 + $0x8] sm:$0xf]
      %v2064 = vld [vmem:[#allocation2 + $0x18] sm:$0xff]
      %v2065 = vld [vmem:[#allocation2 + $0x20] sm:$0xf]
      %v2066 = vld [vmem:[#allocation2 + $0x30] sm:$0xff]
      %v2067 = vld [vmem:[#allocation2 + $0x38] sm:$0xf]
      %v2068 = vld [vmem:[#allocation2 + $0x48] sm:$0xff]
      %v2069 = vld [vmem:[#allocation2 + $0x50] sm:$0xf]
      %v2070 = vld [vmem:[#allocation2 + $0x60] sm:$0xff]
      %v2071 = vld [vmem:[#allocation2 + $0x68] sm:$0xf]
      %v2072 = vld [vmem:[#allocation2 + $0x78] sm:$0xff]
      %v2073 = vld [vmem:[#allocation2 + $0x80] sm:$0xf]
      %v2074 = vld [vmem:[#allocation2 + $0x90] sm:$0xff]
      %v2075 = vld [vmem:[#allocation2 + $0x98] sm:$0xf]
      %v2076 = vld [vmem:[#allocation2 + $0xa8] sm:$0xff]
      %v2077 = vld [vmem:[#allocation2 + $0xb0] sm:$0xf]
      %2078 = vst [vmem:[#allocation4] sm:$0xff] %v2062
      %2079 = vst [vmem:[#allocation4 + $0x8] sm:$0xf] %v2063
      %2080 = vst [vmem:[#allocation4 + $0x6c] sm:$0xff] %v2064
      %2081 = vst [vmem:[#allocation4 + $0x74] sm:$0xf] %v2065
      %2082 = vst [vmem:[#allocation4 + $0xd8] sm:$0xff] %v2066
      %2083 = vst [vmem:[#allocation4 + $0xe0] sm:$0xf] %v2067
      %2084 = vst [vmem:[#allocation4 + $0x144] sm:$0xff] %v2068
      %2085 = vst [vmem:[#allocation4 + $0x14c] sm:$0xf] %v2069
      %2086 = vst [vmem:[#allocation4 + $0x1b0] sm:$0xff] %v2070
      %2087 = vst [vmem:[#allocation4 + $0x1b8] sm:$0xf] %v2071
      %2088 = vst [vmem:[#allocation4 + $0x21c] sm:$0xff] %v2072
      %2089 = vst [vmem:[#allocation4 + $0x224] sm:$0xf] %v2073
      %2090 = vst [vmem:[#allocation4 + $0x288] sm:$0xff] %v2074
      %2091 = vst [vmem:[#allocation4 + $0x290] sm:$0xf] %v2075
      %2092 = vst [vmem:[#allocation4 + $0x2f4] sm:$0xff] %v2076
      %2093 = vst [vmem:[#allocation4 + $0x2fc] sm:$0xf] %v2077
      %v2094 = vld [vmem:[#allocation2] sm:$0xff]
      %v2095 = vld [vmem:[#allocation2 + $0x8] sm:$0xf]
      %v2096 = vld [vmem:[#allocation2 + $0xc] sm:$0x11]
      %v2097 = vld [vmem:[#allocation2 + $0x14] sm:$0x1]
      %v2098 = vld [vmem:[#allocation2 + $0x18] sm:$0xff]
      %v2099 = vld [vmem:[#allocation2 + $0x20] sm:$0xf]
      %v2100 = vld [vmem:[#allocation2 + $0x24] sm:$0x11]
      %v2101 = vld [vmem:[#allocation2 + $0x2c] sm:$0x1]
      %v2102 = vld [vmem:[#allocation2 + $0x30] sm:$0xff]
      %v2103 = vld [vmem:[#allocation2 + $0x38] sm:$0xf]
      %v2104 = vld [vmem:[#allocation2 + $0x3c] sm:$0x11]
      %v2105 = vld [vmem:[#allocation2 + $0x44] sm:$0x1]
      %v2106 = vld [vmem:[#allocation2 + $0x48] sm:$0xff]
      %v2107 = vld [vmem:[#allocation2 + $0x50] sm:$0xf]
      %v2108 = vld [vmem:[#allocation2 + $0x54] sm:$0x11]
      %v2109 = vld [vmem:[#allocation2 + $0x5c] sm:$0x1]
      %v2110 = vld [vmem:[#allocation2 + $0x60] sm:$0xff]
      %v2111 = vld [vmem:[#allocation2 + $0x68] sm:$0xf]
      %v2112 = vld [vmem:[#allocation2 + $0x6c] sm:$0x11]
      %v2113 = vld [vmem:[#allocation2 + $0x74] sm:$0x1]
      %v2114 = vld [vmem:[#allocation2 + $0x78] sm:$0xff]
      %v2115 = vld [vmem:[#allocation2 + $0x80] sm:$0xf]
      %v2116 = vld [vmem:[#allocation2 + $0x84] sm:$0x11]
      %v2117 = vld [vmem:[#allocation2 + $0x8c] sm:$0x1]
      %v2118 = vld [vmem:[#allocation2 + $0x90] sm:$0xff]
      %v2119 = vld [vmem:[#allocation2 + $0x98] sm:$0xf]
      %v2120 = vld [vmem:[#allocation2 + $0x9c] sm:$0x11]
      %v2121 = vld [vmem:[#allocation2 + $0xa4] sm:$0x1]
      %v2122 = vld [vmem:[#allocation2 + $0xa8] sm:$0xff]
      %v2123 = vld [vmem:[#allocation2 + $0xb0] sm:$0xf]
      %v2124 = vld [vmem:[#allocation2 + $0xb4] sm:$0x11]
      %v2125 = vld [vmem:[#allocation2 + $0xbc] sm:$0x1]
      %vm2126 = vsmask.f32 3328
      %vm2127 = vsmask.f32 7440
      %vm2128 = vmor %vm2126, %vm2127
      %v2130 = vshrl.u32 %v2094, 16
      %v2132 = vrot.slane %v2130, 4
      %v2133 = vshll.u32 %v2094, 16
      %v2135 = vrot.slane %v2133, 5
      %v2136 = vor.u32 %v2132, %v2135
      %v2137 = vrot.slane %v2136, 4
      %v2139 = vshll.u32 %v2096, 16
      %v2141 = vrot.slane %v2139, 5
      %v2142 = vsel %vm2128, %v2137, %v2141
      %v2144 = vshrl.u32 %v2095, 16
      %v2146 = vrot.slane %v2144, 4
      %v2147 = vshll.u32 %v2095, 16
      %v2149 = vrot.slane %v2147, 5
      %v2150 = vor.u32 %v2146, %v2149
      %v2151 = vrot.slane %v2150, 4
      %v2153 = vshll.u32 %v2097, 16
      %v2155 = vrot.slane %v2153, 5
      %v2156 = vsel %vm2128, %v2151, %v2155
      %v2158 = vshrl.u32 %v2098, 16
      %v2160 = vrot.slane %v2158, 4
      %v2161 = vshll.u32 %v2098, 16
      %v2163 = vrot.slane %v2161, 5
      %v2164 = vor.u32 %v2160, %v2163
      %v2165 = vrot.slane %v2164, 4
      %v2167 = vshll.u32 %v2100, 16
      %v2169 = vrot.slane %v2167, 5
      %v2170 = vsel %vm2128, %v2165, %v2169
      %v2172 = vshrl.u32 %v2099, 16
      %v2174 = vrot.slane %v2172, 4
      %v2175 = vshll.u32 %v2099, 16
      %v2177 = vrot.slane %v2175, 5
      %v2178 = vor.u32 %v2174, %v2177
      %v2179 = vrot.slane %v2178, 4
      %v2181 = vshll.u32 %v2101, 16
      %v2183 = vrot.slane %v2181, 5
      %v2184 = vsel %vm2128, %v2179, %v2183
      %v2186 = vshrl.u32 %v2102, 16
      %v2188 = vrot.slane %v2186, 4
      %v2189 = vshll.u32 %v2102, 16
      %v2191 = vrot.slane %v2189, 5
      %v2192 = vor.u32 %v2188, %v2191
      %v2193 = vrot.slane %v2192, 4
      %v2195 = vshll.u32 %v2104, 16
      %v2197 = vrot.slane %v2195, 5
      %v2198 = vsel %vm2128, %v2193, %v2197
      %v2200 = vshrl.u32 %v2103, 16
      %v2202 = vrot.slane %v2200, 4
      %v2203 = vshll.u32 %v2103, 16
      %v2205 = vrot.slane %v2203, 5
      %v2206 = vor.u32 %v2202, %v2205
      %v2207 = vrot.slane %v2206, 4
      %v2209 = vshll.u32 %v2105, 16
      %v2211 = vrot.slane %v2209, 5
      %v2212 = vsel %vm2128, %v2207, %v2211
      %v2214 = vshrl.u32 %v2106, 16
      %v2216 = vrot.slane %v2214, 4
      %v2217 = vshll.u32 %v2106, 16
      %v2219 = vrot.slane %v2217, 5
      %v2220 = vor.u32 %v2216, %v2219
      %v2221 = vrot.slane %v2220, 4
      %v2223 = vshll.u32 %v2108, 16
      %v2225 = vrot.slane %v2223, 5
      %v2226 = vsel %vm2128, %v2221, %v2225
      %v2228 = vshrl.u32 %v2107, 16
      %v2230 = vrot.slane %v2228, 4
      %v2231 = vshll.u32 %v2107, 16
      %v2233 = vrot.slane %v2231, 5
      %v2234 = vor.u32 %v2230, %v2233
      %v2235 = vrot.slane %v2234, 4
      %v2237 = vshll.u32 %v2109, 16
      %v2239 = vrot.slane %v2237, 5
      %v2240 = vsel %vm2128, %v2235, %v2239
      %v2242 = vshrl.u32 %v2110, 16
      %v2244 = vrot.slane %v2242, 4
      %v2245 = vshll.u32 %v2110, 16
      %v2247 = vrot.slane %v2245, 5
      %v2248 = vor.u32 %v2244, %v2247
      %v2249 = vrot.slane %v2248, 4
      %v2251 = vshll.u32 %v2112, 16
      %v2253 = vrot.slane %v2251, 5
      %v2254 = vsel %vm2128, %v2249, %v2253
      %v2256 = vshrl.u32 %v2111, 16
      %v2258 = vrot.slane %v2256, 4
      %v2259 = vshll.u32 %v2111, 16
      %v2261 = vrot.slane %v2259, 5
      %v2262 = vor.u32 %v2258, %v2261
      %v2263 = vrot.slane %v2262, 4
      %v2265 = vshll.u32 %v2113, 16
      %v2267 = vrot.slane %v2265, 5
      %v2268 = vsel %vm2128, %v2263, %v2267
      %v2270 = vshrl.u32 %v2114, 16
      %v2272 = vrot.slane %v2270, 4
      %v2273 = vshll.u32 %v2114, 16
      %v2275 = vrot.slane %v2273, 5
      %v2276 = vor.u32 %v2272, %v2275
      %v2277 = vrot.slane %v2276, 4
      %v2279 = vshll.u32 %v2116, 16
      %v2281 = vrot.slane %v2279, 5
      %v2282 = vsel %vm2128, %v2277, %v2281
      %v2284 = vshrl.u32 %v2115, 16
      %v2286 = vrot.slane %v2284, 4
      %v2287 = vshll.u32 %v2115, 16
      %v2289 = vrot.slane %v2287, 5
      %v2290 = vor.u32 %v2286, %v2289
      %v2291 = vrot.slane %v2290, 4
      %v2293 = vshll.u32 %v2117, 16
      %v2295 = vrot.slane %v2293, 5
      %v2296 = vsel %vm2128, %v2291, %v2295
      %v2298 = vshrl.u32 %v2118, 16
      %v2300 = vrot.slane %v2298, 4
      %v2301 = vshll.u32 %v2118, 16
      %v2303 = vrot.slane %v2301, 5
      %v2304 = vor.u32 %v2300, %v2303
      %v2305 = vrot.slane %v2304, 4
      %v2307 = vshll.u32 %v2120, 16
      %v2309 = vrot.slane %v2307, 5
      %v2310 = vsel %vm2128, %v2305, %v2309
      %v2312 = vshrl.u32 %v2119, 16
      %v2314 = vrot.slane %v2312, 4
      %v2315 = vshll.u32 %v2119, 16
      %v2317 = vrot.slane %v2315, 5
      %v2318 = vor.u32 %v2314, %v2317
      %v2319 = vrot.slane %v2318, 4
      %v2321 = vshll.u32 %v2121, 16
      %v2323 = vrot.slane %v2321, 5
      %v2324 = vsel %vm2128, %v2319, %v2323
      %v2326 = vshrl.u32 %v2122, 16
      %v2328 = vrot.slane %v2326, 4
      %v2329 = vshll.u32 %v2122, 16
      %v2331 = vrot.slane %v2329, 5
      %v2332 = vor.u32 %v2328, %v2331
      %v2333 = vrot.slane %v2332, 4
      %v2335 = vshll.u32 %v2124, 16
      %v2337 = vrot.slane %v2335, 5
      %v2338 = vsel %vm2128, %v2333, %v2337
      %v2340 = vshrl.u32 %v2123, 16
      %v2342 = vrot.slane %v2340, 4
      %v2343 = vshll.u32 %v2123, 16
      %v2345 = vrot.slane %v2343, 5
      %v2346 = vor.u32 %v2342, %v2345
      %v2347 = vrot.slane %v2346, 4
      %v2349 = vshll.u32 %v2125, 16
      %v2351 = vrot.slane %v2349, 5
      %v2352 = vsel %vm2128, %v2347, %v2351
      %2369 = vst [vmem:[#allocation4 + $0xc] sm:$0xff] %v2142
      %2370 = vst [vmem:[#allocation4 + $0x14] sm:$0xf] %v2156
      %2371 = vst [vmem:[#allocation4 + $0x78] sm:$0xff] %v2170
      %2372 = vst [vmem:[#allocation4 + $0x80] sm:$0xf] %v2184
      %2373 = vst [vmem:[#allocation4 + $0xe4] sm:$0xff] %v2198
      %2374 = vst [vmem:[#allocation4 + $0xec] sm:$0xf] %v2212
      %2375 = vst [vmem:[#allocation4 + $0x150] sm:$0xff] %v2226
      %2376 = vst [vmem:[#allocation4 + $0x158] sm:$0xf] %v2240
      %2377 = vst [vmem:[#allocation4 + $0x1bc] sm:$0xff] %v2254
      %2378 = vst [vmem:[#allocation4 + $0x1c4] sm:$0xf] %v2268
      %2379 = vst [vmem:[#allocation4 + $0x228] sm:$0xff] %v2282
      %2380 = vst [vmem:[#allocation4 + $0x230] sm:$0xf] %v2296
      %2381 = vst [vmem:[#allocation4 + $0x294] sm:$0xff] %v2310
      %2382 = vst [vmem:[#allocation4 + $0x29c] sm:$0xf] %v2324
      %2383 = vst [vmem:[#allocation4 + $0x300] sm:$0xff] %v2338
      %2384 = vst [vmem:[#allocation4 + $0x308] sm:$0xf] %v2352
      %v2385 = vld [vmem:[#allocation2] sm:$0xee]
      %v2386 = vld [vmem:[#allocation2 + $0x8] sm:$0xe]
      %v2387 = vld [vmem:[#allocation2 + $0xc] sm:$0x11]
      %v2388 = vld [vmem:[#allocation2 + $0x14] sm:$0x1]
      %v2389 = vld [vmem:[#allocation2 + $0x18] sm:$0xee]
      %v2390 = vld [vmem:[#allocation2 + $0x20] sm:$0xe]
      %v2391 = vld [vmem:[#allocation2 + $0x24] sm:$0x11]
      %v2392 = vld [vmem:[#allocation2 + $0x2c] sm:$0x1]
      %v2393 = vld [vmem:[#allocation2 + $0x30] sm:$0xee]
      %v2394 = vld [vmem:[#allocation2 + $0x38] sm:$0xe]
      %v2395 = vld [vmem:[#allocation2 + $0x3c] sm:$0x11]
      %v2396 = vld [vmem:[#allocation2 + $0x44] sm:$0x1]
      %v2397 = vld [vmem:[#allocation2 + $0x48] sm:$0xee]
      %v2398 = vld [vmem:[#allocation2 + $0x50] sm:$0xe]
      %v2399 = vld [vmem:[#allocation2 + $0x54] sm:$0x11]
      %v2400 = vld [vmem:[#allocation2 + $0x5c] sm:$0x1]
      %v2401 = vld [vmem:[#allocation2 + $0x60] sm:$0xee]
      %v2402 = vld [vmem:[#allocation2 + $0x68] sm:$0xe]
      %v2403 = vld [vmem:[#allocation2 + $0x6c] sm:$0x11]
      %v2404 = vld [vmem:[#allocation2 + $0x74] sm:$0x1]
      %v2405 = vld [vmem:[#allocation2 + $0x78] sm:$0xee]
      %v2406 = vld [vmem:[#allocation2 + $0x80] sm:$0xe]
      %v2407 = vld [vmem:[#allocation2 + $0x84] sm:$0x11]
      %v2408 = vld [vmem:[#allocation2 + $0x8c] sm:$0x1]
      %v2409 = vld [vmem:[#allocation2 + $0x90] sm:$0xee]
      %v2410 = vld [vmem:[#allocation2 + $0x98] sm:$0xe]
      %v2411 = vld [vmem:[#allocation2 + $0x9c] sm:$0x11]
      %v2412 = vld [vmem:[#allocation2 + $0xa4] sm:$0x1]
      %v2413 = vld [vmem:[#allocation2 + $0xa8] sm:$0xee]
      %v2414 = vld [vmem:[#allocation2 + $0xb0] sm:$0xe]
      %v2415 = vld [vmem:[#allocation2 + $0xb4] sm:$0x11]
      %v2416 = vld [vmem:[#allocation2 + $0xbc] sm:$0x1]
      %vm2449 = vcmask 1042432
      %vm2450 = vcmask 1046532
      %vm2451 = vmor %vm2449, %vm2450
      %v2452 = vrot.slane %v2385, 5
      %v2453 = vrot.slane %v2452, 4
      %v2454 = vrot.slane %v2387, 5
      %v2455 = vsel %vm2451, %v2453, %v2454
      %v2456 = vrot.slane %v2386, 5
      %v2457 = vrot.slane %v2456, 4
      %v2458 = vrot.slane %v2388, 5
      %v2459 = vsel %vm2451, %v2457, %v2458
      %v2460 = vrot.slane %v2389, 5
      %v2461 = vrot.slane %v2460, 4
      %v2462 = vrot.slane %v2391, 5
      %v2463 = vsel %vm2451, %v2461, %v2462
      %v2464 = vrot.slane %v2390, 5
      %v2465 = vrot.slane %v2464, 4
      %v2466 = vrot.slane %v2392, 5
      %v2467 = vsel %vm2451, %v2465, %v2466
      %v2468 = vrot.slane %v2393, 5
      %v2469 = vrot.slane %v2468, 4
      %v2470 = vrot.slane %v2395, 5
      %v2471 = vsel %vm2451, %v2469, %v2470
      %v2472 = vrot.slane %v2394, 5
      %v2473 = vrot.slane %v2472, 4
      %v2474 = vrot.slane %v2396, 5
      %v2475 = vsel %vm2451, %v2473, %v2474
      %v2476 = vrot.slane %v2397, 5
      %v2477 = vrot.slane %v2476, 4
      %v2478 = vrot.slane %v2399, 5
      %v2479 = vsel %vm2451, %v2477, %v2478
      %v2480 = vrot.slane %v2398, 5
      %v2481 = vrot.slane %v2480, 4
      %v2482 = vrot.slane %v2400, 5
      %v2483 = vsel %vm2451, %v2481, %v2482
      %v2484 = vrot.slane %v2401, 5
      %v2485 = vrot.slane %v2484, 4
      %v2486 = vrot.slane %v2403, 5
      %v2487 = vsel %vm2451, %v2485, %v2486
      %v2488 = vrot.slane %v2402, 5
      %v2489 = vrot.slane %v2488, 4
      %v2490 = vrot.slane %v2404, 5
      %v2491 = vsel %vm2451, %v2489, %v2490
      %v2492 = vrot.slane %v2405, 5
      %v2493 = vrot.slane %v2492, 4
      %v2494 = vrot.slane %v2407, 5
      %v2495 = vsel %vm2451, %v2493, %v2494
      %v2496 = vrot.slane %v2406, 5
      %v2497 = vrot.slane %v2496, 4
      %v2498 = vrot.slane %v2408, 5
      %v2499 = vsel %vm2451, %v2497, %v2498
      %v2500 = vrot.slane %v2409, 5
      %v2501 = vrot.slane %v2500, 4
      %v2502 = vrot.slane %v2411, 5
      %v2503 = vsel %vm2451, %v2501, %v2502
      %v2504 = vrot.slane %v2410, 5
      %v2505 = vrot.slane %v2504, 4
      %v2506 = vrot.slane %v2412, 5
      %v2507 = vsel %vm2451, %v2505, %v2506
      %v2508 = vrot.slane %v2413, 5
      %v2509 = vrot.slane %v2508, 4
      %v2510 = vrot.slane %v2415, 5
      %v2511 = vsel %vm2451, %v2509, %v2510
      %v2512 = vrot.slane %v2414, 5
      %v2513 = vrot.slane %v2512, 4
      %v2514 = vrot.slane %v2416, 5
      %v2515 = vsel %vm2451, %v2513, %v2514
      %2532 = vst [vmem:[#allocation4 + $0x18] sm:$0xff] %v2455
      %2533 = vst [vmem:[#allocation4 + $0x20] sm:$0xf] %v2459
      %2534 = vst [vmem:[#allocation4 + $0x84] sm:$0xff] %v2463
      %2535 = vst [vmem:[#allocation4 + $0x8c] sm:$0xf] %v2467
      %2536 = vst [vmem:[#allocation4 + $0xf0] sm:$0xff] %v2471
      %2537 = vst [vmem:[#allocation4 + $0xf8] sm:$0xf] %v2475
      %2538 = vst [vmem:[#allocation4 + $0x15c] sm:$0xff] %v2479
      %2539 = vst [vmem:[#allocation4 + $0x164] sm:$0xf] %v2483
      %2540 = vst [vmem:[#allocation4 + $0x1c8] sm:$0xff] %v2487
      %2541 = vst [vmem:[#allocation4 + $0x1d0] sm:$0xf] %v2491
      %2542 = vst [vmem:[#allocation4 + $0x234] sm:$0xff] %v2495
      %2543 = vst [vmem:[#allocation4 + $0x23c] sm:$0xf] %v2499
      %2544 = vst [vmem:[#allocation4 + $0x2a0] sm:$0xff] %v2503
      %2545 = vst [vmem:[#allocation4 + $0x2a8] sm:$0xf] %v2507
      %2546 = vst [vmem:[#allocation4 + $0x30c] sm:$0xff] %v2511
      %2547 = vst [vmem:[#allocation4 + $0x314] sm:$0xf] %v2515
      %v2548 = vld [vmem:[%s1521] sm:$0xff]
      %v2549 = vld [vmem:[%s1521 + $0x8] sm:$0xf]
      %v2550 = vld [vmem:[%s1521 + $0x18] sm:$0xff]
      %v2551 = vld [vmem:[%s1521 + $0x20] sm:$0xf]
      %v2552 = vld [vmem:[%s1521 + $0x30] sm:$0xff]
      %v2553 = vld [vmem:[%s1521 + $0x38] sm:$0xf]
      %v2554 = vld [vmem:[%s1521 + $0x48] sm:$0xff]
      %v2555 = vld [vmem:[%s1521 + $0x50] sm:$0xf]
      %v2556 = vld [vmem:[%s1521 + $0x60] sm:$0xff]
      %v2557 = vld [vmem:[%s1521 + $0x68] sm:$0xf]
      %v2558 = vld [vmem:[%s1521 + $0x78] sm:$0xff]
      %v2559 = vld [vmem:[%s1521 + $0x80] sm:$0xf]
      %v2560 = vld [vmem:[%s1521 + $0x90] sm:$0xff]
      %v2561 = vld [vmem:[%s1521 + $0x98] sm:$0xf]
      %v2562 = vld [vmem:[%s1521 + $0xa8] sm:$0xff]
      %v2563 = vld [vmem:[%s1521 + $0xb0] sm:$0xf]
      %2564 = vst [vmem:[#allocation4 + $0x24] sm:$0xff] %v2548
      %2565 = vst [vmem:[#allocation4 + $0x2c] sm:$0xf] %v2549
      %2566 = vst [vmem:[#allocation4 + $0x90] sm:$0xff] %v2550
      %2567 = vst [vmem:[#allocation4 + $0x98] sm:$0xf] %v2551
      %2568 = vst [vmem:[#allocation4 + $0xfc] sm:$0xff] %v2552
      %2569 = vst [vmem:[#allocation4 + $0x104] sm:$0xf] %v2553
      %2570 = vst [vmem:[#allocation4 + $0x168] sm:$0xff] %v2554
      %2571 = vst [vmem:[#allocation4 + $0x170] sm:$0xf] %v2555
      %2572 = vst [vmem:[#allocation4 + $0x1d4] sm:$0xff] %v2556
      %2573 = vst [vmem:[#allocation4 + $0x1dc] sm:$0xf] %v2557
      %2574 = vst [vmem:[#allocation4 + $0x240] sm:$0xff] %v2558
      %2575 = vst [vmem:[#allocation4 + $0x248] sm:$0xf] %v2559
      %2576 = vst [vmem:[#allocation4 + $0x2ac] sm:$0xff] %v2560
      %2577 = vst [vmem:[#allocation4 + $0x2b4] sm:$0xf] %v2561
      %2578 = vst [vmem:[#allocation4 + $0x318] sm:$0xff] %v2562
      %2579 = vst [vmem:[#allocation4 + $0x320] sm:$0xf] %v2563
      %v2580 = vld [vmem:[%s1521] sm:$0xff]
      %v2581 = vld [vmem:[%s1521 + $0x8] sm:$0xf]
      %v2582 = vld [vmem:[%s1521 + $0xc] sm:$0x11]
      %v2583 = vld [vmem:[%s1521 + $0x14] sm:$0x1]
      %v2584 = vld [vmem:[%s1521 + $0x18] sm:$0xff]
      %v2585 = vld [vmem:[%s1521 + $0x20] sm:$0xf]
      %v2586 = vld [vmem:[%s1521 + $0x24] sm:$0x11]
      %v2587 = vld [vmem:[%s1521 + $0x2c] sm:$0x1]
      %v2588 = vld [vmem:[%s1521 + $0x30] sm:$0xff]
      %v2589 = vld [vmem:[%s1521 + $0x38] sm:$0xf]
      %v2590 = vld [vmem:[%s1521 + $0x3c] sm:$0x11]
      %v2591 = vld [vmem:[%s1521 + $0x44] sm:$0x1]
      %v2592 = vld [vmem:[%s1521 + $0x48] sm:$0xff]
      %v2593 = vld [vmem:[%s1521 + $0x50] sm:$0xf]
      %v2594 = vld [vmem:[%s1521 + $0x54] sm:$0x11]
      %v2595 = vld [vmem:[%s1521 + $0x5c] sm:$0x1]
      %v2596 = vld [vmem:[%s1521 + $0x60] sm:$0xff]
      %v2597 = vld [vmem:[%s1521 + $0x68] sm:$0xf]
      %v2598 = vld [vmem:[%s1521 + $0x6c] sm:$0x11]
      %v2599 = vld [vmem:[%s1521 + $0x74] sm:$0x1]
      %v2600 = vld [vmem:[%s1521 + $0x78] sm:$0xff]
      %v2601 = vld [vmem:[%s1521 + $0x80] sm:$0xf]
      %v2602 = vld [vmem:[%s1521 + $0x84] sm:$0x11]
      %v2603 = vld [vmem:[%s1521 + $0x8c] sm:$0x1]
      %v2604 = vld [vmem:[%s1521 + $0x90] sm:$0xff]
      %v2605 = vld [vmem:[%s1521 + $0x98] sm:$0xf]
      %v2606 = vld [vmem:[%s1521 + $0x9c] sm:$0x11]
      %v2607 = vld [vmem:[%s1521 + $0xa4] sm:$0x1]
      %v2608 = vld [vmem:[%s1521 + $0xa8] sm:$0xff]
      %v2609 = vld [vmem:[%s1521 + $0xb0] sm:$0xf]
      %v2610 = vld [vmem:[%s1521 + $0xb4] sm:$0x11]
      %v2611 = vld [vmem:[%s1521 + $0xbc] sm:$0x1]
      %v2613 = vshrl.u32 %v2580, 16
      %v2615 = vrot.slane %v2613, 4
      %v2616 = vshll.u32 %v2580, 16
      %v2618 = vrot.slane %v2616, 5
      %v2619 = vor.u32 %v2615, %v2618
      %v2620 = vrot.slane %v2619, 4
      %v2622 = vshll.u32 %v2582, 16
      %v2624 = vrot.slane %v2622, 5
      %v2625 = vsel %vm2128, %v2620, %v2624
      %v2627 = vshrl.u32 %v2581, 16
      %v2629 = vrot.slane %v2627, 4
      %v2630 = vshll.u32 %v2581, 16
      %v2632 = vrot.slane %v2630, 5
      %v2633 = vor.u32 %v2629, %v2632
      %v2634 = vrot.slane %v2633, 4
      %v2636 = vshll.u32 %v2583, 16
      %v2638 = vrot.slane %v2636, 5
      %v2639 = vsel %vm2128, %v2634, %v2638
      %v2641 = vshrl.u32 %v2584, 16
      %v2643 = vrot.slane %v2641, 4
      %v2644 = vshll.u32 %v2584, 16
      %v2646 = vrot.slane %v2644, 5
      %v2647 = vor.u32 %v2643, %v2646
      %v2648 = vrot.slane %v2647, 4
      %v2650 = vshll.u32 %v2586, 16
      %v2652 = vrot.slane %v2650, 5
      %v2653 = vsel %vm2128, %v2648, %v2652
      %v2655 = vshrl.u32 %v2585, 16
      %v2657 = vrot.slane %v2655, 4
      %v2658 = vshll.u32 %v2585, 16
      %v2660 = vrot.slane %v2658, 5
      %v2661 = vor.u32 %v2657, %v2660
      %v2662 = vrot.slane %v2661, 4
      %v2664 = vshll.u32 %v2587, 16
      %v2666 = vrot.slane %v2664, 5
      %v2667 = vsel %vm2128, %v2662, %v2666
      %v2669 = vshrl.u32 %v2588, 16
      %v2671 = vrot.slane %v2669, 4
      %v2672 = vshll.u32 %v2588, 16
      %v2674 = vrot.slane %v2672, 5
      %v2675 = vor.u32 %v2671, %v2674
      %v2676 = vrot.slane %v2675, 4
      %v2678 = vshll.u32 %v2590, 16
      %v2680 = vrot.slane %v2678, 5
      %v2681 = vsel %vm2128, %v2676, %v2680
      %v2683 = vshrl.u32 %v2589, 16
      %v2685 = vrot.slane %v2683, 4
      %v2686 = vshll.u32 %v2589, 16
      %v2688 = vrot.slane %v2686, 5
      %v2689 = vor.u32 %v2685, %v2688
      %v2690 = vrot.slane %v2689, 4
      %v2692 = vshll.u32 %v2591, 16
      %v2694 = vrot.slane %v2692, 5
      %v2695 = vsel %vm2128, %v2690, %v2694
      %v2697 = vshrl.u32 %v2592, 16
      %v2699 = vrot.slane %v2697, 4
      %v2700 = vshll.u32 %v2592, 16
      %v2702 = vrot.slane %v2700, 5
      %v2703 = vor.u32 %v2699, %v2702
      %v2704 = vrot.slane %v2703, 4
      %v2706 = vshll.u32 %v2594, 16
      %v2708 = vrot.slane %v2706, 5
      %v2709 = vsel %vm2128, %v2704, %v2708
      %v2711 = vshrl.u32 %v2593, 16
      %v2713 = vrot.slane %v2711, 4
      %v2714 = vshll.u32 %v2593, 16
      %v2716 = vrot.slane %v2714, 5
      %v2717 = vor.u32 %v2713, %v2716
      %v2718 = vrot.slane %v2717, 4
      %v2720 = vshll.u32 %v2595, 16
      %v2722 = vrot.slane %v2720, 5
      %v2723 = vsel %vm2128, %v2718, %v2722
      %v2725 = vshrl.u32 %v2596, 16
      %v2727 = vrot.slane %v2725, 4
      %v2728 = vshll.u32 %v2596, 16
      %v2730 = vrot.slane %v2728, 5
      %v2731 = vor.u32 %v2727, %v2730
      %v2732 = vrot.slane %v2731, 4
      %v2734 = vshll.u32 %v2598, 16
      %v2736 = vrot.slane %v2734, 5
      %v2737 = vsel %vm2128, %v2732, %v2736
      %v2739 = vshrl.u32 %v2597, 16
      %v2741 = vrot.slane %v2739, 4
      %v2742 = vshll.u32 %v2597, 16
      %v2744 = vrot.slane %v2742, 5
      %v2745 = vor.u32 %v2741, %v2744
      %v2746 = vrot.slane %v2745, 4
      %v2748 = vshll.u32 %v2599, 16
      %v2750 = vrot.slane %v2748, 5
      %v2751 = vsel %vm2128, %v2746, %v2750
      %v2753 = vshrl.u32 %v2600, 16
      %v2755 = vrot.slane %v2753, 4
      %v2756 = vshll.u32 %v2600, 16
      %v2758 = vrot.slane %v2756, 5
      %v2759 = vor.u32 %v2755, %v2758
      %v2760 = vrot.slane %v2759, 4
      %v2762 = vshll.u32 %v2602, 16
      %v2764 = vrot.slane %v2762, 5
      %v2765 = vsel %vm2128, %v2760, %v2764
      %v2767 = vshrl.u32 %v2601, 16
      %v2769 = vrot.slane %v2767, 4
      %v2770 = vshll.u32 %v2601, 16
      %v2772 = vrot.slane %v2770, 5
      %v2773 = vor.u32 %v2769, %v2772
      %v2774 = vrot.slane %v2773, 4
      %v2776 = vshll.u32 %v2603, 16
      %v2778 = vrot.slane %v2776, 5
      %v2779 = vsel %vm2128, %v2774, %v2778
      %v2781 = vshrl.u32 %v2604, 16
      %v2783 = vrot.slane %v2781, 4
      %v2784 = vshll.u32 %v2604, 16
      %v2786 = vrot.slane %v2784, 5
      %v2787 = vor.u32 %v2783, %v2786
      %v2788 = vrot.slane %v2787, 4
      %v2790 = vshll.u32 %v2606, 16
      %v2792 = vrot.slane %v2790, 5
      %v2793 = vsel %vm2128, %v2788, %v2792
      %v2795 = vshrl.u32 %v2605, 16
      %v2797 = vrot.slane %v2795, 4
      %v2798 = vshll.u32 %v2605, 16
      %v2800 = vrot.slane %v2798, 5
      %v2801 = vor.u32 %v2797, %v2800
      %v2802 = vrot.slane %v2801, 4
      %v2804 = vshll.u32 %v2607, 16
      %v2806 = vrot.slane %v2804, 5
      %v2807 = vsel %vm2128, %v2802, %v2806
      %v2809 = vshrl.u32 %v2608, 16
      %v2811 = vrot.slane %v2809, 4
      %v2812 = vshll.u32 %v2608, 16
      %v2814 = vrot.slane %v2812, 5
      %v2815 = vor.u32 %v2811, %v2814
      %v2816 = vrot.slane %v2815, 4
      %v2818 = vshll.u32 %v2610, 16
      %v2820 = vrot.slane %v2818, 5
      %v2821 = vsel %vm2128, %v2816, %v2820
      %v2823 = vshrl.u32 %v2609, 16
      %v2825 = vrot.slane %v2823, 4
      %v2826 = vshll.u32 %v2609, 16
      %v2828 = vrot.slane %v2826, 5
      %v2829 = vor.u32 %v2825, %v2828
      %v2830 = vrot.slane %v2829, 4
      %v2832 = vshll.u32 %v2611, 16
      %v2834 = vrot.slane %v2832, 5
      %v2835 = vsel %vm2128, %v2830, %v2834
      %2852 = vst [vmem:[#allocation4 + $0x30] sm:$0xff] %v2625
      %2853 = vst [vmem:[#allocation4 + $0x38] sm:$0xf] %v2639
      %2854 = vst [vmem:[#allocation4 + $0x9c] sm:$0xff] %v2653
      %2855 = vst [vmem:[#allocation4 + $0xa4] sm:$0xf] %v2667
      %2856 = vst [vmem:[#allocation4 + $0x108] sm:$0xff] %v2681
      %2857 = vst [vmem:[#allocation4 + $0x110] sm:$0xf] %v2695
      %2858 = vst [vmem:[#allocation4 + $0x174] sm:$0xff] %v2709
      %2859 = vst [vmem:[#allocation4 + $0x17c] sm:$0xf] %v2723
      %2860 = vst [vmem:[#allocation4 + $0x1e0] sm:$0xff] %v2737
      %2861 = vst [vmem:[#allocation4 + $0x1e8] sm:$0xf] %v2751
      %2862 = vst [vmem:[#allocation4 + $0x24c] sm:$0xff] %v2765
      %2863 = vst [vmem:[#allocation4 + $0x254] sm:$0xf] %v2779
      %2864 = vst [vmem:[#allocation4 + $0x2b8] sm:$0xff] %v2793
      %2865 = vst [vmem:[#allocation4 + $0x2c0] sm:$0xf] %v2807
      %2866 = vst [vmem:[#allocation4 + $0x324] sm:$0xff] %v2821
      %2867 = vst [vmem:[#allocation4 + $0x32c] sm:$0xf] %v2835
      %v2868 = vld [vmem:[%s1521] sm:$0xee]
      %v2869 = vld [vmem:[%s1521 + $0x8] sm:$0xe]
      %v2870 = vld [vmem:[%s1521 + $0xc] sm:$0x11]
      %v2871 = vld [vmem:[%s1521 + $0x14] sm:$0x1]
      %v2872 = vld [vmem:[%s1521 + $0x18] sm:$0xee]
      %v2873 = vld [vmem:[%s1521 + $0x20] sm:$0xe]
      %v2874 = vld [vmem:[%s1521 + $0x24] sm:$0x11]
      %v2875 = vld [vmem:[%s1521 + $0x2c] sm:$0x1]
      %v2876 = vld [vmem:[%s1521 + $0x30] sm:$0xee]
      %v2877 = vld [vmem:[%s1521 + $0x38] sm:$0xe]
      %v2878 = vld [vmem:[%s1521 + $0x3c] sm:$0x11]
      %v2879 = vld [vmem:[%s1521 + $0x44] sm:$0x1]
      %v2880 = vld [vmem:[%s1521 + $0x48] sm:$0xee]
      %v2881 = vld [vmem:[%s1521 + $0x50] sm:$0xe]
      %v2882 = vld [vmem:[%s1521 + $0x54] sm:$0x11]
      %v2883 = vld [vmem:[%s1521 + $0x5c] sm:$0x1]
      %v2884 = vld [vmem:[%s1521 + $0x60] sm:$0xee]
      %v2885 = vld [vmem:[%s1521 + $0x68] sm:$0xe]
      %v2886 = vld [vmem:[%s1521 + $0x6c] sm:$0x11]
      %v2887 = vld [vmem:[%s1521 + $0x74] sm:$0x1]
      %v2888 = vld [vmem:[%s1521 + $0x78] sm:$0xee]
      %v2889 = vld [vmem:[%s1521 + $0x80] sm:$0xe]
      %v2890 = vld [vmem:[%s1521 + $0x84] sm:$0x11]
      %v2891 = vld [vmem:[%s1521 + $0x8c] sm:$0x1]
      %v2892 = vld [vmem:[%s1521 + $0x90] sm:$0xee]
      %v2893 = vld [vmem:[%s1521 + $0x98] sm:$0xe]
      %v2894 = vld [vmem:[%s1521 + $0x9c] sm:$0x11]
      %v2895 = vld [vmem:[%s1521 + $0xa4] sm:$0x1]
      %v2896 = vld [vmem:[%s1521 + $0xa8] sm:$0xee]
      %v2897 = vld [vmem:[%s1521 + $0xb0] sm:$0xe]
      %v2898 = vld [vmem:[%s1521 + $0xb4] sm:$0x11]
      %v2899 = vld [vmem:[%s1521 + $0xbc] sm:$0x1]
      %v2932 = vrot.slane %v2868, 5
      %v2933 = vrot.slane %v2932, 4
      %v2934 = vrot.slane %v2870, 5
      %v2935 = vsel %vm2451, %v2933, %v2934
      %v2936 = vrot.slane %v2869, 5
      %v2937 = vrot.slane %v2936, 4
      %v2938 = vrot.slane %v2871, 5
      %v2939 = vsel %vm2451, %v2937, %v2938
      %v2940 = vrot.slane %v2872, 5
      %v2941 = vrot.slane %v2940, 4
      %v2942 = vrot.slane %v2874, 5
      %v2943 = vsel %vm2451, %v2941, %v2942
      %v2944 = vrot.slane %v2873, 5
      %v2945 = vrot.slane %v2944, 4
      %v2946 = vrot.slane %v2875, 5
      %v2947 = vsel %vm2451, %v2945, %v2946
      %v2948 = vrot.slane %v2876, 5
      %v2949 = vrot.slane %v2948, 4
      %v2950 = vrot.slane %v2878, 5
      %v2951 = vsel %vm2451, %v2949, %v2950
      %v2952 = vrot.slane %v2877, 5
      %v2953 = vrot.slane %v2952, 4
      %v2954 = vrot.slane %v2879, 5
      %v2955 = vsel %vm2451, %v2953, %v2954
      %v2956 = vrot.slane %v2880, 5
      %v2957 = vrot.slane %v2956, 4
      %v2958 = vrot.slane %v2882, 5
      %v2959 = vsel %vm2451, %v2957, %v2958
      %v2960 = vrot.slane %v2881, 5
      %v2961 = vrot.slane %v2960, 4
      %v2962 = vrot.slane %v2883, 5
      %v2963 = vsel %vm2451, %v2961, %v2962
      %v2964 = vrot.slane %v2884, 5
      %v2965 = vrot.slane %v2964, 4
      %v2966 = vrot.slane %v2886, 5
      %v2967 = vsel %vm2451, %v2965, %v2966
      %v2968 = vrot.slane %v2885, 5
      %v2969 = vrot.slane %v2968, 4
      %v2970 = vrot.slane %v2887, 5
      %v2971 = vsel %vm2451, %v2969, %v2970
      %v2972 = vrot.slane %v2888, 5
      %v2973 = vrot.slane %v2972, 4
      %v2974 = vrot.slane %v2890, 5
      %v2975 = vsel %vm2451, %v2973, %v2974
      %v2976 = vrot.slane %v2889, 5
      %v2977 = vrot.slane %v2976, 4
      %v2978 = vrot.slane %v2891, 5
      %v2979 = vsel %vm2451, %v2977, %v2978
      %v2980 = vrot.slane %v2892, 5
      %v2981 = vrot.slane %v2980, 4
      %v2982 = vrot.slane %v2894, 5
      %v2983 = vsel %vm2451, %v2981, %v2982
      %v2984 = vrot.slane %v2893, 5
      %v2985 = vrot.slane %v2984, 4
      %v2986 = vrot.slane %v2895, 5
      %v2987 = vsel %vm2451, %v2985, %v2986
      %v2988 = vrot.slane %v2896, 5
      %v2989 = vrot.slane %v2988, 4
      %v2990 = vrot.slane %v2898, 5
      %v2991 = vsel %vm2451, %v2989, %v2990
      %v2992 = vrot.slane %v2897, 5
      %v2993 = vrot.slane %v2992, 4
      %v2994 = vrot.slane %v2899, 5
      %v2995 = vsel %vm2451, %v2993, %v2994
      %3012 = vst [vmem:[#allocation4 + $0x3c] sm:$0xff] %v2935
      %3013 = vst [vmem:[#allocation4 + $0x44] sm:$0xf] %v2939
      %3014 = vst [vmem:[#allocation4 + $0xa8] sm:$0xff] %v2943
      %3015 = vst [vmem:[#allocation4 + $0xb0] sm:$0xf] %v2947
      %3016 = vst [vmem:[#allocation4 + $0x114] sm:$0xff] %v2951
      %3017 = vst [vmem:[#allocation4 + $0x11c] sm:$0xf] %v2955
      %3018 = vst [vmem:[#allocation4 + $0x180] sm:$0xff] %v2959
      %3019 = vst [vmem:[#allocation4 + $0x188] sm:$0xf] %v2963
      %3020 = vst [vmem:[#allocation4 + $0x1ec] sm:$0xff] %v2967
      %3021 = vst [vmem:[#allocation4 + $0x1f4] sm:$0xf] %v2971
      %3022 = vst [vmem:[#allocation4 + $0x258] sm:$0xff] %v2975
      %3023 = vst [vmem:[#allocation4 + $0x260] sm:$0xf] %v2979
      %3024 = vst [vmem:[#allocation4 + $0x2c4] sm:$0xff] %v2983
      %3025 = vst [vmem:[#allocation4 + $0x2cc] sm:$0xf] %v2987
      %3026 = vst [vmem:[#allocation4 + $0x330] sm:$0xff] %v2991
      %3027 = vst [vmem:[#allocation4 + $0x338] sm:$0xf] %v2995
      %s3028 = scalar_lea.vmem [#allocation2], 48
      %v3029 = vld [vmem:[%s3028] sm:$0xff]
      %v3030 = vld [vmem:[%s3028 + $0x8] sm:$0xf]
      %v3031 = vld [vmem:[%s3028 + $0x18] sm:$0xff]
      %v3032 = vld [vmem:[%s3028 + $0x20] sm:$0xf]
      %v3033 = vld [vmem:[%s3028 + $0x30] sm:$0xff]
      %v3034 = vld [vmem:[%s3028 + $0x38] sm:$0xf]
      %v3035 = vld [vmem:[%s3028 + $0x48] sm:$0xff]
      %v3036 = vld [vmem:[%s3028 + $0x50] sm:$0xf]
      %v3037 = vld [vmem:[%s3028 + $0x60] sm:$0xff]
      %v3038 = vld [vmem:[%s3028 + $0x68] sm:$0xf]
      %v3039 = vld [vmem:[%s3028 + $0x78] sm:$0xff]
      %v3040 = vld [vmem:[%s3028 + $0x80] sm:$0xf]
      %v3041 = vld [vmem:[%s3028 + $0x90] sm:$0xff]
      %v3042 = vld [vmem:[%s3028 + $0x98] sm:$0xf]
      %v3043 = vld [vmem:[%s3028 + $0xa8] sm:$0xff]
      %v3044 = vld [vmem:[%s3028 + $0xb0] sm:$0xf]
      %3045 = vst [vmem:[#allocation4 + $0x48] sm:$0xff] %v3029
      %3046 = vst [vmem:[#allocation4 + $0x50] sm:$0xf] %v3030
      %3047 = vst [vmem:[#allocation4 + $0xb4] sm:$0xff] %v3031
      %3048 = vst [vmem:[#allocation4 + $0xbc] sm:$0xf] %v3032
      %3049 = vst [vmem:[#allocation4 + $0x120] sm:$0xff] %v3033
      %3050 = vst [vmem:[#allocation4 + $0x128] sm:$0xf] %v3034
      %3051 = vst [vmem:[#allocation4 + $0x18c] sm:$0xff] %v3035
      %3052 = vst [vmem:[#allocation4 + $0x194] sm:$0xf] %v3036
      %3053 = vst [vmem:[#allocation4 + $0x1f8] sm:$0xff] %v3037
      %3054 = vst [vmem:[#allocation4 + $0x200] sm:$0xf] %v3038
      %3055 = vst [vmem:[#allocation4 + $0x264] sm:$0xff] %v3039
      %3056 = vst [vmem:[#allocation4 + $0x26c] sm:$0xf] %v3040
      %3057 = vst [vmem:[#allocation4 + $0x2d0] sm:$0xff] %v3041
      %3058 = vst [vmem:[#allocation4 + $0x2d8] sm:$0xf] %v3042
      %3059 = vst [vmem:[#allocation4 + $0x33c] sm:$0xff] %v3043
      %3060 = vst [vmem:[#allocation4 + $0x344] sm:$0xf] %v3044
      %v3061 = vld [vmem:[%s3028] sm:$0xff]
      %v3062 = vld [vmem:[%s3028 + $0x8] sm:$0xf]
      %v3063 = vld [vmem:[%s3028 + $0xc] sm:$0x11]
      %v3064 = vld [vmem:[%s3028 + $0x14] sm:$0x1]
      %v3065 = vld [vmem:[%s3028 + $0x18] sm:$0xff]
      %v3066 = vld [vmem:[%s3028 + $0x20] sm:$0xf]
      %v3067 = vld [vmem:[%s3028 + $0x24] sm:$0x11]
      %v3068 = vld [vmem:[%s3028 + $0x2c] sm:$0x1]
      %v3069 = vld [vmem:[%s3028 + $0x30] sm:$0xff]
      %v3070 = vld [vmem:[%s3028 + $0x38] sm:$0xf]
      %v3071 = vld [vmem:[%s3028 + $0x3c] sm:$0x11]
      %v3072 = vld [vmem:[%s3028 + $0x44] sm:$0x1]
      %v3073 = vld [vmem:[%s3028 + $0x48] sm:$0xff]
      %v3074 = vld [vmem:[%s3028 + $0x50] sm:$0xf]
      %v3075 = vld [vmem:[%s3028 + $0x54] sm:$0x11]
      %v3076 = vld [vmem:[%s3028 + $0x5c] sm:$0x1]
      %v3077 = vld [vmem:[%s3028 + $0x60] sm:$0xff]
      %v3078 = vld [vmem:[%s3028 + $0x68] sm:$0xf]
      %v3079 = vld [vmem:[%s3028 + $0x6c] sm:$0x11]
      %v3080 = vld [vmem:[%s3028 + $0x74] sm:$0x1]
      %v3081 = vld [vmem:[%s3028 + $0x78] sm:$0xff]
      %v3082 = vld [vmem:[%s3028 + $0x80] sm:$0xf]
      %v3083 = vld [vmem:[%s3028 + $0x84] sm:$0x11]
      %v3084 = vld [vmem:[%s3028 + $0x8c] sm:$0x1]
      %v3085 = vld [vmem:[%s3028 + $0x90] sm:$0xff]
      %v3086 = vld [vmem:[%s3028 + $0x98] sm:$0xf]
      %v3087 = vld [vmem:[%s3028 + $0x9c] sm:$0x11]
      %v3088 = vld [vmem:[%s3028 + $0xa4] sm:$0x1]
      %v3089 = vld [vmem:[%s3028 + $0xa8] sm:$0xff]
      %v3090 = vld [vmem:[%s3028 + $0xb0] sm:$0xf]
      %v3091 = vld [vmem:[%s3028 + $0xb4] sm:$0x11]
      %v3092 = vld [vmem:[%s3028 + $0xbc] sm:$0x1]
      %v3094 = vshrl.u32 %v3061, 16
      %v3096 = vrot.slane %v3094, 4
      %v3097 = vshll.u32 %v3061, 16
      %v3099 = vrot.slane %v3097, 5
      %v3100 = vor.u32 %v3096, %v3099
      %v3101 = vrot.slane %v3100, 4
      %v3103 = vshll.u32 %v3063, 16
      %v3105 = vrot.slane %v3103, 5
      %v3106 = vsel %vm2128, %v3101, %v3105
      %v3108 = vshrl.u32 %v3062, 16
      %v3110 = vrot.slane %v3108, 4
      %v3111 = vshll.u32 %v3062, 16
      %v3113 = vrot.slane %v3111, 5
      %v3114 = vor.u32 %v3110, %v3113
      %v3115 = vrot.slane %v3114, 4
      %v3117 = vshll.u32 %v3064, 16
      %v3119 = vrot.slane %v3117, 5
      %v3120 = vsel %vm2128, %v3115, %v3119
      %v3122 = vshrl.u32 %v3065, 16
      %v3124 = vrot.slane %v3122, 4
      %v3125 = vshll.u32 %v3065, 16
      %v3127 = vrot.slane %v3125, 5
      %v3128 = vor.u32 %v3124, %v3127
      %v3129 = vrot.slane %v3128, 4
      %v3131 = vshll.u32 %v3067, 16
      %v3133 = vrot.slane %v3131, 5
      %v3134 = vsel %vm2128, %v3129, %v3133
      %v3136 = vshrl.u32 %v3066, 16
      %v3138 = vrot.slane %v3136, 4
      %v3139 = vshll.u32 %v3066, 16
      %v3141 = vrot.slane %v3139, 5
      %v3142 = vor.u32 %v3138, %v3141
      %v3143 = vrot.slane %v3142, 4
      %v3145 = vshll.u32 %v3068, 16
      %v3147 = vrot.slane %v3145, 5
      %v3148 = vsel %vm2128, %v3143, %v3147
      %v3150 = vshrl.u32 %v3069, 16
      %v3152 = vrot.slane %v3150, 4
      %v3153 = vshll.u32 %v3069, 16
      %v3155 = vrot.slane %v3153, 5
      %v3156 = vor.u32 %v3152, %v3155
      %v3157 = vrot.slane %v3156, 4
      %v3159 = vshll.u32 %v3071, 16
      %v3161 = vrot.slane %v3159, 5
      %v3162 = vsel %vm2128, %v3157, %v3161
      %v3164 = vshrl.u32 %v3070, 16
      %v3166 = vrot.slane %v3164, 4
      %v3167 = vshll.u32 %v3070, 16
      %v3169 = vrot.slane %v3167, 5
      %v3170 = vor.u32 %v3166, %v3169
      %v3171 = vrot.slane %v3170, 4
      %v3173 = vshll.u32 %v3072, 16
      %v3175 = vrot.slane %v3173, 5
      %v3176 = vsel %vm2128, %v3171, %v3175
      %v3178 = vshrl.u32 %v3073, 16
      %v3180 = vrot.slane %v3178, 4
      %v3181 = vshll.u32 %v3073, 16
      %v3183 = vrot.slane %v3181, 5
      %v3184 = vor.u32 %v3180, %v3183
      %v3185 = vrot.slane %v3184, 4
      %v3187 = vshll.u32 %v3075, 16
      %v3189 = vrot.slane %v3187, 5
      %v3190 = vsel %vm2128, %v3185, %v3189
      %v3192 = vshrl.u32 %v3074, 16
      %v3194 = vrot.slane %v3192, 4
      %v3195 = vshll.u32 %v3074, 16
      %v3197 = vrot.slane %v3195, 5
      %v3198 = vor.u32 %v3194, %v3197
      %v3199 = vrot.slane %v3198, 4
      %v3201 = vshll.u32 %v3076, 16
      %v3203 = vrot.slane %v3201, 5
      %v3204 = vsel %vm2128, %v3199, %v3203
      %v3206 = vshrl.u32 %v3077, 16
      %v3208 = vrot.slane %v3206, 4
      %v3209 = vshll.u32 %v3077, 16
      %v3211 = vrot.slane %v3209, 5
      %v3212 = vor.u32 %v3208, %v3211
      %v3213 = vrot.slane %v3212, 4
      %v3215 = vshll.u32 %v3079, 16
      %v3217 = vrot.slane %v3215, 5
      %v3218 = vsel %vm2128, %v3213, %v3217
      %v3220 = vshrl.u32 %v3078, 16
      %v3222 = vrot.slane %v3220, 4
      %v3223 = vshll.u32 %v3078, 16
      %v3225 = vrot.slane %v3223, 5
      %v3226 = vor.u32 %v3222, %v3225
      %v3227 = vrot.slane %v3226, 4
      %v3229 = vshll.u32 %v3080, 16
      %v3231 = vrot.slane %v3229, 5
      %v3232 = vsel %vm2128, %v3227, %v3231
      %v3234 = vshrl.u32 %v3081, 16
      %v3236 = vrot.slane %v3234, 4
      %v3237 = vshll.u32 %v3081, 16
      %v3239 = vrot.slane %v3237, 5
      %v3240 = vor.u32 %v3236, %v3239
      %v3241 = vrot.slane %v3240, 4
      %v3243 = vshll.u32 %v3083, 16
      %v3245 = vrot.slane %v3243, 5
      %v3246 = vsel %vm2128, %v3241, %v3245
      %v3248 = vshrl.u32 %v3082, 16
      %v3250 = vrot.slane %v3248, 4
      %v3251 = vshll.u32 %v3082, 16
      %v3253 = vrot.slane %v3251, 5
      %v3254 = vor.u32 %v3250, %v3253
      %v3255 = vrot.slane %v3254, 4
      %v3257 = vshll.u32 %v3084, 16
      %v3259 = vrot.slane %v3257, 5
      %v3260 = vsel %vm2128, %v3255, %v3259
      %v3262 = vshrl.u32 %v3085, 16
      %v3264 = vrot.slane %v3262, 4
      %v3265 = vshll.u32 %v3085, 16
      %v3267 = vrot.slane %v3265, 5
      %v3268 = vor.u32 %v3264, %v3267
      %v3269 = vrot.slane %v3268, 4
      %v3271 = vshll.u32 %v3087, 16
      %v3273 = vrot.slane %v3271, 5
      %v3274 = vsel %vm2128, %v3269, %v3273
      %v3276 = vshrl.u32 %v3086, 16
      %v3278 = vrot.slane %v3276, 4
      %v3279 = vshll.u32 %v3086, 16
      %v3281 = vrot.slane %v3279, 5
      %v3282 = vor.u32 %v3278, %v3281
      %v3283 = vrot.slane %v3282, 4
      %v3285 = vshll.u32 %v3088, 16
      %v3287 = vrot.slane %v3285, 5
      %v3288 = vsel %vm2128, %v3283, %v3287
      %v3290 = vshrl.u32 %v3089, 16
      %v3292 = vrot.slane %v3290, 4
      %v3293 = vshll.u32 %v3089, 16
      %v3295 = vrot.slane %v3293, 5
      %v3296 = vor.u32 %v3292, %v3295
      %v3297 = vrot.slane %v3296, 4
      %v3299 = vshll.u32 %v3091, 16
      %v3301 = vrot.slane %v3299, 5
      %v3302 = vsel %vm2128, %v3297, %v3301
      %v3304 = vshrl.u32 %v3090, 16
      %v3306 = vrot.slane %v3304, 4
      %v3307 = vshll.u32 %v3090, 16
      %v3309 = vrot.slane %v3307, 5
      %v3310 = vor.u32 %v3306, %v3309
      %v3311 = vrot.slane %v3310, 4
      %v3313 = vshll.u32 %v3092, 16
      %v3315 = vrot.slane %v3313, 5
      %v3316 = vsel %vm2128, %v3311, %v3315
      %3333 = vst [vmem:[#allocation4 + $0x54] sm:$0xff] %v3106
      %3334 = vst [vmem:[#allocation4 + $0x5c] sm:$0xf] %v3120
      %3335 = vst [vmem:[#allocation4 + $0xc0] sm:$0xff] %v3134
      %3336 = vst [vmem:[#allocation4 + $0xc8] sm:$0xf] %v3148
      %3337 = vst [vmem:[#allocation4 + $0x12c] sm:$0xff] %v3162
      %3338 = vst [vmem:[#allocation4 + $0x134] sm:$0xf] %v3176
      %3339 = vst [vmem:[#allocation4 + $0x198] sm:$0xff] %v3190
      %3340 = vst [vmem:[#allocation4 + $0x1a0] sm:$0xf] %v3204
      %3341 = vst [vmem:[#allocation4 + $0x204] sm:$0xff] %v3218
      %3342 = vst [vmem:[#allocation4 + $0x20c] sm:$0xf] %v3232
      %3343 = vst [vmem:[#allocation4 + $0x270] sm:$0xff] %v3246
      %3344 = vst [vmem:[#allocation4 + $0x278] sm:$0xf] %v3260
      %3345 = vst [vmem:[#allocation4 + $0x2dc] sm:$0xff] %v3274
      %3346 = vst [vmem:[#allocation4 + $0x2e4] sm:$0xf] %v3288
      %3347 = vst [vmem:[#allocation4 + $0x348] sm:$0xff] %v3302
      %3348 = vst [vmem:[#allocation4 + $0x350] sm:$0xf] %v3316
      %v3349 = vld [vmem:[%s3028] sm:$0xee]
      %v3350 = vld [vmem:[%s3028 + $0x8] sm:$0xe]
      %v3351 = vld [vmem:[%s3028 + $0xc] sm:$0x11]
      %v3352 = vld [vmem:[%s3028 + $0x14] sm:$0x1]
      %v3353 = vld [vmem:[%s3028 + $0x18] sm:$0xee]
      %v3354 = vld [vmem:[%s3028 + $0x20] sm:$0xe]
      %v3355 = vld [vmem:[%s3028 + $0x24] sm:$0x11]
      %v3356 = vld [vmem:[%s3028 + $0x2c] sm:$0x1]
      %v3357 = vld [vmem:[%s3028 + $0x30] sm:$0xee]
      %v3358 = vld [vmem:[%s3028 + $0x38] sm:$0xe]
      %v3359 = vld [vmem:[%s3028 + $0x3c] sm:$0x11]
      %v3360 = vld [vmem:[%s3028 + $0x44] sm:$0x1]
      %v3361 = vld [vmem:[%s3028 + $0x48] sm:$0xee]
      %v3362 = vld [vmem:[%s3028 + $0x50] sm:$0xe]
      %v3363 = vld [vmem:[%s3028 + $0x54] sm:$0x11]
      %v3364 = vld [vmem:[%s3028 + $0x5c] sm:$0x1]
      %v3365 = vld [vmem:[%s3028 + $0x60] sm:$0xee]
      %v3366 = vld [vmem:[%s3028 + $0x68] sm:$0xe]
      %v3367 = vld [vmem:[%s3028 + $0x6c] sm:$0x11]
      %v3368 = vld [vmem:[%s3028 + $0x74] sm:$0x1]
      %v3369 = vld [vmem:[%s3028 + $0x78] sm:$0xee]
      %v3370 = vld [vmem:[%s3028 + $0x80] sm:$0xe]
      %v3371 = vld [vmem:[%s3028 + $0x84] sm:$0x11]
      %v3372 = vld [vmem:[%s3028 + $0x8c] sm:$0x1]
      %v3373 = vld [vmem:[%s3028 + $0x90] sm:$0xee]
      %v3374 = vld [vmem:[%s3028 + $0x98] sm:$0xe]
      %v3375 = vld [vmem:[%s3028 + $0x9c] sm:$0x11]
      %v3376 = vld [vmem:[%s3028 + $0xa4] sm:$0x1]
      %v3377 = vld [vmem:[%s3028 + $0xa8] sm:$0xee]
      %v3378 = vld [vmem:[%s3028 + $0xb0] sm:$0xe]
      %v3379 = vld [vmem:[%s3028 + $0xb4] sm:$0x11]
      %v3380 = vld [vmem:[%s3028 + $0xbc] sm:$0x1]
      %v3413 = vrot.slane %v3349, 5
      %v3414 = vrot.slane %v3413, 4
      %v3415 = vrot.slane %v3351, 5
      %v3416 = vsel %vm2451, %v3414, %v3415
      %v3417 = vrot.slane %v3350, 5
      %v3418 = vrot.slane %v3417, 4
      %v3419 = vrot.slane %v3352, 5
      %v3420 = vsel %vm2451, %v3418, %v3419
      %v3421 = vrot.slane %v3353, 5
      %v3422 = vrot.slane %v3421, 4
      %v3423 = vrot.slane %v3355, 5
      %v3424 = vsel %vm2451, %v3422, %v3423
      %v3425 = vrot.slane %v3354, 5
      %v3426 = vrot.slane %v3425, 4
      %v3427 = vrot.slane %v3356, 5
      %v3428 = vsel %vm2451, %v3426, %v3427
      %v3429 = vrot.slane %v3357, 5
      %v3430 = vrot.slane %v3429, 4
      %v3431 = vrot.slane %v3359, 5
      %v3432 = vsel %vm2451, %v3430, %v3431
      %v3433 = vrot.slane %v3358, 5
      %v3434 = vrot.slane %v3433, 4
      %v3435 = vrot.slane %v3360, 5
      %v3436 = vsel %vm2451, %v3434, %v3435
      %v3437 = vrot.slane %v3361, 5
      %v3438 = vrot.slane %v3437, 4
      %v3439 = vrot.slane %v3363, 5
      %v3440 = vsel %vm2451, %v3438, %v3439
      %v3441 = vrot.slane %v3362, 5
      %v3442 = vrot.slane %v3441, 4
      %v3443 = vrot.slane %v3364, 5
      %v3444 = vsel %vm2451, %v3442, %v3443
      %v3445 = vrot.slane %v3365, 5
      %v3446 = vrot.slane %v3445, 4
      %v3447 = vrot.slane %v3367, 5
      %v3448 = vsel %vm2451, %v3446, %v3447
      %v3449 = vrot.slane %v3366, 5
      %v3450 = vrot.slane %v3449, 4
      %v3451 = vrot.slane %v3368, 5
      %v3452 = vsel %vm2451, %v3450, %v3451
      %v3453 = vrot.slane %v3369, 5
      %v3454 = vrot.slane %v3453, 4
      %v3455 = vrot.slane %v3371, 5
      %v3456 = vsel %vm2451, %v3454, %v3455
      %v3457 = vrot.slane %v3370, 5
      %v3458 = vrot.slane %v3457, 4
      %v3459 = vrot.slane %v3372, 5
      %v3460 = vsel %vm2451, %v3458, %v3459
      %v3461 = vrot.slane %v3373, 5
      %v3462 = vrot.slane %v3461, 4
      %v3463 = vrot.slane %v3375, 5
      %v3464 = vsel %vm2451, %v3462, %v3463
      %v3465 = vrot.slane %v3374, 5
      %v3466 = vrot.slane %v3465, 4
      %v3467 = vrot.slane %v3376, 5
      %v3468 = vsel %vm2451, %v3466, %v3467
      %v3469 = vrot.slane %v3377, 5
      %v3470 = vrot.slane %v3469, 4
      %v3471 = vrot.slane %v3379, 5
      %v3472 = vsel %vm2451, %v3470, %v3471
      %v3473 = vrot.slane %v3378, 5
      %v3474 = vrot.slane %v3473, 4
      %v3475 = vrot.slane %v3380, 5
      %v3476 = vsel %vm2451, %v3474, %v3475
      %3493 = vst [vmem:[#allocation4 + $0x60] sm:$0xff] %v3416
      %3494 = vst [vmem:[#allocation4 + $0x68] sm:$0xf] %v3420
      %3495 = vst [vmem:[#allocation4 + $0xcc] sm:$0xff] %v3424
      %3496 = vst [vmem:[#allocation4 + $0xd4] sm:$0xf] %v3428
      %3497 = vst [vmem:[#allocation4 + $0x138] sm:$0xff] %v3432
      %3498 = vst [vmem:[#allocation4 + $0x140] sm:$0xf] %v3436
      %3499 = vst [vmem:[#allocation4 + $0x1a4] sm:$0xff] %v3440
      %3500 = vst [vmem:[#allocation4 + $0x1ac] sm:$0xf] %v3444
      %3501 = vst [vmem:[#allocation4 + $0x210] sm:$0xff] %v3448
      %3502 = vst [vmem:[#allocation4 + $0x218] sm:$0xf] %v3452
      %3503 = vst [vmem:[#allocation4 + $0x27c] sm:$0xff] %v3456
      %3504 = vst [vmem:[#allocation4 + $0x284] sm:$0xf] %v3460
      %3505 = vst [vmem:[#allocation4 + $0x2e8] sm:$0xff] %v3464
      %3506 = vst [vmem:[#allocation4 + $0x2f0] sm:$0xf] %v3468
      %3507 = vst [vmem:[#allocation4 + $0x354] sm:$0xff] %v3472
      %3508 = vst [vmem:[#allocation4 + $0x35c] sm:$0xf] %v3476
      %v3509 = vld [vmem:[#allocation4] sm:$0xff]
      %v3510 = vld [vmem:[#allocation4 + $0x8] sm:$0xff]
      %v3511 = vld [vmem:[#allocation4 + $0x10] sm:$0xff]
      %v3512 = vld [vmem:[#allocation4 + $0x18] sm:$0xff]
      %v3513 = vld [vmem:[#allocation4 + $0x20] sm:$0xff]
      %v3514 = vld [vmem:[#allocation4 + $0x28] sm:$0xff]
      %v3515 = vld [vmem:[#allocation4 + $0x30] sm:$0xff]
      %v3516 = vld [vmem:[#allocation4 + $0x38] sm:$0xff]
      %v3517 = vld [vmem:[#allocation4 + $0x40] sm:$0xff]
      %v3518 = vld [vmem:[#allocation4 + $0x48] sm:$0xff]
      %v3519 = vld [vmem:[#allocation4 + $0x50] sm:$0xff]
      %v3520 = vld [vmem:[#allocation4 + $0x58] sm:$0xff]
      %v3521 = vld [vmem:[#allocation4 + $0x60] sm:$0xff]
      %v3522 = vld [vmem:[#allocation4 + $0x68] sm:$0xf]
      %v3523 = vld [vmem:[#allocation4 + $0x6c] sm:$0xff]
      %v3524 = vld [vmem:[#allocation4 + $0x74] sm:$0xff]
      %v3525 = vld [vmem:[#allocation4 + $0x7c] sm:$0xff]
      %v3526 = vld [vmem:[#allocation4 + $0x84] sm:$0xff]
      %v3527 = vld [vmem:[#allocation4 + $0x8c] sm:$0xff]
      %v3528 = vld [vmem:[#allocation4 + $0x94] sm:$0xff]
      %v3529 = vld [vmem:[#allocation4 + $0x9c] sm:$0xff]
      %v3530 = vld [vmem:[#allocation4 + $0xa4] sm:$0xff]
      %v3531 = vld [vmem:[#allocation4 + $0xac] sm:$0xff]
      %v3532 = vld [vmem:[#allocation4 + $0xb4] sm:$0xff]
      %v3533 = vld [vmem:[#allocation4 + $0xbc] sm:$0xff]
      %v3534 = vld [vmem:[#allocation4 + $0xc4] sm:$0xff]
      %v3535 = vld [vmem:[#allocation4 + $0xcc] sm:$0xff]
      %v3536 = vld [vmem:[#allocation4 + $0xd4] sm:$0xf]
      %v3537 = vld [vmem:[#allocation4 + $0xd8] sm:$0xff]
      %v3538 = vld [vmem:[#allocation4 + $0xe0] sm:$0xff]
      %v3539 = vld [vmem:[#allocation4 + $0xe8] sm:$0xff]
      %v3540 = vld [vmem:[#allocation4 + $0xf0] sm:$0xff]
      %v3541 = vld [vmem:[#allocation4 + $0xf8] sm:$0xff]
      %v3542 = vld [vmem:[#allocation4 + $0x100] sm:$0xff]
      %v3543 = vld [vmem:[#allocation4 + $0x108] sm:$0xff]
      %v3544 = vld [vmem:[#allocation4 + $0x110] sm:$0xff]
      %v3545 = vld [vmem:[#allocation4 + $0x118] sm:$0xff]
      %v3546 = vld [vmem:[#allocation4 + $0x120] sm:$0xff]
      %v3547 = vld [vmem:[#allocation4 + $0x128] sm:$0xff]
      %v3548 = vld [vmem:[#allocation4 + $0x130] sm:$0xff]
      %v3549 = vld [vmem:[#allocation4 + $0x138] sm:$0xff]
      %v3550 = vld [vmem:[#allocation4 + $0x140] sm:$0xf]
      %v3551 = vld [vmem:[#allocation4 + $0x144] sm:$0xff]
      %v3552 = vld [vmem:[#allocation4 + $0x14c] sm:$0xff]
      %v3553 = vld [vmem:[#allocation4 + $0x154] sm:$0xff]
      %v3554 = vld [vmem:[#allocation4 + $0x15c] sm:$0xff]
      %v3555 = vld [vmem:[#allocation4 + $0x164] sm:$0xff]
      %v3556 = vld [vmem:[#allocation4 + $0x16c] sm:$0xff]
      %v3557 = vld [vmem:[#allocation4 + $0x174] sm:$0xff]
      %v3558 = vld [vmem:[#allocation4 + $0x17c] sm:$0xff]
      %v3559 = vld [vmem:[#allocation4 + $0x184] sm:$0xff]
      %v3560 = vld [vmem:[#allocation4 + $0x18c] sm:$0xff]
      %v3561 = vld [vmem:[#allocation4 + $0x194] sm:$0xff]
      %v3562 = vld [vmem:[#allocation4 + $0x19c] sm:$0xff]
      %v3563 = vld [vmem:[#allocation4 + $0x1a4] sm:$0xff]
      %v3564 = vld [vmem:[#allocation4 + $0x1ac] sm:$0xf]
      %v3565 = vld [vmem:[#allocation4 + $0x1b0] sm:$0xff]
      %v3566 = vld [vmem:[#allocation4 + $0x1b8] sm:$0xff]
      %v3567 = vld [vmem:[#allocation4 + $0x1c0] sm:$0xff]
      %v3568 = vld [vmem:[#allocation4 + $0x1c8] sm:$0xff]
      %v3569 = vld [vmem:[#allocation4 + $0x1d0] sm:$0xff]
      %v3570 = vld [vmem:[#allocation4 + $0x1d8] sm:$0xff]
      %v3571 = vld [vmem:[#allocation4 + $0x1e0] sm:$0xff]
      %v3572 = vld [vmem:[#allocation4 + $0x1e8] sm:$0xff]
      %v3573 = vld [vmem:[#allocation4 + $0x1f0] sm:$0xff]
      %v3574 = vld [vmem:[#allocation4 + $0x1f8] sm:$0xff]
      %v3575 = vld [vmem:[#allocation4 + $0x200] sm:$0xff]
      %v3576 = vld [vmem:[#allocation4 + $0x208] sm:$0xff]
      %v3577 = vld [vmem:[#allocation4 + $0x210] sm:$0xff]
      %v3578 = vld [vmem:[#allocation4 + $0x218] sm:$0xf]
      %v3579 = vld [vmem:[#allocation4 + $0x21c] sm:$0xff]
      %v3580 = vld [vmem:[#allocation4 + $0x224] sm:$0xff]
      %v3581 = vld [vmem:[#allocation4 + $0x22c] sm:$0xff]
      %v3582 = vld [vmem:[#allocation4 + $0x234] sm:$0xff]
      %v3583 = vld [vmem:[#allocation4 + $0x23c] sm:$0xff]
      %v3584 = vld [vmem:[#allocation4 + $0x244] sm:$0xff]
      %v3585 = vld [vmem:[#allocation4 + $0x24c] sm:$0xff]
      %v3586 = vld [vmem:[#allocation4 + $0x254] sm:$0xff]
      %v3587 = vld [vmem:[#allocation4 + $0x25c] sm:$0xff]
      %v3588 = vld [vmem:[#allocation4 + $0x264] sm:$0xff]
      %v3589 = vld [vmem:[#allocation4 + $0x26c] sm:$0xff]
      %v3590 = vld [vmem:[#allocation4 + $0x274] sm:$0xff]
      %v3591 = vld [vmem:[#allocation4 + $0x27c] sm:$0xff]
      %v3592 = vld [vmem:[#allocation4 + $0x284] sm:$0xf]
      %v3593 = vld [vmem:[#allocation4 + $0x288] sm:$0xff]
      %v3594 = vld [vmem:[#allocation4 + $0x290] sm:$0xff]
      %v3595 = vld [vmem:[#allocation4 + $0x298] sm:$0xff]
      %v3596 = vld [vmem:[#allocation4 + $0x2a0] sm:$0xff]
      %v3597 = vld [vmem:[#allocation4 + $0x2a8] sm:$0xff]
      %v3598 = vld [vmem:[#allocation4 + $0x2b0] sm:$0xff]
      %v3599 = vld [vmem:[#allocation4 + $0x2b8] sm:$0xff]
      %v3600 = vld [vmem:[#allocation4 + $0x2c0] sm:$0xff]
      %v3601 = vld [vmem:[#allocation4 + $0x2c8] sm:$0xff]
      %v3602 = vld [vmem:[#allocation4 + $0x2d0] sm:$0xff]
      %v3603 = vld [vmem:[#allocation4 + $0x2d8] sm:$0xff]
      %v3604 = vld [vmem:[#allocation4 + $0x2e0] sm:$0xff]
      %v3605 = vld [vmem:[#allocation4 + $0x2e8] sm:$0xff]
      %v3606 = vld [vmem:[#allocation4 + $0x2f0] sm:$0xf]
      %v3607 = vld [vmem:[#allocation4 + $0x2f4] sm:$0xff]
      %v3608 = vld [vmem:[#allocation4 + $0x2fc] sm:$0xff]
      %v3609 = vld [vmem:[#allocation4 + $0x304] sm:$0xff]
      %v3610 = vld [vmem:[#allocation4 + $0x30c] sm:$0xff]
      %v3611 = vld [vmem:[#allocation4 + $0x314] sm:$0xff]
      %v3612 = vld [vmem:[#allocation4 + $0x31c] sm:$0xff]
      %v3613 = vld [vmem:[#allocation4 + $0x324] sm:$0xff]
      %v3614 = vld [vmem:[#allocation4 + $0x32c] sm:$0xff]
      %v3615 = vld [vmem:[#allocation4 + $0x334] sm:$0xff]
      %v3616 = vld [vmem:[#allocation4 + $0x33c] sm:$0xff]
      %v3617 = vld [vmem:[#allocation4 + $0x344] sm:$0xff]
      %v3618 = vld [vmem:[#allocation4 + $0x34c] sm:$0xff]
      %v3619 = vld [vmem:[#allocation4 + $0x354] sm:$0xff]
      %v3620 = vld [vmem:[#allocation4 + $0x35c] sm:$0xf]
      %v3621 = vld [vmem:[%s9] sm:$0xf]
      %v3622 = vld [vmem:[%s9 + $0x4] sm:$0xf]
      %v3623 = vld [vmem:[%s9 + $0x8] sm:$0xf]
      %v3624 = vld [vmem:[%s9 + $0xc] sm:$0xf]
      %v3625 = vld [vmem:[%s9 + $0x10] sm:$0xf]
      %v3626 = vld [vmem:[%s9 + $0x14] sm:$0xf]
      %v3627 = vld [vmem:[%s9 + $0x18] sm:$0xf]
      %v3628 = vld [vmem:[%s9 + $0x1c] sm:$0xf]
      %v3629 = vld [vmem:[%s9 + $0x20] sm:$0xf]
      %v3630 = vld [vmem:[%s9 + $0x24] sm:$0xf]
      %v3631 = vld [vmem:[%s9 + $0x28] sm:$0xf]
      %v3632 = vld [vmem:[%s9 + $0x2c] sm:$0xf]
      %v3633 = vld [vmem:[%s9 + $0x30] sm:$0xf]
      %v3634 = vld [vmem:[%s9 + $0x34] sm:$0xf]
      %v3635 = vld [vmem:[%s9 + $0x38] sm:$0xf]
      %v3636 = vld [vmem:[%s9 + $0x3c] sm:$0xf]
      %v3637 = vld [vmem:[%s9 + $0x40] sm:$0xf]
      %v3638 = vld [vmem:[%s9 + $0x44] sm:$0xf]
      %v3639 = vld [vmem:[%s9 + $0x48] sm:$0xf]
      %v3640 = vld [vmem:[%s9 + $0x4c] sm:$0xf]
      %v3641 = vld [vmem:[%s9 + $0x50] sm:$0xf]
      %v3642 = vld [vmem:[%s9 + $0x54] sm:$0xf]
      %v3643 = vld [vmem:[%s9 + $0x58] sm:$0xf]
      %v3644 = vld [vmem:[%s9 + $0x5c] sm:$0xf]
      %v3645 = vld [vmem:[%s9 + $0x60] sm:$0xf]
      %v3646 = vld [vmem:[%s9 + $0x64] sm:$0xf]
      %v3647 = vld [vmem:[%s9 + $0x68] sm:$0xf]
      %v3648 = vld [vmem:[%s9 + $0x6c] sm:$0xf]
      %v3649 = vld [vmem:[%s9 + $0x70] sm:$0xf]
      %v3650 = vld [vmem:[%s9 + $0x74] sm:$0xf]
      %v3651 = vld [vmem:[%s9 + $0x78] sm:$0xf]
      %v3652 = vld [vmem:[%s9 + $0x7c] sm:$0xf]
      %v3653 = vld [vmem:[%s9 + $0x80] sm:$0xf]
      %v3654 = vld [vmem:[%s9 + $0x84] sm:$0xf]
      %v3655 = vld [vmem:[%s9 + $0x88] sm:$0xf]
      %v3656 = vld [vmem:[%s9 + $0x8c] sm:$0xf]
      %v3657 = vld [vmem:[%s9 + $0x90] sm:$0xf]
      %v3658 = vld [vmem:[%s9 + $0x94] sm:$0xf]
      %v3659 = vld [vmem:[%s9 + $0x98] sm:$0xf]
      %v3660 = vld [vmem:[%s9 + $0x9c] sm:$0xf]
      %v3661 = vld [vmem:[%s9 + $0xa0] sm:$0xf]
      %v3662 = vld [vmem:[%s9 + $0xa4] sm:$0xf]
      %v3663 = vld [vmem:[%s9 + $0xa8] sm:$0xf]
      %v3664 = vld [vmem:[%s9 + $0xac] sm:$0xf]
      %v3665 = vld [vmem:[%s9 + $0xb0] sm:$0xf]
      %v3666 = vld [vmem:[%s9 + $0xb4] sm:$0xf]
      %v3667 = vld [vmem:[%s9 + $0xb8] sm:$0xf]
      %v3668 = vld [vmem:[%s9 + $0xbc] sm:$0xf]
      %v3669 = vld [vmem:[%s9 + $0xc0] sm:$0xf]
      %v3670 = vld [vmem:[%s9 + $0xc4] sm:$0xf]
      %v3671 = vld [vmem:[%s9 + $0xc8] sm:$0xf]
      %v3672 = vld [vmem:[%s9 + $0xcc] sm:$0xf]
      %v3673 = vld [vmem:[%s9 + $0xd0] sm:$0xf]
      %v3674 = vld [vmem:[%s9 + $0xd4] sm:$0xf]
      %v3675 = vld [vmem:[%s9 + $0xd8] sm:$0xf]
      %v3676 = vld [vmem:[%s9 + $0xdc] sm:$0xf]
      %v3677 = vld [vmem:[%s9 + $0xe0] sm:$0xf]
      %v3678 = vld [vmem:[%s9 + $0xe4] sm:$0xf]
      %v3679 = vld [vmem:[%s9 + $0xe8] sm:$0xf]
      %v3680 = vld [vmem:[%s9 + $0xec] sm:$0xf]
      %v3681 = vld [vmem:[%s9 + $0xf0] sm:$0xf]
      %v3682 = vld [vmem:[%s9 + $0xf4] sm:$0xf]
      %v3683 = vld [vmem:[%s9 + $0xf8] sm:$0xf]
      %v3684 = vld [vmem:[%s9 + $0xfc] sm:$0xf]
      %v3685 = vld [vmem:[%s9 + $0x100] sm:$0xf]
      %v3686 = vld [vmem:[%s9 + $0x104] sm:$0xf]
      %v3687 = vld [vmem:[%s9 + $0x108] sm:$0xf]
      %v3688 = vld [vmem:[%s9 + $0x10c] sm:$0xf]
      %v3689 = vld [vmem:[%s9 + $0x110] sm:$0xf]
      %v3690 = vld [vmem:[%s9 + $0x114] sm:$0xf]
      %v3691 = vld [vmem:[%s9 + $0x118] sm:$0xf]
      %v3692 = vld [vmem:[%s9 + $0x11c] sm:$0xf]
      %v3693 = vld [vmem:[%s9 + $0x120] sm:$0xf]
      %v3694 = vld [vmem:[%s9 + $0x124] sm:$0xf]
      %v3695 = vld [vmem:[%s9 + $0x128] sm:$0xf]
      %v3696 = vld [vmem:[%s9 + $0x12c] sm:$0xf]
      %v3697 = vld [vmem:[%s9 + $0x130] sm:$0xf]
      %v3698 = vld [vmem:[%s9 + $0x134] sm:$0xf]
      %v3699 = vld [vmem:[%s9 + $0x138] sm:$0xf]
      %v3700 = vld [vmem:[%s9 + $0x13c] sm:$0xf]
      %v3701 = vld [vmem:[%s9 + $0x140] sm:$0xf]
      %v3702 = vld [vmem:[%s9 + $0x144] sm:$0xf]
      %v3703 = vld [vmem:[%s9 + $0x148] sm:$0xf]
      %v3704 = vld [vmem:[%s9 + $0x14c] sm:$0xf]
      %v3705 = vld [vmem:[%s9 + $0x150] sm:$0xf]
      %v3706 = vld [vmem:[%s9 + $0x154] sm:$0xf]
      %v3707 = vld [vmem:[%s9 + $0x158] sm:$0xf]
      %v3708 = vld [vmem:[%s9 + $0x15c] sm:$0xf]
      %v3709 = vld [vmem:[%s9 + $0x160] sm:$0xf]
      %v3710 = vld [vmem:[%s9 + $0x164] sm:$0xf]
      %v3711 = vld [vmem:[%s9 + $0x168] sm:$0xf]
      %v3712 = vld [vmem:[%s9 + $0x16c] sm:$0xf]
      %v3713 = vld [vmem:[%s9 + $0x170] sm:$0xf]
      %v3714 = vld [vmem:[%s9 + $0x174] sm:$0xf]
      %v3715 = vld [vmem:[%s9 + $0x178] sm:$0xf]
      %v3716 = vld [vmem:[%s9 + $0x17c] sm:$0xf]
      %v3717 = vld [vmem:[%s9 + $0x180] sm:$0xf]
      %v3718 = vld [vmem:[%s9 + $0x184] sm:$0xf]
      %v3719 = vld [vmem:[%s9 + $0x188] sm:$0xf]
      %v3720 = vld [vmem:[%s9 + $0x18c] sm:$0xf]
      %v3721 = vld [vmem:[%s9 + $0x190] sm:$0xf]
      %v3722 = vld [vmem:[%s9 + $0x194] sm:$0xf]
      %v3723 = vld [vmem:[%s9 + $0x198] sm:$0xf]
      %v3724 = vld [vmem:[%s9 + $0x19c] sm:$0xf]
      %v3725 = vld [vmem:[%s9 + $0x1a0] sm:$0xf]
      %v3726 = vld [vmem:[%s9 + $0x1a4] sm:$0xf]
      %v3727 = vld [vmem:[%s9 + $0x1a8] sm:$0xf]
      %v3728 = vld [vmem:[%s9 + $0x1ac] sm:$0xf]
      %v3729 = vld [vmem:[%s9 + $0x1b0] sm:$0xf]
      %v3730 = vld [vmem:[%s9 + $0x1b4] sm:$0xf]
      %v3731 = vld [vmem:[%s9 + $0x1b8] sm:$0xf]
      %v3732 = vld [vmem:[%s9 + $0x1bc] sm:$0xf]
      %v3733 = vld [vmem:[%s9 + $0x1c0] sm:$0xf]
      %v3734 = vld [vmem:[%s9 + $0x1c4] sm:$0xf]
      %v3735 = vld [vmem:[%s9 + $0x1c8] sm:$0xf]
      %v3736 = vld [vmem:[%s9 + $0x1cc] sm:$0xf]
      %v3737 = vld [vmem:[%s9 + $0x1d0] sm:$0xf]
      %v3738 = vld [vmem:[%s9 + $0x1d4] sm:$0xf]
      %v3739 = vld [vmem:[%s9 + $0x1d8] sm:$0xf]
      %v3740 = vld [vmem:[%s9 + $0x1dc] sm:$0xf]
      %v3741 = vld [vmem:[%s9 + $0x1e0] sm:$0xf]
      %v3742 = vld [vmem:[%s9 + $0x1e4] sm:$0xf]
      %v3743 = vld [vmem:[%s9 + $0x1e8] sm:$0xf]
      %v3744 = vld [vmem:[%s9 + $0x1ec] sm:$0xf]
      %v3745 = vld [vmem:[%s9 + $0x1f0] sm:$0xf]
      %v3746 = vld [vmem:[%s9 + $0x1f4] sm:$0xf]
      %v3747 = vld [vmem:[%s9 + $0x1f8] sm:$0xf]
      %v3748 = vld [vmem:[%s9 + $0x1fc] sm:$0xf]
      %v3749 = vld [vmem:[%s9 + $0x200] sm:$0xf]
      %v3750 = vld [vmem:[%s9 + $0x204] sm:$0xf]
      %v3751 = vld [vmem:[%s9 + $0x208] sm:$0xf]
      %v3752 = vld [vmem:[%s9 + $0x20c] sm:$0xf]
      %v3753 = vld [vmem:[%s9 + $0x210] sm:$0xf]
      %v3754 = vld [vmem:[%s9 + $0x214] sm:$0xf]
      %v3755 = vld [vmem:[%s9 + $0x218] sm:$0xf]
      %v3756 = vld [vmem:[%s9 + $0x21c] sm:$0xf]
      %v3757 = vld [vmem:[%s9 + $0x220] sm:$0xf]
      %v3758 = vld [vmem:[%s9 + $0x224] sm:$0xf]
      %v3759 = vld [vmem:[%s9 + $0x228] sm:$0xf]
      %v3760 = vld [vmem:[%s9 + $0x22c] sm:$0xf]
      %v3761 = vld [vmem:[%s9 + $0x230] sm:$0xf]
      %v3762 = vld [vmem:[%s9 + $0x234] sm:$0xf]
      %v3763 = vld [vmem:[%s9 + $0x238] sm:$0xf]
      %v3764 = vld [vmem:[%s9 + $0x23c] sm:$0xf]
      %v3765 = vld [vmem:[%s9 + $0x240] sm:$0xf]
      %v3766 = vld [vmem:[%s9 + $0x244] sm:$0xf]
      %v3767 = vld [vmem:[%s9 + $0x248] sm:$0xf]
      %v3768 = vld [vmem:[%s9 + $0x24c] sm:$0xf]
      %v3769 = vld [vmem:[%s9 + $0x250] sm:$0xf]
      %v3770 = vld [vmem:[%s9 + $0x254] sm:$0xf]
      %v3771 = vld [vmem:[%s9 + $0x258] sm:$0xf]
      %v3772 = vld [vmem:[%s9 + $0x25c] sm:$0xf]
      %v3773 = vld [vmem:[%s9 + $0x260] sm:$0xf]
      %v3774 = vld [vmem:[%s9 + $0x264] sm:$0xf]
      %v3775 = vld [vmem:[%s9 + $0x268] sm:$0xf]
      %v3776 = vld [vmem:[%s9 + $0x26c] sm:$0xf]
      %v3777 = vld [vmem:[%s9 + $0x270] sm:$0xf]
      %v3778 = vld [vmem:[%s9 + $0x274] sm:$0xf]
      %v3779 = vld [vmem:[%s9 + $0x278] sm:$0xf]
      %v3780 = vld [vmem:[%s9 + $0x27c] sm:$0xf]
      %v3781 = vld [vmem:[%s9 + $0x280] sm:$0xf]
      %v3782 = vld [vmem:[%s9 + $0x284] sm:$0xf]
      %v3783 = vld [vmem:[%s9 + $0x288] sm:$0xf]
      %v3784 = vld [vmem:[%s9 + $0x28c] sm:$0xf]
      %v3785 = vld [vmem:[%s9 + $0x290] sm:$0xf]
      %v3786 = vld [vmem:[%s9 + $0x294] sm:$0xf]
      %v3787 = vld [vmem:[%s9 + $0x298] sm:$0xf]
      %v3788 = vld [vmem:[%s9 + $0x29c] sm:$0xf]
      %v3789 = vld [vmem:[%s9 + $0x2a0] sm:$0xf]
      %v3790 = vld [vmem:[%s9 + $0x2a4] sm:$0xf]
      %v3791 = vld [vmem:[%s9 + $0x2a8] sm:$0xf]
      %v3792 = vld [vmem:[%s9 + $0x2ac] sm:$0xf]
      %v3793 = vld [vmem:[%s9 + $0x2b0] sm:$0xf]
      %v3794 = vld [vmem:[%s9 + $0x2b4] sm:$0xf]
      %v3795 = vld [vmem:[%s9 + $0x2b8] sm:$0xf]
      %v3796 = vld [vmem:[%s9 + $0x2bc] sm:$0xf]
      %v3797 = vld [vmem:[%s9 + $0x2c0] sm:$0xf]
      %v3798 = vld [vmem:[%s9 + $0x2c4] sm:$0xf]
      %v3799 = vld [vmem:[%s9 + $0x2c8] sm:$0xf]
      %v3800 = vld [vmem:[%s9 + $0x2cc] sm:$0xf]
      %v3801 = vld [vmem:[%s9 + $0x2d0] sm:$0xf]
      %v3802 = vld [vmem:[%s9 + $0x2d4] sm:$0xf]
      %v3803 = vld [vmem:[%s9 + $0x2d8] sm:$0xf]
      %v3804 = vld [vmem:[%s9 + $0x2dc] sm:$0xf]
      %v3805 = vld [vmem:[%s9 + $0x2e0] sm:$0xf]
      %v3806 = vld [vmem:[%s9 + $0x2e4] sm:$0xf]
      %v3807 = vld [vmem:[%s9 + $0x2e8] sm:$0xf]
      %v3808 = vld [vmem:[%s9 + $0x2ec] sm:$0xf]
      %v3809 = vld [vmem:[%s9 + $0x2f0] sm:$0xf]
      %v3810 = vld [vmem:[%s9 + $0x2f4] sm:$0xf]
      %v3811 = vld [vmem:[%s9 + $0x2f8] sm:$0xf]
      %v3812 = vld [vmem:[%s9 + $0x2fc] sm:$0xf]
      %v3813 = vld [vmem:[%s9 + $0x300] sm:$0xf]
      %v3814 = vld [vmem:[%s9 + $0x304] sm:$0xf]
      %v3815 = vld [vmem:[%s9 + $0x308] sm:$0xf]
      %v3816 = vld [vmem:[%s9 + $0x30c] sm:$0xf]
      %v3817 = vld [vmem:[%s9 + $0x310] sm:$0xf]
      %v3818 = vld [vmem:[%s9 + $0x314] sm:$0xf]
      %v3819 = vld [vmem:[%s9 + $0x318] sm:$0xf]
      %v3820 = vld [vmem:[%s9 + $0x31c] sm:$0xf]
      %v3821 = vld [vmem:[%s9 + $0x320] sm:$0xf]
      %v3822 = vld [vmem:[%s9 + $0x324] sm:$0xf]
      %v3823 = vld [vmem:[%s9 + $0x328] sm:$0xf]
      %v3824 = vld [vmem:[%s9 + $0x32c] sm:$0xf]
      %v3825 = vld [vmem:[%s9 + $0x330] sm:$0xf]
      %v3826 = vld [vmem:[%s9 + $0x334] sm:$0xf]
      %v3827 = vld [vmem:[%s9 + $0x338] sm:$0xf]
      %v3828 = vld [vmem:[%s9 + $0x33c] sm:$0xf]
      %v3829 = vld [vmem:[%s9 + $0x340] sm:$0xf]
      %v3830 = vld [vmem:[%s9 + $0x344] sm:$0xf]
      %v3831 = vld [vmem:[%s9 + $0x348] sm:$0xf]
      %v3832 = vld [vmem:[%s9 + $0x34c] sm:$0xf]
      %v3833 = vld [vmem:[%s9 + $0x350] sm:$0xf]
      %v3834 = vld [vmem:[%s9 + $0x354] sm:$0xf]
      %v3835 = vld [vmem:[%s9 + $0x358] sm:$0xf]
      %v3836 = vld [vmem:[%s9 + $0x35c] sm:$0xf]
      %v3837 = vld [vmem:[%s9 + $0x360] sm:$0xf]
      %v3838 = vld [vmem:[%s9 + $0x364] sm:$0xf]
      %v3839 = vld [vmem:[%s9 + $0x368] sm:$0xf]
      %v3840 = vld [vmem:[%s9 + $0x36c] sm:$0xf]
      %v3841 = vld [vmem:[%s9 + $0x370] sm:$0xf]
      %v3842 = vld [vmem:[%s9 + $0x374] sm:$0xf]
      %v3843 = vld [vmem:[%s9 + $0x378] sm:$0xf]
      %v3844 = vld [vmem:[%s9 + $0x37c] sm:$0xf]
      %v3845 = vld [vmem:[%s9 + $0x380] sm:$0xf]
      %v3846 = vld [vmem:[%s9 + $0x384] sm:$0xf]
      %v3847 = vld [vmem:[%s9 + $0x388] sm:$0xf]
      %v3848 = vld [vmem:[%s9 + $0x38c] sm:$0xf]
      %v3849 = vld [vmem:[%s9 + $0x390] sm:$0xf]
      %v3850 = vld [vmem:[%s9 + $0x394] sm:$0xf]
      %v3851 = vld [vmem:[%s9 + $0x398] sm:$0xf]
      %v3852 = vld [vmem:[%s9 + $0x39c] sm:$0xf]
      %v3853 = vld [vmem:[%s9 + $0x3a0] sm:$0xf]
      %v3854 = vld [vmem:[%s9 + $0x3a4] sm:$0xf]
      %v3855 = vld [vmem:[%s9 + $0x3a8] sm:$0xf]
      %v3856 = vld [vmem:[%s9 + $0x3ac] sm:$0xf]
      %v3857 = vld [vmem:[%s9 + $0x3b0] sm:$0xf]
      %v3858 = vld [vmem:[%s9 + $0x3b4] sm:$0xf]
      %v3859 = vld [vmem:[%s9 + $0x3b8] sm:$0xf]
      %v3860 = vld [vmem:[%s9 + $0x3bc] sm:$0xf]
      %v3861 = vld [vmem:[%s9 + $0x3c0] sm:$0xf]
      %v3862 = vld [vmem:[%s9 + $0x3c4] sm:$0xf]
      %v3863 = vld [vmem:[%s9 + $0x3c8] sm:$0xf]
      %v3864 = vld [vmem:[%s9 + $0x3cc] sm:$0xf]
      %v3865 = vld [vmem:[%s9 + $0x3d0] sm:$0xf]
      %v3866 = vld [vmem:[%s9 + $0x3d4] sm:$0xf]
      %v3867 = vld [vmem:[%s9 + $0x3d8] sm:$0xf]
      %v3868 = vld [vmem:[%s9 + $0x3dc] sm:$0xf]
      %v3869 = vld [vmem:[%s9 + $0x3e0] sm:$0xf]
      %v3870 = vld [vmem:[%s9 + $0x3e4] sm:$0xf]
      %v3871 = vld [vmem:[%s9 + $0x3e8] sm:$0xf]
      %v3872 = vld [vmem:[%s9 + $0x3ec] sm:$0xf]
      %v3873 = vld [vmem:[%s9 + $0x3f0] sm:$0xf]
      %v3874 = vld [vmem:[%s9 + $0x3f4] sm:$0xf]
      %v3875 = vld [vmem:[%s9 + $0x3f8] sm:$0xf]
      %v3876 = vld [vmem:[%s9 + $0x3fc] sm:$0xf]
      %v3877 = vld [vmem:[%s9 + $0x400] sm:$0xf]
      %v3878 = vld [vmem:[%s9 + $0x404] sm:$0xf]
      %v3879 = vld [vmem:[%s9 + $0x408] sm:$0xf]
      %v3880 = vld [vmem:[%s9 + $0x40c] sm:$0xf]
      %v3881 = vld [vmem:[%s9 + $0x410] sm:$0xf]
      %v3882 = vld [vmem:[%s9 + $0x414] sm:$0xf]
      %v3883 = vld [vmem:[%s9 + $0x418] sm:$0xf]
      %v3884 = vld [vmem:[%s9 + $0x41c] sm:$0xf]
      %v3885 = vld [vmem:[%s9 + $0x420] sm:$0xf]
      %v3886 = vld [vmem:[%s9 + $0x424] sm:$0xf]
      %v3887 = vld [vmem:[%s9 + $0x428] sm:$0xf]
      %v3888 = vld [vmem:[%s9 + $0x42c] sm:$0xf]
      %v3889 = vld [vmem:[%s9 + $0x430] sm:$0xf]
      %v3890 = vld [vmem:[%s9 + $0x434] sm:$0xf]
      %v3891 = vld [vmem:[%s9 + $0x438] sm:$0xf]
      %v3892 = vld [vmem:[%s9 + $0x43c] sm:$0xf]
      %v3893 = vld [vmem:[%s9 + $0x440] sm:$0xf]
      %v3894 = vld [vmem:[%s9 + $0x444] sm:$0xf]
      %v3895 = vld [vmem:[%s9 + $0x448] sm:$0xf]
      %v3896 = vld [vmem:[%s9 + $0x44c] sm:$0xf]
      %v3897 = vld [vmem:[%s9 + $0x450] sm:$0xf]
      %v3898 = vld [vmem:[%s9 + $0x454] sm:$0xf]
      %v3899 = vld [vmem:[%s9 + $0x458] sm:$0xf]
      %v3900 = vld [vmem:[%s9 + $0x45c] sm:$0xf]
      %v3901 = vld [vmem:[%s9 + $0x460] sm:$0xf]
      %v3902 = vld [vmem:[%s9 + $0x464] sm:$0xf]
      %v3903 = vld [vmem:[%s9 + $0x468] sm:$0xf]
      %v3904 = vld [vmem:[%s9 + $0x46c] sm:$0xf]
      %v3905 = vld [vmem:[%s9 + $0x470] sm:$0xf]
      %v3906 = vld [vmem:[%s9 + $0x474] sm:$0xf]
      %v3907 = vld [vmem:[%s9 + $0x478] sm:$0xf]
      %v3908 = vld [vmem:[%s9 + $0x47c] sm:$0xf]
      %v3909 = vld [vmem:[%s9 + $0x480] sm:$0xf]
      %v3910 = vld [vmem:[%s9 + $0x484] sm:$0xf]
      %v3911 = vld [vmem:[%s9 + $0x488] sm:$0xf]
      %v3912 = vld [vmem:[%s9 + $0x48c] sm:$0xf]
      %v3913 = vld [vmem:[%s9 + $0x490] sm:$0xf]
      %v3914 = vld [vmem:[%s9 + $0x494] sm:$0xf]
      %v3915 = vld [vmem:[%s9 + $0x498] sm:$0xf]
      %v3916 = vld [vmem:[%s9 + $0x49c] sm:$0xf]
      %v3917 = vld [vmem:[%s9 + $0x4a0] sm:$0xf]
      %v3918 = vld [vmem:[%s9 + $0x4a4] sm:$0xf]
      %v3919 = vld [vmem:[%s9 + $0x4a8] sm:$0xf]
      %v3920 = vld [vmem:[%s9 + $0x4ac] sm:$0xf]
      %v3921 = vld [vmem:[%s9 + $0x4b0] sm:$0xf]
      %v3922 = vld [vmem:[%s9 + $0x4b4] sm:$0xf]
      %v3923 = vld [vmem:[%s9 + $0x4b8] sm:$0xf]
      %v3924 = vld [vmem:[%s9 + $0x4bc] sm:$0xf]
      %v3925 = vld [vmem:[%s9 + $0x4c0] sm:$0xf]
      %v3926 = vld [vmem:[%s9 + $0x4c4] sm:$0xf]
      %v3927 = vld [vmem:[%s9 + $0x4c8] sm:$0xf]
      %v3928 = vld [vmem:[%s9 + $0x4cc] sm:$0xf]
      %v3929 = vld [vmem:[%s9 + $0x4d0] sm:$0xf]
      %v3930 = vld [vmem:[%s9 + $0x4d4] sm:$0xf]
      %v3931 = vld [vmem:[%s9 + $0x4d8] sm:$0xf]
      %v3932 = vld [vmem:[%s9 + $0x4dc] sm:$0xf]
      %v3933 = vld [vmem:[%s9 + $0x4e0] sm:$0xf]
      %v3934 = vld [vmem:[%s9 + $0x4e4] sm:$0xf]
      %v3935 = vld [vmem:[%s9 + $0x4e8] sm:$0xf]
      %v3936 = vld [vmem:[%s9 + $0x4ec] sm:$0xf]
      %v3937 = vld [vmem:[%s9 + $0x4f0] sm:$0xf]
      %v3938 = vld [vmem:[%s9 + $0x4f4] sm:$0xf]
      %v3939 = vld [vmem:[%s9 + $0x4f8] sm:$0xf]
      %v3940 = vld [vmem:[%s9 + $0x4fc] sm:$0xf]
      %v3941 = vld [vmem:[%s9 + $0x500] sm:$0xf]
      %v3942 = vld [vmem:[%s9 + $0x504] sm:$0xf]
      %v3943 = vld [vmem:[%s9 + $0x508] sm:$0xf]
      %v3944 = vld [vmem:[%s9 + $0x50c] sm:$0xf]
      %v3945 = vld [vmem:[%s9 + $0x510] sm:$0xf]
      %v3946 = vld [vmem:[%s9 + $0x514] sm:$0xf]
      %v3947 = vld [vmem:[%s9 + $0x518] sm:$0xf]
      %v3948 = vld [vmem:[%s9 + $0x51c] sm:$0xf]
      %v3949 = vld [vmem:[%s9 + $0x520] sm:$0xf]
      %v3950 = vld [vmem:[%s9 + $0x524] sm:$0xf]
      %v3951 = vld [vmem:[%s9 + $0x528] sm:$0xf]
      %v3952 = vld [vmem:[%s9 + $0x52c] sm:$0xf]
      %v3953 = vld [vmem:[%s9 + $0x530] sm:$0xf]
      %v3954 = vld [vmem:[%s9 + $0x534] sm:$0xf]
      %v3955 = vld [vmem:[%s9 + $0x538] sm:$0xf]
      %v3956 = vld [vmem:[%s9 + $0x53c] sm:$0xf]
      %v3957 = vld [vmem:[%s9 + $0x540] sm:$0xf]
      %v3958 = vld [vmem:[%s9 + $0x544] sm:$0xf]
      %v3959 = vld [vmem:[%s9 + $0x548] sm:$0xf]
      %v3960 = vld [vmem:[%s9 + $0x54c] sm:$0xf]
      %v3961 = vld [vmem:[%s9 + $0x550] sm:$0xf]
      %v3962 = vld [vmem:[%s9 + $0x554] sm:$0xf]
      %v3963 = vld [vmem:[%s9 + $0x558] sm:$0xf]
      %v3964 = vld [vmem:[%s9 + $0x55c] sm:$0xf]
      %v3965 = vld [vmem:[%s9 + $0x560] sm:$0xf]
      %v3966 = vld [vmem:[%s9 + $0x564] sm:$0xf]
      %v3967 = vld [vmem:[%s9 + $0x568] sm:$0xf]
      %v3968 = vld [vmem:[%s9 + $0x56c] sm:$0xf]
      %v3969 = vld [vmem:[%s9 + $0x570] sm:$0xf]
      %v3970 = vld [vmem:[%s9 + $0x574] sm:$0xf]
      %v3971 = vld [vmem:[%s9 + $0x578] sm:$0xf]
      %v3972 = vld [vmem:[%s9 + $0x57c] sm:$0xf]
      %v3973 = vld [vmem:[%s9 + $0x580] sm:$0xf]
      %v3974 = vld [vmem:[%s9 + $0x584] sm:$0xf]
      %v3975 = vld [vmem:[%s9 + $0x588] sm:$0xf]
      %v3976 = vld [vmem:[%s9 + $0x58c] sm:$0xf]
      %v3977 = vld [vmem:[%s9 + $0x590] sm:$0xf]
      %v3978 = vld [vmem:[%s9 + $0x594] sm:$0xf]
      %v3979 = vld [vmem:[%s9 + $0x598] sm:$0xf]
      %v3980 = vld [vmem:[%s9 + $0x59c] sm:$0xf]
      %v3981 = vld [vmem:[%s9 + $0x5a0] sm:$0xf]
      %v3982 = vld [vmem:[%s9 + $0x5a4] sm:$0xf]
      %v3983 = vld [vmem:[%s9 + $0x5a8] sm:$0xf]
      %v3984 = vld [vmem:[%s9 + $0x5ac] sm:$0xf]
      %v3985 = vld [vmem:[%s9 + $0x5b0] sm:$0xf]
      %v3986 = vld [vmem:[%s9 + $0x5b4] sm:$0xf]
      %v3987 = vld [vmem:[%s9 + $0x5b8] sm:$0xf]
      %v3988 = vld [vmem:[%s9 + $0x5bc] sm:$0xf]
      %v3989 = vld [vmem:[%s9 + $0x5c0] sm:$0xf]
      %v3990 = vld [vmem:[%s9 + $0x5c4] sm:$0xf]
      %v3991 = vld [vmem:[%s9 + $0x5c8] sm:$0xf]
      %v3992 = vld [vmem:[%s9 + $0x5cc] sm:$0xf]
      %v3993 = vld [vmem:[%s9 + $0x5d0] sm:$0xf]
      %v3994 = vld [vmem:[%s9 + $0x5d4] sm:$0xf]
      %v3995 = vld [vmem:[%s9 + $0x5d8] sm:$0xf]
      %v3996 = vld [vmem:[%s9 + $0x5dc] sm:$0xf]
      %v3997 = vld [vmem:[%s9 + $0x5e0] sm:$0xf]
      %v3998 = vld [vmem:[%s9 + $0x5e4] sm:$0xf]
      %v3999 = vld [vmem:[%s9 + $0x5e8] sm:$0xf]
      %v4000 = vld [vmem:[%s9 + $0x5ec] sm:$0xf]
      %v4001 = vld [vmem:[%s9 + $0x5f0] sm:$0xf]
      %v4002 = vld [vmem:[%s9 + $0x5f4] sm:$0xf]
      %v4003 = vld [vmem:[%s9 + $0x5f8] sm:$0xf]
      %v4004 = vld [vmem:[%s9 + $0x5fc] sm:$0xf]
      %v4005 = vld [vmem:[%s9 + $0x600] sm:$0xf]
      %v4006 = vld [vmem:[%s9 + $0x604] sm:$0xf]
      %v4007 = vld [vmem:[%s9 + $0x608] sm:$0xf]
      %v4008 = vld [vmem:[%s9 + $0x60c] sm:$0xf]
      %v4009 = vld [vmem:[%s9 + $0x610] sm:$0xf]
      %v4010 = vld [vmem:[%s9 + $0x614] sm:$0xf]
      %v4011 = vld [vmem:[%s9 + $0x618] sm:$0xf]
      %v4012 = vld [vmem:[%s9 + $0x61c] sm:$0xf]
      %v4013 = vld [vmem:[%s9 + $0x620] sm:$0xf]
      %v4014 = vld [vmem:[%s9 + $0x624] sm:$0xf]
      %v4015 = vld [vmem:[%s9 + $0x628] sm:$0xf]
      %v4016 = vld [vmem:[%s9 + $0x62c] sm:$0xf]
      %v4017 = vld [vmem:[%s9 + $0x630] sm:$0xf]
      %v4018 = vld [vmem:[%s9 + $0x634] sm:$0xf]
      %v4019 = vld [vmem:[%s9 + $0x638] sm:$0xf]
      %v4020 = vld [vmem:[%s9 + $0x63c] sm:$0xf]
      %v4021 = vld [vmem:[%s9 + $0x640] sm:$0xf]
      %v4022 = vld [vmem:[%s9 + $0x644] sm:$0xf]
      %v4023 = vld [vmem:[%s9 + $0x648] sm:$0xf]
      %v4024 = vld [vmem:[%s9 + $0x64c] sm:$0xf]
      %v4025 = vld [vmem:[%s9 + $0x650] sm:$0xf]
      %v4026 = vld [vmem:[%s9 + $0x654] sm:$0xf]
      %v4027 = vld [vmem:[%s9 + $0x658] sm:$0xf]
      %v4028 = vld [vmem:[%s9 + $0x65c] sm:$0xf]
      %v4029 = vld [vmem:[%s9 + $0x660] sm:$0xf]
      %v4030 = vld [vmem:[%s9 + $0x664] sm:$0xf]
      %v4031 = vld [vmem:[%s9 + $0x668] sm:$0xf]
      %v4032 = vld [vmem:[%s9 + $0x66c] sm:$0xf]
      %v4033 = vld [vmem:[%s9 + $0x670] sm:$0xf]
      %v4034 = vld [vmem:[%s9 + $0x674] sm:$0xf]
      %v4035 = vld [vmem:[%s9 + $0x678] sm:$0xf]
      %v4036 = vld [vmem:[%s9 + $0x67c] sm:$0xf]
      %v4037 = vld [vmem:[%s9 + $0x680] sm:$0xf]
      %v4038 = vld [vmem:[%s9 + $0x684] sm:$0xf]
      %v4039 = vld [vmem:[%s9 + $0x688] sm:$0xf]
      %v4040 = vld [vmem:[%s9 + $0x68c] sm:$0xf]
      %v4041 = vld [vmem:[%s9 + $0x690] sm:$0xf]
      %v4042 = vld [vmem:[%s9 + $0x694] sm:$0xf]
      %v4043 = vld [vmem:[%s9 + $0x698] sm:$0xf]
      %v4044 = vld [vmem:[%s9 + $0x69c] sm:$0xf]
      %v4045 = vld [vmem:[%s9 + $0x6a0] sm:$0xf]
      %v4046 = vld [vmem:[%s9 + $0x6a4] sm:$0xf]
      %v4047 = vld [vmem:[%s9 + $0x6a8] sm:$0xf]
      %v4048 = vld [vmem:[%s9 + $0x6ac] sm:$0xf]
      %v4049 = vld [vmem:[%s9 + $0x6b0] sm:$0xf]
      %v4050 = vld [vmem:[%s9 + $0x6b4] sm:$0xf]
      %v4051 = vld [vmem:[%s9 + $0x6b8] sm:$0xf]
      %v4052 = vld [vmem:[%s9 + $0x6bc] sm:$0xf]
      %v4165 = vunpack.c.l.b16 %v3509
      %v4166 = vunpack.c.h.b16 %v3509
      %v4167 = vunpack.c.l.b16 %v3510
      %v4168 = vunpack.c.h.b16 %v3510
      %v4169 = vunpack.c.l.b16 %v3511
      %v4170 = vunpack.c.h.b16 %v3511
      %v4171 = vunpack.c.l.b16 %v3512
      %v4172 = vunpack.c.h.b16 %v3512
      %v4173 = vunpack.c.l.b16 %v3513
      %v4174 = vunpack.c.h.b16 %v3513
      %v4175 = vunpack.c.l.b16 %v3514
      %v4176 = vunpack.c.h.b16 %v3514
      %v4177 = vunpack.c.l.b16 %v3515
      %v4178 = vunpack.c.h.b16 %v3515
      %v4179 = vunpack.c.l.b16 %v3516
      %v4180 = vunpack.c.h.b16 %v3516
      %v4181 = vunpack.c.l.b16 %v3517
      %v4182 = vunpack.c.h.b16 %v3517
      %v4183 = vunpack.c.l.b16 %v3518
      %v4184 = vunpack.c.h.b16 %v3518
      %v4185 = vunpack.c.l.b16 %v3519
      %v4186 = vunpack.c.h.b16 %v3519
      %v4187 = vunpack.c.l.b16 %v3520
      %v4188 = vunpack.c.h.b16 %v3520
      %v4189 = vunpack.c.l.b16 %v3521
      %v4190 = vunpack.c.h.b16 %v3521
      %v4191 = vunpack.c.l.b16 %v3522
      %v4192 = vunpack.c.l.b16 %v3523
      %v4193 = vunpack.c.h.b16 %v3523
      %v4194 = vunpack.c.l.b16 %v3524
      %v4195 = vunpack.c.h.b16 %v3524
      %v4196 = vunpack.c.l.b16 %v3525
      %v4197 = vunpack.c.h.b16 %v3525
      %v4198 = vunpack.c.l.b16 %v3526
      %v4199 = vunpack.c.h.b16 %v3526
      %v4200 = vunpack.c.l.b16 %v3527
      %v4201 = vunpack.c.h.b16 %v3527
      %v4202 = vunpack.c.l.b16 %v3528
      %v4203 = vunpack.c.h.b16 %v3528
      %v4204 = vunpack.c.l.b16 %v3529
      %v4205 = vunpack.c.h.b16 %v3529
      %v4206 = vunpack.c.l.b16 %v3530
      %v4207 = vunpack.c.h.b16 %v3530
      %v4208 = vunpack.c.l.b16 %v3531
      %v4209 = vunpack.c.h.b16 %v3531
      %v4210 = vunpack.c.l.b16 %v3532
      %v4211 = vunpack.c.h.b16 %v3532
      %v4212 = vunpack.c.l.b16 %v3533
      %v4213 = vunpack.c.h.b16 %v3533
      %v4214 = vunpack.c.l.b16 %v3534
      %v4215 = vunpack.c.h.b16 %v3534
      %v4216 = vunpack.c.l.b16 %v3535
      %v4217 = vunpack.c.h.b16 %v3535
      %v4218 = vunpack.c.l.b16 %v3536
      %v4219 = vunpack.c.l.b16 %v3537
      %v4220 = vunpack.c.h.b16 %v3537
      %v4221 = vunpack.c.l.b16 %v3538
      %v4222 = vunpack.c.h.b16 %v3538
      %v4223 = vunpack.c.l.b16 %v3539
      %v4224 = vunpack.c.h.b16 %v3539
      %v4225 = vunpack.c.l.b16 %v3540
      %v4226 = vunpack.c.h.b16 %v3540
      %v4227 = vunpack.c.l.b16 %v3541
      %v4228 = vunpack.c.h.b16 %v3541
      %v4229 = vunpack.c.l.b16 %v3542
      %v4230 = vunpack.c.h.b16 %v3542
      %v4231 = vunpack.c.l.b16 %v3543
      %v4232 = vunpack.c.h.b16 %v3543
      %v4233 = vunpack.c.l.b16 %v3544
      %v4234 = vunpack.c.h.b16 %v3544
      %v4235 = vunpack.c.l.b16 %v3545
      %v4236 = vunpack.c.h.b16 %v3545
      %v4237 = vunpack.c.l.b16 %v3546
      %v4238 = vunpack.c.h.b16 %v3546
      %v4239 = vunpack.c.l.b16 %v3547
      %v4240 = vunpack.c.h.b16 %v3547
      %v4241 = vunpack.c.l.b16 %v3548
      %v4242 = vunpack.c.h.b16 %v3548
      %v4243 = vunpack.c.l.b16 %v3549
      %v4244 = vunpack.c.h.b16 %v3549
      %v4245 = vunpack.c.l.b16 %v3550
      %v4246 = vunpack.c.l.b16 %v3551
      %v4247 = vunpack.c.h.b16 %v3551
      %v4248 = vunpack.c.l.b16 %v3552
      %v4249 = vunpack.c.h.b16 %v3552
      %v4250 = vunpack.c.l.b16 %v3553
      %v4251 = vunpack.c.h.b16 %v3553
      %v4252 = vunpack.c.l.b16 %v3554
      %v4253 = vunpack.c.h.b16 %v3554
      %v4254 = vunpack.c.l.b16 %v3555
      %v4255 = vunpack.c.h.b16 %v3555
      %v4256 = vunpack.c.l.b16 %v3556
      %v4257 = vunpack.c.h.b16 %v3556
      %v4258 = vunpack.c.l.b16 %v3557
      %v4259 = vunpack.c.h.b16 %v3557
      %v4260 = vunpack.c.l.b16 %v3558
      %v4261 = vunpack.c.h.b16 %v3558
      %v4262 = vunpack.c.l.b16 %v3559
      %v4263 = vunpack.c.h.b16 %v3559
      %v4264 = vunpack.c.l.b16 %v3560
      %v4265 = vunpack.c.h.b16 %v3560
      %v4266 = vunpack.c.l.b16 %v3561
      %v4267 = vunpack.c.h.b16 %v3561
      %v4268 = vunpack.c.l.b16 %v3562
      %v4269 = vunpack.c.h.b16 %v3562
      %v4270 = vunpack.c.l.b16 %v3563
      %v4271 = vunpack.c.h.b16 %v3563
      %v4272 = vunpack.c.l.b16 %v3564
      %v4273 = vunpack.c.l.b16 %v3565
      %v4274 = vunpack.c.h.b16 %v3565
      %v4275 = vunpack.c.l.b16 %v3566
      %v4276 = vunpack.c.h.b16 %v3566
      %v4277 = vunpack.c.l.b16 %v3567
      %v4278 = vunpack.c.h.b16 %v3567
      %v4279 = vunpack.c.l.b16 %v3568
      %v4280 = vunpack.c.h.b16 %v3568
      %v4281 = vunpack.c.l.b16 %v3569
      %v4282 = vunpack.c.h.b16 %v3569
      %v4283 = vunpack.c.l.b16 %v3570
      %v4284 = vunpack.c.h.b16 %v3570
      %v4285 = vunpack.c.l.b16 %v3571
      %v4286 = vunpack.c.h.b16 %v3571
      %v4287 = vunpack.c.l.b16 %v3572
      %v4288 = vunpack.c.h.b16 %v3572
      %v4289 = vunpack.c.l.b16 %v3573
      %v4290 = vunpack.c.h.b16 %v3573
      %v4291 = vunpack.c.l.b16 %v3574
      %v4292 = vunpack.c.h.b16 %v3574
      %v4293 = vunpack.c.l.b16 %v3575
      %v4294 = vunpack.c.h.b16 %v3575
      %v4295 = vunpack.c.l.b16 %v3576
      %v4296 = vunpack.c.h.b16 %v3576
      %v4297 = vunpack.c.l.b16 %v3577
      %v4298 = vunpack.c.h.b16 %v3577
      %v4299 = vunpack.c.l.b16 %v3578
      %v4300 = vunpack.c.l.b16 %v3579
      %v4301 = vunpack.c.h.b16 %v3579
      %v4302 = vunpack.c.l.b16 %v3580
      %v4303 = vunpack.c.h.b16 %v3580
      %v4304 = vunpack.c.l.b16 %v3581
      %v4305 = vunpack.c.h.b16 %v3581
      %v4306 = vunpack.c.l.b16 %v3582
      %v4307 = vunpack.c.h.b16 %v3582
      %v4308 = vunpack.c.l.b16 %v3583
      %v4309 = vunpack.c.h.b16 %v3583
      %v4310 = vunpack.c.l.b16 %v3584
      %v4311 = vunpack.c.h.b16 %v3584
      %v4312 = vunpack.c.l.b16 %v3585
      %v4313 = vunpack.c.h.b16 %v3585
      %v4314 = vunpack.c.l.b16 %v3586
      %v4315 = vunpack.c.h.b16 %v3586
      %v4316 = vunpack.c.l.b16 %v3587
      %v4317 = vunpack.c.h.b16 %v3587
      %v4318 = vunpack.c.l.b16 %v3588
      %v4319 = vunpack.c.h.b16 %v3588
      %v4320 = vunpack.c.l.b16 %v3589
      %v4321 = vunpack.c.h.b16 %v3589
      %v4322 = vunpack.c.l.b16 %v3590
      %v4323 = vunpack.c.h.b16 %v3590
      %v4324 = vunpack.c.l.b16 %v3591
      %v4325 = vunpack.c.h.b16 %v3591
      %v4326 = vunpack.c.l.b16 %v3592
      %v4327 = vunpack.c.l.b16 %v3593
      %v4328 = vunpack.c.h.b16 %v3593
      %v4329 = vunpack.c.l.b16 %v3594
      %v4330 = vunpack.c.h.b16 %v3594
      %v4331 = vunpack.c.l.b16 %v3595
      %v4332 = vunpack.c.h.b16 %v3595
      %v4333 = vunpack.c.l.b16 %v3596
      %v4334 = vunpack.c.h.b16 %v3596
      %v4335 = vunpack.c.l.b16 %v3597
      %v4336 = vunpack.c.h.b16 %v3597
      %v4337 = vunpack.c.l.b16 %v3598
      %v4338 = vunpack.c.h.b16 %v3598
      %v4339 = vunpack.c.l.b16 %v3599
      %v4340 = vunpack.c.h.b16 %v3599
      %v4341 = vunpack.c.l.b16 %v3600
      %v4342 = vunpack.c.h.b16 %v3600
      %v4343 = vunpack.c.l.b16 %v3601
      %v4344 = vunpack.c.h.b16 %v3601
      %v4345 = vunpack.c.l.b16 %v3602
      %v4346 = vunpack.c.h.b16 %v3602
      %v4347 = vunpack.c.l.b16 %v3603
      %v4348 = vunpack.c.h.b16 %v3603
      %v4349 = vunpack.c.l.b16 %v3604
      %v4350 = vunpack.c.h.b16 %v3604
      %v4351 = vunpack.c.l.b16 %v3605
      %v4352 = vunpack.c.h.b16 %v3605
      %v4353 = vunpack.c.l.b16 %v3606
      %v4354 = vunpack.c.l.b16 %v3607
      %v4355 = vunpack.c.h.b16 %v3607
      %v4356 = vunpack.c.l.b16 %v3608
      %v4357 = vunpack.c.h.b16 %v3608
      %v4358 = vunpack.c.l.b16 %v3609
      %v4359 = vunpack.c.h.b16 %v3609
      %v4360 = vunpack.c.l.b16 %v3610
      %v4361 = vunpack.c.h.b16 %v3610
      %v4362 = vunpack.c.l.b16 %v3611
      %v4363 = vunpack.c.h.b16 %v3611
      %v4364 = vunpack.c.l.b16 %v3612
      %v4365 = vunpack.c.h.b16 %v3612
      %v4366 = vunpack.c.l.b16 %v3613
      %v4367 = vunpack.c.h.b16 %v3613
      %v4368 = vunpack.c.l.b16 %v3614
      %v4369 = vunpack.c.h.b16 %v3614
      %v4370 = vunpack.c.l.b16 %v3615
      %v4371 = vunpack.c.h.b16 %v3615
      %v4372 = vunpack.c.l.b16 %v3616
      %v4373 = vunpack.c.h.b16 %v3616
      %v4374 = vunpack.c.l.b16 %v3617
      %v4375 = vunpack.c.h.b16 %v3617
      %v4376 = vunpack.c.l.b16 %v3618
      %v4377 = vunpack.c.h.b16 %v3618
      %v4378 = vunpack.c.l.b16 %v3619
      %v4379 = vunpack.c.h.b16 %v3619
      %v4380 = vunpack.c.l.b16 %v3620
      %v4381 = vpack.c.b16 %v4192, %v4165
      %v4382 = vpack.c.b16 %v4193, %v4166
      %v4383 = vpack.c.b16 %v4194, %v4167
      %v4384 = vpack.c.b16 %v4195, %v4168
      %v4385 = vpack.c.b16 %v4196, %v4169
      %v4386 = vpack.c.b16 %v4197, %v4170
      %v4387 = vpack.c.b16 %v4198, %v4171
      %v4388 = vpack.c.b16 %v4199, %v4172
      %v4389 = vpack.c.b16 %v4200, %v4173
      %v4390 = vpack.c.b16 %v4201, %v4174
      %v4391 = vpack.c.b16 %v4202, %v4175
      %v4392 = vpack.c.b16 %v4203, %v4176
      %v4393 = vpack.c.b16 %v4204, %v4177
      %v4394 = vpack.c.b16 %v4205, %v4178
      %v4395 = vpack.c.b16 %v4206, %v4179
      %v4396 = vpack.c.b16 %v4207, %v4180
      %v4397 = vpack.c.b16 %v4208, %v4181
      %v4398 = vpack.c.b16 %v4209, %v4182
      %v4399 = vpack.c.b16 %v4210, %v4183
      %v4400 = vpack.c.b16 %v4211, %v4184
      %v4401 = vpack.c.b16 %v4212, %v4185
      %v4402 = vpack.c.b16 %v4213, %v4186
      %v4403 = vpack.c.b16 %v4214, %v4187
      %v4404 = vpack.c.b16 %v4215, %v4188
      %v4405 = vpack.c.b16 %v4216, %v4189
      %v4406 = vpack.c.b16 %v4217, %v4190
      %v4407 = vpack.c.b16 %v4218, %v4191
      %v4408 = vpack.c.b16 %v4246, %v4219
      %v4409 = vpack.c.b16 %v4247, %v4220
      %v4410 = vpack.c.b16 %v4248, %v4221
      %v4411 = vpack.c.b16 %v4249, %v4222
      %v4412 = vpack.c.b16 %v4250, %v4223
      %v4413 = vpack.c.b16 %v4251, %v4224
      %v4414 = vpack.c.b16 %v4252, %v4225
      %v4415 = vpack.c.b16 %v4253, %v4226
      %v4416 = vpack.c.b16 %v4254, %v4227
      %v4417 = vpack.c.b16 %v4255, %v4228
      %v4418 = vpack.c.b16 %v4256, %v4229
      %v4419 = vpack.c.b16 %v4257, %v4230
      %v4420 = vpack.c.b16 %v4258, %v4231
      %v4421 = vpack.c.b16 %v4259, %v4232
      %v4422 = vpack.c.b16 %v4260, %v4233
      %v4423 = vpack.c.b16 %v4261, %v4234
      %v4424 = vpack.c.b16 %v4262, %v4235
      %v4425 = vpack.c.b16 %v4263, %v4236
      %v4426 = vpack.c.b16 %v4264, %v4237
      %v4427 = vpack.c.b16 %v4265, %v4238
      %v4428 = vpack.c.b16 %v4266, %v4239
      %v4429 = vpack.c.b16 %v4267, %v4240
      %v4430 = vpack.c.b16 %v4268, %v4241
      %v4431 = vpack.c.b16 %v4269, %v4242
      %v4432 = vpack.c.b16 %v4270, %v4243
      %v4433 = vpack.c.b16 %v4271, %v4244
      %v4434 = vpack.c.b16 %v4272, %v4245
      %v4435 = vpack.c.b16 %v4300, %v4273
      %v4436 = vpack.c.b16 %v4301, %v4274
      %v4437 = vpack.c.b16 %v4302, %v4275
      %v4438 = vpack.c.b16 %v4303, %v4276
      %v4439 = vpack.c.b16 %v4304, %v4277
      %v4440 = vpack.c.b16 %v4305, %v4278
      %v4441 = vpack.c.b16 %v4306, %v4279
      %v4442 = vpack.c.b16 %v4307, %v4280
      %v4443 = vpack.c.b16 %v4308, %v4281
      %v4444 = vpack.c.b16 %v4309, %v4282
      %v4445 = vpack.c.b16 %v4310, %v4283
      %v4446 = vpack.c.b16 %v4311, %v4284
      %v4447 = vpack.c.b16 %v4312, %v4285
      %v4448 = vpack.c.b16 %v4313, %v4286
      %v4449 = vpack.c.b16 %v4314, %v4287
      %v4450 = vpack.c.b16 %v4315, %v4288
      %v4451 = vpack.c.b16 %v4316, %v4289
      %v4452 = vpack.c.b16 %v4317, %v4290
      %v4453 = vpack.c.b16 %v4318, %v4291
      %v4454 = vpack.c.b16 %v4319, %v4292
      %v4455 = vpack.c.b16 %v4320, %v4293
      %v4456 = vpack.c.b16 %v4321, %v4294
      %v4457 = vpack.c.b16 %v4322, %v4295
      %v4458 = vpack.c.b16 %v4323, %v4296
      %v4459 = vpack.c.b16 %v4324, %v4297
      %v4460 = vpack.c.b16 %v4325, %v4298
      %v4461 = vpack.c.b16 %v4326, %v4299
      %v4462 = vpack.c.b16 %v4354, %v4327
      %v4463 = vpack.c.b16 %v4355, %v4328
      %v4464 = vpack.c.b16 %v4356, %v4329
      %v4465 = vpack.c.b16 %v4357, %v4330
      %v4466 = vpack.c.b16 %v4358, %v4331
      %v4467 = vpack.c.b16 %v4359, %v4332
      %v4468 = vpack.c.b16 %v4360, %v4333
      %v4469 = vpack.c.b16 %v4361, %v4334
      %v4470 = vpack.c.b16 %v4362, %v4335
      %v4471 = vpack.c.b16 %v4363, %v4336
      %v4472 = vpack.c.b16 %v4364, %v4337
      %v4473 = vpack.c.b16 %v4365, %v4338
      %v4474 = vpack.c.b16 %v4366, %v4339
      %v4475 = vpack.c.b16 %v4367, %v4340
      %v4476 = vpack.c.b16 %v4368, %v4341
      %v4477 = vpack.c.b16 %v4369, %v4342
      %v4478 = vpack.c.b16 %v4370, %v4343
      %v4479 = vpack.c.b16 %v4371, %v4344
      %v4480 = vpack.c.b16 %v4372, %v4345
      %v4481 = vpack.c.b16 %v4373, %v4346
      %v4482 = vpack.c.b16 %v4374, %v4347
      %v4483 = vpack.c.b16 %v4375, %v4348
      %v4484 = vpack.c.b16 %v4376, %v4349
      %v4485 = vpack.c.b16 %v4377, %v4350
      %v4486 = vpack.c.b16 %v4378, %v4351
      %v4487 = vpack.c.b16 %v4379, %v4352
      %v4488 = vpack.c.b16 %v4380, %v4353
      %v5029 = vunpack.c.l.b16 %v3621
      %v5030 = vunpack.c.l.b16 %v3622
      %v5031 = vunpack.c.l.b16 %v3623
      %v5032 = vunpack.c.l.b16 %v3624
      %v5033 = vunpack.c.l.b16 %v3625
      %v5034 = vunpack.c.l.b16 %v3626
      %v5035 = vunpack.c.l.b16 %v3627
      %v5036 = vunpack.c.l.b16 %v3628
      %v5037 = vunpack.c.l.b16 %v3629
      %v5038 = vunpack.c.l.b16 %v3630
      %v5039 = vunpack.c.l.b16 %v3631
      %v5040 = vunpack.c.l.b16 %v3632
      %v5041 = vunpack.c.l.b16 %v3633
      %v5042 = vunpack.c.l.b16 %v3634
      %v5043 = vunpack.c.l.b16 %v3635
      %v5044 = vunpack.c.l.b16 %v3636
      %v5045 = vunpack.c.l.b16 %v3637
      %v5046 = vunpack.c.l.b16 %v3638
      %v5047 = vunpack.c.l.b16 %v3639
      %v5048 = vunpack.c.l.b16 %v3640
      %v5049 = vunpack.c.l.b16 %v3641
      %v5050 = vunpack.c.l.b16 %v3642
      %v5051 = vunpack.c.l.b16 %v3643
      %v5052 = vunpack.c.l.b16 %v3644
      %v5053 = vunpack.c.l.b16 %v3645
      %v5054 = vunpack.c.l.b16 %v3646
      %v5055 = vunpack.c.l.b16 %v3647
      %v5056 = vunpack.c.l.b16 %v3648
      %v5057 = vunpack.c.l.b16 %v3649
      %v5058 = vunpack.c.l.b16 %v3650
      %v5059 = vunpack.c.l.b16 %v3651
      %v5060 = vunpack.c.l.b16 %v3652
      %v5061 = vunpack.c.l.b16 %v3653
      %v5062 = vunpack.c.l.b16 %v3654
      %v5063 = vunpack.c.l.b16 %v3655
      %v5064 = vunpack.c.l.b16 %v3656
      %v5065 = vunpack.c.l.b16 %v3657
      %v5066 = vunpack.c.l.b16 %v3658
      %v5067 = vunpack.c.l.b16 %v3659
      %v5068 = vunpack.c.l.b16 %v3660
      %v5069 = vunpack.c.l.b16 %v3661
      %v5070 = vunpack.c.l.b16 %v3662
      %v5071 = vunpack.c.l.b16 %v3663
      %v5072 = vunpack.c.l.b16 %v3664
      %v5073 = vunpack.c.l.b16 %v3665
      %v5074 = vunpack.c.l.b16 %v3666
      %v5075 = vunpack.c.l.b16 %v3667
      %v5076 = vunpack.c.l.b16 %v3668
      %v5077 = vunpack.c.l.b16 %v3669
      %v5078 = vunpack.c.l.b16 %v3670
      %v5079 = vunpack.c.l.b16 %v3671
      %v5080 = vunpack.c.l.b16 %v3672
      %v5081 = vunpack.c.l.b16 %v3673
      %v5082 = vunpack.c.l.b16 %v3674
      %v5083 = vunpack.c.l.b16 %v3675
      %v5084 = vunpack.c.l.b16 %v3676
      %v5085 = vunpack.c.l.b16 %v3677
      %v5086 = vunpack.c.l.b16 %v3678
      %v5087 = vunpack.c.l.b16 %v3679
      %v5088 = vunpack.c.l.b16 %v3680
      %v5089 = vunpack.c.l.b16 %v3681
      %v5090 = vunpack.c.l.b16 %v3682
      %v5091 = vunpack.c.l.b16 %v3683
      %v5092 = vunpack.c.l.b16 %v3684
      %v5093 = vunpack.c.l.b16 %v3685
      %v5094 = vunpack.c.l.b16 %v3686
      %v5095 = vunpack.c.l.b16 %v3687
      %v5096 = vunpack.c.l.b16 %v3688
      %v5097 = vunpack.c.l.b16 %v3689
      %v5098 = vunpack.c.l.b16 %v3690
      %v5099 = vunpack.c.l.b16 %v3691
      %v5100 = vunpack.c.l.b16 %v3692
      %v5101 = vunpack.c.l.b16 %v3693
      %v5102 = vunpack.c.l.b16 %v3694
      %v5103 = vunpack.c.l.b16 %v3695
      %v5104 = vunpack.c.l.b16 %v3696
      %v5105 = vunpack.c.l.b16 %v3697
      %v5106 = vunpack.c.l.b16 %v3698
      %v5107 = vunpack.c.l.b16 %v3699
      %v5108 = vunpack.c.l.b16 %v3700
      %v5109 = vunpack.c.l.b16 %v3701
      %v5110 = vunpack.c.l.b16 %v3702
      %v5111 = vunpack.c.l.b16 %v3703
      %v5112 = vunpack.c.l.b16 %v3704
      %v5113 = vunpack.c.l.b16 %v3705
      %v5114 = vunpack.c.l.b16 %v3706
      %v5115 = vunpack.c.l.b16 %v3707
      %v5116 = vunpack.c.l.b16 %v3708
      %v5117 = vunpack.c.l.b16 %v3709
      %v5118 = vunpack.c.l.b16 %v3710
      %v5119 = vunpack.c.l.b16 %v3711
      %v5120 = vunpack.c.l.b16 %v3712
      %v5121 = vunpack.c.l.b16 %v3713
      %v5122 = vunpack.c.l.b16 %v3714
      %v5123 = vunpack.c.l.b16 %v3715
      %v5124 = vunpack.c.l.b16 %v3716
      %v5125 = vunpack.c.l.b16 %v3717
      %v5126 = vunpack.c.l.b16 %v3718
      %v5127 = vunpack.c.l.b16 %v3719
      %v5128 = vunpack.c.l.b16 %v3720
      %v5129 = vunpack.c.l.b16 %v3721
      %v5130 = vunpack.c.l.b16 %v3722
      %v5131 = vunpack.c.l.b16 %v3723
      %v5132 = vunpack.c.l.b16 %v3724
      %v5133 = vunpack.c.l.b16 %v3725
      %v5134 = vunpack.c.l.b16 %v3726
      %v5135 = vunpack.c.l.b16 %v3727
      %v5136 = vunpack.c.l.b16 %v3728
      %v5137 = vunpack.c.l.b16 %v3729
      %v5138 = vunpack.c.l.b16 %v3730
      %v5139 = vunpack.c.l.b16 %v3731
      %v5140 = vunpack.c.l.b16 %v3732
      %v5141 = vunpack.c.l.b16 %v3733
      %v5142 = vunpack.c.l.b16 %v3734
      %v5143 = vunpack.c.l.b16 %v3735
      %v5144 = vunpack.c.l.b16 %v3736
      %v5145 = vunpack.c.l.b16 %v3737
      %v5146 = vunpack.c.l.b16 %v3738
      %v5147 = vunpack.c.l.b16 %v3739
      %v5148 = vunpack.c.l.b16 %v3740
      %v5149 = vunpack.c.l.b16 %v3741
      %v5150 = vunpack.c.l.b16 %v3742
      %v5151 = vunpack.c.l.b16 %v3743
      %v5152 = vunpack.c.l.b16 %v3744
      %v5153 = vunpack.c.l.b16 %v3745
      %v5154 = vunpack.c.l.b16 %v3746
      %v5155 = vunpack.c.l.b16 %v3747
      %v5156 = vunpack.c.l.b16 %v3748
      %v5157 = vunpack.c.l.b16 %v3749
      %v5158 = vunpack.c.l.b16 %v3750
      %v5159 = vunpack.c.l.b16 %v3751
      %v5160 = vunpack.c.l.b16 %v3752
      %v5161 = vunpack.c.l.b16 %v3753
      %v5162 = vunpack.c.l.b16 %v3754
      %v5163 = vunpack.c.l.b16 %v3755
      %v5164 = vunpack.c.l.b16 %v3756
      %v5165 = vunpack.c.l.b16 %v3757
      %v5166 = vunpack.c.l.b16 %v3758
      %v5167 = vunpack.c.l.b16 %v3759
      %v5168 = vunpack.c.l.b16 %v3760
      %v5169 = vunpack.c.l.b16 %v3761
      %v5170 = vunpack.c.l.b16 %v3762
      %v5171 = vunpack.c.l.b16 %v3763
      %v5172 = vunpack.c.l.b16 %v3764
      %v5173 = vunpack.c.l.b16 %v3765
      %v5174 = vunpack.c.l.b16 %v3766
      %v5175 = vunpack.c.l.b16 %v3767
      %v5176 = vunpack.c.l.b16 %v3768
      %v5177 = vunpack.c.l.b16 %v3769
      %v5178 = vunpack.c.l.b16 %v3770
      %v5179 = vunpack.c.l.b16 %v3771
      %v5180 = vunpack.c.l.b16 %v3772
      %v5181 = vunpack.c.l.b16 %v3773
      %v5182 = vunpack.c.l.b16 %v3774
      %v5183 = vunpack.c.l.b16 %v3775
      %v5184 = vunpack.c.l.b16 %v3776
      %v5185 = vunpack.c.l.b16 %v3777
      %v5186 = vunpack.c.l.b16 %v3778
      %v5187 = vunpack.c.l.b16 %v3779
      %v5188 = vunpack.c.l.b16 %v3780
      %v5189 = vunpack.c.l.b16 %v3781
      %v5190 = vunpack.c.l.b16 %v3782
      %v5191 = vunpack.c.l.b16 %v3783
      %v5192 = vunpack.c.l.b16 %v3784
      %v5193 = vunpack.c.l.b16 %v3785
      %v5194 = vunpack.c.l.b16 %v3786
      %v5195 = vunpack.c.l.b16 %v3787
      %v5196 = vunpack.c.l.b16 %v3788
      %v5197 = vunpack.c.l.b16 %v3789
      %v5198 = vunpack.c.l.b16 %v3790
      %v5199 = vunpack.c.l.b16 %v3791
      %v5200 = vunpack.c.l.b16 %v3792
      %v5201 = vunpack.c.l.b16 %v3793
      %v5202 = vunpack.c.l.b16 %v3794
      %v5203 = vunpack.c.l.b16 %v3795
      %v5204 = vunpack.c.l.b16 %v3796
      %v5205 = vunpack.c.l.b16 %v3797
      %v5206 = vunpack.c.l.b16 %v3798
      %v5207 = vunpack.c.l.b16 %v3799
      %v5208 = vunpack.c.l.b16 %v3800
      %v5209 = vunpack.c.l.b16 %v3801
      %v5210 = vunpack.c.l.b16 %v3802
      %v5211 = vunpack.c.l.b16 %v3803
      %v5212 = vunpack.c.l.b16 %v3804
      %v5213 = vunpack.c.l.b16 %v3805
      %v5214 = vunpack.c.l.b16 %v3806
      %v5215 = vunpack.c.l.b16 %v3807
      %v5216 = vunpack.c.l.b16 %v3808
      %v5217 = vunpack.c.l.b16 %v3809
      %v5218 = vunpack.c.l.b16 %v3810
      %v5219 = vunpack.c.l.b16 %v3811
      %v5220 = vunpack.c.l.b16 %v3812
      %v5221 = vunpack.c.l.b16 %v3813
      %v5222 = vunpack.c.l.b16 %v3814
      %v5223 = vunpack.c.l.b16 %v3815
      %v5224 = vunpack.c.l.b16 %v3816
      %v5225 = vunpack.c.l.b16 %v3817
      %v5226 = vunpack.c.l.b16 %v3818
      %v5227 = vunpack.c.l.b16 %v3819
      %v5228 = vunpack.c.l.b16 %v3820
      %v5229 = vunpack.c.l.b16 %v3821
      %v5230 = vunpack.c.l.b16 %v3822
      %v5231 = vunpack.c.l.b16 %v3823
      %v5232 = vunpack.c.l.b16 %v3824
      %v5233 = vunpack.c.l.b16 %v3825
      %v5234 = vunpack.c.l.b16 %v3826
      %v5235 = vunpack.c.l.b16 %v3827
      %v5236 = vunpack.c.l.b16 %v3828
      %v5237 = vunpack.c.l.b16 %v3829
      %v5238 = vunpack.c.l.b16 %v3830
      %v5239 = vunpack.c.l.b16 %v3831
      %v5240 = vunpack.c.l.b16 %v3832
      %v5241 = vunpack.c.l.b16 %v3833
      %v5242 = vunpack.c.l.b16 %v3834
      %v5243 = vunpack.c.l.b16 %v3835
      %v5244 = vunpack.c.l.b16 %v3836
      %v5245 = vunpack.c.l.b16 %v3837
      %v5246 = vunpack.c.l.b16 %v3838
      %v5247 = vunpack.c.l.b16 %v3839
      %v5248 = vunpack.c.l.b16 %v3840
      %v5249 = vunpack.c.l.b16 %v3841
      %v5250 = vunpack.c.l.b16 %v3842
      %v5251 = vunpack.c.l.b16 %v3843
      %v5252 = vunpack.c.l.b16 %v3844
      %v5253 = vunpack.c.l.b16 %v3845
      %v5254 = vunpack.c.l.b16 %v3846
      %v5255 = vunpack.c.l.b16 %v3847
      %v5256 = vunpack.c.l.b16 %v3848
      %v5257 = vunpack.c.l.b16 %v3849
      %v5258 = vunpack.c.l.b16 %v3850
      %v5259 = vunpack.c.l.b16 %v3851
      %v5260 = vunpack.c.l.b16 %v3852
      %v5261 = vunpack.c.l.b16 %v3853
      %v5262 = vunpack.c.l.b16 %v3854
      %v5263 = vunpack.c.l.b16 %v3855
      %v5264 = vunpack.c.l.b16 %v3856
      %v5265 = vunpack.c.l.b16 %v3857
      %v5266 = vunpack.c.l.b16 %v3858
      %v5267 = vunpack.c.l.b16 %v3859
      %v5268 = vunpack.c.l.b16 %v3860
      %v5269 = vunpack.c.l.b16 %v3861
      %v5270 = vunpack.c.l.b16 %v3862
      %v5271 = vunpack.c.l.b16 %v3863
      %v5272 = vunpack.c.l.b16 %v3864
      %v5273 = vunpack.c.l.b16 %v3865
      %v5274 = vunpack.c.l.b16 %v3866
      %v5275 = vunpack.c.l.b16 %v3867
      %v5276 = vunpack.c.l.b16 %v3868
      %v5277 = vunpack.c.l.b16 %v3869
      %v5278 = vunpack.c.l.b16 %v3870
      %v5279 = vunpack.c.l.b16 %v3871
      %v5280 = vunpack.c.l.b16 %v3872
      %v5281 = vunpack.c.l.b16 %v3873
      %v5282 = vunpack.c.l.b16 %v3874
      %v5283 = vunpack.c.l.b16 %v3875
      %v5284 = vunpack.c.l.b16 %v3876
      %v5285 = vunpack.c.l.b16 %v3877
      %v5286 = vunpack.c.l.b16 %v3878
      %v5287 = vunpack.c.l.b16 %v3879
      %v5288 = vunpack.c.l.b16 %v3880
      %v5289 = vunpack.c.l.b16 %v3881
      %v5290 = vunpack.c.l.b16 %v3882
      %v5291 = vunpack.c.l.b16 %v3883
      %v5292 = vunpack.c.l.b16 %v3884
      %v5293 = vunpack.c.l.b16 %v3885
      %v5294 = vunpack.c.l.b16 %v3886
      %v5295 = vunpack.c.l.b16 %v3887
      %v5296 = vunpack.c.l.b16 %v3888
      %v5297 = vunpack.c.l.b16 %v3889
      %v5298 = vunpack.c.l.b16 %v3890
      %v5299 = vunpack.c.l.b16 %v3891
      %v5300 = vunpack.c.l.b16 %v3892
      %v5301 = vunpack.c.l.b16 %v3893
      %v5302 = vunpack.c.l.b16 %v3894
      %v5303 = vunpack.c.l.b16 %v3895
      %v5304 = vunpack.c.l.b16 %v3896
      %v5305 = vunpack.c.l.b16 %v3897
      %v5306 = vunpack.c.l.b16 %v3898
      %v5307 = vunpack.c.l.b16 %v3899
      %v5308 = vunpack.c.l.b16 %v3900
      %v5309 = vunpack.c.l.b16 %v3901
      %v5310 = vunpack.c.l.b16 %v3902
      %v5311 = vunpack.c.l.b16 %v3903
      %v5312 = vunpack.c.l.b16 %v3904
      %v5313 = vunpack.c.l.b16 %v3905
      %v5314 = vunpack.c.l.b16 %v3906
      %v5315 = vunpack.c.l.b16 %v3907
      %v5316 = vunpack.c.l.b16 %v3908
      %v5317 = vunpack.c.l.b16 %v3909
      %v5318 = vunpack.c.l.b16 %v3910
      %v5319 = vunpack.c.l.b16 %v3911
      %v5320 = vunpack.c.l.b16 %v3912
      %v5321 = vunpack.c.l.b16 %v3913
      %v5322 = vunpack.c.l.b16 %v3914
      %v5323 = vunpack.c.l.b16 %v3915
      %v5324 = vunpack.c.l.b16 %v3916
      %v5325 = vunpack.c.l.b16 %v3917
      %v5326 = vunpack.c.l.b16 %v3918
      %v5327 = vunpack.c.l.b16 %v3919
      %v5328 = vunpack.c.l.b16 %v3920
      %v5329 = vunpack.c.l.b16 %v3921
      %v5330 = vunpack.c.l.b16 %v3922
      %v5331 = vunpack.c.l.b16 %v3923
      %v5332 = vunpack.c.l.b16 %v3924
      %v5333 = vunpack.c.l.b16 %v3925
      %v5334 = vunpack.c.l.b16 %v3926
      %v5335 = vunpack.c.l.b16 %v3927
      %v5336 = vunpack.c.l.b16 %v3928
      %v5337 = vunpack.c.l.b16 %v3929
      %v5338 = vunpack.c.l.b16 %v3930
      %v5339 = vunpack.c.l.b16 %v3931
      %v5340 = vunpack.c.l.b16 %v3932
      %v5341 = vunpack.c.l.b16 %v3933
      %v5342 = vunpack.c.l.b16 %v3934
      %v5343 = vunpack.c.l.b16 %v3935
      %v5344 = vunpack.c.l.b16 %v3936
      %v5345 = vunpack.c.l.b16 %v3937
      %v5346 = vunpack.c.l.b16 %v3938
      %v5347 = vunpack.c.l.b16 %v3939
      %v5348 = vunpack.c.l.b16 %v3940
      %v5349 = vunpack.c.l.b16 %v3941
      %v5350 = vunpack.c.l.b16 %v3942
      %v5351 = vunpack.c.l.b16 %v3943
      %v5352 = vunpack.c.l.b16 %v3944
      %v5353 = vunpack.c.l.b16 %v3945
      %v5354 = vunpack.c.l.b16 %v3946
      %v5355 = vunpack.c.l.b16 %v3947
      %v5356 = vunpack.c.l.b16 %v3948
      %v5357 = vunpack.c.l.b16 %v3949
      %v5358 = vunpack.c.l.b16 %v3950
      %v5359 = vunpack.c.l.b16 %v3951
      %v5360 = vunpack.c.l.b16 %v3952
      %v5361 = vunpack.c.l.b16 %v3953
      %v5362 = vunpack.c.l.b16 %v3954
      %v5363 = vunpack.c.l.b16 %v3955
      %v5364 = vunpack.c.l.b16 %v3956
      %v5365 = vunpack.c.l.b16 %v3957
      %v5366 = vunpack.c.l.b16 %v3958
      %v5367 = vunpack.c.l.b16 %v3959
      %v5368 = vunpack.c.l.b16 %v3960
      %v5369 = vunpack.c.l.b16 %v3961
      %v5370 = vunpack.c.l.b16 %v3962
      %v5371 = vunpack.c.l.b16 %v3963
      %v5372 = vunpack.c.l.b16 %v3964
      %v5373 = vunpack.c.l.b16 %v3965
      %v5374 = vunpack.c.l.b16 %v3966
      %v5375 = vunpack.c.l.b16 %v3967
      %v5376 = vunpack.c.l.b16 %v3968
      %v5377 = vunpack.c.l.b16 %v3969
      %v5378 = vunpack.c.l.b16 %v3970
      %v5379 = vunpack.c.l.b16 %v3971
      %v5380 = vunpack.c.l.b16 %v3972
      %v5381 = vunpack.c.l.b16 %v3973
      %v5382 = vunpack.c.l.b16 %v3974
      %v5383 = vunpack.c.l.b16 %v3975
      %v5384 = vunpack.c.l.b16 %v3976
      %v5385 = vunpack.c.l.b16 %v3977
      %v5386 = vunpack.c.l.b16 %v3978
      %v5387 = vunpack.c.l.b16 %v3979
      %v5388 = vunpack.c.l.b16 %v3980
      %v5389 = vunpack.c.l.b16 %v3981
      %v5390 = vunpack.c.l.b16 %v3982
      %v5391 = vunpack.c.l.b16 %v3983
      %v5392 = vunpack.c.l.b16 %v3984
      %v5393 = vunpack.c.l.b16 %v3985
      %v5394 = vunpack.c.l.b16 %v3986
      %v5395 = vunpack.c.l.b16 %v3987
      %v5396 = vunpack.c.l.b16 %v3988
      %v5397 = vunpack.c.l.b16 %v3989
      %v5398 = vunpack.c.l.b16 %v3990
      %v5399 = vunpack.c.l.b16 %v3991
      %v5400 = vunpack.c.l.b16 %v3992
      %v5401 = vunpack.c.l.b16 %v3993
      %v5402 = vunpack.c.l.b16 %v3994
      %v5403 = vunpack.c.l.b16 %v3995
      %v5404 = vunpack.c.l.b16 %v3996
      %v5405 = vunpack.c.l.b16 %v3997
      %v5406 = vunpack.c.l.b16 %v3998
      %v5407 = vunpack.c.l.b16 %v3999
      %v5408 = vunpack.c.l.b16 %v4000
      %v5409 = vunpack.c.l.b16 %v4001
      %v5410 = vunpack.c.l.b16 %v4002
      %v5411 = vunpack.c.l.b16 %v4003
      %v5412 = vunpack.c.l.b16 %v4004
      %v5413 = vunpack.c.l.b16 %v4005
      %v5414 = vunpack.c.l.b16 %v4006
      %v5415 = vunpack.c.l.b16 %v4007
      %v5416 = vunpack.c.l.b16 %v4008
      %v5417 = vunpack.c.l.b16 %v4009
      %v5418 = vunpack.c.l.b16 %v4010
      %v5419 = vunpack.c.l.b16 %v4011
      %v5420 = vunpack.c.l.b16 %v4012
      %v5421 = vunpack.c.l.b16 %v4013
      %v5422 = vunpack.c.l.b16 %v4014
      %v5423 = vunpack.c.l.b16 %v4015
      %v5424 = vunpack.c.l.b16 %v4016
      %v5425 = vunpack.c.l.b16 %v4017
      %v5426 = vunpack.c.l.b16 %v4018
      %v5427 = vunpack.c.l.b16 %v4019
      %v5428 = vunpack.c.l.b16 %v4020
      %v5429 = vunpack.c.l.b16 %v4021
      %v5430 = vunpack.c.l.b16 %v4022
      %v5431 = vunpack.c.l.b16 %v4023
      %v5432 = vunpack.c.l.b16 %v4024
      %v5433 = vunpack.c.l.b16 %v4025
      %v5434 = vunpack.c.l.b16 %v4026
      %v5435 = vunpack.c.l.b16 %v4027
      %v5436 = vunpack.c.l.b16 %v4028
      %v5437 = vunpack.c.l.b16 %v4029
      %v5438 = vunpack.c.l.b16 %v4030
      %v5439 = vunpack.c.l.b16 %v4031
      %v5440 = vunpack.c.l.b16 %v4032
      %v5441 = vunpack.c.l.b16 %v4033
      %v5442 = vunpack.c.l.b16 %v4034
      %v5443 = vunpack.c.l.b16 %v4035
      %v5444 = vunpack.c.l.b16 %v4036
      %v5445 = vunpack.c.l.b16 %v4037
      %v5446 = vunpack.c.l.b16 %v4038
      %v5447 = vunpack.c.l.b16 %v4039
      %v5448 = vunpack.c.l.b16 %v4040
      %v5449 = vunpack.c.l.b16 %v4041
      %v5450 = vunpack.c.l.b16 %v4042
      %v5451 = vunpack.c.l.b16 %v4043
      %v5452 = vunpack.c.l.b16 %v4044
      %v5453 = vunpack.c.l.b16 %v4045
      %v5454 = vunpack.c.l.b16 %v4046
      %v5455 = vunpack.c.l.b16 %v4047
      %v5456 = vunpack.c.l.b16 %v4048
      %v5457 = vunpack.c.l.b16 %v4049
      %v5458 = vunpack.c.l.b16 %v4050
      %v5459 = vunpack.c.l.b16 %v4051
      %v5460 = vunpack.c.l.b16 %v4052
      %v5461 = vpack.c.b16 %v5030, %v5029
      %v5462 = vpack.c.b16 %v5032, %v5031
      %v5463 = vpack.c.b16 %v5034, %v5033
      %v5464 = vpack.c.b16 %v5036, %v5035
      %v5465 = vpack.c.b16 %v5038, %v5037
      %v5466 = vpack.c.b16 %v5040, %v5039
      %v5467 = vpack.c.b16 %v5042, %v5041
      %v5468 = vpack.c.b16 %v5044, %v5043
      %v5469 = vpack.c.b16 %v5046, %v5045
      %v5470 = vpack.c.b16 %v5048, %v5047
      %v5471 = vpack.c.b16 %v5050, %v5049
      %v5472 = vpack.c.b16 %v5052, %v5051
      %v5473 = vpack.c.b16 %v5054, %v5053
      %v5474 = vpack.c.b16 %v5056, %v5055
      %v5475 = vpack.c.b16 %v5058, %v5057
      %v5476 = vpack.c.b16 %v5060, %v5059
      %v5477 = vpack.c.b16 %v5062, %v5061
      %v5478 = vpack.c.b16 %v5064, %v5063
      %v5479 = vpack.c.b16 %v5066, %v5065
      %v5480 = vpack.c.b16 %v5068, %v5067
      %v5481 = vpack.c.b16 %v5070, %v5069
      %v5482 = vpack.c.b16 %v5072, %v5071
      %v5483 = vpack.c.b16 %v5074, %v5073
      %v5484 = vpack.c.b16 %v5076, %v5075
      %v5485 = vpack.c.b16 %v5078, %v5077
      %v5486 = vpack.c.b16 %v5080, %v5079
      %v5487 = vpack.c.b16 %v5082, %v5081
      %v5488 = vpack.c.b16 %v5084, %v5083
      %v5489 = vpack.c.b16 %v5086, %v5085
      %v5490 = vpack.c.b16 %v5088, %v5087
      %v5491 = vpack.c.b16 %v5090, %v5089
      %v5492 = vpack.c.b16 %v5092, %v5091
      %v5493 = vpack.c.b16 %v5094, %v5093
      %v5494 = vpack.c.b16 %v5096, %v5095
      %v5495 = vpack.c.b16 %v5098, %v5097
      %v5496 = vpack.c.b16 %v5100, %v5099
      %v5497 = vpack.c.b16 %v5102, %v5101
      %v5498 = vpack.c.b16 %v5104, %v5103
      %v5499 = vpack.c.b16 %v5106, %v5105
      %v5500 = vpack.c.b16 %v5108, %v5107
      %v5501 = vpack.c.b16 %v5110, %v5109
      %v5502 = vpack.c.b16 %v5112, %v5111
      %v5503 = vpack.c.b16 %v5114, %v5113
      %v5504 = vpack.c.b16 %v5116, %v5115
      %v5505 = vpack.c.b16 %v5118, %v5117
      %v5506 = vpack.c.b16 %v5120, %v5119
      %v5507 = vpack.c.b16 %v5122, %v5121
      %v5508 = vpack.c.b16 %v5124, %v5123
      %v5509 = vpack.c.b16 %v5126, %v5125
      %v5510 = vpack.c.b16 %v5128, %v5127
      %v5511 = vpack.c.b16 %v5130, %v5129
      %v5512 = vpack.c.b16 %v5132, %v5131
      %v5513 = vpack.c.b16 %v5134, %v5133
      %v5514 = vpack.c.b16 %v5136, %v5135
      %v5515 = vpack.c.b16 %v5138, %v5137
      %v5516 = vpack.c.b16 %v5140, %v5139
      %v5517 = vpack.c.b16 %v5142, %v5141
      %v5518 = vpack.c.b16 %v5144, %v5143
      %v5519 = vpack.c.b16 %v5146, %v5145
      %v5520 = vpack.c.b16 %v5148, %v5147
      %v5521 = vpack.c.b16 %v5150, %v5149
      %v5522 = vpack.c.b16 %v5152, %v5151
      %v5523 = vpack.c.b16 %v5154, %v5153
      %v5524 = vpack.c.b16 %v5156, %v5155
      %v5525 = vpack.c.b16 %v5158, %v5157
      %v5526 = vpack.c.b16 %v5160, %v5159
      %v5527 = vpack.c.b16 %v5162, %v5161
      %v5528 = vpack.c.b16 %v5164, %v5163
      %v5529 = vpack.c.b16 %v5166, %v5165
      %v5530 = vpack.c.b16 %v5168, %v5167
      %v5531 = vpack.c.b16 %v5170, %v5169
      %v5532 = vpack.c.b16 %v5172, %v5171
      %v5533 = vpack.c.b16 %v5174, %v5173
      %v5534 = vpack.c.b16 %v5176, %v5175
      %v5535 = vpack.c.b16 %v5178, %v5177
      %v5536 = vpack.c.b16 %v5180, %v5179
      %v5537 = vpack.c.b16 %v5182, %v5181
      %v5538 = vpack.c.b16 %v5184, %v5183
      %v5539 = vpack.c.b16 %v5186, %v5185
      %v5540 = vpack.c.b16 %v5188, %v5187
      %v5541 = vpack.c.b16 %v5190, %v5189
      %v5542 = vpack.c.b16 %v5192, %v5191
      %v5543 = vpack.c.b16 %v5194, %v5193
      %v5544 = vpack.c.b16 %v5196, %v5195
      %v5545 = vpack.c.b16 %v5198, %v5197
      %v5546 = vpack.c.b16 %v5200, %v5199
      %v5547 = vpack.c.b16 %v5202, %v5201
      %v5548 = vpack.c.b16 %v5204, %v5203
      %v5549 = vpack.c.b16 %v5206, %v5205
      %v5550 = vpack.c.b16 %v5208, %v5207
      %v5551 = vpack.c.b16 %v5210, %v5209
      %v5552 = vpack.c.b16 %v5212, %v5211
      %v5553 = vpack.c.b16 %v5214, %v5213
      %v5554 = vpack.c.b16 %v5216, %v5215
      %v5555 = vpack.c.b16 %v5218, %v5217
      %v5556 = vpack.c.b16 %v5220, %v5219
      %v5557 = vpack.c.b16 %v5222, %v5221
      %v5558 = vpack.c.b16 %v5224, %v5223
      %v5559 = vpack.c.b16 %v5226, %v5225
      %v5560 = vpack.c.b16 %v5228, %v5227
      %v5561 = vpack.c.b16 %v5230, %v5229
      %v5562 = vpack.c.b16 %v5232, %v5231
      %v5563 = vpack.c.b16 %v5234, %v5233
      %v5564 = vpack.c.b16 %v5236, %v5235
      %v5565 = vpack.c.b16 %v5238, %v5237
      %v5566 = vpack.c.b16 %v5240, %v5239
      %v5567 = vpack.c.b16 %v5242, %v5241
      %v5568 = vpack.c.b16 %v5244, %v5243
      %v5569 = vpack.c.b16 %v5246, %v5245
      %v5570 = vpack.c.b16 %v5248, %v5247
      %v5571 = vpack.c.b16 %v5250, %v5249
      %v5572 = vpack.c.b16 %v5252, %v5251
      %v5573 = vpack.c.b16 %v5254, %v5253
      %v5574 = vpack.c.b16 %v5256, %v5255
      %v5575 = vpack.c.b16 %v5258, %v5257
      %v5576 = vpack.c.b16 %v5260, %v5259
      %v5577 = vpack.c.b16 %v5262, %v5261
      %v5578 = vpack.c.b16 %v5264, %v5263
      %v5579 = vpack.c.b16 %v5266, %v5265
      %v5580 = vpack.c.b16 %v5268, %v5267
      %v5581 = vpack.c.b16 %v5270, %v5269
      %v5582 = vpack.c.b16 %v5272, %v5271
      %v5583 = vpack.c.b16 %v5274, %v5273
      %v5584 = vpack.c.b16 %v5276, %v5275
      %v5585 = vpack.c.b16 %v5278, %v5277
      %v5586 = vpack.c.b16 %v5280, %v5279
      %v5587 = vpack.c.b16 %v5282, %v5281
      %v5588 = vpack.c.b16 %v5284, %v5283
      %v5589 = vpack.c.b16 %v5286, %v5285
      %v5590 = vpack.c.b16 %v5288, %v5287
      %v5591 = vpack.c.b16 %v5290, %v5289
      %v5592 = vpack.c.b16 %v5292, %v5291
      %v5593 = vpack.c.b16 %v5294, %v5293
      %v5594 = vpack.c.b16 %v5296, %v5295
      %v5595 = vpack.c.b16 %v5298, %v5297
      %v5596 = vpack.c.b16 %v5300, %v5299
      %v5597 = vpack.c.b16 %v5302, %v5301
      %v5598 = vpack.c.b16 %v5304, %v5303
      %v5599 = vpack.c.b16 %v5306, %v5305
      %v5600 = vpack.c.b16 %v5308, %v5307
      %v5601 = vpack.c.b16 %v5310, %v5309
      %v5602 = vpack.c.b16 %v5312, %v5311
      %v5603 = vpack.c.b16 %v5314, %v5313
      %v5604 = vpack.c.b16 %v5316, %v5315
      %v5605 = vpack.c.b16 %v5318, %v5317
      %v5606 = vpack.c.b16 %v5320, %v5319
      %v5607 = vpack.c.b16 %v5322, %v5321
      %v5608 = vpack.c.b16 %v5324, %v5323
      %v5609 = vpack.c.b16 %v5326, %v5325
      %v5610 = vpack.c.b16 %v5328, %v5327
      %v5611 = vpack.c.b16 %v5330, %v5329
      %v5612 = vpack.c.b16 %v5332, %v5331
      %v5613 = vpack.c.b16 %v5334, %v5333
      %v5614 = vpack.c.b16 %v5336, %v5335
      %v5615 = vpack.c.b16 %v5338, %v5337
      %v5616 = vpack.c.b16 %v5340, %v5339
      %v5617 = vpack.c.b16 %v5342, %v5341
      %v5618 = vpack.c.b16 %v5344, %v5343
      %v5619 = vpack.c.b16 %v5346, %v5345
      %v5620 = vpack.c.b16 %v5348, %v5347
      %v5621 = vpack.c.b16 %v5350, %v5349
      %v5622 = vpack.c.b16 %v5352, %v5351
      %v5623 = vpack.c.b16 %v5354, %v5353
      %v5624 = vpack.c.b16 %v5356, %v5355
      %v5625 = vpack.c.b16 %v5358, %v5357
      %v5626 = vpack.c.b16 %v5360, %v5359
      %v5627 = vpack.c.b16 %v5362, %v5361
      %v5628 = vpack.c.b16 %v5364, %v5363
      %v5629 = vpack.c.b16 %v5366, %v5365
      %v5630 = vpack.c.b16 %v5368, %v5367
      %v5631 = vpack.c.b16 %v5370, %v5369
      %v5632 = vpack.c.b16 %v5372, %v5371
      %v5633 = vpack.c.b16 %v5374, %v5373
      %v5634 = vpack.c.b16 %v5376, %v5375
      %v5635 = vpack.c.b16 %v5378, %v5377
      %v5636 = vpack.c.b16 %v5380, %v5379
      %v5637 = vpack.c.b16 %v5382, %v5381
      %v5638 = vpack.c.b16 %v5384, %v5383
      %v5639 = vpack.c.b16 %v5386, %v5385
      %v5640 = vpack.c.b16 %v5388, %v5387
      %v5641 = vpack.c.b16 %v5390, %v5389
      %v5642 = vpack.c.b16 %v5392, %v5391
      %v5643 = vpack.c.b16 %v5394, %v5393
      %v5644 = vpack.c.b16 %v5396, %v5395
      %v5645 = vpack.c.b16 %v5398, %v5397
      %v5646 = vpack.c.b16 %v5400, %v5399
      %v5647 = vpack.c.b16 %v5402, %v5401
      %v5648 = vpack.c.b16 %v5404, %v5403
      %v5649 = vpack.c.b16 %v5406, %v5405
      %v5650 = vpack.c.b16 %v5408, %v5407
      %v5651 = vpack.c.b16 %v5410, %v5409
      %v5652 = vpack.c.b16 %v5412, %v5411
      %v5653 = vpack.c.b16 %v5414, %v5413
      %v5654 = vpack.c.b16 %v5416, %v5415
      %v5655 = vpack.c.b16 %v5418, %v5417
      %v5656 = vpack.c.b16 %v5420, %v5419
      %v5657 = vpack.c.b16 %v5422, %v5421
      %v5658 = vpack.c.b16 %v5424, %v5423
      %v5659 = vpack.c.b16 %v5426, %v5425
      %v5660 = vpack.c.b16 %v5428, %v5427
      %v5661 = vpack.c.b16 %v5430, %v5429
      %v5662 = vpack.c.b16 %v5432, %v5431
      %v5663 = vpack.c.b16 %v5434, %v5433
      %v5664 = vpack.c.b16 %v5436, %v5435
      %v5665 = vpack.c.b16 %v5438, %v5437
      %v5666 = vpack.c.b16 %v5440, %v5439
      %v5667 = vpack.c.b16 %v5442, %v5441
      %v5668 = vpack.c.b16 %v5444, %v5443
      %v5669 = vpack.c.b16 %v5446, %v5445
      %v5670 = vpack.c.b16 %v5448, %v5447
      %v5671 = vpack.c.b16 %v5450, %v5449
      %v5672 = vpack.c.b16 %v5452, %v5451
      %v5673 = vpack.c.b16 %v5454, %v5453
      %v5674 = vpack.c.b16 %v5456, %v5455
      %v5675 = vpack.c.b16 %v5458, %v5457
      %v5676 = vpack.c.b16 %v5460, %v5459
      %5893 = vmatpush.bf16.msra.mxu0 %v5468
      %5894 = vmatpush.bf16.msra.mxu0 %v5467
      %5895 = vmatpush.bf16.msra.mxu0 %v5466
      %5896 = vmatpush.bf16.msra.mxu0 %v5465
      %5897 = vmatpush.bf16.msra.mxu0 %v5464
      %5898 = vmatpush.bf16.msra.mxu0 %v5463
      %5899 = vmatpush.bf16.msra.mxu0 %v5462
      %5900 = vmatpush.bf16.msra.mxu0 %v5461
      %5901 = vmatmul.bf16.gmra.mxu0 %v4381
      %v5902 = vpop.f32.mrf.mxu0
      %v5903 = vadd.f32 0.0, %v5902
      %v5904 = vpop.f32.mrf.mxu0
      %v5905 = vadd.f32 0.0, %v5904
      %5906 = vmatmul.bf16.gmra.mxu0 %v4408
      %v5907 = vpop.f32.mrf.mxu0
      %v5908 = vadd.f32 0.0, %v5907
      %v5909 = vpop.f32.mrf.mxu0
      %v5910 = vadd.f32 0.0, %v5909
      %5911 = vmatmul.bf16.gmra.mxu0 %v4435
      %v5912 = vpop.f32.mrf.mxu0
      %v5913 = vadd.f32 0.0, %v5912
      %v5914 = vpop.f32.mrf.mxu0
      %v5915 = vadd.f32 0.0, %v5914
      %5916 = vmatmul.bf16.gmra.mxu0 %v4462
      %v5917 = vpop.f32.mrf.mxu0
      %v5918 = vadd.f32 0.0, %v5917
      %v5919 = vpop.f32.mrf.mxu0
      %v5920 = vadd.f32 0.0, %v5919
      %5921 = vdwg.mxu0
      %5922 = vmatpush.bf16.msra.mxu0 %v5476
      %5923 = vmatpush.bf16.msra.mxu0 %v5475
      %5924 = vmatpush.bf16.msra.mxu0 %v5474
      %5925 = vmatpush.bf16.msra.mxu0 %v5473
      %5926 = vmatpush.bf16.msra.mxu0 %v5472
      %5927 = vmatpush.bf16.msra.mxu0 %v5471
      %5928 = vmatpush.bf16.msra.mxu0 %v5470
      %5929 = vmatpush.bf16.msra.mxu0 %v5469
      %5930 = vmatmul.bf16.gmra.mxu0 %v4382
      %v5931 = vpop.f32.mrf.mxu0
      %v5932 = vadd.f32 %v5903, %v5931
      %v5933 = vpop.f32.mrf.mxu0
      %v5934 = vadd.f32 %v5905, %v5933
      %5935 = vmatmul.bf16.gmra.mxu0 %v4409
      %v5936 = vpop.f32.mrf.mxu0
      %v5937 = vadd.f32 %v5908, %v5936
      %v5938 = vpop.f32.mrf.mxu0
      %v5939 = vadd.f32 %v5910, %v5938
      %5940 = vmatmul.bf16.gmra.mxu0 %v4436
      %v5941 = vpop.f32.mrf.mxu0
      %v5942 = vadd.f32 %v5913, %v5941
      %v5943 = vpop.f32.mrf.mxu0
      %v5944 = vadd.f32 %v5915, %v5943
      %5945 = vmatmul.bf16.gmra.mxu0 %v4463
      %v5946 = vpop.f32.mrf.mxu0
      %v5947 = vadd.f32 %v5918, %v5946
      %v5948 = vpop.f32.mrf.mxu0
      %v5949 = vadd.f32 %v5920, %v5948
      %5950 = vdwg.mxu0
      %5951 = vmatpush.bf16.msra.mxu0 %v5484
      %5952 = vmatpush.bf16.msra.mxu0 %v5483
      %5953 = vmatpush.bf16.msra.mxu0 %v5482
      %5954 = vmatpush.bf16.msra.mxu0 %v5481
      %5955 = vmatpush.bf16.msra.mxu0 %v5480
      %5956 = vmatpush.bf16.msra.mxu0 %v5479
      %5957 = vmatpush.bf16.msra.mxu0 %v5478
      %5958 = vmatpush.bf16.msra.mxu0 %v5477
      %5959 = vmatmul.bf16.gmra.mxu0 %v4383
      %v5960 = vpop.f32.mrf.mxu0
      %v5961 = vadd.f32 %v5932, %v5960
      %v5962 = vpop.f32.mrf.mxu0
      %v5963 = vadd.f32 %v5934, %v5962
      %5964 = vmatmul.bf16.gmra.mxu0 %v4410
      %v5965 = vpop.f32.mrf.mxu0
      %v5966 = vadd.f32 %v5937, %v5965
      %v5967 = vpop.f32.mrf.mxu0
      %v5968 = vadd.f32 %v5939, %v5967
      %5969 = vmatmul.bf16.gmra.mxu0 %v4437
      %v5970 = vpop.f32.mrf.mxu0
      %v5971 = vadd.f32 %v5942, %v5970
      %v5972 = vpop.f32.mrf.mxu0
      %v5973 = vadd.f32 %v5944, %v5972
      %5974 = vmatmul.bf16.gmra.mxu0 %v4464
      %v5975 = vpop.f32.mrf.mxu0
      %v5976 = vadd.f32 %v5947, %v5975
      %v5977 = vpop.f32.mrf.mxu0
      %v5978 = vadd.f32 %v5949, %v5977
      %5979 = vdwg.mxu0
      %5980 = vmatpush.bf16.msra.mxu0 %v5492
      %5981 = vmatpush.bf16.msra.mxu0 %v5491
      %5982 = vmatpush.bf16.msra.mxu0 %v5490
      %5983 = vmatpush.bf16.msra.mxu0 %v5489
      %5984 = vmatpush.bf16.msra.mxu0 %v5488
      %5985 = vmatpush.bf16.msra.mxu0 %v5487
      %5986 = vmatpush.bf16.msra.mxu0 %v5486
      %5987 = vmatpush.bf16.msra.mxu0 %v5485
      %5988 = vmatmul.bf16.gmra.mxu0 %v4384
      %v5989 = vpop.f32.mrf.mxu0
      %v5990 = vadd.f32 %v5961, %v5989
      %v5991 = vpop.f32.mrf.mxu0
      %v5992 = vadd.f32 %v5963, %v5991
      %5993 = vmatmul.bf16.gmra.mxu0 %v4411
      %v5994 = vpop.f32.mrf.mxu0
      %v5995 = vadd.f32 %v5966, %v5994
      %v5996 = vpop.f32.mrf.mxu0
      %v5997 = vadd.f32 %v5968, %v5996
      %5998 = vmatmul.bf16.gmra.mxu0 %v4438
      %v5999 = vpop.f32.mrf.mxu0
      %v6000 = vadd.f32 %v5971, %v5999
      %v6001 = vpop.f32.mrf.mxu0
      %v6002 = vadd.f32 %v5973, %v6001
      %6003 = vmatmul.bf16.gmra.mxu0 %v4465
      %v6004 = vpop.f32.mrf.mxu0
      %v6005 = vadd.f32 %v5976, %v6004
      %v6006 = vpop.f32.mrf.mxu0
      %v6007 = vadd.f32 %v5978, %v6006
      %6008 = vdwg.mxu0
      %6009 = vmatpush.bf16.msra.mxu0 %v5500
      %6010 = vmatpush.bf16.msra.mxu0 %v5499
      %6011 = vmatpush.bf16.msra.mxu0 %v5498
      %6012 = vmatpush.bf16.msra.mxu0 %v5497
      %6013 = vmatpush.bf16.msra.mxu0 %v5496
      %6014 = vmatpush.bf16.msra.mxu0 %v5495
      %6015 = vmatpush.bf16.msra.mxu0 %v5494
      %6016 = vmatpush.bf16.msra.mxu0 %v5493
      %6017 = vmatmul.bf16.gmra.mxu0 %v4385
      %v6018 = vpop.f32.mrf.mxu0
      %v6019 = vadd.f32 %v5990, %v6018
      %v6020 = vpop.f32.mrf.mxu0
      %v6021 = vadd.f32 %v5992, %v6020
      %6022 = vmatmul.bf16.gmra.mxu0 %v4412
      %v6023 = vpop.f32.mrf.mxu0
      %v6024 = vadd.f32 %v5995, %v6023
      %v6025 = vpop.f32.mrf.mxu0
      %v6026 = vadd.f32 %v5997, %v6025
      %6027 = vmatmul.bf16.gmra.mxu0 %v4439
      %v6028 = vpop.f32.mrf.mxu0
      %v6029 = vadd.f32 %v6000, %v6028
      %v6030 = vpop.f32.mrf.mxu0
      %v6031 = vadd.f32 %v6002, %v6030
      %6032 = vmatmul.bf16.gmra.mxu0 %v4466
      %v6033 = vpop.f32.mrf.mxu0
      %v6034 = vadd.f32 %v6005, %v6033
      %v6035 = vpop.f32.mrf.mxu0
      %v6036 = vadd.f32 %v6007, %v6035
      %6037 = vdwg.mxu0
      %6038 = vmatpush.bf16.msra.mxu0 %v5508
      %6039 = vmatpush.bf16.msra.mxu0 %v5507
      %6040 = vmatpush.bf16.msra.mxu0 %v5506
      %6041 = vmatpush.bf16.msra.mxu0 %v5505
      %6042 = vmatpush.bf16.msra.mxu0 %v5504
      %6043 = vmatpush.bf16.msra.mxu0 %v5503
      %6044 = vmatpush.bf16.msra.mxu0 %v5502
      %6045 = vmatpush.bf16.msra.mxu0 %v5501
      %6046 = vmatmul.bf16.gmra.mxu0 %v4386
      %v6047 = vpop.f32.mrf.mxu0
      %v6048 = vadd.f32 %v6019, %v6047
      %v6049 = vpop.f32.mrf.mxu0
      %v6050 = vadd.f32 %v6021, %v6049
      %6051 = vmatmul.bf16.gmra.mxu0 %v4413
      %v6052 = vpop.f32.mrf.mxu0
      %v6053 = vadd.f32 %v6024, %v6052
      %v6054 = vpop.f32.mrf.mxu0
      %v6055 = vadd.f32 %v6026, %v6054
      %6056 = vmatmul.bf16.gmra.mxu0 %v4440
      %v6057 = vpop.f32.mrf.mxu0
      %v6058 = vadd.f32 %v6029, %v6057
      %v6059 = vpop.f32.mrf.mxu0
      %v6060 = vadd.f32 %v6031, %v6059
      %6061 = vmatmul.bf16.gmra.mxu0 %v4467
      %v6062 = vpop.f32.mrf.mxu0
      %v6063 = vadd.f32 %v6034, %v6062
      %v6064 = vpop.f32.mrf.mxu0
      %v6065 = vadd.f32 %v6036, %v6064
      %6066 = vdwg.mxu0
      %6067 = vmatpush.bf16.msra.mxu0 %v5516
      %6068 = vmatpush.bf16.msra.mxu0 %v5515
      %6069 = vmatpush.bf16.msra.mxu0 %v5514
      %6070 = vmatpush.bf16.msra.mxu0 %v5513
      %6071 = vmatpush.bf16.msra.mxu0 %v5512
      %6072 = vmatpush.bf16.msra.mxu0 %v5511
      %6073 = vmatpush.bf16.msra.mxu0 %v5510
      %6074 = vmatpush.bf16.msra.mxu0 %v5509
      %6075 = vmatmul.bf16.gmra.mxu0 %v4387
      %v6076 = vpop.f32.mrf.mxu0
      %v6077 = vadd.f32 %v6048, %v6076
      %v6078 = vpop.f32.mrf.mxu0
      %v6079 = vadd.f32 %v6050, %v6078
      %6080 = vmatmul.bf16.gmra.mxu0 %v4414
      %v6081 = vpop.f32.mrf.mxu0
      %v6082 = vadd.f32 %v6053, %v6081
      %v6083 = vpop.f32.mrf.mxu0
      %v6084 = vadd.f32 %v6055, %v6083
      %6085 = vmatmul.bf16.gmra.mxu0 %v4441
      %v6086 = vpop.f32.mrf.mxu0
      %v6087 = vadd.f32 %v6058, %v6086
      %v6088 = vpop.f32.mrf.mxu0
      %v6089 = vadd.f32 %v6060, %v6088
      %6090 = vmatmul.bf16.gmra.mxu0 %v4468
      %v6091 = vpop.f32.mrf.mxu0
      %v6092 = vadd.f32 %v6063, %v6091
      %v6093 = vpop.f32.mrf.mxu0
      %v6094 = vadd.f32 %v6065, %v6093
      %6095 = vdwg.mxu0
      %6096 = vmatpush.bf16.msra.mxu0 %v5524
      %6097 = vmatpush.bf16.msra.mxu0 %v5523
      %6098 = vmatpush.bf16.msra.mxu0 %v5522
      %6099 = vmatpush.bf16.msra.mxu0 %v5521
      %6100 = vmatpush.bf16.msra.mxu0 %v5520
      %6101 = vmatpush.bf16.msra.mxu0 %v5519
      %6102 = vmatpush.bf16.msra.mxu0 %v5518
      %6103 = vmatpush.bf16.msra.mxu0 %v5517
      %6104 = vmatmul.bf16.gmra.mxu0 %v4388
      %v6105 = vpop.f32.mrf.mxu0
      %v6106 = vadd.f32 %v6077, %v6105
      %v6107 = vpop.f32.mrf.mxu0
      %v6108 = vadd.f32 %v6079, %v6107
      %6109 = vmatmul.bf16.gmra.mxu0 %v4415
      %v6110 = vpop.f32.mrf.mxu0
      %v6111 = vadd.f32 %v6082, %v6110
      %v6112 = vpop.f32.mrf.mxu0
      %v6113 = vadd.f32 %v6084, %v6112
      %6114 = vmatmul.bf16.gmra.mxu0 %v4442
      %v6115 = vpop.f32.mrf.mxu0
      %v6116 = vadd.f32 %v6087, %v6115
      %v6117 = vpop.f32.mrf.mxu0
      %v6118 = vadd.f32 %v6089, %v6117
      %6119 = vmatmul.bf16.gmra.mxu0 %v4469
      %v6120 = vpop.f32.mrf.mxu0
      %v6121 = vadd.f32 %v6092, %v6120
      %v6122 = vpop.f32.mrf.mxu0
      %v6123 = vadd.f32 %v6094, %v6122
      %6124 = vdwg.mxu0
      %6125 = vmatpush.bf16.msra.mxu0 %v5532
      %6126 = vmatpush.bf16.msra.mxu0 %v5531
      %6127 = vmatpush.bf16.msra.mxu0 %v5530
      %6128 = vmatpush.bf16.msra.mxu0 %v5529
      %6129 = vmatpush.bf16.msra.mxu0 %v5528
      %6130 = vmatpush.bf16.msra.mxu0 %v5527
      %6131 = vmatpush.bf16.msra.mxu0 %v5526
      %6132 = vmatpush.bf16.msra.mxu0 %v5525
      %6133 = vmatmul.bf16.gmra.mxu0 %v4389
      %v6134 = vpop.f32.mrf.mxu0
      %v6135 = vadd.f32 %v6106, %v6134
      %v6136 = vpop.f32.mrf.mxu0
      %v6137 = vadd.f32 %v6108, %v6136
      %6138 = vmatmul.bf16.gmra.mxu0 %v4416
      %v6139 = vpop.f32.mrf.mxu0
      %v6140 = vadd.f32 %v6111, %v6139
      %v6141 = vpop.f32.mrf.mxu0
      %v6142 = vadd.f32 %v6113, %v6141
      %6143 = vmatmul.bf16.gmra.mxu0 %v4443
      %v6144 = vpop.f32.mrf.mxu0
      %v6145 = vadd.f32 %v6116, %v6144
      %v6146 = vpop.f32.mrf.mxu0
      %v6147 = vadd.f32 %v6118, %v6146
      %6148 = vmatmul.bf16.gmra.mxu0 %v4470
      %v6149 = vpop.f32.mrf.mxu0
      %v6150 = vadd.f32 %v6121, %v6149
      %v6151 = vpop.f32.mrf.mxu0
      %v6152 = vadd.f32 %v6123, %v6151
      %6153 = vdwg.mxu0
      %6154 = vmatpush.bf16.msra.mxu0 %v5540
      %6155 = vmatpush.bf16.msra.mxu0 %v5539
      %6156 = vmatpush.bf16.msra.mxu0 %v5538
      %6157 = vmatpush.bf16.msra.mxu0 %v5537
      %6158 = vmatpush.bf16.msra.mxu0 %v5536
      %6159 = vmatpush.bf16.msra.mxu0 %v5535
      %6160 = vmatpush.bf16.msra.mxu0 %v5534
      %6161 = vmatpush.bf16.msra.mxu0 %v5533
      %6162 = vmatmul.bf16.gmra.mxu0 %v4390
      %v6163 = vpop.f32.mrf.mxu0
      %v6164 = vadd.f32 %v6135, %v6163
      %v6165 = vpop.f32.mrf.mxu0
      %v6166 = vadd.f32 %v6137, %v6165
      %6167 = vmatmul.bf16.gmra.mxu0 %v4417
      %v6168 = vpop.f32.mrf.mxu0
      %v6169 = vadd.f32 %v6140, %v6168
      %v6170 = vpop.f32.mrf.mxu0
      %v6171 = vadd.f32 %v6142, %v6170
      %6172 = vmatmul.bf16.gmra.mxu0 %v4444
      %v6173 = vpop.f32.mrf.mxu0
      %v6174 = vadd.f32 %v6145, %v6173
      %v6175 = vpop.f32.mrf.mxu0
      %v6176 = vadd.f32 %v6147, %v6175
      %6177 = vmatmul.bf16.gmra.mxu0 %v4471
      %v6178 = vpop.f32.mrf.mxu0
      %v6179 = vadd.f32 %v6150, %v6178
      %v6180 = vpop.f32.mrf.mxu0
      %v6181 = vadd.f32 %v6152, %v6180
      %6182 = vdwg.mxu0
      %6183 = vmatpush.bf16.msra.mxu0 %v5548
      %6184 = vmatpush.bf16.msra.mxu0 %v5547
      %6185 = vmatpush.bf16.msra.mxu0 %v5546
      %6186 = vmatpush.bf16.msra.mxu0 %v5545
      %6187 = vmatpush.bf16.msra.mxu0 %v5544
      %6188 = vmatpush.bf16.msra.mxu0 %v5543
      %6189 = vmatpush.bf16.msra.mxu0 %v5542
      %6190 = vmatpush.bf16.msra.mxu0 %v5541
      %6191 = vmatmul.bf16.gmra.mxu0 %v4391
      %v6192 = vpop.f32.mrf.mxu0
      %v6193 = vadd.f32 %v6164, %v6192
      %v6194 = vpop.f32.mrf.mxu0
      %v6195 = vadd.f32 %v6166, %v6194
      %6196 = vmatmul.bf16.gmra.mxu0 %v4418
      %v6197 = vpop.f32.mrf.mxu0
      %v6198 = vadd.f32 %v6169, %v6197
      %v6199 = vpop.f32.mrf.mxu0
      %v6200 = vadd.f32 %v6171, %v6199
      %6201 = vmatmul.bf16.gmra.mxu0 %v4445
      %v6202 = vpop.f32.mrf.mxu0
      %v6203 = vadd.f32 %v6174, %v6202
      %v6204 = vpop.f32.mrf.mxu0
      %v6205 = vadd.f32 %v6176, %v6204
      %6206 = vmatmul.bf16.gmra.mxu0 %v4472
      %v6207 = vpop.f32.mrf.mxu0
      %v6208 = vadd.f32 %v6179, %v6207
      %v6209 = vpop.f32.mrf.mxu0
      %v6210 = vadd.f32 %v6181, %v6209
      %6211 = vdwg.mxu0
      %6212 = vmatpush.bf16.msra.mxu0 %v5556
      %6213 = vmatpush.bf16.msra.mxu0 %v5555
      %6214 = vmatpush.bf16.msra.mxu0 %v5554
      %6215 = vmatpush.bf16.msra.mxu0 %v5553
      %6216 = vmatpush.bf16.msra.mxu0 %v5552
      %6217 = vmatpush.bf16.msra.mxu0 %v5551
      %6218 = vmatpush.bf16.msra.mxu0 %v5550
      %6219 = vmatpush.bf16.msra.mxu0 %v5549
      %6220 = vmatmul.bf16.gmra.mxu0 %v4392
      %v6221 = vpop.f32.mrf.mxu0
      %v6222 = vadd.f32 %v6193, %v6221
      %v6223 = vpop.f32.mrf.mxu0
      %v6224 = vadd.f32 %v6195, %v6223
      %6225 = vmatmul.bf16.gmra.mxu0 %v4419
      %v6226 = vpop.f32.mrf.mxu0
      %v6227 = vadd.f32 %v6198, %v6226
      %v6228 = vpop.f32.mrf.mxu0
      %v6229 = vadd.f32 %v6200, %v6228
      %6230 = vmatmul.bf16.gmra.mxu0 %v4446
      %v6231 = vpop.f32.mrf.mxu0
      %v6232 = vadd.f32 %v6203, %v6231
      %v6233 = vpop.f32.mrf.mxu0
      %v6234 = vadd.f32 %v6205, %v6233
      %6235 = vmatmul.bf16.gmra.mxu0 %v4473
      %v6236 = vpop.f32.mrf.mxu0
      %v6237 = vadd.f32 %v6208, %v6236
      %v6238 = vpop.f32.mrf.mxu0
      %v6239 = vadd.f32 %v6210, %v6238
      %6240 = vdwg.mxu0
      %6241 = vmatpush.bf16.msra.mxu0 %v5564
      %6242 = vmatpush.bf16.msra.mxu0 %v5563
      %6243 = vmatpush.bf16.msra.mxu0 %v5562
      %6244 = vmatpush.bf16.msra.mxu0 %v5561
      %6245 = vmatpush.bf16.msra.mxu0 %v5560
      %6246 = vmatpush.bf16.msra.mxu0 %v5559
      %6247 = vmatpush.bf16.msra.mxu0 %v5558
      %6248 = vmatpush.bf16.msra.mxu0 %v5557
      %6249 = vmatmul.bf16.gmra.mxu0 %v4393
      %v6250 = vpop.f32.mrf.mxu0
      %v6251 = vadd.f32 %v6222, %v6250
      %v6252 = vpop.f32.mrf.mxu0
      %v6253 = vadd.f32 %v6224, %v6252
      %6254 = vmatmul.bf16.gmra.mxu0 %v4420
      %v6255 = vpop.f32.mrf.mxu0
      %v6256 = vadd.f32 %v6227, %v6255
      %v6257 = vpop.f32.mrf.mxu0
      %v6258 = vadd.f32 %v6229, %v6257
      %6259 = vmatmul.bf16.gmra.mxu0 %v4447
      %v6260 = vpop.f32.mrf.mxu0
      %v6261 = vadd.f32 %v6232, %v6260
      %v6262 = vpop.f32.mrf.mxu0
      %v6263 = vadd.f32 %v6234, %v6262
      %6264 = vmatmul.bf16.gmra.mxu0 %v4474
      %v6265 = vpop.f32.mrf.mxu0
      %v6266 = vadd.f32 %v6237, %v6265
      %v6267 = vpop.f32.mrf.mxu0
      %v6268 = vadd.f32 %v6239, %v6267
      %6269 = vdwg.mxu0
      %6270 = vmatpush.bf16.msra.mxu0 %v5572
      %6271 = vmatpush.bf16.msra.mxu0 %v5571
      %6272 = vmatpush.bf16.msra.mxu0 %v5570
      %6273 = vmatpush.bf16.msra.mxu0 %v5569
      %6274 = vmatpush.bf16.msra.mxu0 %v5568
      %6275 = vmatpush.bf16.msra.mxu0 %v5567
      %6276 = vmatpush.bf16.msra.mxu0 %v5566
      %6277 = vmatpush.bf16.msra.mxu0 %v5565
      %6278 = vmatmul.bf16.gmra.mxu0 %v4394
      %v6279 = vpop.f32.mrf.mxu0
      %v6280 = vadd.f32 %v6251, %v6279
      %v6281 = vpop.f32.mrf.mxu0
      %v6282 = vadd.f32 %v6253, %v6281
      %6283 = vmatmul.bf16.gmra.mxu0 %v4421
      %v6284 = vpop.f32.mrf.mxu0
      %v6285 = vadd.f32 %v6256, %v6284
      %v6286 = vpop.f32.mrf.mxu0
      %v6287 = vadd.f32 %v6258, %v6286
      %6288 = vmatmul.bf16.gmra.mxu0 %v4448
      %v6289 = vpop.f32.mrf.mxu0
      %v6290 = vadd.f32 %v6261, %v6289
      %v6291 = vpop.f32.mrf.mxu0
      %v6292 = vadd.f32 %v6263, %v6291
      %6293 = vmatmul.bf16.gmra.mxu0 %v4475
      %v6294 = vpop.f32.mrf.mxu0
      %v6295 = vadd.f32 %v6266, %v6294
      %v6296 = vpop.f32.mrf.mxu0
      %v6297 = vadd.f32 %v6268, %v6296
      %6298 = vdwg.mxu0
      %6299 = vmatpush.bf16.msra.mxu0 %v5580
      %6300 = vmatpush.bf16.msra.mxu0 %v5579
      %6301 = vmatpush.bf16.msra.mxu0 %v5578
      %6302 = vmatpush.bf16.msra.mxu0 %v5577
      %6303 = vmatpush.bf16.msra.mxu0 %v5576
      %6304 = vmatpush.bf16.msra.mxu0 %v5575
      %6305 = vmatpush.bf16.msra.mxu0 %v5574
      %6306 = vmatpush.bf16.msra.mxu0 %v5573
      %6307 = vmatmul.bf16.gmra.mxu0 %v4395
      %v6308 = vpop.f32.mrf.mxu0
      %v6309 = vadd.f32 %v6280, %v6308
      %v6310 = vpop.f32.mrf.mxu0
      %v6311 = vadd.f32 %v6282, %v6310
      %6312 = vmatmul.bf16.gmra.mxu0 %v4422
      %v6313 = vpop.f32.mrf.mxu0
      %v6314 = vadd.f32 %v6285, %v6313
      %v6315 = vpop.f32.mrf.mxu0
      %v6316 = vadd.f32 %v6287, %v6315
      %6317 = vmatmul.bf16.gmra.mxu0 %v4449
      %v6318 = vpop.f32.mrf.mxu0
      %v6319 = vadd.f32 %v6290, %v6318
      %v6320 = vpop.f32.mrf.mxu0
      %v6321 = vadd.f32 %v6292, %v6320
      %6322 = vmatmul.bf16.gmra.mxu0 %v4476
      %v6323 = vpop.f32.mrf.mxu0
      %v6324 = vadd.f32 %v6295, %v6323
      %v6325 = vpop.f32.mrf.mxu0
      %v6326 = vadd.f32 %v6297, %v6325
      %6327 = vdwg.mxu0
      %6328 = vmatpush.bf16.msra.mxu0 %v5588
      %6329 = vmatpush.bf16.msra.mxu0 %v5587
      %6330 = vmatpush.bf16.msra.mxu0 %v5586
      %6331 = vmatpush.bf16.msra.mxu0 %v5585
      %6332 = vmatpush.bf16.msra.mxu0 %v5584
      %6333 = vmatpush.bf16.msra.mxu0 %v5583
      %6334 = vmatpush.bf16.msra.mxu0 %v5582
      %6335 = vmatpush.bf16.msra.mxu0 %v5581
      %6336 = vmatmul.bf16.gmra.mxu0 %v4396
      %v6337 = vpop.f32.mrf.mxu0
      %v6338 = vadd.f32 %v6309, %v6337
      %v6339 = vpop.f32.mrf.mxu0
      %v6340 = vadd.f32 %v6311, %v6339
      %6341 = vmatmul.bf16.gmra.mxu0 %v4423
      %v6342 = vpop.f32.mrf.mxu0
      %v6343 = vadd.f32 %v6314, %v6342
      %v6344 = vpop.f32.mrf.mxu0
      %v6345 = vadd.f32 %v6316, %v6344
      %6346 = vmatmul.bf16.gmra.mxu0 %v4450
      %v6347 = vpop.f32.mrf.mxu0
      %v6348 = vadd.f32 %v6319, %v6347
      %v6349 = vpop.f32.mrf.mxu0
      %v6350 = vadd.f32 %v6321, %v6349
      %6351 = vmatmul.bf16.gmra.mxu0 %v4477
      %v6352 = vpop.f32.mrf.mxu0
      %v6353 = vadd.f32 %v6324, %v6352
      %v6354 = vpop.f32.mrf.mxu0
      %v6355 = vadd.f32 %v6326, %v6354
      %6356 = vdwg.mxu0
      %6357 = vmatpush.bf16.msra.mxu0 %v5596
      %6358 = vmatpush.bf16.msra.mxu0 %v5595
      %6359 = vmatpush.bf16.msra.mxu0 %v5594
      %6360 = vmatpush.bf16.msra.mxu0 %v5593
      %6361 = vmatpush.bf16.msra.mxu0 %v5592
      %6362 = vmatpush.bf16.msra.mxu0 %v5591
      %6363 = vmatpush.bf16.msra.mxu0 %v5590
      %6364 = vmatpush.bf16.msra.mxu0 %v5589
      %6365 = vmatmul.bf16.gmra.mxu0 %v4397
      %v6366 = vpop.f32.mrf.mxu0
      %v6367 = vadd.f32 %v6338, %v6366
      %v6368 = vpop.f32.mrf.mxu0
      %v6369 = vadd.f32 %v6340, %v6368
      %6370 = vmatmul.bf16.gmra.mxu0 %v4424
      %v6371 = vpop.f32.mrf.mxu0
      %v6372 = vadd.f32 %v6343, %v6371
      %v6373 = vpop.f32.mrf.mxu0
      %v6374 = vadd.f32 %v6345, %v6373
      %6375 = vmatmul.bf16.gmra.mxu0 %v4451
      %v6376 = vpop.f32.mrf.mxu0
      %v6377 = vadd.f32 %v6348, %v6376
      %v6378 = vpop.f32.mrf.mxu0
      %v6379 = vadd.f32 %v6350, %v6378
      %6380 = vmatmul.bf16.gmra.mxu0 %v4478
      %v6381 = vpop.f32.mrf.mxu0
      %v6382 = vadd.f32 %v6353, %v6381
      %v6383 = vpop.f32.mrf.mxu0
      %v6384 = vadd.f32 %v6355, %v6383
      %6385 = vdwg.mxu0
      %6386 = vmatpush.bf16.msra.mxu0 %v5604
      %6387 = vmatpush.bf16.msra.mxu0 %v5603
      %6388 = vmatpush.bf16.msra.mxu0 %v5602
      %6389 = vmatpush.bf16.msra.mxu0 %v5601
      %6390 = vmatpush.bf16.msra.mxu0 %v5600
      %6391 = vmatpush.bf16.msra.mxu0 %v5599
      %6392 = vmatpush.bf16.msra.mxu0 %v5598
      %6393 = vmatpush.bf16.msra.mxu0 %v5597
      %6394 = vmatmul.bf16.gmra.mxu0 %v4398
      %v6395 = vpop.f32.mrf.mxu0
      %v6396 = vadd.f32 %v6367, %v6395
      %v6397 = vpop.f32.mrf.mxu0
      %v6398 = vadd.f32 %v6369, %v6397
      %6399 = vmatmul.bf16.gmra.mxu0 %v4425
      %v6400 = vpop.f32.mrf.mxu0
      %v6401 = vadd.f32 %v6372, %v6400
      %v6402 = vpop.f32.mrf.mxu0
      %v6403 = vadd.f32 %v6374, %v6402
      %6404 = vmatmul.bf16.gmra.mxu0 %v4452
      %v6405 = vpop.f32.mrf.mxu0
      %v6406 = vadd.f32 %v6377, %v6405
      %v6407 = vpop.f32.mrf.mxu0
      %v6408 = vadd.f32 %v6379, %v6407
      %6409 = vmatmul.bf16.gmra.mxu0 %v4479
      %v6410 = vpop.f32.mrf.mxu0
      %v6411 = vadd.f32 %v6382, %v6410
      %v6412 = vpop.f32.mrf.mxu0
      %v6413 = vadd.f32 %v6384, %v6412
      %6414 = vdwg.mxu0
      %6415 = vmatpush.bf16.msra.mxu0 %v5612
      %6416 = vmatpush.bf16.msra.mxu0 %v5611
      %6417 = vmatpush.bf16.msra.mxu0 %v5610
      %6418 = vmatpush.bf16.msra.mxu0 %v5609
      %6419 = vmatpush.bf16.msra.mxu0 %v5608
      %6420 = vmatpush.bf16.msra.mxu0 %v5607
      %6421 = vmatpush.bf16.msra.mxu0 %v5606
      %6422 = vmatpush.bf16.msra.mxu0 %v5605
      %6423 = vmatmul.bf16.gmra.mxu0 %v4399
      %v6424 = vpop.f32.mrf.mxu0
      %v6425 = vadd.f32 %v6396, %v6424
      %v6426 = vpop.f32.mrf.mxu0
      %v6427 = vadd.f32 %v6398, %v6426
      %6428 = vmatmul.bf16.gmra.mxu0 %v4426
      %v6429 = vpop.f32.mrf.mxu0
      %v6430 = vadd.f32 %v6401, %v6429
      %v6431 = vpop.f32.mrf.mxu0
      %v6432 = vadd.f32 %v6403, %v6431
      %6433 = vmatmul.bf16.gmra.mxu0 %v4453
      %v6434 = vpop.f32.mrf.mxu0
      %v6435 = vadd.f32 %v6406, %v6434
      %v6436 = vpop.f32.mrf.mxu0
      %v6437 = vadd.f32 %v6408, %v6436
      %6438 = vmatmul.bf16.gmra.mxu0 %v4480
      %v6439 = vpop.f32.mrf.mxu0
      %v6440 = vadd.f32 %v6411, %v6439
      %v6441 = vpop.f32.mrf.mxu0
      %v6442 = vadd.f32 %v6413, %v6441
      %6443 = vdwg.mxu0
      %6444 = vmatpush.bf16.msra.mxu0 %v5620
      %6445 = vmatpush.bf16.msra.mxu0 %v5619
      %6446 = vmatpush.bf16.msra.mxu0 %v5618
      %6447 = vmatpush.bf16.msra.mxu0 %v5617
      %6448 = vmatpush.bf16.msra.mxu0 %v5616
      %6449 = vmatpush.bf16.msra.mxu0 %v5615
      %6450 = vmatpush.bf16.msra.mxu0 %v5614
      %6451 = vmatpush.bf16.msra.mxu0 %v5613
      %6452 = vmatmul.bf16.gmra.mxu0 %v4400
      %v6453 = vpop.f32.mrf.mxu0
      %v6454 = vadd.f32 %v6425, %v6453
      %v6455 = vpop.f32.mrf.mxu0
      %v6456 = vadd.f32 %v6427, %v6455
      %6457 = vmatmul.bf16.gmra.mxu0 %v4427
      %v6458 = vpop.f32.mrf.mxu0
      %v6459 = vadd.f32 %v6430, %v6458
      %v6460 = vpop.f32.mrf.mxu0
      %v6461 = vadd.f32 %v6432, %v6460
      %6462 = vmatmul.bf16.gmra.mxu0 %v4454
      %v6463 = vpop.f32.mrf.mxu0
      %v6464 = vadd.f32 %v6435, %v6463
      %v6465 = vpop.f32.mrf.mxu0
      %v6466 = vadd.f32 %v6437, %v6465
      %6467 = vmatmul.bf16.gmra.mxu0 %v4481
      %v6468 = vpop.f32.mrf.mxu0
      %v6469 = vadd.f32 %v6440, %v6468
      %v6470 = vpop.f32.mrf.mxu0
      %v6471 = vadd.f32 %v6442, %v6470
      %6472 = vdwg.mxu0
      %6473 = vmatpush.bf16.msra.mxu0 %v5628
      %6474 = vmatpush.bf16.msra.mxu0 %v5627
      %6475 = vmatpush.bf16.msra.mxu0 %v5626
      %6476 = vmatpush.bf16.msra.mxu0 %v5625
      %6477 = vmatpush.bf16.msra.mxu0 %v5624
      %6478 = vmatpush.bf16.msra.mxu0 %v5623
      %6479 = vmatpush.bf16.msra.mxu0 %v5622
      %6480 = vmatpush.bf16.msra.mxu0 %v5621
      %6481 = vmatmul.bf16.gmra.mxu0 %v4401
      %v6482 = vpop.f32.mrf.mxu0
      %v6483 = vadd.f32 %v6454, %v6482
      %v6484 = vpop.f32.mrf.mxu0
      %v6485 = vadd.f32 %v6456, %v6484
      %6486 = vmatmul.bf16.gmra.mxu0 %v4428
      %v6487 = vpop.f32.mrf.mxu0
      %v6488 = vadd.f32 %v6459, %v6487
      %v6489 = vpop.f32.mrf.mxu0
      %v6490 = vadd.f32 %v6461, %v6489
      %6491 = vmatmul.bf16.gmra.mxu0 %v4455
      %v6492 = vpop.f32.mrf.mxu0
      %v6493 = vadd.f32 %v6464, %v6492
      %v6494 = vpop.f32.mrf.mxu0
      %v6495 = vadd.f32 %v6466, %v6494
      %6496 = vmatmul.bf16.gmra.mxu0 %v4482
      %v6497 = vpop.f32.mrf.mxu0
      %v6498 = vadd.f32 %v6469, %v6497
      %v6499 = vpop.f32.mrf.mxu0
      %v6500 = vadd.f32 %v6471, %v6499
      %6501 = vdwg.mxu0
      %6502 = vmatpush.bf16.msra.mxu0 %v5636
      %6503 = vmatpush.bf16.msra.mxu0 %v5635
      %6504 = vmatpush.bf16.msra.mxu0 %v5634
      %6505 = vmatpush.bf16.msra.mxu0 %v5633
      %6506 = vmatpush.bf16.msra.mxu0 %v5632
      %6507 = vmatpush.bf16.msra.mxu0 %v5631
      %6508 = vmatpush.bf16.msra.mxu0 %v5630
      %6509 = vmatpush.bf16.msra.mxu0 %v5629
      %6510 = vmatmul.bf16.gmra.mxu0 %v4402
      %v6511 = vpop.f32.mrf.mxu0
      %v6512 = vadd.f32 %v6483, %v6511
      %v6513 = vpop.f32.mrf.mxu0
      %v6514 = vadd.f32 %v6485, %v6513
      %6515 = vmatmul.bf16.gmra.mxu0 %v4429
      %v6516 = vpop.f32.mrf.mxu0
      %v6517 = vadd.f32 %v6488, %v6516
      %v6518 = vpop.f32.mrf.mxu0
      %v6519 = vadd.f32 %v6490, %v6518
      %6520 = vmatmul.bf16.gmra.mxu0 %v4456
      %v6521 = vpop.f32.mrf.mxu0
      %v6522 = vadd.f32 %v6493, %v6521
      %v6523 = vpop.f32.mrf.mxu0
      %v6524 = vadd.f32 %v6495, %v6523
      %6525 = vmatmul.bf16.gmra.mxu0 %v4483
      %v6526 = vpop.f32.mrf.mxu0
      %v6527 = vadd.f32 %v6498, %v6526
      %v6528 = vpop.f32.mrf.mxu0
      %v6529 = vadd.f32 %v6500, %v6528
      %6530 = vdwg.mxu0
      %6531 = vmatpush.bf16.msra.mxu0 %v5644
      %6532 = vmatpush.bf16.msra.mxu0 %v5643
      %6533 = vmatpush.bf16.msra.mxu0 %v5642
      %6534 = vmatpush.bf16.msra.mxu0 %v5641
      %6535 = vmatpush.bf16.msra.mxu0 %v5640
      %6536 = vmatpush.bf16.msra.mxu0 %v5639
      %6537 = vmatpush.bf16.msra.mxu0 %v5638
      %6538 = vmatpush.bf16.msra.mxu0 %v5637
      %6539 = vmatmul.bf16.gmra.mxu0 %v4403
      %v6540 = vpop.f32.mrf.mxu0
      %v6541 = vadd.f32 %v6512, %v6540
      %v6542 = vpop.f32.mrf.mxu0
      %v6543 = vadd.f32 %v6514, %v6542
      %6544 = vmatmul.bf16.gmra.mxu0 %v4430
      %v6545 = vpop.f32.mrf.mxu0
      %v6546 = vadd.f32 %v6517, %v6545
      %v6547 = vpop.f32.mrf.mxu0
      %v6548 = vadd.f32 %v6519, %v6547
      %6549 = vmatmul.bf16.gmra.mxu0 %v4457
      %v6550 = vpop.f32.mrf.mxu0
      %v6551 = vadd.f32 %v6522, %v6550
      %v6552 = vpop.f32.mrf.mxu0
      %v6553 = vadd.f32 %v6524, %v6552
      %6554 = vmatmul.bf16.gmra.mxu0 %v4484
      %v6555 = vpop.f32.mrf.mxu0
      %v6556 = vadd.f32 %v6527, %v6555
      %v6557 = vpop.f32.mrf.mxu0
      %v6558 = vadd.f32 %v6529, %v6557
      %6559 = vdwg.mxu0
      %6560 = vmatpush.bf16.msra.mxu0 %v5652
      %6561 = vmatpush.bf16.msra.mxu0 %v5651
      %6562 = vmatpush.bf16.msra.mxu0 %v5650
      %6563 = vmatpush.bf16.msra.mxu0 %v5649
      %6564 = vmatpush.bf16.msra.mxu0 %v5648
      %6565 = vmatpush.bf16.msra.mxu0 %v5647
      %6566 = vmatpush.bf16.msra.mxu0 %v5646
      %6567 = vmatpush.bf16.msra.mxu0 %v5645
      %6568 = vmatmul.bf16.gmra.mxu0 %v4404
      %v6569 = vpop.f32.mrf.mxu0
      %v6570 = vadd.f32 %v6541, %v6569
      %v6571 = vpop.f32.mrf.mxu0
      %v6572 = vadd.f32 %v6543, %v6571
      %6573 = vmatmul.bf16.gmra.mxu0 %v4431
      %v6574 = vpop.f32.mrf.mxu0
      %v6575 = vadd.f32 %v6546, %v6574
      %v6576 = vpop.f32.mrf.mxu0
      %v6577 = vadd.f32 %v6548, %v6576
      %6578 = vmatmul.bf16.gmra.mxu0 %v4458
      %v6579 = vpop.f32.mrf.mxu0
      %v6580 = vadd.f32 %v6551, %v6579
      %v6581 = vpop.f32.mrf.mxu0
      %v6582 = vadd.f32 %v6553, %v6581
      %6583 = vmatmul.bf16.gmra.mxu0 %v4485
      %v6584 = vpop.f32.mrf.mxu0
      %v6585 = vadd.f32 %v6556, %v6584
      %v6586 = vpop.f32.mrf.mxu0
      %v6587 = vadd.f32 %v6558, %v6586
      %6588 = vdwg.mxu0
      %6589 = vmatpush.bf16.msra.mxu0 %v5660
      %6590 = vmatpush.bf16.msra.mxu0 %v5659
      %6591 = vmatpush.bf16.msra.mxu0 %v5658
      %6592 = vmatpush.bf16.msra.mxu0 %v5657
      %6593 = vmatpush.bf16.msra.mxu0 %v5656
      %6594 = vmatpush.bf16.msra.mxu0 %v5655
      %6595 = vmatpush.bf16.msra.mxu0 %v5654
      %6596 = vmatpush.bf16.msra.mxu0 %v5653
      %6597 = vmatmul.bf16.gmra.mxu0 %v4405
      %v6598 = vpop.f32.mrf.mxu0
      %v6599 = vadd.f32 %v6570, %v6598
      %v6600 = vpop.f32.mrf.mxu0
      %v6601 = vadd.f32 %v6572, %v6600
      %6602 = vmatmul.bf16.gmra.mxu0 %v4432
      %v6603 = vpop.f32.mrf.mxu0
      %v6604 = vadd.f32 %v6575, %v6603
      %v6605 = vpop.f32.mrf.mxu0
      %v6606 = vadd.f32 %v6577, %v6605
      %6607 = vmatmul.bf16.gmra.mxu0 %v4459
      %v6608 = vpop.f32.mrf.mxu0
      %v6609 = vadd.f32 %v6580, %v6608
      %v6610 = vpop.f32.mrf.mxu0
      %v6611 = vadd.f32 %v6582, %v6610
      %6612 = vmatmul.bf16.gmra.mxu0 %v4486
      %v6613 = vpop.f32.mrf.mxu0
      %v6614 = vadd.f32 %v6585, %v6613
      %v6615 = vpop.f32.mrf.mxu0
      %v6616 = vadd.f32 %v6587, %v6615
      %6617 = vdwg.mxu0
      %6618 = vmatpush.bf16.msra.mxu0 %v5668
      %6619 = vmatpush.bf16.msra.mxu0 %v5667
      %6620 = vmatpush.bf16.msra.mxu0 %v5666
      %6621 = vmatpush.bf16.msra.mxu0 %v5665
      %6622 = vmatpush.bf16.msra.mxu0 %v5664
      %6623 = vmatpush.bf16.msra.mxu0 %v5663
      %6624 = vmatpush.bf16.msra.mxu0 %v5662
      %6625 = vmatpush.bf16.msra.mxu0 %v5661
      %6626 = vmatmul.bf16.gmra.mxu0 %v4406
      %v6627 = vpop.f32.mrf.mxu0
      %v6628 = vadd.f32 %v6599, %v6627
      %v6629 = vpop.f32.mrf.mxu0
      %v6630 = vadd.f32 %v6601, %v6629
      %6631 = vmatmul.bf16.gmra.mxu0 %v4433
      %v6632 = vpop.f32.mrf.mxu0
      %v6633 = vadd.f32 %v6604, %v6632
      %v6634 = vpop.f32.mrf.mxu0
      %v6635 = vadd.f32 %v6606, %v6634
      %6636 = vmatmul.bf16.gmra.mxu0 %v4460
      %v6637 = vpop.f32.mrf.mxu0
      %v6638 = vadd.f32 %v6609, %v6637
      %v6639 = vpop.f32.mrf.mxu0
      %v6640 = vadd.f32 %v6611, %v6639
      %6641 = vmatmul.bf16.gmra.mxu0 %v4487
      %v6642 = vpop.f32.mrf.mxu0
      %v6643 = vadd.f32 %v6614, %v6642
      %v6644 = vpop.f32.mrf.mxu0
      %v6645 = vadd.f32 %v6616, %v6644
      %6646 = vdwg.mxu0
      %6647 = vmatpush.bf16.msra.mxu0 %v5676
      %6648 = vmatpush.bf16.msra.mxu0 %v5675
      %6649 = vmatpush.bf16.msra.mxu0 %v5674
      %6650 = vmatpush.bf16.msra.mxu0 %v5673
      %6651 = vmatpush.bf16.msra.mxu0 %v5672
      %6652 = vmatpush.bf16.msra.mxu0 %v5671
      %6653 = vmatpush.bf16.msra.mxu0 %v5670
      %6654 = vmatpush.bf16.msra.mxu0 %v5669
      %6655 = vmatmul.bf16.gmra.mxu0 %v4407
      %v6656 = vpop.f32.mrf.mxu0
      %v6657 = vadd.f32 %v6628, %v6656
      %v6658 = vpop.f32.mrf.mxu0
      %v6659 = vadd.f32 %v6630, %v6658
      %6660 = vmatmul.bf16.gmra.mxu0 %v4434
      %v6661 = vpop.f32.mrf.mxu0
      %v6662 = vadd.f32 %v6633, %v6661
      %v6663 = vpop.f32.mrf.mxu0
      %v6664 = vadd.f32 %v6635, %v6663
      %6665 = vmatmul.bf16.gmra.mxu0 %v4461
      %v6666 = vpop.f32.mrf.mxu0
      %v6667 = vadd.f32 %v6638, %v6666
      %v6668 = vpop.f32.mrf.mxu0
      %v6669 = vadd.f32 %v6640, %v6668
      %6670 = vmatmul.bf16.gmra.mxu0 %v4488
      %v6671 = vpop.f32.mrf.mxu0
      %v6672 = vadd.f32 %v6643, %v6671
      %v6673 = vpop.f32.mrf.mxu0
      %v6674 = vadd.f32 %v6645, %v6673
      %6675 = vdwg.mxu0
      %v6676 = vadd.f32 %v6657, %v6659
      %v6677 = vadd.f32 %v6676, %v6662
      %v6678 = vadd.f32 %v6677, %v6664
      %v6679 = vadd.f32 %v6678, %v6667
      %v6680 = vadd.f32 %v6679, %v6669
      %v6681 = vadd.f32 %v6680, %v6672
      %v6682 = vadd.f32 %v6681, %v6674
      %6683 = vadd.xlane.f32.xlu0 %v6682
      %v6684 = vpop.xlane.xlu0 %6683
      %v6685 = vrot.slane %v6684, 4
      %v6686 = vadd.f32 %v6684, %v6685
      %v6687 = vrot.slane %v6686, 2
      %v6688 = vadd.f32 %v6686, %v6687
      %v6689 = vrot.slane %v6688, 1
      %v6690 = vadd.f32 %v6688, %v6689
      %s6691 = vtos %v6690
      %v6692 = vrcp.pop 8192.0
      %v6693 = vmul.f32 8192.0, %v6692
      %v6694 = vsub.f32 1.0, %v6693
      %v6695 = vmul.f32 %v6692, %v6694
      %v6696 = vadd.f32 %v6692, %v6695
      %vm6697 = vweird.f32 %v6692
      %v6698 = vsel %vm6697, %v6692, %v6696
      %s6699 = vtos %v6698
      %s6700 = smul.f32 %s6691, %s6699
      %v6701 = vstv %s6700
      %v6702 = vsub.f32 %v6657, %v6701
      %v6703 = vsub.f32 %v6659, %v6701
      %v6704 = vsub.f32 %v6662, %v6701
      %v6705 = vsub.f32 %v6664, %v6701
      %v6706 = vsub.f32 %v6667, %v6701
      %v6707 = vsub.f32 %v6669, %v6701
      %v6708 = vsub.f32 %v6672, %v6701
      %v6709 = vsub.f32 %v6674, %v6701
      %v6710 = vmul.f32 %v6702, %v6702
      %v6711 = vmul.f32 %v6703, %v6703
      %v6712 = vmul.f32 %v6704, %v6704
      %v6713 = vmul.f32 %v6705, %v6705
      %v6714 = vmul.f32 %v6706, %v6706
      %v6715 = vmul.f32 %v6707, %v6707
      %v6716 = vmul.f32 %v6708, %v6708
      %v6717 = vmul.f32 %v6709, %v6709
      %v6718 = vadd.f32 %v6710, %v6711
      %v6719 = vadd.f32 %v6718, %v6712
      %v6720 = vadd.f32 %v6719, %v6713
      %v6721 = vadd.f32 %v6720, %v6714
      %v6722 = vadd.f32 %v6721, %v6715
      %v6723 = vadd.f32 %v6722, %v6716
      %v6724 = vadd.f32 %v6723, %v6717
      %6725 = vadd.xlane.f32.xlu0 %v6724
      %v6726 = vpop.xlane.xlu0 %6725
      %v6727 = vrot.slane %v6726, 4
      %v6728 = vadd.f32 %v6726, %v6727
      %v6729 = vrot.slane %v6728, 2
      %v6730 = vadd.f32 %v6728, %v6729
      %v6731 = vrot.slane %v6730, 1
      %v6732 = vadd.f32 %v6730, %v6731
      %s6733 = vtos %v6732
      %v6734 = vrcp.pop 8192.0
      %v6735 = vmul.f32 8192.0, %v6734
      %v6736 = vsub.f32 1.0, %v6735
      %v6737 = vmul.f32 %v6734, %v6736
      %v6738 = vadd.f32 %v6734, %v6737
      %vm6739 = vweird.f32 %v6734
      %v6740 = vsel %vm6739, %v6734, %v6738
      %s6741 = vtos %v6740
      %s6742 = smul.f32 %s6733, %s6741
      %s6743 = sadd.f32 %s6742, 1e-05
      %v6744 = vstv %s6743
      %v6745 = vrsqrt.pop %v6744
      %v6746 = vmul.f32 %v6745, %v6744
      %v6747 = vmul.f32 %v6746, %v6745
      %v6748 = vmul.f32 0.5, %v6747
      %v6749 = vsub.f32 1.5, %v6748
      %v6750 = vmul.f32 %v6745, %v6749
      %vm6751 = vweird.f32 %v6744
      %vm6752 = vweird.f32 %v6745
      %vm6753 = vmor %vm6751, %vm6752
      %v6754 = vsel %vm6753, %v6745, %v6750
      %s6755 = vtos %v6754
      %v6756 = vstv %s6755
      %v6757 = vmul.f32 %v6702, %v6756
      %v6758 = vmul.f32 %v6703, %v6756
      %v6759 = vmul.f32 %v6704, %v6756
      %v6760 = vmul.f32 %v6705, %v6756
      %v6761 = vmul.f32 %v6706, %v6756
      %v6762 = vmul.f32 %v6707, %v6756
      %v6763 = vmul.f32 %v6708, %v6756
      %v6764 = vmul.f32 %v6709, %v6756
      %v6765 = vld [vmem:[%s10] sm:$0x1]
      %v6767 = vperm.slane %v6765, 0
      %v6769 = vmul.f32 %v6757, %v6767
      %v6770 = vmul.f32 %v6758, %v6767
      %v6771 = vmul.f32 %v6759, %v6767
      %v6772 = vmul.f32 %v6760, %v6767
      %v6773 = vmul.f32 %v6761, %v6767
      %v6774 = vmul.f32 %v6762, %v6767
      %v6775 = vmul.f32 %v6763, %v6767
      %v6776 = vmul.f32 %v6764, %v6767
      %v6777 = vld [vmem:[%s11] sm:$0x1]
      %v6779 = vperm.slane %v6777, 0
      %v6781 = vadd.f32 %v6769, %v6779
      %v6782 = vadd.f32 %v6770, %v6779
      %v6783 = vadd.f32 %v6771, %v6779
      %v6784 = vadd.f32 %v6772, %v6779
      %v6785 = vadd.f32 %v6773, %v6779
      %v6786 = vadd.f32 %v6774, %v6779
      %v6787 = vadd.f32 %v6775, %v6779
      %v6788 = vadd.f32 %v6776, %v6779
      %v6789 = vmax.f32 %v6781, 0.0
      %v6790 = vmax.f32 %v6782, 0.0
      %v6791 = vmax.f32 %v6783, 0.0
      %v6792 = vmax.f32 %v6784, 0.0
      %v6793 = vmax.f32 %v6785, 0.0
      %v6794 = vmax.f32 %v6786, 0.0
      %v6795 = vmax.f32 %v6787, 0.0
      %v6796 = vmax.f32 %v6788, 0.0
      %v6797 = vpack.c.bf16 %v6789, %v6789
      %v6798 = vpack.c.bf16 %v6790, %v6790
      %v6799 = vpack.c.bf16 %v6791, %v6791
      %v6800 = vpack.c.bf16 %v6792, %v6792
      %v6801 = vpack.c.bf16 %v6793, %v6793
      %v6802 = vpack.c.bf16 %v6794, %v6794
      %v6803 = vpack.c.bf16 %v6795, %v6795
      %v6804 = vpack.c.bf16 %v6796, %v6796
      %v6806 = vshrl.u32 %v6797, 16
      %v6808 = vrot.slane %v6806, 7
      %v6809 = vshll.u32 %v6797, 16
      %v6811 = vor.u32 %v6808, %v6809
      %v6812 = vrot.slane %v6808, 4
      %v6814 = vshrl.u32 %v6798, 16
      %v6816 = vrot.slane %v6814, 7
      %v6817 = vshll.u32 %v6798, 16
      %v6819 = vor.u32 %v6816, %v6817
      %v6820 = vrot.slane %v6816, 4
      %v6822 = vshrl.u32 %v6799, 16
      %v6824 = vrot.slane %v6822, 7
      %v6825 = vshll.u32 %v6799, 16
      %v6827 = vor.u32 %v6824, %v6825
      %v6828 = vrot.slane %v6824, 4
      %v6830 = vshrl.u32 %v6800, 16
      %v6832 = vrot.slane %v6830, 7
      %v6833 = vshll.u32 %v6800, 16
      %v6835 = vor.u32 %v6832, %v6833
      %v6836 = vrot.slane %v6832, 4
      %v6838 = vshrl.u32 %v6801, 16
      %v6840 = vrot.slane %v6838, 7
      %v6841 = vshll.u32 %v6801, 16
      %v6843 = vor.u32 %v6840, %v6841
      %v6844 = vrot.slane %v6840, 4
      %v6846 = vshrl.u32 %v6802, 16
      %v6848 = vrot.slane %v6846, 7
      %v6849 = vshll.u32 %v6802, 16
      %v6851 = vor.u32 %v6848, %v6849
      %v6852 = vrot.slane %v6848, 4
      %v6854 = vshrl.u32 %v6803, 16
      %v6856 = vrot.slane %v6854, 7
      %v6857 = vshll.u32 %v6803, 16
      %v6859 = vor.u32 %v6856, %v6857
      %v6860 = vrot.slane %v6856, 4
      %v6862 = vshrl.u32 %v6804, 16
      %v6864 = vrot.slane %v6862, 7
      %v6865 = vshll.u32 %v6804, 16
      %v6867 = vor.u32 %v6864, %v6865
      %v6868 = vrot.slane %v6864, 4
      %v6885 = vld [vmem:[%s1635] sm:$0xf]
      %v6886 = vsel %vm1773, %v6811, %v6885
      %6887 = vst [vmem:[%s1635] sm:$0xf] %v6886
      %v6888 = vld [vmem:[%s1635 + $0x4] sm:$0x1]
      %v6889 = vsel %vm1524, %v6812, %v6888
      %6890 = vst [vmem:[%s1635 + $0x4] sm:$0x1] %v6889
      %v6891 = vld [vmem:[%s1635 + $0x8] sm:$0xf]
      %v6892 = vsel %vm1773, %v6819, %v6891
      %6893 = vst [vmem:[%s1635 + $0x8] sm:$0xf] %v6892
      %v6894 = vld [vmem:[%s1635 + $0xc] sm:$0x1]
      %v6895 = vsel %vm1524, %v6820, %v6894
      %6896 = vst [vmem:[%s1635 + $0xc] sm:$0x1] %v6895
      %v6897 = vld [vmem:[%s1635 + $0x10] sm:$0xf]
      %v6898 = vsel %vm1773, %v6827, %v6897
      %6899 = vst [vmem:[%s1635 + $0x10] sm:$0xf] %v6898
      %v6900 = vld [vmem:[%s1635 + $0x14] sm:$0x1]
      %v6901 = vsel %vm1524, %v6828, %v6900
      %6902 = vst [vmem:[%s1635 + $0x14] sm:$0x1] %v6901
      %v6903 = vld [vmem:[%s1635 + $0x18] sm:$0xf]
      %v6904 = vsel %vm1773, %v6835, %v6903
      %6905 = vst [vmem:[%s1635 + $0x18] sm:$0xf] %v6904
      %v6906 = vld [vmem:[%s1635 + $0x1c] sm:$0x1]
      %v6907 = vsel %vm1524, %v6836, %v6906
      %6908 = vst [vmem:[%s1635 + $0x1c] sm:$0x1] %v6907
      %v6909 = vld [vmem:[%s1635 + $0x20] sm:$0xf]
      %v6910 = vsel %vm1773, %v6843, %v6909
      %6911 = vst [vmem:[%s1635 + $0x20] sm:$0xf] %v6910
      %v6912 = vld [vmem:[%s1635 + $0x24] sm:$0x1]
      %v6913 = vsel %vm1524, %v6844, %v6912
      %6914 = vst [vmem:[%s1635 + $0x24] sm:$0x1] %v6913
      %v6915 = vld [vmem:[%s1635 + $0x28] sm:$0xf]
      %v6916 = vsel %vm1773, %v6851, %v6915
      %6917 = vst [vmem:[%s1635 + $0x28] sm:$0xf] %v6916
      %v6918 = vld [vmem:[%s1635 + $0x2c] sm:$0x1]
      %v6919 = vsel %vm1524, %v6852, %v6918
      %6920 = vst [vmem:[%s1635 + $0x2c] sm:$0x1] %v6919
      %v6921 = vld [vmem:[%s1635 + $0x30] sm:$0xf]
      %v6922 = vsel %vm1773, %v6859, %v6921
      %6923 = vst [vmem:[%s1635 + $0x30] sm:$0xf] %v6922
      %v6924 = vld [vmem:[%s1635 + $0x34] sm:$0x1]
      %v6925 = vsel %vm1524, %v6860, %v6924
      %6926 = vst [vmem:[%s1635 + $0x34] sm:$0x1] %v6925
      %v6927 = vld [vmem:[%s1635 + $0x38] sm:$0xf]
      %v6928 = vsel %vm1773, %v6867, %v6927
      %6929 = vst [vmem:[%s1635 + $0x38] sm:$0xf] %v6928
      %v6930 = vld [vmem:[%s1635 + $0x3c] sm:$0x1]
      %v6931 = vsel %vm1524, %v6868, %v6930
      %6932 = vst [vmem:[%s1635 + $0x3c] sm:$0x1] %v6931
      %v6933 = vld [vmem:[#allocation3] sm:$0xf]
      %v6934 = vld [vmem:[#allocation3 + $0x8] sm:$0xf]
      %v6935 = vld [vmem:[#allocation3 + $0x10] sm:$0xf]
      %v6936 = vld [vmem:[#allocation3 + $0x18] sm:$0xf]
      %v6937 = vld [vmem:[#allocation3 + $0x20] sm:$0xf]
      %v6938 = vld [vmem:[#allocation3 + $0x28] sm:$0xf]
      %v6939 = vld [vmem:[#allocation3 + $0x30] sm:$0xf]
      %v6940 = vld [vmem:[#allocation3 + $0x38] sm:$0xf]
      %6941 = vst [vmem:[#allocation5] sm:$0xf] %v6933
      %6942 = vst [vmem:[#allocation5 + $0x24] sm:$0xf] %v6934
      %6943 = vst [vmem:[#allocation5 + $0x48] sm:$0xf] %v6935
      %6944 = vst [vmem:[#allocation5 + $0x6c] sm:$0xf] %v6936
      %6945 = vst [vmem:[#allocation5 + $0x90] sm:$0xf] %v6937
      %6946 = vst [vmem:[#allocation5 + $0xb4] sm:$0xf] %v6938
      %6947 = vst [vmem:[#allocation5 + $0xd8] sm:$0xf] %v6939
      %6948 = vst [vmem:[#allocation5 + $0xfc] sm:$0xf] %v6940
      %v6949 = vld [vmem:[#allocation3] sm:$0xf]
      %v6950 = vld [vmem:[#allocation3 + $0x4] sm:$0x1]
      %v6951 = vld [vmem:[#allocation3 + $0x8] sm:$0xf]
      %v6952 = vld [vmem:[#allocation3 + $0xc] sm:$0x1]
      %v6953 = vld [vmem:[#allocation3 + $0x10] sm:$0xf]
      %v6954 = vld [vmem:[#allocation3 + $0x14] sm:$0x1]
      %v6955 = vld [vmem:[#allocation3 + $0x18] sm:$0xf]
      %v6956 = vld [vmem:[#allocation3 + $0x1c] sm:$0x1]
      %v6957 = vld [vmem:[#allocation3 + $0x20] sm:$0xf]
      %v6958 = vld [vmem:[#allocation3 + $0x24] sm:$0x1]
      %v6959 = vld [vmem:[#allocation3 + $0x28] sm:$0xf]
      %v6960 = vld [vmem:[#allocation3 + $0x2c] sm:$0x1]
      %v6961 = vld [vmem:[#allocation3 + $0x30] sm:$0xf]
      %v6962 = vld [vmem:[#allocation3 + $0x34] sm:$0x1]
      %v6963 = vld [vmem:[#allocation3 + $0x38] sm:$0xf]
      %v6964 = vld [vmem:[#allocation3 + $0x3c] sm:$0x1]
      %v6966 = vshrl.u32 %v6949, 16
      %v6968 = vrot.slane %v6966, 4
      %v6969 = vshll.u32 %v6949, 16
      %v6971 = vrot.slane %v6969, 5
      %v6972 = vor.u32 %v6968, %v6971
      %v6973 = vrot.slane %v6972, 4
      %v6975 = vshll.u32 %v6950, 16
      %v6977 = vrot.slane %v6975, 5
      %v6978 = vsel %vm2128, %v6973, %v6977
      %v6980 = vshrl.u32 %v6951, 16
      %v6982 = vrot.slane %v6980, 4
      %v6983 = vshll.u32 %v6951, 16
      %v6985 = vrot.slane %v6983, 5
      %v6986 = vor.u32 %v6982, %v6985
      %v6987 = vrot.slane %v6986, 4
      %v6989 = vshll.u32 %v6952, 16
      %v6991 = vrot.slane %v6989, 5
      %v6992 = vsel %vm2128, %v6987, %v6991
      %v6994 = vshrl.u32 %v6953, 16
      %v6996 = vrot.slane %v6994, 4
      %v6997 = vshll.u32 %v6953, 16
      %v6999 = vrot.slane %v6997, 5
      %v7000 = vor.u32 %v6996, %v6999
      %v7001 = vrot.slane %v7000, 4
      %v7003 = vshll.u32 %v6954, 16
      %v7005 = vrot.slane %v7003, 5
      %v7006 = vsel %vm2128, %v7001, %v7005
      %v7008 = vshrl.u32 %v6955, 16
      %v7010 = vrot.slane %v7008, 4
      %v7011 = vshll.u32 %v6955, 16
      %v7013 = vrot.slane %v7011, 5
      %v7014 = vor.u32 %v7010, %v7013
      %v7015 = vrot.slane %v7014, 4
      %v7017 = vshll.u32 %v6956, 16
      %v7019 = vrot.slane %v7017, 5
      %v7020 = vsel %vm2128, %v7015, %v7019
      %v7022 = vshrl.u32 %v6957, 16
      %v7024 = vrot.slane %v7022, 4
      %v7025 = vshll.u32 %v6957, 16
      %v7027 = vrot.slane %v7025, 5
      %v7028 = vor.u32 %v7024, %v7027
      %v7029 = vrot.slane %v7028, 4
      %v7031 = vshll.u32 %v6958, 16
      %v7033 = vrot.slane %v7031, 5
      %v7034 = vsel %vm2128, %v7029, %v7033
      %v7036 = vshrl.u32 %v6959, 16
      %v7038 = vrot.slane %v7036, 4
      %v7039 = vshll.u32 %v6959, 16
      %v7041 = vrot.slane %v7039, 5
      %v7042 = vor.u32 %v7038, %v7041
      %v7043 = vrot.slane %v7042, 4
      %v7045 = vshll.u32 %v6960, 16
      %v7047 = vrot.slane %v7045, 5
      %v7048 = vsel %vm2128, %v7043, %v7047
      %v7050 = vshrl.u32 %v6961, 16
      %v7052 = vrot.slane %v7050, 4
      %v7053 = vshll.u32 %v6961, 16
      %v7055 = vrot.slane %v7053, 5
      %v7056 = vor.u32 %v7052, %v7055
      %v7057 = vrot.slane %v7056, 4
      %v7059 = vshll.u32 %v6962, 16
      %v7061 = vrot.slane %v7059, 5
      %v7062 = vsel %vm2128, %v7057, %v7061
      %v7064 = vshrl.u32 %v6963, 16
      %v7066 = vrot.slane %v7064, 4
      %v7067 = vshll.u32 %v6963, 16
      %v7069 = vrot.slane %v7067, 5
      %v7070 = vor.u32 %v7066, %v7069
      %v7071 = vrot.slane %v7070, 4
      %v7073 = vshll.u32 %v6964, 16
      %v7075 = vrot.slane %v7073, 5
      %v7076 = vsel %vm2128, %v7071, %v7075
      %7085 = vst [vmem:[#allocation5 + $0x4] sm:$0xf] %v6978
      %7086 = vst [vmem:[#allocation5 + $0x28] sm:$0xf] %v6992
      %7087 = vst [vmem:[#allocation5 + $0x4c] sm:$0xf] %v7006
      %7088 = vst [vmem:[#allocation5 + $0x70] sm:$0xf] %v7020
      %7089 = vst [vmem:[#allocation5 + $0x94] sm:$0xf] %v7034
      %7090 = vst [vmem:[#allocation5 + $0xb8] sm:$0xf] %v7048
      %7091 = vst [vmem:[#allocation5 + $0xdc] sm:$0xf] %v7062
      %7092 = vst [vmem:[#allocation5 + $0x100] sm:$0xf] %v7076
      %v7093 = vld [vmem:[#allocation3] sm:$0xe]
      %v7094 = vld [vmem:[#allocation3 + $0x4] sm:$0x1]
      %v7095 = vld [vmem:[#allocation3 + $0x8] sm:$0xe]
      %v7096 = vld [vmem:[#allocation3 + $0xc] sm:$0x1]
      %v7097 = vld [vmem:[#allocation3 + $0x10] sm:$0xe]
      %v7098 = vld [vmem:[#allocation3 + $0x14] sm:$0x1]
      %v7099 = vld [vmem:[#allocation3 + $0x18] sm:$0xe]
      %v7100 = vld [vmem:[#allocation3 + $0x1c] sm:$0x1]
      %v7101 = vld [vmem:[#allocation3 + $0x20] sm:$0xe]
      %v7102 = vld [vmem:[#allocation3 + $0x24] sm:$0x1]
      %v7103 = vld [vmem:[#allocation3 + $0x28] sm:$0xe]
      %v7104 = vld [vmem:[#allocation3 + $0x2c] sm:$0x1]
      %v7105 = vld [vmem:[#allocation3 + $0x30] sm:$0xe]
      %v7106 = vld [vmem:[#allocation3 + $0x34] sm:$0x1]
      %v7107 = vld [vmem:[#allocation3 + $0x38] sm:$0xe]
      %v7108 = vld [vmem:[#allocation3 + $0x3c] sm:$0x1]
      %v7125 = vrot.slane %v7093, 5
      %v7126 = vrot.slane %v7125, 4
      %v7127 = vrot.slane %v7094, 5
      %v7128 = vsel %vm2451, %v7126, %v7127
      %v7129 = vrot.slane %v7095, 5
      %v7130 = vrot.slane %v7129, 4
      %v7131 = vrot.slane %v7096, 5
      %v7132 = vsel %vm2451, %v7130, %v7131
      %v7133 = vrot.slane %v7097, 5
      %v7134 = vrot.slane %v7133, 4
      %v7135 = vrot.slane %v7098, 5
      %v7136 = vsel %vm2451, %v7134, %v7135
      %v7137 = vrot.slane %v7099, 5
      %v7138 = vrot.slane %v7137, 4
      %v7139 = vrot.slane %v7100, 5
      %v7140 = vsel %vm2451, %v7138, %v7139
      %v7141 = vrot.slane %v7101, 5
      %v7142 = vrot.slane %v7141, 4
      %v7143 = vrot.slane %v7102, 5
      %v7144 = vsel %vm2451, %v7142, %v7143
      %v7145 = vrot.slane %v7103, 5
      %v7146 = vrot.slane %v7145, 4
      %v7147 = vrot.slane %v7104, 5
      %v7148 = vsel %vm2451, %v7146, %v7147
      %v7149 = vrot.slane %v7105, 5
      %v7150 = vrot.slane %v7149, 4
      %v7151 = vrot.slane %v7106, 5
      %v7152 = vsel %vm2451, %v7150, %v7151
      %v7153 = vrot.slane %v7107, 5
      %v7154 = vrot.slane %v7153, 4
      %v7155 = vrot.slane %v7108, 5
      %v7156 = vsel %vm2451, %v7154, %v7155
      %7165 = vst [vmem:[#allocation5 + $0x8] sm:$0xf] %v7128
      %7166 = vst [vmem:[#allocation5 + $0x2c] sm:$0xf] %v7132
      %7167 = vst [vmem:[#allocation5 + $0x50] sm:$0xf] %v7136
      %7168 = vst [vmem:[#allocation5 + $0x74] sm:$0xf] %v7140
      %7169 = vst [vmem:[#allocation5 + $0x98] sm:$0xf] %v7144
      %7170 = vst [vmem:[#allocation5 + $0xbc] sm:$0xf] %v7148
      %7171 = vst [vmem:[#allocation5 + $0xe0] sm:$0xf] %v7152
      %7172 = vst [vmem:[#allocation5 + $0x104] sm:$0xf] %v7156
      %v7173 = vld [vmem:[%s1635] sm:$0xf]
      %v7174 = vld [vmem:[%s1635 + $0x8] sm:$0xf]
      %v7175 = vld [vmem:[%s1635 + $0x10] sm:$0xf]
      %v7176 = vld [vmem:[%s1635 + $0x18] sm:$0xf]
      %v7177 = vld [vmem:[%s1635 + $0x20] sm:$0xf]
      %v7178 = vld [vmem:[%s1635 + $0x28] sm:$0xf]
      %v7179 = vld [vmem:[%s1635 + $0x30] sm:$0xf]
      %v7180 = vld [vmem:[%s1635 + $0x38] sm:$0xf]
      %7181 = vst [vmem:[#allocation5 + $0xc] sm:$0xf] %v7173
      %7182 = vst [vmem:[#allocation5 + $0x30] sm:$0xf] %v7174
      %7183 = vst [vmem:[#allocation5 + $0x54] sm:$0xf] %v7175
      %7184 = vst [vmem:[#allocation5 + $0x78] sm:$0xf] %v7176
      %7185 = vst [vmem:[#allocation5 + $0x9c] sm:$0xf] %v7177
      %7186 = vst [vmem:[#allocation5 + $0xc0] sm:$0xf] %v7178
      %7187 = vst [vmem:[#allocation5 + $0xe4] sm:$0xf] %v7179
      %7188 = vst [vmem:[#allocation5 + $0x108] sm:$0xf] %v7180
      %v7189 = vld [vmem:[%s1635] sm:$0xf]
      %v7190 = vld [vmem:[%s1635 + $0x4] sm:$0x1]
      %v7191 = vld [vmem:[%s1635 + $0x8] sm:$0xf]
      %v7192 = vld [vmem:[%s1635 + $0xc] sm:$0x1]
      %v7193 = vld [vmem:[%s1635 + $0x10] sm:$0xf]
      %v7194 = vld [vmem:[%s1635 + $0x14] sm:$0x1]
      %v7195 = vld [vmem:[%s1635 + $0x18] sm:$0xf]
      %v7196 = vld [vmem:[%s1635 + $0x1c] sm:$0x1]
      %v7197 = vld [vmem:[%s1635 + $0x20] sm:$0xf]
      %v7198 = vld [vmem:[%s1635 + $0x24] sm:$0x1]
      %v7199 = vld [vmem:[%s1635 + $0x28] sm:$0xf]
      %v7200 = vld [vmem:[%s1635 + $0x2c] sm:$0x1]
      %v7201 = vld [vmem:[%s1635 + $0x30] sm:$0xf]
      %v7202 = vld [vmem:[%s1635 + $0x34] sm:$0x1]
      %v7203 = vld [vmem:[%s1635 + $0x38] sm:$0xf]
      %v7204 = vld [vmem:[%s1635 + $0x3c] sm:$0x1]
      %v7206 = vshrl.u32 %v7189, 16
      %v7208 = vrot.slane %v7206, 4
      %v7209 = vshll.u32 %v7189, 16
      %v7211 = vrot.slane %v7209, 5
      %v7212 = vor.u32 %v7208, %v7211
      %v7213 = vrot.slane %v7212, 4
      %v7215 = vshll.u32 %v7190, 16
      %v7217 = vrot.slane %v7215, 5
      %v7218 = vsel %vm2128, %v7213, %v7217
      %v7220 = vshrl.u32 %v7191, 16
      %v7222 = vrot.slane %v7220, 4
      %v7223 = vshll.u32 %v7191, 16
      %v7225 = vrot.slane %v7223, 5
      %v7226 = vor.u32 %v7222, %v7225
      %v7227 = vrot.slane %v7226, 4
      %v7229 = vshll.u32 %v7192, 16
      %v7231 = vrot.slane %v7229, 5
      %v7232 = vsel %vm2128, %v7227, %v7231
      %v7234 = vshrl.u32 %v7193, 16
      %v7236 = vrot.slane %v7234, 4
      %v7237 = vshll.u32 %v7193, 16
      %v7239 = vrot.slane %v7237, 5
      %v7240 = vor.u32 %v7236, %v7239
      %v7241 = vrot.slane %v7240, 4
      %v7243 = vshll.u32 %v7194, 16
      %v7245 = vrot.slane %v7243, 5
      %v7246 = vsel %vm2128, %v7241, %v7245
      %v7248 = vshrl.u32 %v7195, 16
      %v7250 = vrot.slane %v7248, 4
      %v7251 = vshll.u32 %v7195, 16
      %v7253 = vrot.slane %v7251, 5
      %v7254 = vor.u32 %v7250, %v7253
      %v7255 = vrot.slane %v7254, 4
      %v7257 = vshll.u32 %v7196, 16
      %v7259 = vrot.slane %v7257, 5
      %v7260 = vsel %vm2128, %v7255, %v7259
      %v7262 = vshrl.u32 %v7197, 16
      %v7264 = vrot.slane %v7262, 4
      %v7265 = vshll.u32 %v7197, 16
      %v7267 = vrot.slane %v7265, 5
      %v7268 = vor.u32 %v7264, %v7267
      %v7269 = vrot.slane %v7268, 4
      %v7271 = vshll.u32 %v7198, 16
      %v7273 = vrot.slane %v7271, 5
      %v7274 = vsel %vm2128, %v7269, %v7273
      %v7276 = vshrl.u32 %v7199, 16
      %v7278 = vrot.slane %v7276, 4
      %v7279 = vshll.u32 %v7199, 16
      %v7281 = vrot.slane %v7279, 5
      %v7282 = vor.u32 %v7278, %v7281
      %v7283 = vrot.slane %v7282, 4
      %v7285 = vshll.u32 %v7200, 16
      %v7287 = vrot.slane %v7285, 5
      %v7288 = vsel %vm2128, %v7283, %v7287
      %v7290 = vshrl.u32 %v7201, 16
      %v7292 = vrot.slane %v7290, 4
      %v7293 = vshll.u32 %v7201, 16
      %v7295 = vrot.slane %v7293, 5
      %v7296 = vor.u32 %v7292, %v7295
      %v7297 = vrot.slane %v7296, 4
      %v7299 = vshll.u32 %v7202, 16
      %v7301 = vrot.slane %v7299, 5
      %v7302 = vsel %vm2128, %v7297, %v7301
      %v7304 = vshrl.u32 %v7203, 16
      %v7306 = vrot.slane %v7304, 4
      %v7307 = vshll.u32 %v7203, 16
      %v7309 = vrot.slane %v7307, 5
      %v7310 = vor.u32 %v7306, %v7309
      %v7311 = vrot.slane %v7310, 4
      %v7313 = vshll.u32 %v7204, 16
      %v7315 = vrot.slane %v7313, 5
      %v7316 = vsel %vm2128, %v7311, %v7315
      %7325 = vst [vmem:[#allocation5 + $0x10] sm:$0xf] %v7218
      %7326 = vst [vmem:[#allocation5 + $0x34] sm:$0xf] %v7232
      %7327 = vst [vmem:[#allocation5 + $0x58] sm:$0xf] %v7246
      %7328 = vst [vmem:[#allocation5 + $0x7c] sm:$0xf] %v7260
      %7329 = vst [vmem:[#allocation5 + $0xa0] sm:$0xf] %v7274
      %7330 = vst [vmem:[#allocation5 + $0xc4] sm:$0xf] %v7288
      %7331 = vst [vmem:[#allocation5 + $0xe8] sm:$0xf] %v7302
      %7332 = vst [vmem:[#allocation5 + $0x10c] sm:$0xf] %v7316
      %v7333 = vld [vmem:[%s1635] sm:$0xe]
      %v7334 = vld [vmem:[%s1635 + $0x4] sm:$0x1]
      %v7335 = vld [vmem:[%s1635 + $0x8] sm:$0xe]
      %v7336 = vld [vmem:[%s1635 + $0xc] sm:$0x1]
      %v7337 = vld [vmem:[%s1635 + $0x10] sm:$0xe]
      %v7338 = vld [vmem:[%s1635 + $0x14] sm:$0x1]
      %v7339 = vld [vmem:[%s1635 + $0x18] sm:$0xe]
      %v7340 = vld [vmem:[%s1635 + $0x1c] sm:$0x1]
      %v7341 = vld [vmem:[%s1635 + $0x20] sm:$0xe]
      %v7342 = vld [vmem:[%s1635 + $0x24] sm:$0x1]
      %v7343 = vld [vmem:[%s1635 + $0x28] sm:$0xe]
      %v7344 = vld [vmem:[%s1635 + $0x2c] sm:$0x1]
      %v7345 = vld [vmem:[%s1635 + $0x30] sm:$0xe]
      %v7346 = vld [vmem:[%s1635 + $0x34] sm:$0x1]
      %v7347 = vld [vmem:[%s1635 + $0x38] sm:$0xe]
      %v7348 = vld [vmem:[%s1635 + $0x3c] sm:$0x1]
      %v7365 = vrot.slane %v7333, 5
      %v7366 = vrot.slane %v7365, 4
      %v7367 = vrot.slane %v7334, 5
      %v7368 = vsel %vm2451, %v7366, %v7367
      %v7369 = vrot.slane %v7335, 5
      %v7370 = vrot.slane %v7369, 4
      %v7371 = vrot.slane %v7336, 5
      %v7372 = vsel %vm2451, %v7370, %v7371
      %v7373 = vrot.slane %v7337, 5
      %v7374 = vrot.slane %v7373, 4
      %v7375 = vrot.slane %v7338, 5
      %v7376 = vsel %vm2451, %v7374, %v7375
      %v7377 = vrot.slane %v7339, 5
      %v7378 = vrot.slane %v7377, 4
      %v7379 = vrot.slane %v7340, 5
      %v7380 = vsel %vm2451, %v7378, %v7379
      %v7381 = vrot.slane %v7341, 5
      %v7382 = vrot.slane %v7381, 4
      %v7383 = vrot.slane %v7342, 5
      %v7384 = vsel %vm2451, %v7382, %v7383
      %v7385 = vrot.slane %v7343, 5
      %v7386 = vrot.slane %v7385, 4
      %v7387 = vrot.slane %v7344, 5
      %v7388 = vsel %vm2451, %v7386, %v7387
      %v7389 = vrot.slane %v7345, 5
      %v7390 = vrot.slane %v7389, 4
      %v7391 = vrot.slane %v7346, 5
      %v7392 = vsel %vm2451, %v7390, %v7391
      %v7393 = vrot.slane %v7347, 5
      %v7394 = vrot.slane %v7393, 4
      %v7395 = vrot.slane %v7348, 5
      %v7396 = vsel %vm2451, %v7394, %v7395
      %7405 = vst [vmem:[#allocation5 + $0x14] sm:$0xf] %v7368
      %7406 = vst [vmem:[#allocation5 + $0x38] sm:$0xf] %v7372
      %7407 = vst [vmem:[#allocation5 + $0x5c] sm:$0xf] %v7376
      %7408 = vst [vmem:[#allocation5 + $0x80] sm:$0xf] %v7380
      %7409 = vst [vmem:[#allocation5 + $0xa4] sm:$0xf] %v7384
      %7410 = vst [vmem:[#allocation5 + $0xc8] sm:$0xf] %v7388
      %7411 = vst [vmem:[#allocation5 + $0xec] sm:$0xf] %v7392
      %7412 = vst [vmem:[#allocation5 + $0x110] sm:$0xf] %v7396
      %s7413 = scalar_lea.vmem [#allocation3], 16
      %v7414 = vld [vmem:[%s7413] sm:$0xf]
      %v7415 = vld [vmem:[%s7413 + $0x8] sm:$0xf]
      %v7416 = vld [vmem:[%s7413 + $0x10] sm:$0xf]
      %v7417 = vld [vmem:[%s7413 + $0x18] sm:$0xf]
      %v7418 = vld [vmem:[%s7413 + $0x20] sm:$0xf]
      %v7419 = vld [vmem:[%s7413 + $0x28] sm:$0xf]
      %v7420 = vld [vmem:[%s7413 + $0x30] sm:$0xf]
      %v7421 = vld [vmem:[%s7413 + $0x38] sm:$0xf]
      %7422 = vst [vmem:[#allocation5 + $0x18] sm:$0xf] %v7414
      %7423 = vst [vmem:[#allocation5 + $0x3c] sm:$0xf] %v7415
      %7424 = vst [vmem:[#allocation5 + $0x60] sm:$0xf] %v7416
      %7425 = vst [vmem:[#allocation5 + $0x84] sm:$0xf] %v7417
      %7426 = vst [vmem:[#allocation5 + $0xa8] sm:$0xf] %v7418
      %7427 = vst [vmem:[#allocation5 + $0xcc] sm:$0xf] %v7419
      %7428 = vst [vmem:[#allocation5 + $0xf0] sm:$0xf] %v7420
      %7429 = vst [vmem:[#allocation5 + $0x114] sm:$0xf] %v7421
      %v7430 = vld [vmem:[%s7413] sm:$0xf]
      %v7431 = vld [vmem:[%s7413 + $0x4] sm:$0x1]
      %v7432 = vld [vmem:[%s7413 + $0x8] sm:$0xf]
      %v7433 = vld [vmem:[%s7413 + $0xc] sm:$0x1]
      %v7434 = vld [vmem:[%s7413 + $0x10] sm:$0xf]
      %v7435 = vld [vmem:[%s7413 + $0x14] sm:$0x1]
      %v7436 = vld [vmem:[%s7413 + $0x18] sm:$0xf]
      %v7437 = vld [vmem:[%s7413 + $0x1c] sm:$0x1]
      %v7438 = vld [vmem:[%s7413 + $0x20] sm:$0xf]
      %v7439 = vld [vmem:[%s7413 + $0x24] sm:$0x1]
      %v7440 = vld [vmem:[%s7413 + $0x28] sm:$0xf]
      %v7441 = vld [vmem:[%s7413 + $0x2c] sm:$0x1]
      %v7442 = vld [vmem:[%s7413 + $0x30] sm:$0xf]
      %v7443 = vld [vmem:[%s7413 + $0x34] sm:$0x1]
      %v7444 = vld [vmem:[%s7413 + $0x38] sm:$0xf]
      %v7445 = vld [vmem:[%s7413 + $0x3c] sm:$0x1]
      %v7447 = vshrl.u32 %v7430, 16
      %v7449 = vrot.slane %v7447, 4
      %v7450 = vshll.u32 %v7430, 16
      %v7452 = vrot.slane %v7450, 5
      %v7453 = vor.u32 %v7449, %v7452
      %v7454 = vrot.slane %v7453, 4
      %v7456 = vshll.u32 %v7431, 16
      %v7458 = vrot.slane %v7456, 5
      %v7459 = vsel %vm2128, %v7454, %v7458
      %v7461 = vshrl.u32 %v7432, 16
      %v7463 = vrot.slane %v7461, 4
      %v7464 = vshll.u32 %v7432, 16
      %v7466 = vrot.slane %v7464, 5
      %v7467 = vor.u32 %v7463, %v7466
      %v7468 = vrot.slane %v7467, 4
      %v7470 = vshll.u32 %v7433, 16
      %v7472 = vrot.slane %v7470, 5
      %v7473 = vsel %vm2128, %v7468, %v7472
      %v7475 = vshrl.u32 %v7434, 16
      %v7477 = vrot.slane %v7475, 4
      %v7478 = vshll.u32 %v7434, 16
      %v7480 = vrot.slane %v7478, 5
      %v7481 = vor.u32 %v7477, %v7480
      %v7482 = vrot.slane %v7481, 4
      %v7484 = vshll.u32 %v7435, 16
      %v7486 = vrot.slane %v7484, 5
      %v7487 = vsel %vm2128, %v7482, %v7486
      %v7489 = vshrl.u32 %v7436, 16
      %v7491 = vrot.slane %v7489, 4
      %v7492 = vshll.u32 %v7436, 16
      %v7494 = vrot.slane %v7492, 5
      %v7495 = vor.u32 %v7491, %v7494
      %v7496 = vrot.slane %v7495, 4
      %v7498 = vshll.u32 %v7437, 16
      %v7500 = vrot.slane %v7498, 5
      %v7501 = vsel %vm2128, %v7496, %v7500
      %v7503 = vshrl.u32 %v7438, 16
      %v7505 = vrot.slane %v7503, 4
      %v7506 = vshll.u32 %v7438, 16
      %v7508 = vrot.slane %v7506, 5
      %v7509 = vor.u32 %v7505, %v7508
      %v7510 = vrot.slane %v7509, 4
      %v7512 = vshll.u32 %v7439, 16
      %v7514 = vrot.slane %v7512, 5
      %v7515 = vsel %vm2128, %v7510, %v7514
      %v7517 = vshrl.u32 %v7440, 16
      %v7519 = vrot.slane %v7517, 4
      %v7520 = vshll.u32 %v7440, 16
      %v7522 = vrot.slane %v7520, 5
      %v7523 = vor.u32 %v7519, %v7522
      %v7524 = vrot.slane %v7523, 4
      %v7526 = vshll.u32 %v7441, 16
      %v7528 = vrot.slane %v7526, 5
      %v7529 = vsel %vm2128, %v7524, %v7528
      %v7531 = vshrl.u32 %v7442, 16
      %v7533 = vrot.slane %v7531, 4
      %v7534 = vshll.u32 %v7442, 16
      %v7536 = vrot.slane %v7534, 5
      %v7537 = vor.u32 %v7533, %v7536
      %v7538 = vrot.slane %v7537, 4
      %v7540 = vshll.u32 %v7443, 16
      %v7542 = vrot.slane %v7540, 5
      %v7543 = vsel %vm2128, %v7538, %v7542
      %v7545 = vshrl.u32 %v7444, 16
      %v7547 = vrot.slane %v7545, 4
      %v7548 = vshll.u32 %v7444, 16
      %v7550 = vrot.slane %v7548, 5
      %v7551 = vor.u32 %v7547, %v7550
      %v7552 = vrot.slane %v7551, 4
      %v7554 = vshll.u32 %v7445, 16
      %v7556 = vrot.slane %v7554, 5
      %v7557 = vsel %vm2128, %v7552, %v7556
      %7566 = vst [vmem:[#allocation5 + $0x1c] sm:$0xf] %v7459
      %7567 = vst [vmem:[#allocation5 + $0x40] sm:$0xf] %v7473
      %7568 = vst [vmem:[#allocation5 + $0x64] sm:$0xf] %v7487
      %7569 = vst [vmem:[#allocation5 + $0x88] sm:$0xf] %v7501
      %7570 = vst [vmem:[#allocation5 + $0xac] sm:$0xf] %v7515
      %7571 = vst [vmem:[#allocation5 + $0xd0] sm:$0xf] %v7529
      %7572 = vst [vmem:[#allocation5 + $0xf4] sm:$0xf] %v7543
      %7573 = vst [vmem:[#allocation5 + $0x118] sm:$0xf] %v7557
      %v7574 = vld [vmem:[%s7413] sm:$0xe]
      %v7575 = vld [vmem:[%s7413 + $0x4] sm:$0x1]
      %v7576 = vld [vmem:[%s7413 + $0x8] sm:$0xe]
      %v7577 = vld [vmem:[%s7413 + $0xc] sm:$0x1]
      %v7578 = vld [vmem:[%s7413 + $0x10] sm:$0xe]
      %v7579 = vld [vmem:[%s7413 + $0x14] sm:$0x1]
      %v7580 = vld [vmem:[%s7413 + $0x18] sm:$0xe]
      %v7581 = vld [vmem:[%s7413 + $0x1c] sm:$0x1]
      %v7582 = vld [vmem:[%s7413 + $0x20] sm:$0xe]
      %v7583 = vld [vmem:[%s7413 + $0x24] sm:$0x1]
      %v7584 = vld [vmem:[%s7413 + $0x28] sm:$0xe]
      %v7585 = vld [vmem:[%s7413 + $0x2c] sm:$0x1]
      %v7586 = vld [vmem:[%s7413 + $0x30] sm:$0xe]
      %v7587 = vld [vmem:[%s7413 + $0x34] sm:$0x1]
      %v7588 = vld [vmem:[%s7413 + $0x38] sm:$0xe]
      %v7589 = vld [vmem:[%s7413 + $0x3c] sm:$0x1]
      %v7606 = vrot.slane %v7574, 5
      %v7607 = vrot.slane %v7606, 4
      %v7608 = vrot.slane %v7575, 5
      %v7609 = vsel %vm2451, %v7607, %v7608
      %v7610 = vrot.slane %v7576, 5
      %v7611 = vrot.slane %v7610, 4
      %v7612 = vrot.slane %v7577, 5
      %v7613 = vsel %vm2451, %v7611, %v7612
      %v7614 = vrot.slane %v7578, 5
      %v7615 = vrot.slane %v7614, 4
      %v7616 = vrot.slane %v7579, 5
      %v7617 = vsel %vm2451, %v7615, %v7616
      %v7618 = vrot.slane %v7580, 5
      %v7619 = vrot.slane %v7618, 4
      %v7620 = vrot.slane %v7581, 5
      %v7621 = vsel %vm2451, %v7619, %v7620
      %v7622 = vrot.slane %v7582, 5
      %v7623 = vrot.slane %v7622, 4
      %v7624 = vrot.slane %v7583, 5
      %v7625 = vsel %vm2451, %v7623, %v7624
      %v7626 = vrot.slane %v7584, 5
      %v7627 = vrot.slane %v7626, 4
      %v7628 = vrot.slane %v7585, 5
      %v7629 = vsel %vm2451, %v7627, %v7628
      %v7630 = vrot.slane %v7586, 5
      %v7631 = vrot.slane %v7630, 4
      %v7632 = vrot.slane %v7587, 5
      %v7633 = vsel %vm2451, %v7631, %v7632
      %v7634 = vrot.slane %v7588, 5
      %v7635 = vrot.slane %v7634, 4
      %v7636 = vrot.slane %v7589, 5
      %v7637 = vsel %vm2451, %v7635, %v7636
      %7646 = vst [vmem:[#allocation5 + $0x20] sm:$0xf] %v7609
      %7647 = vst [vmem:[#allocation5 + $0x44] sm:$0xf] %v7613
      %7648 = vst [vmem:[#allocation5 + $0x68] sm:$0xf] %v7617
      %7649 = vst [vmem:[#allocation5 + $0x8c] sm:$0xf] %v7621
      %7650 = vst [vmem:[#allocation5 + $0xb0] sm:$0xf] %v7625
      %7651 = vst [vmem:[#allocation5 + $0xd4] sm:$0xf] %v7629
      %7652 = vst [vmem:[#allocation5 + $0xf8] sm:$0xf] %v7633
      %7653 = vst [vmem:[#allocation5 + $0x11c] sm:$0xf] %v7637
      %v7654 = vld [vmem:[#allocation5] sm:$0xff]
      %v7655 = vld [vmem:[#allocation5 + $0x8] sm:$0xff]
      %v7656 = vld [vmem:[#allocation5 + $0x10] sm:$0xff]
      %v7657 = vld [vmem:[#allocation5 + $0x18] sm:$0xff]
      %v7658 = vld [vmem:[#allocation5 + $0x20] sm:$0xf]
      %v7659 = vld [vmem:[#allocation5 + $0x24] sm:$0xff]
      %v7660 = vld [vmem:[#allocation5 + $0x2c] sm:$0xff]
      %v7661 = vld [vmem:[#allocation5 + $0x34] sm:$0xff]
      %v7662 = vld [vmem:[#allocation5 + $0x3c] sm:$0xff]
      %v7663 = vld [vmem:[#allocation5 + $0x44] sm:$0xf]
      %v7664 = vld [vmem:[#allocation5 + $0x48] sm:$0xff]
      %v7665 = vld [vmem:[#allocation5 + $0x50] sm:$0xff]
      %v7666 = vld [vmem:[#allocation5 + $0x58] sm:$0xff]
      %v7667 = vld [vmem:[#allocation5 + $0x60] sm:$0xff]
      %v7668 = vld [vmem:[#allocation5 + $0x68] sm:$0xf]
      %v7669 = vld [vmem:[#allocation5 + $0x6c] sm:$0xff]
      %v7670 = vld [vmem:[#allocation5 + $0x74] sm:$0xff]
      %v7671 = vld [vmem:[#allocation5 + $0x7c] sm:$0xff]
      %v7672 = vld [vmem:[#allocation5 + $0x84] sm:$0xff]
      %v7673 = vld [vmem:[#allocation5 + $0x8c] sm:$0xf]
      %v7674 = vld [vmem:[#allocation5 + $0x90] sm:$0xff]
      %v7675 = vld [vmem:[#allocation5 + $0x98] sm:$0xff]
      %v7676 = vld [vmem:[#allocation5 + $0xa0] sm:$0xff]
      %v7677 = vld [vmem:[#allocation5 + $0xa8] sm:$0xff]
      %v7678 = vld [vmem:[#allocation5 + $0xb0] sm:$0xf]
      %v7679 = vld [vmem:[#allocation5 + $0xb4] sm:$0xff]
      %v7680 = vld [vmem:[#allocation5 + $0xbc] sm:$0xff]
      %v7681 = vld [vmem:[#allocation5 + $0xc4] sm:$0xff]
      %v7682 = vld [vmem:[#allocation5 + $0xcc] sm:$0xff]
      %v7683 = vld [vmem:[#allocation5 + $0xd4] sm:$0xf]
      %v7684 = vld [vmem:[#allocation5 + $0xd8] sm:$0xff]
      %v7685 = vld [vmem:[#allocation5 + $0xe0] sm:$0xff]
      %v7686 = vld [vmem:[#allocation5 + $0xe8] sm:$0xff]
      %v7687 = vld [vmem:[#allocation5 + $0xf0] sm:$0xff]
      %v7688 = vld [vmem:[#allocation5 + $0xf8] sm:$0xf]
      %v7689 = vld [vmem:[#allocation5 + $0xfc] sm:$0xff]
      %v7690 = vld [vmem:[#allocation5 + $0x104] sm:$0xff]
      %v7691 = vld [vmem:[#allocation5 + $0x10c] sm:$0xff]
      %v7692 = vld [vmem:[#allocation5 + $0x114] sm:$0xff]
      %v7693 = vld [vmem:[#allocation5 + $0x11c] sm:$0xf]
      %v7694 = vld [vmem:[%s12] sm:$0xf]
      %v7695 = vld [vmem:[%s12 + $0x4] sm:$0xf]
      %v7696 = vld [vmem:[%s12 + $0x8] sm:$0xf]
      %v7697 = vld [vmem:[%s12 + $0xc] sm:$0xf]
      %v7698 = vld [vmem:[%s12 + $0x10] sm:$0xf]
      %v7699 = vld [vmem:[%s12 + $0x14] sm:$0xf]
      %v7700 = vld [vmem:[%s12 + $0x18] sm:$0xf]
      %v7701 = vld [vmem:[%s12 + $0x1c] sm:$0xf]
      %v7702 = vld [vmem:[%s12 + $0x20] sm:$0xf]
      %v7703 = vld [vmem:[%s12 + $0x24] sm:$0xf]
      %v7704 = vld [vmem:[%s12 + $0x28] sm:$0xf]
      %v7705 = vld [vmem:[%s12 + $0x2c] sm:$0xf]
      %v7706 = vld [vmem:[%s12 + $0x30] sm:$0xf]
      %v7707 = vld [vmem:[%s12 + $0x34] sm:$0xf]
      %v7708 = vld [vmem:[%s12 + $0x38] sm:$0xf]
      %v7709 = vld [vmem:[%s12 + $0x3c] sm:$0xf]
      %v7710 = vld [vmem:[%s12 + $0x40] sm:$0xf]
      %v7711 = vld [vmem:[%s12 + $0x44] sm:$0xf]
      %v7712 = vld [vmem:[%s12 + $0x48] sm:$0xf]
      %v7713 = vld [vmem:[%s12 + $0x4c] sm:$0xf]
      %v7714 = vld [vmem:[%s12 + $0x50] sm:$0xf]
      %v7715 = vld [vmem:[%s12 + $0x54] sm:$0xf]
      %v7716 = vld [vmem:[%s12 + $0x58] sm:$0xf]
      %v7717 = vld [vmem:[%s12 + $0x5c] sm:$0xf]
      %v7718 = vld [vmem:[%s12 + $0x60] sm:$0xf]
      %v7719 = vld [vmem:[%s12 + $0x64] sm:$0xf]
      %v7720 = vld [vmem:[%s12 + $0x68] sm:$0xf]
      %v7721 = vld [vmem:[%s12 + $0x6c] sm:$0xf]
      %v7722 = vld [vmem:[%s12 + $0x70] sm:$0xf]
      %v7723 = vld [vmem:[%s12 + $0x74] sm:$0xf]
      %v7724 = vld [vmem:[%s12 + $0x78] sm:$0xf]
      %v7725 = vld [vmem:[%s12 + $0x7c] sm:$0xf]
      %v7726 = vld [vmem:[%s12 + $0x80] sm:$0xf]
      %v7727 = vld [vmem:[%s12 + $0x84] sm:$0xf]
      %v7728 = vld [vmem:[%s12 + $0x88] sm:$0xf]
      %v7729 = vld [vmem:[%s12 + $0x8c] sm:$0xf]
      %v7730 = vld [vmem:[%s12 + $0x90] sm:$0xf]
      %v7731 = vld [vmem:[%s12 + $0x94] sm:$0xf]
      %v7732 = vld [vmem:[%s12 + $0x98] sm:$0xf]
      %v7733 = vld [vmem:[%s12 + $0x9c] sm:$0xf]
      %v7734 = vld [vmem:[%s12 + $0xa0] sm:$0xf]
      %v7735 = vld [vmem:[%s12 + $0xa4] sm:$0xf]
      %v7736 = vld [vmem:[%s12 + $0xa8] sm:$0xf]
      %v7737 = vld [vmem:[%s12 + $0xac] sm:$0xf]
      %v7738 = vld [vmem:[%s12 + $0xb0] sm:$0xf]
      %v7739 = vld [vmem:[%s12 + $0xb4] sm:$0xf]
      %v7740 = vld [vmem:[%s12 + $0xb8] sm:$0xf]
      %v7741 = vld [vmem:[%s12 + $0xbc] sm:$0xf]
      %v7742 = vld [vmem:[%s12 + $0xc0] sm:$0xf]
      %v7743 = vld [vmem:[%s12 + $0xc4] sm:$0xf]
      %v7744 = vld [vmem:[%s12 + $0xc8] sm:$0xf]
      %v7745 = vld [vmem:[%s12 + $0xcc] sm:$0xf]
      %v7746 = vld [vmem:[%s12 + $0xd0] sm:$0xf]
      %v7747 = vld [vmem:[%s12 + $0xd4] sm:$0xf]
      %v7748 = vld [vmem:[%s12 + $0xd8] sm:$0xf]
      %v7749 = vld [vmem:[%s12 + $0xdc] sm:$0xf]
      %v7750 = vld [vmem:[%s12 + $0xe0] sm:$0xf]
      %v7751 = vld [vmem:[%s12 + $0xe4] sm:$0xf]
      %v7752 = vld [vmem:[%s12 + $0xe8] sm:$0xf]
      %v7753 = vld [vmem:[%s12 + $0xec] sm:$0xf]
      %v7754 = vld [vmem:[%s12 + $0xf0] sm:$0xf]
      %v7755 = vld [vmem:[%s12 + $0xf4] sm:$0xf]
      %v7756 = vld [vmem:[%s12 + $0xf8] sm:$0xf]
      %v7757 = vld [vmem:[%s12 + $0xfc] sm:$0xf]
      %v7758 = vld [vmem:[%s12 + $0x100] sm:$0xf]
      %v7759 = vld [vmem:[%s12 + $0x104] sm:$0xf]
      %v7760 = vld [vmem:[%s12 + $0x108] sm:$0xf]
      %v7761 = vld [vmem:[%s12 + $0x10c] sm:$0xf]
      %v7762 = vld [vmem:[%s12 + $0x110] sm:$0xf]
      %v7763 = vld [vmem:[%s12 + $0x114] sm:$0xf]
      %v7764 = vld [vmem:[%s12 + $0x118] sm:$0xf]
      %v7765 = vld [vmem:[%s12 + $0x11c] sm:$0xf]
      %v7766 = vld [vmem:[%s12 + $0x120] sm:$0xf]
      %v7767 = vld [vmem:[%s12 + $0x124] sm:$0xf]
      %v7768 = vld [vmem:[%s12 + $0x128] sm:$0xf]
      %v7769 = vld [vmem:[%s12 + $0x12c] sm:$0xf]
      %v7770 = vld [vmem:[%s12 + $0x130] sm:$0xf]
      %v7771 = vld [vmem:[%s12 + $0x134] sm:$0xf]
      %v7772 = vld [vmem:[%s12 + $0x138] sm:$0xf]
      %v7773 = vld [vmem:[%s12 + $0x13c] sm:$0xf]
      %v7774 = vld [vmem:[%s12 + $0x140] sm:$0xf]
      %v7775 = vld [vmem:[%s12 + $0x144] sm:$0xf]
      %v7776 = vld [vmem:[%s12 + $0x148] sm:$0xf]
      %v7777 = vld [vmem:[%s12 + $0x14c] sm:$0xf]
      %v7778 = vld [vmem:[%s12 + $0x150] sm:$0xf]
      %v7779 = vld [vmem:[%s12 + $0x154] sm:$0xf]
      %v7780 = vld [vmem:[%s12 + $0x158] sm:$0xf]
      %v7781 = vld [vmem:[%s12 + $0x15c] sm:$0xf]
      %v7782 = vld [vmem:[%s12 + $0x160] sm:$0xf]
      %v7783 = vld [vmem:[%s12 + $0x164] sm:$0xf]
      %v7784 = vld [vmem:[%s12 + $0x168] sm:$0xf]
      %v7785 = vld [vmem:[%s12 + $0x16c] sm:$0xf]
      %v7786 = vld [vmem:[%s12 + $0x170] sm:$0xf]
      %v7787 = vld [vmem:[%s12 + $0x174] sm:$0xf]
      %v7788 = vld [vmem:[%s12 + $0x178] sm:$0xf]
      %v7789 = vld [vmem:[%s12 + $0x17c] sm:$0xf]
      %v7790 = vld [vmem:[%s12 + $0x180] sm:$0xf]
      %v7791 = vld [vmem:[%s12 + $0x184] sm:$0xf]
      %v7792 = vld [vmem:[%s12 + $0x188] sm:$0xf]
      %v7793 = vld [vmem:[%s12 + $0x18c] sm:$0xf]
      %v7794 = vld [vmem:[%s12 + $0x190] sm:$0xf]
      %v7795 = vld [vmem:[%s12 + $0x194] sm:$0xf]
      %v7796 = vld [vmem:[%s12 + $0x198] sm:$0xf]
      %v7797 = vld [vmem:[%s12 + $0x19c] sm:$0xf]
      %v7798 = vld [vmem:[%s12 + $0x1a0] sm:$0xf]
      %v7799 = vld [vmem:[%s12 + $0x1a4] sm:$0xf]
      %v7800 = vld [vmem:[%s12 + $0x1a8] sm:$0xf]
      %v7801 = vld [vmem:[%s12 + $0x1ac] sm:$0xf]
      %v7802 = vld [vmem:[%s12 + $0x1b0] sm:$0xf]
      %v7803 = vld [vmem:[%s12 + $0x1b4] sm:$0xf]
      %v7804 = vld [vmem:[%s12 + $0x1b8] sm:$0xf]
      %v7805 = vld [vmem:[%s12 + $0x1bc] sm:$0xf]
      %v7806 = vld [vmem:[%s12 + $0x1c0] sm:$0xf]
      %v7807 = vld [vmem:[%s12 + $0x1c4] sm:$0xf]
      %v7808 = vld [vmem:[%s12 + $0x1c8] sm:$0xf]
      %v7809 = vld [vmem:[%s12 + $0x1cc] sm:$0xf]
      %v7810 = vld [vmem:[%s12 + $0x1d0] sm:$0xf]
      %v7811 = vld [vmem:[%s12 + $0x1d4] sm:$0xf]
      %v7812 = vld [vmem:[%s12 + $0x1d8] sm:$0xf]
      %v7813 = vld [vmem:[%s12 + $0x1dc] sm:$0xf]
      %v7814 = vld [vmem:[%s12 + $0x1e0] sm:$0xf]
      %v7815 = vld [vmem:[%s12 + $0x1e4] sm:$0xf]
      %v7816 = vld [vmem:[%s12 + $0x1e8] sm:$0xf]
      %v7817 = vld [vmem:[%s12 + $0x1ec] sm:$0xf]
      %v7818 = vld [vmem:[%s12 + $0x1f0] sm:$0xf]
      %v7819 = vld [vmem:[%s12 + $0x1f4] sm:$0xf]
      %v7820 = vld [vmem:[%s12 + $0x1f8] sm:$0xf]
      %v7821 = vld [vmem:[%s12 + $0x1fc] sm:$0xf]
      %v7822 = vld [vmem:[%s12 + $0x200] sm:$0xf]
      %v7823 = vld [vmem:[%s12 + $0x204] sm:$0xf]
      %v7824 = vld [vmem:[%s12 + $0x208] sm:$0xf]
      %v7825 = vld [vmem:[%s12 + $0x20c] sm:$0xf]
      %v7826 = vld [vmem:[%s12 + $0x210] sm:$0xf]
      %v7827 = vld [vmem:[%s12 + $0x214] sm:$0xf]
      %v7828 = vld [vmem:[%s12 + $0x218] sm:$0xf]
      %v7829 = vld [vmem:[%s12 + $0x21c] sm:$0xf]
      %v7830 = vld [vmem:[%s12 + $0x220] sm:$0xf]
      %v7831 = vld [vmem:[%s12 + $0x224] sm:$0xf]
      %v7832 = vld [vmem:[%s12 + $0x228] sm:$0xf]
      %v7833 = vld [vmem:[%s12 + $0x22c] sm:$0xf]
      %v7834 = vld [vmem:[%s12 + $0x230] sm:$0xf]
      %v7835 = vld [vmem:[%s12 + $0x234] sm:$0xf]
      %v7836 = vld [vmem:[%s12 + $0x238] sm:$0xf]
      %v7837 = vld [vmem:[%s12 + $0x23c] sm:$0xf]
      %v7878 = vunpack.c.l.b16 %v7654
      %v7879 = vunpack.c.h.b16 %v7654
      %v7880 = vunpack.c.l.b16 %v7655
      %v7881 = vunpack.c.h.b16 %v7655
      %v7882 = vunpack.c.l.b16 %v7656
      %v7883 = vunpack.c.h.b16 %v7656
      %v7884 = vunpack.c.l.b16 %v7657
      %v7885 = vunpack.c.h.b16 %v7657
      %v7886 = vunpack.c.l.b16 %v7658
      %v7887 = vunpack.c.l.b16 %v7659
      %v7888 = vunpack.c.h.b16 %v7659
      %v7889 = vunpack.c.l.b16 %v7660
      %v7890 = vunpack.c.h.b16 %v7660
      %v7891 = vunpack.c.l.b16 %v7661
      %v7892 = vunpack.c.h.b16 %v7661
      %v7893 = vunpack.c.l.b16 %v7662
      %v7894 = vunpack.c.h.b16 %v7662
      %v7895 = vunpack.c.l.b16 %v7663
      %v7896 = vunpack.c.l.b16 %v7664
      %v7897 = vunpack.c.h.b16 %v7664
      %v7898 = vunpack.c.l.b16 %v7665
      %v7899 = vunpack.c.h.b16 %v7665
      %v7900 = vunpack.c.l.b16 %v7666
      %v7901 = vunpack.c.h.b16 %v7666
      %v7902 = vunpack.c.l.b16 %v7667
      %v7903 = vunpack.c.h.b16 %v7667
      %v7904 = vunpack.c.l.b16 %v7668
      %v7905 = vunpack.c.l.b16 %v7669
      %v7906 = vunpack.c.h.b16 %v7669
      %v7907 = vunpack.c.l.b16 %v7670
      %v7908 = vunpack.c.h.b16 %v7670
      %v7909 = vunpack.c.l.b16 %v7671
      %v7910 = vunpack.c.h.b16 %v7671
      %v7911 = vunpack.c.l.b16 %v7672
      %v7912 = vunpack.c.h.b16 %v7672
      %v7913 = vunpack.c.l.b16 %v7673
      %v7914 = vunpack.c.l.b16 %v7674
      %v7915 = vunpack.c.h.b16 %v7674
      %v7916 = vunpack.c.l.b16 %v7675
      %v7917 = vunpack.c.h.b16 %v7675
      %v7918 = vunpack.c.l.b16 %v7676
      %v7919 = vunpack.c.h.b16 %v7676
      %v7920 = vunpack.c.l.b16 %v7677
      %v7921 = vunpack.c.h.b16 %v7677
      %v7922 = vunpack.c.l.b16 %v7678
      %v7923 = vunpack.c.l.b16 %v7679
      %v7924 = vunpack.c.h.b16 %v7679
      %v7925 = vunpack.c.l.b16 %v7680
      %v7926 = vunpack.c.h.b16 %v7680
      %v7927 = vunpack.c.l.b16 %v7681
      %v7928 = vunpack.c.h.b16 %v7681
      %v7929 = vunpack.c.l.b16 %v7682
      %v7930 = vunpack.c.h.b16 %v7682
      %v7931 = vunpack.c.l.b16 %v7683
      %v7932 = vunpack.c.l.b16 %v7684
      %v7933 = vunpack.c.h.b16 %v7684
      %v7934 = vunpack.c.l.b16 %v7685
      %v7935 = vunpack.c.h.b16 %v7685
      %v7936 = vunpack.c.l.b16 %v7686
      %v7937 = vunpack.c.h.b16 %v7686
      %v7938 = vunpack.c.l.b16 %v7687
      %v7939 = vunpack.c.h.b16 %v7687
      %v7940 = vunpack.c.l.b16 %v7688
      %v7941 = vunpack.c.l.b16 %v7689
      %v7942 = vunpack.c.h.b16 %v7689
      %v7943 = vunpack.c.l.b16 %v7690
      %v7944 = vunpack.c.h.b16 %v7690
      %v7945 = vunpack.c.l.b16 %v7691
      %v7946 = vunpack.c.h.b16 %v7691
      %v7947 = vunpack.c.l.b16 %v7692
      %v7948 = vunpack.c.h.b16 %v7692
      %v7949 = vunpack.c.l.b16 %v7693
      %v7950 = vpack.c.b16 %v7887, %v7878
      %v7951 = vpack.c.b16 %v7888, %v7879
      %v7952 = vpack.c.b16 %v7889, %v7880
      %v7953 = vpack.c.b16 %v7890, %v7881
      %v7954 = vpack.c.b16 %v7891, %v7882
      %v7955 = vpack.c.b16 %v7892, %v7883
      %v7956 = vpack.c.b16 %v7893, %v7884
      %v7957 = vpack.c.b16 %v7894, %v7885
      %v7958 = vpack.c.b16 %v7895, %v7886
      %v7959 = vpack.c.b16 %v7905, %v7896
      %v7960 = vpack.c.b16 %v7906, %v7897
      %v7961 = vpack.c.b16 %v7907, %v7898
      %v7962 = vpack.c.b16 %v7908, %v7899
      %v7963 = vpack.c.b16 %v7909, %v7900
      %v7964 = vpack.c.b16 %v7910, %v7901
      %v7965 = vpack.c.b16 %v7911, %v7902
      %v7966 = vpack.c.b16 %v7912, %v7903
      %v7967 = vpack.c.b16 %v7913, %v7904
      %v7968 = vpack.c.b16 %v7923, %v7914
      %v7969 = vpack.c.b16 %v7924, %v7915
      %v7970 = vpack.c.b16 %v7925, %v7916
      %v7971 = vpack.c.b16 %v7926, %v7917
      %v7972 = vpack.c.b16 %v7927, %v7918
      %v7973 = vpack.c.b16 %v7928, %v7919
      %v7974 = vpack.c.b16 %v7929, %v7920
      %v7975 = vpack.c.b16 %v7930, %v7921
      %v7976 = vpack.c.b16 %v7931, %v7922
      %v7977 = vpack.c.b16 %v7941, %v7932
      %v7978 = vpack.c.b16 %v7942, %v7933
      %v7979 = vpack.c.b16 %v7943, %v7934
      %v7980 = vpack.c.b16 %v7944, %v7935
      %v7981 = vpack.c.b16 %v7945, %v7936
      %v7982 = vpack.c.b16 %v7946, %v7937
      %v7983 = vpack.c.b16 %v7947, %v7938
      %v7984 = vpack.c.b16 %v7948, %v7939
      %v7985 = vpack.c.b16 %v7949, %v7940
      %v8166 = vunpack.c.l.b16 %v7694
      %v8167 = vunpack.c.l.b16 %v7695
      %v8168 = vunpack.c.l.b16 %v7696
      %v8169 = vunpack.c.l.b16 %v7697
      %v8170 = vunpack.c.l.b16 %v7698
      %v8171 = vunpack.c.l.b16 %v7699
      %v8172 = vunpack.c.l.b16 %v7700
      %v8173 = vunpack.c.l.b16 %v7701
      %v8174 = vunpack.c.l.b16 %v7702
      %v8175 = vunpack.c.l.b16 %v7703
      %v8176 = vunpack.c.l.b16 %v7704
      %v8177 = vunpack.c.l.b16 %v7705
      %v8178 = vunpack.c.l.b16 %v7706
      %v8179 = vunpack.c.l.b16 %v7707
      %v8180 = vunpack.c.l.b16 %v7708
      %v8181 = vunpack.c.l.b16 %v7709
      %v8182 = vunpack.c.l.b16 %v7710
      %v8183 = vunpack.c.l.b16 %v7711
      %v8184 = vunpack.c.l.b16 %v7712
      %v8185 = vunpack.c.l.b16 %v7713
      %v8186 = vunpack.c.l.b16 %v7714
      %v8187 = vunpack.c.l.b16 %v7715
      %v8188 = vunpack.c.l.b16 %v7716
      %v8189 = vunpack.c.l.b16 %v7717
      %v8190 = vunpack.c.l.b16 %v7718
      %v8191 = vunpack.c.l.b16 %v7719
      %v8192 = vunpack.c.l.b16 %v7720
      %v8193 = vunpack.c.l.b16 %v7721
      %v8194 = vunpack.c.l.b16 %v7722
      %v8195 = vunpack.c.l.b16 %v7723
      %v8196 = vunpack.c.l.b16 %v7724
      %v8197 = vunpack.c.l.b16 %v7725
      %v8198 = vunpack.c.l.b16 %v7726
      %v8199 = vunpack.c.l.b16 %v7727
      %v8200 = vunpack.c.l.b16 %v7728
      %v8201 = vunpack.c.l.b16 %v7729
      %v8202 = vunpack.c.l.b16 %v7730
      %v8203 = vunpack.c.l.b16 %v7731
      %v8204 = vunpack.c.l.b16 %v7732
      %v8205 = vunpack.c.l.b16 %v7733
      %v8206 = vunpack.c.l.b16 %v7734
      %v8207 = vunpack.c.l.b16 %v7735
      %v8208 = vunpack.c.l.b16 %v7736
      %v8209 = vunpack.c.l.b16 %v7737
      %v8210 = vunpack.c.l.b16 %v7738
      %v8211 = vunpack.c.l.b16 %v7739
      %v8212 = vunpack.c.l.b16 %v7740
      %v8213 = vunpack.c.l.b16 %v7741
      %v8214 = vunpack.c.l.b16 %v7742
      %v8215 = vunpack.c.l.b16 %v7743
      %v8216 = vunpack.c.l.b16 %v7744
      %v8217 = vunpack.c.l.b16 %v7745
      %v8218 = vunpack.c.l.b16 %v7746
      %v8219 = vunpack.c.l.b16 %v7747
      %v8220 = vunpack.c.l.b16 %v7748
      %v8221 = vunpack.c.l.b16 %v7749
      %v8222 = vunpack.c.l.b16 %v7750
      %v8223 = vunpack.c.l.b16 %v7751
      %v8224 = vunpack.c.l.b16 %v7752
      %v8225 = vunpack.c.l.b16 %v7753
      %v8226 = vunpack.c.l.b16 %v7754
      %v8227 = vunpack.c.l.b16 %v7755
      %v8228 = vunpack.c.l.b16 %v7756
      %v8229 = vunpack.c.l.b16 %v7757
      %v8230 = vunpack.c.l.b16 %v7758
      %v8231 = vunpack.c.l.b16 %v7759
      %v8232 = vunpack.c.l.b16 %v7760
      %v8233 = vunpack.c.l.b16 %v7761
      %v8234 = vunpack.c.l.b16 %v7762
      %v8235 = vunpack.c.l.b16 %v7763
      %v8236 = vunpack.c.l.b16 %v7764
      %v8237 = vunpack.c.l.b16 %v7765
      %v8238 = vunpack.c.l.b16 %v7766
      %v8239 = vunpack.c.l.b16 %v7767
      %v8240 = vunpack.c.l.b16 %v7768
      %v8241 = vunpack.c.l.b16 %v7769
      %v8242 = vunpack.c.l.b16 %v7770
      %v8243 = vunpack.c.l.b16 %v7771
      %v8244 = vunpack.c.l.b16 %v7772
      %v8245 = vunpack.c.l.b16 %v7773
      %v8246 = vunpack.c.l.b16 %v7774
      %v8247 = vunpack.c.l.b16 %v7775
      %v8248 = vunpack.c.l.b16 %v7776
      %v8249 = vunpack.c.l.b16 %v7777
      %v8250 = vunpack.c.l.b16 %v7778
      %v8251 = vunpack.c.l.b16 %v7779
      %v8252 = vunpack.c.l.b16 %v7780
      %v8253 = vunpack.c.l.b16 %v7781
      %v8254 = vunpack.c.l.b16 %v7782
      %v8255 = vunpack.c.l.b16 %v7783
      %v8256 = vunpack.c.l.b16 %v7784
      %v8257 = vunpack.c.l.b16 %v7785
      %v8258 = vunpack.c.l.b16 %v7786
      %v8259 = vunpack.c.l.b16 %v7787
      %v8260 = vunpack.c.l.b16 %v7788
      %v8261 = vunpack.c.l.b16 %v7789
      %v8262 = vunpack.c.l.b16 %v7790
      %v8263 = vunpack.c.l.b16 %v7791
      %v8264 = vunpack.c.l.b16 %v7792
      %v8265 = vunpack.c.l.b16 %v7793
      %v8266 = vunpack.c.l.b16 %v7794
      %v8267 = vunpack.c.l.b16 %v7795
      %v8268 = vunpack.c.l.b16 %v7796
      %v8269 = vunpack.c.l.b16 %v7797
      %v8270 = vunpack.c.l.b16 %v7798
      %v8271 = vunpack.c.l.b16 %v7799
      %v8272 = vunpack.c.l.b16 %v7800
      %v8273 = vunpack.c.l.b16 %v7801
      %v8274 = vunpack.c.l.b16 %v7802
      %v8275 = vunpack.c.l.b16 %v7803
      %v8276 = vunpack.c.l.b16 %v7804
      %v8277 = vunpack.c.l.b16 %v7805
      %v8278 = vunpack.c.l.b16 %v7806
      %v8279 = vunpack.c.l.b16 %v7807
      %v8280 = vunpack.c.l.b16 %v7808
      %v8281 = vunpack.c.l.b16 %v7809
      %v8282 = vunpack.c.l.b16 %v7810
      %v8283 = vunpack.c.l.b16 %v7811
      %v8284 = vunpack.c.l.b16 %v7812
      %v8285 = vunpack.c.l.b16 %v7813
      %v8286 = vunpack.c.l.b16 %v7814
      %v8287 = vunpack.c.l.b16 %v7815
      %v8288 = vunpack.c.l.b16 %v7816
      %v8289 = vunpack.c.l.b16 %v7817
      %v8290 = vunpack.c.l.b16 %v7818
      %v8291 = vunpack.c.l.b16 %v7819
      %v8292 = vunpack.c.l.b16 %v7820
      %v8293 = vunpack.c.l.b16 %v7821
      %v8294 = vunpack.c.l.b16 %v7822
      %v8295 = vunpack.c.l.b16 %v7823
      %v8296 = vunpack.c.l.b16 %v7824
      %v8297 = vunpack.c.l.b16 %v7825
      %v8298 = vunpack.c.l.b16 %v7826
      %v8299 = vunpack.c.l.b16 %v7827
      %v8300 = vunpack.c.l.b16 %v7828
      %v8301 = vunpack.c.l.b16 %v7829
      %v8302 = vunpack.c.l.b16 %v7830
      %v8303 = vunpack.c.l.b16 %v7831
      %v8304 = vunpack.c.l.b16 %v7832
      %v8305 = vunpack.c.l.b16 %v7833
      %v8306 = vunpack.c.l.b16 %v7834
      %v8307 = vunpack.c.l.b16 %v7835
      %v8308 = vunpack.c.l.b16 %v7836
      %v8309 = vunpack.c.l.b16 %v7837
      %v8310 = vpack.c.b16 %v8167, %v8166
      %v8311 = vpack.c.b16 %v8169, %v8168
      %v8312 = vpack.c.b16 %v8171, %v8170
      %v8313 = vpack.c.b16 %v8173, %v8172
      %v8314 = vpack.c.b16 %v8175, %v8174
      %v8315 = vpack.c.b16 %v8177, %v8176
      %v8316 = vpack.c.b16 %v8179, %v8178
      %v8317 = vpack.c.b16 %v8181, %v8180
      %v8318 = vpack.c.b16 %v8183, %v8182
      %v8319 = vpack.c.b16 %v8185, %v8184
      %v8320 = vpack.c.b16 %v8187, %v8186
      %v8321 = vpack.c.b16 %v8189, %v8188
      %v8322 = vpack.c.b16 %v8191, %v8190
      %v8323 = vpack.c.b16 %v8193, %v8192
      %v8324 = vpack.c.b16 %v8195, %v8194
      %v8325 = vpack.c.b16 %v8197, %v8196
      %v8326 = vpack.c.b16 %v8199, %v8198
      %v8327 = vpack.c.b16 %v8201, %v8200
      %v8328 = vpack.c.b16 %v8203, %v8202
      %v8329 = vpack.c.b16 %v8205, %v8204
      %v8330 = vpack.c.b16 %v8207, %v8206
      %v8331 = vpack.c.b16 %v8209, %v8208
      %v8332 = vpack.c.b16 %v8211, %v8210
      %v8333 = vpack.c.b16 %v8213, %v8212
      %v8334 = vpack.c.b16 %v8215, %v8214
      %v8335 = vpack.c.b16 %v8217, %v8216
      %v8336 = vpack.c.b16 %v8219, %v8218
      %v8337 = vpack.c.b16 %v8221, %v8220
      %v8338 = vpack.c.b16 %v8223, %v8222
      %v8339 = vpack.c.b16 %v8225, %v8224
      %v8340 = vpack.c.b16 %v8227, %v8226
      %v8341 = vpack.c.b16 %v8229, %v8228
      %v8342 = vpack.c.b16 %v8231, %v8230
      %v8343 = vpack.c.b16 %v8233, %v8232
      %v8344 = vpack.c.b16 %v8235, %v8234
      %v8345 = vpack.c.b16 %v8237, %v8236
      %v8346 = vpack.c.b16 %v8239, %v8238
      %v8347 = vpack.c.b16 %v8241, %v8240
      %v8348 = vpack.c.b16 %v8243, %v8242
      %v8349 = vpack.c.b16 %v8245, %v8244
      %v8350 = vpack.c.b16 %v8247, %v8246
      %v8351 = vpack.c.b16 %v8249, %v8248
      %v8352 = vpack.c.b16 %v8251, %v8250
      %v8353 = vpack.c.b16 %v8253, %v8252
      %v8354 = vpack.c.b16 %v8255, %v8254
      %v8355 = vpack.c.b16 %v8257, %v8256
      %v8356 = vpack.c.b16 %v8259, %v8258
      %v8357 = vpack.c.b16 %v8261, %v8260
      %v8358 = vpack.c.b16 %v8263, %v8262
      %v8359 = vpack.c.b16 %v8265, %v8264
      %v8360 = vpack.c.b16 %v8267, %v8266
      %v8361 = vpack.c.b16 %v8269, %v8268
      %v8362 = vpack.c.b16 %v8271, %v8270
      %v8363 = vpack.c.b16 %v8273, %v8272
      %v8364 = vpack.c.b16 %v8275, %v8274
      %v8365 = vpack.c.b16 %v8277, %v8276
      %v8366 = vpack.c.b16 %v8279, %v8278
      %v8367 = vpack.c.b16 %v8281, %v8280
      %v8368 = vpack.c.b16 %v8283, %v8282
      %v8369 = vpack.c.b16 %v8285, %v8284
      %v8370 = vpack.c.b16 %v8287, %v8286
      %v8371 = vpack.c.b16 %v8289, %v8288
      %v8372 = vpack.c.b16 %v8291, %v8290
      %v8373 = vpack.c.b16 %v8293, %v8292
      %v8374 = vpack.c.b16 %v8295, %v8294
      %v8375 = vpack.c.b16 %v8297, %v8296
      %v8376 = vpack.c.b16 %v8299, %v8298
      %v8377 = vpack.c.b16 %v8301, %v8300
      %v8378 = vpack.c.b16 %v8303, %v8302
      %v8379 = vpack.c.b16 %v8305, %v8304
      %v8380 = vpack.c.b16 %v8307, %v8306
      %v8381 = vpack.c.b16 %v8309, %v8308
      %8454 = vmatpush.bf16.msra.mxu0 %v8317
      %8455 = vmatpush.bf16.msra.mxu0 %v8316
      %8456 = vmatpush.bf16.msra.mxu0 %v8315
      %8457 = vmatpush.bf16.msra.mxu0 %v8314
      %8458 = vmatpush.bf16.msra.mxu0 %v8313
      %8459 = vmatpush.bf16.msra.mxu0 %v8312
      %8460 = vmatpush.bf16.msra.mxu0 %v8311
      %8461 = vmatpush.bf16.msra.mxu0 %v8310
      %8462 = vmatmul.bf16.gmra.mxu0 %v7950
      %v8463 = vpop.f32.mrf.mxu0
      %v8464 = vadd.f32 0.0, %v8463
      %v8465 = vpop.f32.mrf.mxu0
      %v8466 = vadd.f32 0.0, %v8465
      %8467 = vmatmul.bf16.gmra.mxu0 %v7959
      %v8468 = vpop.f32.mrf.mxu0
      %v8469 = vadd.f32 0.0, %v8468
      %v8470 = vpop.f32.mrf.mxu0
      %v8471 = vadd.f32 0.0, %v8470
      %8472 = vmatmul.bf16.gmra.mxu0 %v7968
      %v8473 = vpop.f32.mrf.mxu0
      %v8474 = vadd.f32 0.0, %v8473
      %v8475 = vpop.f32.mrf.mxu0
      %v8476 = vadd.f32 0.0, %v8475
      %8477 = vmatmul.bf16.gmra.mxu0 %v7977
      %v8478 = vpop.f32.mrf.mxu0
      %v8479 = vadd.f32 0.0, %v8478
      %v8480 = vpop.f32.mrf.mxu0
      %v8481 = vadd.f32 0.0, %v8480
      %8482 = vdwg.mxu0
      %8483 = vmatpush.bf16.msra.mxu0 %v8325
      %8484 = vmatpush.bf16.msra.mxu0 %v8324
      %8485 = vmatpush.bf16.msra.mxu0 %v8323
      %8486 = vmatpush.bf16.msra.mxu0 %v8322
      %8487 = vmatpush.bf16.msra.mxu0 %v8321
      %8488 = vmatpush.bf16.msra.mxu0 %v8320
      %8489 = vmatpush.bf16.msra.mxu0 %v8319
      %8490 = vmatpush.bf16.msra.mxu0 %v8318
      %8491 = vmatmul.bf16.gmra.mxu0 %v7951
      %v8492 = vpop.f32.mrf.mxu0
      %v8493 = vadd.f32 %v8464, %v8492
      %v8494 = vpop.f32.mrf.mxu0
      %v8495 = vadd.f32 %v8466, %v8494
      %8496 = vmatmul.bf16.gmra.mxu0 %v7960
      %v8497 = vpop.f32.mrf.mxu0
      %v8498 = vadd.f32 %v8469, %v8497
      %v8499 = vpop.f32.mrf.mxu0
      %v8500 = vadd.f32 %v8471, %v8499
      %8501 = vmatmul.bf16.gmra.mxu0 %v7969
      %v8502 = vpop.f32.mrf.mxu0
      %v8503 = vadd.f32 %v8474, %v8502
      %v8504 = vpop.f32.mrf.mxu0
      %v8505 = vadd.f32 %v8476, %v8504
      %8506 = vmatmul.bf16.gmra.mxu0 %v7978
      %v8507 = vpop.f32.mrf.mxu0
      %v8508 = vadd.f32 %v8479, %v8507
      %v8509 = vpop.f32.mrf.mxu0
      %v8510 = vadd.f32 %v8481, %v8509
      %8511 = vdwg.mxu0
      %8512 = vmatpush.bf16.msra.mxu0 %v8333
      %8513 = vmatpush.bf16.msra.mxu0 %v8332
      %8514 = vmatpush.bf16.msra.mxu0 %v8331
      %8515 = vmatpush.bf16.msra.mxu0 %v8330
      %8516 = vmatpush.bf16.msra.mxu0 %v8329
      %8517 = vmatpush.bf16.msra.mxu0 %v8328
      %8518 = vmatpush.bf16.msra.mxu0 %v8327
      %8519 = vmatpush.bf16.msra.mxu0 %v8326
      %8520 = vmatmul.bf16.gmra.mxu0 %v7952
      %v8521 = vpop.f32.mrf.mxu0
      %v8522 = vadd.f32 %v8493, %v8521
      %v8523 = vpop.f32.mrf.mxu0
      %v8524 = vadd.f32 %v8495, %v8523
      %8525 = vmatmul.bf16.gmra.mxu0 %v7961
      %v8526 = vpop.f32.mrf.mxu0
      %v8527 = vadd.f32 %v8498, %v8526
      %v8528 = vpop.f32.mrf.mxu0
      %v8529 = vadd.f32 %v8500, %v8528
      %8530 = vmatmul.bf16.gmra.mxu0 %v7970
      %v8531 = vpop.f32.mrf.mxu0
      %v8532 = vadd.f32 %v8503, %v8531
      %v8533 = vpop.f32.mrf.mxu0
      %v8534 = vadd.f32 %v8505, %v8533
      %8535 = vmatmul.bf16.gmra.mxu0 %v7979
      %v8536 = vpop.f32.mrf.mxu0
      %v8537 = vadd.f32 %v8508, %v8536
      %v8538 = vpop.f32.mrf.mxu0
      %v8539 = vadd.f32 %v8510, %v8538
      %8540 = vdwg.mxu0
      %8541 = vmatpush.bf16.msra.mxu0 %v8341
      %8542 = vmatpush.bf16.msra.mxu0 %v8340
      %8543 = vmatpush.bf16.msra.mxu0 %v8339
      %8544 = vmatpush.bf16.msra.mxu0 %v8338
      %8545 = vmatpush.bf16.msra.mxu0 %v8337
      %8546 = vmatpush.bf16.msra.mxu0 %v8336
      %8547 = vmatpush.bf16.msra.mxu0 %v8335
      %8548 = vmatpush.bf16.msra.mxu0 %v8334
      %8549 = vmatmul.bf16.gmra.mxu0 %v7953
      %v8550 = vpop.f32.mrf.mxu0
      %v8551 = vadd.f32 %v8522, %v8550
      %v8552 = vpop.f32.mrf.mxu0
      %v8553 = vadd.f32 %v8524, %v8552
      %8554 = vmatmul.bf16.gmra.mxu0 %v7962
      %v8555 = vpop.f32.mrf.mxu0
      %v8556 = vadd.f32 %v8527, %v8555
      %v8557 = vpop.f32.mrf.mxu0
      %v8558 = vadd.f32 %v8529, %v8557
      %8559 = vmatmul.bf16.gmra.mxu0 %v7971
      %v8560 = vpop.f32.mrf.mxu0
      %v8561 = vadd.f32 %v8532, %v8560
      %v8562 = vpop.f32.mrf.mxu0
      %v8563 = vadd.f32 %v8534, %v8562
      %8564 = vmatmul.bf16.gmra.mxu0 %v7980
      %v8565 = vpop.f32.mrf.mxu0
      %v8566 = vadd.f32 %v8537, %v8565
      %v8567 = vpop.f32.mrf.mxu0
      %v8568 = vadd.f32 %v8539, %v8567
      %8569 = vdwg.mxu0
      %8570 = vmatpush.bf16.msra.mxu0 %v8349
      %8571 = vmatpush.bf16.msra.mxu0 %v8348
      %8572 = vmatpush.bf16.msra.mxu0 %v8347
      %8573 = vmatpush.bf16.msra.mxu0 %v8346
      %8574 = vmatpush.bf16.msra.mxu0 %v8345
      %8575 = vmatpush.bf16.msra.mxu0 %v8344
      %8576 = vmatpush.bf16.msra.mxu0 %v8343
      %8577 = vmatpush.bf16.msra.mxu0 %v8342
      %8578 = vmatmul.bf16.gmra.mxu0 %v7954
      %v8579 = vpop.f32.mrf.mxu0
      %v8580 = vadd.f32 %v8551, %v8579
      %v8581 = vpop.f32.mrf.mxu0
      %v8582 = vadd.f32 %v8553, %v8581
      %8583 = vmatmul.bf16.gmra.mxu0 %v7963
      %v8584 = vpop.f32.mrf.mxu0
      %v8585 = vadd.f32 %v8556, %v8584
      %v8586 = vpop.f32.mrf.mxu0
      %v8587 = vadd.f32 %v8558, %v8586
      %8588 = vmatmul.bf16.gmra.mxu0 %v7972
      %v8589 = vpop.f32.mrf.mxu0
      %v8590 = vadd.f32 %v8561, %v8589
      %v8591 = vpop.f32.mrf.mxu0
      %v8592 = vadd.f32 %v8563, %v8591
      %8593 = vmatmul.bf16.gmra.mxu0 %v7981
      %v8594 = vpop.f32.mrf.mxu0
      %v8595 = vadd.f32 %v8566, %v8594
      %v8596 = vpop.f32.mrf.mxu0
      %v8597 = vadd.f32 %v8568, %v8596
      %8598 = vdwg.mxu0
      %8599 = vmatpush.bf16.msra.mxu0 %v8357
      %8600 = vmatpush.bf16.msra.mxu0 %v8356
      %8601 = vmatpush.bf16.msra.mxu0 %v8355
      %8602 = vmatpush.bf16.msra.mxu0 %v8354
      %8603 = vmatpush.bf16.msra.mxu0 %v8353
      %8604 = vmatpush.bf16.msra.mxu0 %v8352
      %8605 = vmatpush.bf16.msra.mxu0 %v8351
      %8606 = vmatpush.bf16.msra.mxu0 %v8350
      %8607 = vmatmul.bf16.gmra.mxu0 %v7955
      %v8608 = vpop.f32.mrf.mxu0
      %v8609 = vadd.f32 %v8580, %v8608
      %v8610 = vpop.f32.mrf.mxu0
      %v8611 = vadd.f32 %v8582, %v8610
      %8612 = vmatmul.bf16.gmra.mxu0 %v7964
      %v8613 = vpop.f32.mrf.mxu0
      %v8614 = vadd.f32 %v8585, %v8613
      %v8615 = vpop.f32.mrf.mxu0
      %v8616 = vadd.f32 %v8587, %v8615
      %8617 = vmatmul.bf16.gmra.mxu0 %v7973
      %v8618 = vpop.f32.mrf.mxu0
      %v8619 = vadd.f32 %v8590, %v8618
      %v8620 = vpop.f32.mrf.mxu0
      %v8621 = vadd.f32 %v8592, %v8620
      %8622 = vmatmul.bf16.gmra.mxu0 %v7982
      %v8623 = vpop.f32.mrf.mxu0
      %v8624 = vadd.f32 %v8595, %v8623
      %v8625 = vpop.f32.mrf.mxu0
      %v8626 = vadd.f32 %v8597, %v8625
      %8627 = vdwg.mxu0
      %8628 = vmatpush.bf16.msra.mxu0 %v8365
      %8629 = vmatpush.bf16.msra.mxu0 %v8364
      %8630 = vmatpush.bf16.msra.mxu0 %v8363
      %8631 = vmatpush.bf16.msra.mxu0 %v8362
      %8632 = vmatpush.bf16.msra.mxu0 %v8361
      %8633 = vmatpush.bf16.msra.mxu0 %v8360
      %8634 = vmatpush.bf16.msra.mxu0 %v8359
      %8635 = vmatpush.bf16.msra.mxu0 %v8358
      %8636 = vmatmul.bf16.gmra.mxu0 %v7956
      %v8637 = vpop.f32.mrf.mxu0
      %v8638 = vadd.f32 %v8609, %v8637
      %v8639 = vpop.f32.mrf.mxu0
      %v8640 = vadd.f32 %v8611, %v8639
      %8641 = vmatmul.bf16.gmra.mxu0 %v7965
      %v8642 = vpop.f32.mrf.mxu0
      %v8643 = vadd.f32 %v8614, %v8642
      %v8644 = vpop.f32.mrf.mxu0
      %v8645 = vadd.f32 %v8616, %v8644
      %8646 = vmatmul.bf16.gmra.mxu0 %v7974
      %v8647 = vpop.f32.mrf.mxu0
      %v8648 = vadd.f32 %v8619, %v8647
      %v8649 = vpop.f32.mrf.mxu0
      %v8650 = vadd.f32 %v8621, %v8649
      %8651 = vmatmul.bf16.gmra.mxu0 %v7983
      %v8652 = vpop.f32.mrf.mxu0
      %v8653 = vadd.f32 %v8624, %v8652
      %v8654 = vpop.f32.mrf.mxu0
      %v8655 = vadd.f32 %v8626, %v8654
      %8656 = vdwg.mxu0
      %8657 = vmatpush.bf16.msra.mxu0 %v8373
      %8658 = vmatpush.bf16.msra.mxu0 %v8372
      %8659 = vmatpush.bf16.msra.mxu0 %v8371
      %8660 = vmatpush.bf16.msra.mxu0 %v8370
      %8661 = vmatpush.bf16.msra.mxu0 %v8369
      %8662 = vmatpush.bf16.msra.mxu0 %v8368
      %8663 = vmatpush.bf16.msra.mxu0 %v8367
      %8664 = vmatpush.bf16.msra.mxu0 %v8366
      %8665 = vmatmul.bf16.gmra.mxu0 %v7957
      %v8666 = vpop.f32.mrf.mxu0
      %v8667 = vadd.f32 %v8638, %v8666
      %v8668 = vpop.f32.mrf.mxu0
      %v8669 = vadd.f32 %v8640, %v8668
      %8670 = vmatmul.bf16.gmra.mxu0 %v7966
      %v8671 = vpop.f32.mrf.mxu0
      %v8672 = vadd.f32 %v8643, %v8671
      %v8673 = vpop.f32.mrf.mxu0
      %v8674 = vadd.f32 %v8645, %v8673
      %8675 = vmatmul.bf16.gmra.mxu0 %v7975
      %v8676 = vpop.f32.mrf.mxu0
      %v8677 = vadd.f32 %v8648, %v8676
      %v8678 = vpop.f32.mrf.mxu0
      %v8679 = vadd.f32 %v8650, %v8678
      %8680 = vmatmul.bf16.gmra.mxu0 %v7984
      %v8681 = vpop.f32.mrf.mxu0
      %v8682 = vadd.f32 %v8653, %v8681
      %v8683 = vpop.f32.mrf.mxu0
      %v8684 = vadd.f32 %v8655, %v8683
      %8685 = vdwg.mxu0
      %8686 = vmatpush.bf16.msra.mxu0 %v8381
      %8687 = vmatpush.bf16.msra.mxu0 %v8380
      %8688 = vmatpush.bf16.msra.mxu0 %v8379
      %8689 = vmatpush.bf16.msra.mxu0 %v8378
      %8690 = vmatpush.bf16.msra.mxu0 %v8377
      %8691 = vmatpush.bf16.msra.mxu0 %v8376
      %8692 = vmatpush.bf16.msra.mxu0 %v8375
      %8693 = vmatpush.bf16.msra.mxu0 %v8374
      %8694 = vmatmul.bf16.gmra.mxu0 %v7958
      %v8695 = vpop.f32.mrf.mxu0
      %v8696 = vadd.f32 %v8667, %v8695
      %v8697 = vpop.f32.mrf.mxu0
      %v8698 = vadd.f32 %v8669, %v8697
      %8699 = vmatmul.bf16.gmra.mxu0 %v7967
      %v8700 = vpop.f32.mrf.mxu0
      %v8701 = vadd.f32 %v8672, %v8700
      %v8702 = vpop.f32.mrf.mxu0
      %v8703 = vadd.f32 %v8674, %v8702
      %8704 = vmatmul.bf16.gmra.mxu0 %v7976
      %v8705 = vpop.f32.mrf.mxu0
      %v8706 = vadd.f32 %v8677, %v8705
      %v8707 = vpop.f32.mrf.mxu0
      %v8708 = vadd.f32 %v8679, %v8707
      %8709 = vmatmul.bf16.gmra.mxu0 %v7985
      %v8710 = vpop.f32.mrf.mxu0
      %v8711 = vadd.f32 %v8682, %v8710
      %v8712 = vpop.f32.mrf.mxu0
      %v8713 = vadd.f32 %v8684, %v8712
      %8714 = vdwg.mxu0
      %v8715 = vadd.f32 %v8696, %v8698
      %v8716 = vadd.f32 %v8715, %v8701
      %v8717 = vadd.f32 %v8716, %v8703
      %v8718 = vadd.f32 %v8717, %v8706
      %v8719 = vadd.f32 %v8718, %v8708
      %v8720 = vadd.f32 %v8719, %v8711
      %v8721 = vadd.f32 %v8720, %v8713
      %8722 = vadd.xlane.f32.xlu0 %v8721
      %v8723 = vpop.xlane.xlu0 %8722
      %v8724 = vrot.slane %v8723, 4
      %v8725 = vadd.f32 %v8723, %v8724
      %v8726 = vrot.slane %v8725, 2
      %v8727 = vadd.f32 %v8725, %v8726
      %v8728 = vrot.slane %v8727, 1
      %v8729 = vadd.f32 %v8727, %v8728
      %s8730 = vtos %v8729
      %v8731 = vrcp.pop 8192.0
      %v8732 = vmul.f32 8192.0, %v8731
      %v8733 = vsub.f32 1.0, %v8732
      %v8734 = vmul.f32 %v8731, %v8733
      %v8735 = vadd.f32 %v8731, %v8734
      %vm8736 = vweird.f32 %v8731
      %v8737 = vsel %vm8736, %v8731, %v8735
      %s8738 = vtos %v8737
      %s8739 = smul.f32 %s8730, %s8738
      %v8740 = vstv %s8739
      %v8741 = vsub.f32 %v8696, %v8740
      %v8742 = vsub.f32 %v8698, %v8740
      %v8743 = vsub.f32 %v8701, %v8740
      %v8744 = vsub.f32 %v8703, %v8740
      %v8745 = vsub.f32 %v8706, %v8740
      %v8746 = vsub.f32 %v8708, %v8740
      %v8747 = vsub.f32 %v8711, %v8740
      %v8748 = vsub.f32 %v8713, %v8740
      %v8749 = vmul.f32 %v8741, %v8741
      %v8750 = vmul.f32 %v8742, %v8742
      %v8751 = vmul.f32 %v8743, %v8743
      %v8752 = vmul.f32 %v8744, %v8744
      %v8753 = vmul.f32 %v8745, %v8745
      %v8754 = vmul.f32 %v8746, %v8746
      %v8755 = vmul.f32 %v8747, %v8747
      %v8756 = vmul.f32 %v8748, %v8748
      %v8757 = vadd.f32 %v8749, %v8750
      %v8758 = vadd.f32 %v8757, %v8751
      %v8759 = vadd.f32 %v8758, %v8752
      %v8760 = vadd.f32 %v8759, %v8753
      %v8761 = vadd.f32 %v8760, %v8754
      %v8762 = vadd.f32 %v8761, %v8755
      %v8763 = vadd.f32 %v8762, %v8756
      %8764 = vadd.xlane.f32.xlu0 %v8763
      %v8765 = vpop.xlane.xlu0 %8764
      %v8766 = vrot.slane %v8765, 4
      %v8767 = vadd.f32 %v8765, %v8766
      %v8768 = vrot.slane %v8767, 2
      %v8769 = vadd.f32 %v8767, %v8768
      %v8770 = vrot.slane %v8769, 1
      %v8771 = vadd.f32 %v8769, %v8770
      %s8772 = vtos %v8771
      %v8773 = vrcp.pop 8192.0
      %v8774 = vmul.f32 8192.0, %v8773
      %v8775 = vsub.f32 1.0, %v8774
      %v8776 = vmul.f32 %v8773, %v8775
      %v8777 = vadd.f32 %v8773, %v8776
      %vm8778 = vweird.f32 %v8773
      %v8779 = vsel %vm8778, %v8773, %v8777
      %s8780 = vtos %v8779
      %s8781 = smul.f32 %s8772, %s8780
      %s8782 = sadd.f32 %s8781, 1e-05
      %v8783 = vstv %s8782
      %v8784 = vrsqrt.pop %v8783
      %v8785 = vmul.f32 %v8784, %v8783
      %v8786 = vmul.f32 %v8785, %v8784
      %v8787 = vmul.f32 0.5, %v8786
      %v8788 = vsub.f32 1.5, %v8787
      %v8789 = vmul.f32 %v8784, %v8788
      %vm8790 = vweird.f32 %v8783
      %vm8791 = vweird.f32 %v8784
      %vm8792 = vmor %vm8790, %vm8791
      %v8793 = vsel %vm8792, %v8784, %v8789
      %s8794 = vtos %v8793
      %v8795 = vstv %s8794
      %v8796 = vmul.f32 %v8741, %v8795
      %v8797 = vmul.f32 %v8742, %v8795
      %v8798 = vmul.f32 %v8743, %v8795
      %v8799 = vmul.f32 %v8744, %v8795
      %v8800 = vmul.f32 %v8745, %v8795
      %v8801 = vmul.f32 %v8746, %v8795
      %v8802 = vmul.f32 %v8747, %v8795
      %v8803 = vmul.f32 %v8748, %v8795
      %v8804 = vld [vmem:[%s13] sm:$0x1]
      %v8806 = vperm.slane %v8804, 0
      %v8808 = vmul.f32 %v8796, %v8806
      %v8809 = vmul.f32 %v8797, %v8806
      %v8810 = vmul.f32 %v8798, %v8806
      %v8811 = vmul.f32 %v8799, %v8806
      %v8812 = vmul.f32 %v8800, %v8806
      %v8813 = vmul.f32 %v8801, %v8806
      %v8814 = vmul.f32 %v8802, %v8806
      %v8815 = vmul.f32 %v8803, %v8806
      %v8816 = vld [vmem:[%s14] sm:$0x1]
      %v8818 = vperm.slane %v8816, 0
      %v8820 = vadd.f32 %v8808, %v8818
      %v8821 = vadd.f32 %v8809, %v8818
      %v8822 = vadd.f32 %v8810, %v8818
      %v8823 = vadd.f32 %v8811, %v8818
      %v8824 = vadd.f32 %v8812, %v8818
      %v8825 = vadd.f32 %v8813, %v8818
      %v8826 = vadd.f32 %v8814, %v8818
      %v8827 = vadd.f32 %v8815, %v8818
      %v8828 = vmax.f32 %v8820, 0.0
      %v8829 = vmax.f32 %v8821, 0.0
      %v8830 = vmax.f32 %v8822, 0.0
      %v8831 = vmax.f32 %v8823, 0.0
      %v8832 = vmax.f32 %v8824, 0.0
      %v8833 = vmax.f32 %v8825, 0.0
      %v8834 = vmax.f32 %v8826, 0.0
      %v8835 = vmax.f32 %v8827, 0.0
      %v8836 = vpack.c.bf16 %v8829, %v8828
      %v8837 = vpack.c.bf16 %v8831, %v8830
      %v8838 = vpack.c.bf16 %v8833, %v8832
      %v8839 = vpack.c.bf16 %v8835, %v8834
      %v8840 = vld [vmem:[%s15] sm:$0xf]
      %v8841 = vld [vmem:[%s15 + $0x4] sm:$0xf]
      %v8842 = vld [vmem:[%s15 + $0x8] sm:$0xf]
      %v8843 = vld [vmem:[%s15 + $0xc] sm:$0xf]
      %v8844 = vld [vmem:[%s15 + $0x10] sm:$0xf]
      %v8845 = vld [vmem:[%s15 + $0x14] sm:$0xf]
      %v8846 = vld [vmem:[%s15 + $0x18] sm:$0xf]
      %v8847 = vld [vmem:[%s15 + $0x1c] sm:$0xf]
      %v8848 = vld [vmem:[%s15 + $0x20] sm:$0xf]
      %v8849 = vld [vmem:[%s15 + $0x24] sm:$0xf]
      %v8850 = vld [vmem:[%s15 + $0x28] sm:$0xf]
      %v8851 = vld [vmem:[%s15 + $0x2c] sm:$0xf]
      %v8852 = vld [vmem:[%s15 + $0x30] sm:$0xf]
      %v8853 = vld [vmem:[%s15 + $0x34] sm:$0xf]
      %v8854 = vld [vmem:[%s15 + $0x38] sm:$0xf]
      %v8855 = vld [vmem:[%s15 + $0x3c] sm:$0xf]
      %v8856 = vld [vmem:[%s16] sm:$0x1]
      %v8858 = vperm.slane %v8856, 0
      %v8876 = vunpack.c.l.b16 %v8840
      %v8877 = vunpack.c.l.b16 %v8841
      %v8878 = vunpack.c.l.b16 %v8842
      %v8879 = vunpack.c.l.b16 %v8843
      %v8880 = vunpack.c.l.b16 %v8844
      %v8881 = vunpack.c.l.b16 %v8845
      %v8882 = vunpack.c.l.b16 %v8846
      %v8883 = vunpack.c.l.b16 %v8847
      %v8884 = vunpack.c.l.b16 %v8848
      %v8885 = vunpack.c.l.b16 %v8849
      %v8886 = vunpack.c.l.b16 %v8850
      %v8887 = vunpack.c.l.b16 %v8851
      %v8888 = vunpack.c.l.b16 %v8852
      %v8889 = vunpack.c.l.b16 %v8853
      %v8890 = vunpack.c.l.b16 %v8854
      %v8891 = vunpack.c.l.b16 %v8855
      %v8892 = vpack.c.b16 %v8877, %v8876
      %v8893 = vpack.c.b16 %v8879, %v8878
      %v8894 = vpack.c.b16 %v8881, %v8880
      %v8895 = vpack.c.b16 %v8883, %v8882
      %v8896 = vpack.c.b16 %v8885, %v8884
      %v8897 = vpack.c.b16 %v8887, %v8886
      %v8898 = vpack.c.b16 %v8889, %v8888
      %v8899 = vpack.c.b16 %v8891, %v8890
      %8908 = vmatpush.bf16.msra.mxu0 %v8899
      %8909 = vmatpush.bf16.msra.mxu0 %v8898
      %8910 = vmatpush.bf16.msra.mxu0 %v8897
      %8911 = vmatpush.bf16.msra.mxu0 %v8896
      %8912 = vmatpush.bf16.msra.mxu0 %v8895
      %8913 = vmatpush.bf16.msra.mxu0 %v8894
      %8914 = vmatpush.bf16.msra.mxu0 %v8893
      %8915 = vmatpush.bf16.msra.mxu0 %v8892
      %8916 = vmatmul.bf16.gmra.mxu0 %v8836
      %v8917 = vpop.f32.mrf.mxu0
      %v8918 = vadd.f32 %v8858, %v8917
      %v8919 = vpop.f32.mrf.mxu0
      %v8920 = vadd.f32 %v8858, %v8919
      %8921 = vmatmul.bf16.gmra.mxu0 %v8837
      %v8922 = vpop.f32.mrf.mxu0
      %v8923 = vadd.f32 %v8858, %v8922
      %v8924 = vpop.f32.mrf.mxu0
      %v8925 = vadd.f32 %v8858, %v8924
      %8926 = vmatmul.bf16.gmra.mxu0 %v8838
      %v8927 = vpop.f32.mrf.mxu0
      %v8928 = vadd.f32 %v8858, %v8927
      %v8929 = vpop.f32.mrf.mxu0
      %v8930 = vadd.f32 %v8858, %v8929
      %8931 = vmatmul.bf16.gmra.mxu0 %v8839
      %v8932 = vpop.f32.mrf.mxu0
      %v8933 = vadd.f32 %v8858, %v8932
      %v8934 = vpop.f32.mrf.mxu0
      %v8935 = vadd.f32 %v8858, %v8934
      %8936 = vdwg.mxu0
      %8937 = vst [vmem:[%s548] sm:$0xff] %v8918
      %8938 = vst [vmem:[%s548 + $0x8] sm:$0xff] %v8920
      %8939 = vst [vmem:[%s548 + $0x10] sm:$0xff] %v8923
      %8940 = vst [vmem:[%s548 + $0x18] sm:$0xff] %v8925
      %8941 = vst [vmem:[%s548 + $0x20] sm:$0xff] %v8928
      %8942 = vst [vmem:[%s548 + $0x28] sm:$0xff] %v8930
      %8943 = vst [vmem:[%s548 + $0x30] sm:$0xff] %v8933
      %8944 = vst [vmem:[%s548 + $0x38] sm:$0xff] %v8935
      %p8945 = scmp.lt.s32.totalorder %s28, 1
      %s8946 = scalar_select %p8945, %s28, 1
      %s8947 = smul.addr %s8946, 8
      %s8948 = smul.addr %s8947, 8
      %s8949 = scalar_lea.vmem %s17, %s8948
      // Predicated region
      $region89: #{encoder_eff_forward.1} parent=87 // pred_check
        %p8950 = pneg %p408
      $region90: #{encoder_eff_forward.1} parent=87 // pred_check_branch
        %8952 = sbr.rel (%p8950) target = $region92
      $region91: #{encoder_eff_forward.1} parent=87 // pred_region
        _
      $region92: #{encoder_eff_forward.1} parent=87 // pred_fallthru
        _
    $region88: #{encoder_eff_forward.1} parent=5 // pred_fallthru
      _
    %p8953 = scmp.le.s32.totalorder 2, %s23
    // Predicated region
    $region93: #{encoder_eff_forward.1} parent=5 // pred_check
      %p8954 = pneg %p8953
    $region94: #{encoder_eff_forward.1} parent=5 // pred_check_branch
      %8956 = sbr.rel (%p8954) target = $region96
    $region95: #{encoder_eff_forward.1} parent=5 // pred_region
      %s8957 = ssub.s32 %s23, 2
      // Predicated region
      $region97: #{encoder_eff_forward.1} parent=95 // pred_check
        %p8958 = pneg %p414
      $region98: #{encoder_eff_forward.1} parent=95 // pred_check_branch
        %8960 = sbr.rel (%p8958) target = $region100
      $region99: #{encoder_eff_forward.1} parent=95 // pred_region
        %p8961 = scmp.lt.s32.totalorder %s29, 1
        %s8962 = scalar_select %p8961, %s29, 1
        %s8963 = smul.addr %s8962, 8
        %s8964 = smul.addr %s8963, 8
        %s8965 = scalar_lea.vmem %s17, %s8964
      $region100: #{encoder_eff_forward.1} parent=95 // pred_fallthru
        _
    $region96: #{encoder_eff_forward.1} parent=5 // pred_fallthru
      _
  $region6: #{encoder_eff_forward.1} parent=0 // loop_footer
    %s27 = sadd.s32 1, %s23
  $region7: #{encoder_eff_forward.1} parent=0 // loop_footer_branch
    %22 = sbr.rel target = $region3
  $region8: #{encoder_eff_forward.1} parent=0 // loop_exit
    _

</llo_original>
